<compile_context>
chip_gen: v6e
topology: v6e:2x2x1
jax: 0.10.0
libtpu: 0.0.40
codegen_flags: <defaults>
</compile_context>

<pallas_src>
import jax
import jax.numpy as jnp
from jax.experimental import pallas as pl
from jax.experimental.pallas import tpu as pltpu


# ----------------------------------------------------------------------------- #
# Fused kernel
# ----------------------------------------------------------------------------- #
def _lstm_attn_kernel(q_ref, src_ref, kv_ref, mask_ref,
                      wih_ref, whh_ref, bl_ref,
                      wq_ref, wk_ref, wv_ref, wfc_ref, bfc_ref,
                      lng_ref, lnb_ref,
                      w1a_ref, w1b_ref, b1_ref, w2_ref, b2_ref,
                      out_ref, attn_ref):
    f32 = jnp.float32
    B, dm = q_ref.shape
    N = kv_ref.shape[1]
    H = whh_ref.shape[1]
    nh = wq_ref.shape[0]
    dk = wq_ref.shape[2]
    dv = wv_ref.shape[2]

    kv = kv_ref[...]                                   # (B, N, dm), VMEM resident

    # ---------------- LSTM over the N timesteps (statically unrolled) ----------
    # gate order i, f, g, o; per-gate weights stacked on the leading axis so no
    # lane-axis slicing is needed; all loads hoisted out of the unrolled loop.
    wih = [wih_ref[g] for g in range(4)]               # (dm, H) each
    whh = [whh_ref[g] for g in range(4)]               # (H,  H) each
    bl = [bl_ref[g] for g in range(4)]                 # (1,  H) each (b_ih + b_hh)
    h = jnp.zeros((B, H), f32)
    c = jnp.zeros((B, H), f32)
    hs = []
    for t in range(N):
        x_t = kv[:, t, :]                              # static slice, (B, dm)
        gi = (jnp.dot(x_t, wih[0], preferred_element_type=f32)
              + jnp.dot(h, whh[0], preferred_element_type=f32) + bl[0])
        gf = (jnp.dot(x_t, wih[1], preferred_element_type=f32)
              + jnp.dot(h, whh[1], preferred_element_type=f32) + bl[1])
        gg = (jnp.dot(x_t, wih[2], preferred_element_type=f32)
              + jnp.dot(h, whh[2], preferred_element_type=f32) + bl[2])
        go = (jnp.dot(x_t, wih[3], preferred_element_type=f32)
              + jnp.dot(h, whh[3], preferred_element_type=f32) + bl[3])
        c = jax.nn.sigmoid(gf) * c + jax.nn.sigmoid(gi) * jnp.tanh(gg)
        h = jax.nn.sigmoid(go) * jnp.tanh(c)
        hs.append(h)
    h_all = jnp.stack(hs, axis=1)                      # (B, N, H): sublane-axis stack

    # ---------------- Multi-head attention (len_q == 1) ------------------------
    # TODO(synk): dropout on attn weights / MHA output is eval-mode identity here.
    q = q_ref[...]                                     # (B, dm)
    residual = q
    mask = mask_ref[...]                               # (B, N), 1.0 = null position
    inv_temp = 1.0 / (float(dk) ** 0.5)

    h2 = h_all.reshape(B * N, H)
    kv2 = kv.reshape(B * N, dm)
    # fold fc bias + residual into the per-head partial-matmul accumulator
    y = bfc_ref[...] + residual                        # (B, dm)
    for hd in range(nh):
        qp = jnp.dot(q, wq_ref[hd], preferred_element_type=f32)                    # (B, dk)
        kp = jnp.dot(h2, wk_ref[hd], preferred_element_type=f32).reshape(B, N, dk)
        vp = jnp.dot(kv2, wv_ref[hd], preferred_element_type=f32).reshape(B, N, dv)
        s = jnp.sum(qp[:, None, :] * kp, axis=-1) * inv_temp                       # (B, N)
        s = jnp.where(mask > 0.5, -1e10, s)
        s_max = jnp.max(s, axis=-1, keepdims=True)
        e = jnp.exp(s - s_max)
        p = e / jnp.sum(e, axis=-1, keepdims=True)                                 # (B, N)
        attn_ref[hd] = p.astype(attn_ref.dtype)
        o_h = jnp.sum(p[:, :, None] * vp, axis=1)                                  # (B, dv)
        y = y + jnp.dot(o_h, wfc_ref[hd], preferred_element_type=f32)              # per-head fc fold

    # LayerNorm(fc(out) + residual)
    mu = jnp.mean(y, axis=-1, keepdims=True)
    var = jnp.mean((y - mu) * (y - mu), axis=-1, keepdims=True)
    ln = (y - mu) * jax.lax.rsqrt(var + 1e-5) * lng_ref[...] + lnb_ref[...]        # (B, dm)

    # ---------------- MergeLayer: concat -> fc1 -> ReLU -> fc2 ------------------
    # concat([ln, src]) @ W1.T  ==  ln @ W1a + src @ W1b   (no lane-axis concat)
    src = src_ref[...]
    hm = (jnp.dot(ln, w1a_ref[...], preferred_element_type=f32)
          + jnp.dot(src, w1b_ref[...], preferred_element_type=f32) + b1_ref[...])
    hm = jnp.maximum(hm, 0.0)
    # w2/b2 are zero-padded to a 128-lane multiple -> lane-dense full-width store.
    out_ref[...] = (jnp.dot(hm, w2_ref[...], preferred_element_type=f32)
                    + b2_ref[...]).astype(out_ref.dtype)


# ----------------------------------------------------------------------------- #
# Parameter handling (torch-layout params -> kernel layout)
# ----------------------------------------------------------------------------- #
def _torch_to_kernel_params(p, feat, dm, n_head, out_pad):
    H = dm
    dk = dv = dm // n_head
    f32 = jnp.float32
    w_ih4 = p['lstm_w_ih'].reshape(4, H, dm).transpose(0, 2, 1)        # (4, dm, H)
    w_hh4 = p['lstm_w_hh'].reshape(4, H, H).transpose(0, 2, 1)         # (4, H, H)
    b4 = (p['lstm_b_ih'] + p['lstm_b_hh']).reshape(4, 1, H)            # (4, 1, H)
    wq = p['wq'].reshape(n_head, dk, dm).transpose(0, 2, 1)            # (nh, dm, dk)
    wk = p['wk'].reshape(n_head, dk, dm).transpose(0, 2, 1)
    wv = p['wv'].reshape(n_head, dv, dm).transpose(0, 2, 1)
    wfc = p['fc_w'].T.reshape(n_head, dv, dm)                          # (nh, dv, dm)
    bfc = p['fc_b'].reshape(1, dm)
    lng = p['ln_g'].reshape(1, dm)
    lnb = p['ln_b'].reshape(1, dm)
    w1a = p['m_fc1_w'][:, :dm].T                                       # (dm, feat)
    w1b = p['m_fc1_w'][:, dm:].T                                       # (feat, feat)
    b1 = p['m_fc1_b'].reshape(1, feat)
    w2p = jnp.zeros((feat, out_pad), f32).at[:, :feat].set(p['m_fc2_w'].T)
    b2p = jnp.zeros((1, out_pad), f32).at[:, :feat].set(p['m_fc2_b'])
    return [w_ih4, w_hh4, b4, wq, wk, wv, wfc, bfc, lng, lnb, w1a, w1b, b1, w2p, b2p]


def lstm_attn_forward(src, src_t, seq, seq_t, seq_e, mask, params, n_head=2):
    """Forward of LstmAttnModel.  src:(B,D) src_t:(B,1,Dt) seq:(B,N,D) seq_t:(B,N,Dt)
    seq_e:(B,N,De) mask:(B,N) bool (True = null).  Returns (out:(B,D), attn:(nh*B,N))."""
    f32 = jnp.float32
    B, feat = src.shape
    _, N, _ = seq.shape
    edge = seq_e.shape[-1]
    tdim = seq_t.shape[-1]
    assert edge == feat, "edge_dim must equal feat_dim (zeros placeholder in q)"
    dm = feat + edge + tdim
    H = dm
    dk = dv = dm // n_head
    out_pad = ((feat + 127) // 128) * 128              # lane-dense output slab

    # Layout plumbing in the wrapper (XLA): the kernel never does lane concats.
    q_in = jnp.concatenate([src, jnp.zeros_like(src), src_t[:, 0, :]], axis=1).astype(f32)
    kv = jnp.concatenate([seq, seq_e, seq_t], axis=2).astype(f32)      # (B, N, dm)
    mask_f = mask.astype(f32)

    inputs = [q_in, src.astype(f32), kv, mask_f] + _torch_to_kernel_params(
        params, feat, dm, n_head, out_pad)

    def full_spec(a):
        return pl.BlockSpec(tuple(a.shape), lambda: (0,) * a.ndim)

    in_specs = [full_spec(a) for a in inputs]
    out_shape = (jax.ShapeDtypeStruct((B, out_pad), f32),
                 jax.ShapeDtypeStruct((n_head, B, N), f32))
    out_specs = (pl.BlockSpec((B, out_pad), lambda: (0, 0)),
                 pl.BlockSpec((n_head, B, N), lambda: (0, 0, 0)))

    # Advisory cost estimate so XLA schedules this tiny custom call sensibly.
    flops = (N * 8 * 2 * B * dm * H
             + n_head * (2 * B * dm * dk + 2 * B * N * dm * dk + 2 * B * N * dm * dv
                         + 2 * B * N * dk + 2 * B * N * dv + 2 * B * dv * dm)
             + 2 * B * dm * feat + 2 * B * feat * feat + 2 * B * feat * out_pad)
    transcendentals = N * B * 5 * H + n_head * B * N + B
    bytes_accessed = 4 * (sum(int(a.size) for a in inputs) + B * out_pad + n_head * B * N)

    out_p, attn = pl.pallas_call(
        _lstm_attn_kernel,
        out_shape=out_shape,
        grid=(),
        in_specs=in_specs,
        out_specs=out_specs,
        cost_estimate=pl.CostEstimate(flops=int(flops),
                                      transcendentals=int(transcendentals),
                                      bytes_accessed=int(bytes_accessed)),
        compiler_params=pltpu.CompilerParams(vmem_limit_bytes=32 * 1024 * 1024),
    )(*inputs)

    return out_p[:, :feat], attn.reshape(n_head * B, N)


# ----------------------------------------------------------------------------- #
# Deterministic init (torch-layout shapes / init distributions) and JAX reference
# ----------------------------------------------------------------------------- #
def init_params(key, feat_dim, edge_dim, time_dim, n_head=2):
    dm = feat_dim + edge_dim + time_dim
    H = dm
    dk = dv = dm // n_head
    f32 = jnp.float32
    ks = jax.random.split(key, 13)

    def uni(k, shape, bound):
        return jax.random.uniform(k, shape, f32, -bound, bound)

    def xavier(k, shape):  # (fan_out, fan_in) torch layout
        std = (2.0 / (shape[0] + shape[1])) ** 0.5
        return std * jax.random.normal(k, shape, f32)

    b_lstm = 1.0 / (H ** 0.5)
    return {
        'lstm_w_ih': uni(ks[0], (4 * H, dm), b_lstm),
        'lstm_w_hh': uni(ks[1], (4 * H, H), b_lstm),
        'lstm_b_ih': uni(ks[2], (4 * H,), b_lstm),
        'lstm_b_hh': uni(ks[3], (4 * H,), b_lstm),
        'wq': ((2.0 / (dm + dk)) ** 0.5) * jax.random.normal(ks[4], (n_head * dk, dm), f32),
        'wk': ((2.0 / (dm + dk)) ** 0.5) * jax.random.normal(ks[5], (n_head * dk, dm), f32),
        'wv': ((2.0 / (dm + dv)) ** 0.5) * jax.random.normal(ks[6], (n_head * dv, dm), f32),
        'fc_w': xavier(ks[7], (dm, n_head * dv)),
        'fc_b': uni(ks[8], (dm,), 1.0 / ((n_head * dv) ** 0.5)),
        'ln_g': jnp.ones((dm,), f32),
        'ln_b': jnp.zeros((dm,), f32),
        'm_fc1_w': xavier(ks[9], (feat_dim, dm + feat_dim)),
        'm_fc1_b': uni(ks[10], (feat_dim,), 1.0 / ((dm + feat_dim) ** 0.5)),
        'm_fc2_w': xavier(ks[11], (feat_dim, feat_dim)),
        'm_fc2_b': uni(ks[12], (feat_dim,), 1.0 / (feat_dim ** 0.5)),
    }


def lstm_attn_ref(src, src_t, seq, seq_t, seq_e, mask, p, n_head=2):
    """Pure-JAX reference mirroring the PyTorch module (eval mode)."""
    B, feat = src.shape
    _, N, _ = seq.shape
    dm = feat + seq_e.shape[-1] + seq_t.shape[-1]
    H = dm
    dk = dv = dm // n_head
    src_ext = src[:, None, :]
    q = jnp.concatenate([src_ext, jnp.zeros_like(src_ext), src_t], axis=2)
    kv = jnp.concatenate([seq, seq_e, seq_t], axis=2)
    # LSTM (batch_first, h0=c0=0), gate order i,f,g,o
    h = jnp.zeros((B, H), jnp.float32)
    c = jnp.zeros((B, H), jnp.float32)
    hs = []
    for t in range(N):
        x = kv[:, t, :]
        gates = x @ p['lstm_w_ih'].T + h @ p['lstm_w_hh'].T + p['lstm_b_ih'] + p['lstm_b_hh']
        i = jax.nn.sigmoid(gates[:, :H])
        f = jax.nn.sigmoid(gates[:, H:2 * H])
        g = jnp.tanh(gates[:, 2 * H:3 * H])
        o = jax.nn.sigmoid(gates[:, 3 * H:])
        c = f * c + i * g
        h = o * jnp.tanh(c)
        hs.append(h)
    k = jnp.stack(hs, axis=1)
    v = kv
    residual = q
    qh = jnp.transpose((q @ p['wq'].T).reshape(B, 1, n_head, dk), (2, 0, 1, 3)).reshape(n_head * B, 1, dk)
    kh = jnp.transpose((k @ p['wk'].T).reshape(B, N, n_head, dk), (2, 0, 1, 3)).reshape(n_head * B, N, dk)
    vh = jnp.transpose((v @ p['wv'].T).reshape(B, N, n_head, dv), (2, 0, 1, 3)).reshape(n_head * B, N, dv)
    maskr = jnp.tile(mask[:, None, :], (n_head, 1, 1))
    attn = jnp.einsum('hqd,hkd->hqk', qh, kh) / (dk ** 0.5)
    attn = jnp.where(maskr, -1e10, attn)
    attn = jax.nn.softmax(attn, axis=2)
    out = jnp.einsum('hqk,hkd->hqd', attn, vh)
    out = jnp.transpose(out.reshape(n_head, B, 1, dv), (1, 2, 0, 3)).reshape(B, 1, n_head * dv)
    out = out @ p['fc_w'].T + p['fc_b']
    y = out + residual
    mu = y.mean(-1, keepdims=True)
    var = ((y - mu) ** 2).mean(-1, keepdims=True)
    mha = (y - mu) / jnp.sqrt(var + 1e-5) * p['ln_g'] + p['ln_b']
    mha = mha[:, 0, :]
    attn_w = attn[:, 0, :]
    x = jnp.concatenate([mha, src], axis=1)
    hmid = jax.nn.relu(x @ p['m_fc1_w'].T + p['m_fc1_b'])
    return hmid @ p['m_fc2_w'].T + p['m_fc2_b'], attn_w


# ----------------------------------------------------------------------------- #
if __name__ == "__main__":
    B, N = 4, 8
    feat_dim, edge_dim, time_dim, n_head = 16, 16, 16, 2      # model_dim = 48
    key = jax.random.PRNGKey(0)
    k_in, k_p = jax.random.split(key)
    k1, k2, k3, k4, k5 = jax.random.split(k_in, 5)
    src = jax.random.normal(k1, (B, feat_dim), jnp.float32)
    src_t = jax.random.normal(k2, (B, 1, time_dim), jnp.float32)
    seq = jax.random.normal(k3, (B, N, feat_dim), jnp.float32)
    seq_t = jax.random.normal(k4, (B, N, time_dim), jnp.float32)
    seq_e = jax.random.normal(k5, (B, N, edge_dim), jnp.float32)
    mask = jnp.zeros((B, N), dtype=bool).at[:, -2:].set(True)  # last two slots null
    params = init_params(k_p, feat_dim, edge_dim, time_dim, n_head)

    out, attn = lstm_attn_forward(src, src_t, seq, seq_t, seq_e, mask, params, n_head=n_head)
    jax.block_until_ready((out, attn))

    ref_out, ref_attn = lstm_attn_ref(src, src_t, seq, seq_t, seq_e, mask, params, n_head=n_head)
    assert out.shape == (B, feat_dim) and attn.shape == (n_head * B, N)
    assert jnp.allclose(out, ref_out, atol=2e-4, rtol=2e-4), \
        float(jnp.max(jnp.abs(out - ref_out)))
    assert jnp.allclose(attn, ref_attn, atol=2e-4, rtol=2e-4), \
        float(jnp.max(jnp.abs(attn - ref_attn)))
    print("KERNEL_OK")
</pallas_src>

<mosaic_0001>
module attributes {stable_mosaic.version = 11 : i64} {
  func.func @_lstm_attn_kernel(%arg0: memref<4x48xf32, #tpu.memory_space<vmem>>, %arg1: memref<4x16xf32, #tpu.memory_space<vmem>>, %arg2: memref<4x8x48xf32, #tpu.memory_space<vmem>>, %arg3: memref<4x8xf32, #tpu.memory_space<vmem>>, %arg4: memref<4x48x48xf32, #tpu.memory_space<vmem>>, %arg5: memref<4x48x48xf32, #tpu.memory_space<vmem>>, %arg6: memref<4x1x48xf32, #tpu.memory_space<vmem>>, %arg7: memref<2x48x24xf32, #tpu.memory_space<vmem>>, %arg8: memref<2x48x24xf32, #tpu.memory_space<vmem>>, %arg9: memref<2x48x24xf32, #tpu.memory_space<vmem>>, %arg10: memref<2x24x48xf32, #tpu.memory_space<vmem>>, %arg11: memref<1x48xf32, #tpu.memory_space<vmem>>, %arg12: memref<1x48xf32, #tpu.memory_space<vmem>>, %arg13: memref<1x48xf32, #tpu.memory_space<vmem>>, %arg14: memref<48x16xf32, #tpu.memory_space<vmem>>, %arg15: memref<16x16xf32, #tpu.memory_space<vmem>>, %arg16: memref<1x16xf32, #tpu.memory_space<vmem>>, %arg17: memref<16x128xf32, #tpu.memory_space<vmem>>, %arg18: memref<1x128xf32, #tpu.memory_space<vmem>>, %arg19: memref<4x128xf32, #tpu.memory_space<vmem>>, %arg20: memref<2x4x8xf32, #tpu.memory_space<vmem>>) attributes {dimension_semantics = [], scalar_prefetch = 0 : i64, scratch_operands = 0 : i64, tpu.core_type = #tpu.core_type<tc>} {
    %c0 = arith.constant 0 : index
    %c0_0 = arith.constant 0 : index
    %c0_1 = arith.constant 0 : index
    %0 = vector.load %arg2[%c0, %c0_0, %c0_1] : memref<4x8x48xf32, #tpu.memory_space<vmem>>, vector<4x8x48xf32>
    %c0_2 = arith.constant 0 : index
    %c0_3 = arith.constant 0 : index
    %c0_4 = arith.constant 0 : index
    %1 = vector.load %arg4[%c0_2, %c0_3, %c0_4] : memref<4x48x48xf32, #tpu.memory_space<vmem>>, vector<1x48x48xf32>
    %2 = vector.shape_cast %1 : vector<1x48x48xf32> to vector<48x48xf32>
    %c1 = arith.constant 1 : index
    %c0_5 = arith.constant 0 : index
    %c0_6 = arith.constant 0 : index
    %3 = vector.load %arg4[%c1, %c0_5, %c0_6] : memref<4x48x48xf32, #tpu.memory_space<vmem>>, vector<1x48x48xf32>
    %4 = vector.shape_cast %3 : vector<1x48x48xf32> to vector<48x48xf32>
    %c2 = arith.constant 2 : index
    %c0_7 = arith.constant 0 : index
    %c0_8 = arith.constant 0 : index
    %5 = vector.load %arg4[%c2, %c0_7, %c0_8] : memref<4x48x48xf32, #tpu.memory_space<vmem>>, vector<1x48x48xf32>
    %6 = vector.shape_cast %5 : vector<1x48x48xf32> to vector<48x48xf32>
    %c3 = arith.constant 3 : index
    %c0_9 = arith.constant 0 : index
    %c0_10 = arith.constant 0 : index
    %7 = vector.load %arg4[%c3, %c0_9, %c0_10] : memref<4x48x48xf32, #tpu.memory_space<vmem>>, vector<1x48x48xf32>
    %8 = vector.shape_cast %7 : vector<1x48x48xf32> to vector<48x48xf32>
    %c0_11 = arith.constant 0 : index
    %c0_12 = arith.constant 0 : index
    %c0_13 = arith.constant 0 : index
    %9 = vector.load %arg5[%c0_11, %c0_12, %c0_13] : memref<4x48x48xf32, #tpu.memory_space<vmem>>, vector<1x48x48xf32>
    %10 = vector.shape_cast %9 : vector<1x48x48xf32> to vector<48x48xf32>
    %c1_14 = arith.constant 1 : index
    %c0_15 = arith.constant 0 : index
    %c0_16 = arith.constant 0 : index
    %11 = vector.load %arg5[%c1_14, %c0_15, %c0_16] : memref<4x48x48xf32, #tpu.memory_space<vmem>>, vector<1x48x48xf32>
    %12 = vector.shape_cast %11 : vector<1x48x48xf32> to vector<48x48xf32>
    %c2_17 = arith.constant 2 : index
    %c0_18 = arith.constant 0 : index
    %c0_19 = arith.constant 0 : index
    %13 = vector.load %arg5[%c2_17, %c0_18, %c0_19] : memref<4x48x48xf32, #tpu.memory_space<vmem>>, vector<1x48x48xf32>
    %14 = vector.shape_cast %13 : vector<1x48x48xf32> to vector<48x48xf32>
    %c3_20 = arith.constant 3 : index
    %c0_21 = arith.constant 0 : index
    %c0_22 = arith.constant 0 : index
    %15 = vector.load %arg5[%c3_20, %c0_21, %c0_22] : memref<4x48x48xf32, #tpu.memory_space<vmem>>, vector<1x48x48xf32>
    %16 = vector.shape_cast %15 : vector<1x48x48xf32> to vector<48x48xf32>
    %c0_23 = arith.constant 0 : index
    %c0_24 = arith.constant 0 : index
    %c0_25 = arith.constant 0 : index
    %17 = vector.load %arg6[%c0_23, %c0_24, %c0_25] : memref<4x1x48xf32, #tpu.memory_space<vmem>>, vector<1x1x48xf32>
    %18 = vector.shape_cast %17 : vector<1x1x48xf32> to vector<1x48xf32>
    %c1_26 = arith.constant 1 : index
    %c0_27 = arith.constant 0 : index
    %c0_28 = arith.constant 0 : index
    %19 = vector.load %arg6[%c1_26, %c0_27, %c0_28] : memref<4x1x48xf32, #tpu.memory_space<vmem>>, vector<1x1x48xf32>
    %20 = vector.shape_cast %19 : vector<1x1x48xf32> to vector<1x48xf32>
    %c2_29 = arith.constant 2 : index
    %c0_30 = arith.constant 0 : index
    %c0_31 = arith.constant 0 : index
    %21 = vector.load %arg6[%c2_29, %c0_30, %c0_31] : memref<4x1x48xf32, #tpu.memory_space<vmem>>, vector<1x1x48xf32>
    %22 = vector.shape_cast %21 : vector<1x1x48xf32> to vector<1x48xf32>
    %c3_32 = arith.constant 3 : index
    %c0_33 = arith.constant 0 : index
    %c0_34 = arith.constant 0 : index
    %23 = vector.load %arg6[%c3_32, %c0_33, %c0_34] : memref<4x1x48xf32, #tpu.memory_space<vmem>>, vector<1x1x48xf32>
    %24 = vector.shape_cast %23 : vector<1x1x48xf32> to vector<1x48xf32>
    %cst = arith.constant 0.000000e+00 : f32
    %25 = vector.broadcast %cst : f32 to vector<4x48xf32>
    %cst_35 = arith.constant 0.000000e+00 : f32
    %26 = vector.broadcast %cst_35 : f32 to vector<4x48xf32>
    %27 = vector.extract_strided_slice %0 {offsets = [0, 0, 0], sizes = [4, 1, 48], strides = [1, 1, 1]} : vector<4x8x48xf32> to vector<4x1x48xf32>
    %28 = vector.shape_cast %27 : vector<4x1x48xf32> to vector<4x48xf32>
    %cst_36 = arith.constant dense<0.000000e+00> : vector<4x48xf32>
    %29 = tpu.matmul %28, %2, %cst_36 {dimension_numbers = #tpu.dot_dimension_numbers<[1], [0], [0], [1], [0, 0, 1, 1], [], []>} : vector<4x48xf32>, vector<48x48xf32>, vector<4x48xf32> -> vector<4x48xf32>
    %cst_37 = arith.constant dense<0.000000e+00> : vector<4x48xf32>
    %30 = tpu.matmul %25, %10, %cst_37 {dimension_numbers = #tpu.dot_dimension_numbers<[1], [0], [0], [1], [0, 0, 1, 1], [], []>} : vector<4x48xf32>, vector<48x48xf32>, vector<4x48xf32> -> vector<4x48xf32>
    %31 = arith.addf %29, %30 : vector<4x48xf32>
    %32 = vector.broadcast %18 : vector<1x48xf32> to vector<4x48xf32>
    %33 = arith.addf %31, %32 : vector<4x48xf32>
    %cst_38 = arith.constant dense<0.000000e+00> : vector<4x48xf32>
    %34 = tpu.matmul %28, %4, %cst_38 {dimension_numbers = #tpu.dot_dimension_numbers<[1], [0], [0], [1], [0, 0, 1, 1], [], []>} : vector<4x48xf32>, vector<48x48xf32>, vector<4x48xf32> -> vector<4x48xf32>
    %cst_39 = arith.constant dense<0.000000e+00> : vector<4x48xf32>
    %35 = tpu.matmul %25, %12, %cst_39 {dimension_numbers = #tpu.dot_dimension_numbers<[1], [0], [0], [1], [0, 0, 1, 1], [], []>} : vector<4x48xf32>, vector<48x48xf32>, vector<4x48xf32> -> vector<4x48xf32>
    %36 = arith.addf %34, %35 : vector<4x48xf32>
    %37 = vector.broadcast %20 : vector<1x48xf32> to vector<4x48xf32>
    %38 = arith.addf %36, %37 : vector<4x48xf32>
    %cst_40 = arith.constant dense<0.000000e+00> : vector<4x48xf32>
    %39 = tpu.matmul %28, %6, %cst_40 {dimension_numbers = #tpu.dot_dimension_numbers<[1], [0], [0], [1], [0, 0, 1, 1], [], []>} : vector<4x48xf32>, vector<48x48xf32>, vector<4x48xf32> -> vector<4x48xf32>
    %cst_41 = arith.constant dense<0.000000e+00> : vector<4x48xf32>
    %40 = tpu.matmul %25, %14, %cst_41 {dimension_numbers = #tpu.dot_dimension_numbers<[1], [0], [0], [1], [0, 0, 1, 1], [], []>} : vector<4x48xf32>, vector<48x48xf32>, vector<4x48xf32> -> vector<4x48xf32>
    %41 = arith.addf %39, %40 : vector<4x48xf32>
    %42 = vector.broadcast %22 : vector<1x48xf32> to vector<4x48xf32>
    %43 = arith.addf %41, %42 : vector<4x48xf32>
    %cst_42 = arith.constant dense<0.000000e+00> : vector<4x48xf32>
    %44 = tpu.matmul %28, %8, %cst_42 {dimension_numbers = #tpu.dot_dimension_numbers<[1], [0], [0], [1], [0, 0, 1, 1], [], []>} : vector<4x48xf32>, vector<48x48xf32>, vector<4x48xf32> -> vector<4x48xf32>
    %cst_43 = arith.constant dense<0.000000e+00> : vector<4x48xf32>
    %45 = tpu.matmul %25, %16, %cst_43 {dimension_numbers = #tpu.dot_dimension_numbers<[1], [0], [0], [1], [0, 0, 1, 1], [], []>} : vector<4x48xf32>, vector<48x48xf32>, vector<4x48xf32> -> vector<4x48xf32>
    %46 = arith.addf %44, %45 : vector<4x48xf32>
    %47 = vector.broadcast %24 : vector<1x48xf32> to vector<4x48xf32>
    %48 = arith.addf %46, %47 : vector<4x48xf32>
    %49 = arith.negf %38 : vector<4x48xf32>
    %50 = math.exp %49 : vector<4x48xf32>
    %cst_44 = arith.constant 1.000000e+00 : f32
    %51 = vector.broadcast %cst_44 : f32 to vector<4x48xf32>
    %52 = arith.addf %51, %50 : vector<4x48xf32>
    %53 = arith.divf %51, %52 : vector<4x48xf32>
    %54 = arith.mulf %53, %26 : vector<4x48xf32>
    %55 = arith.negf %33 : vector<4x48xf32>
    %56 = math.exp %55 : vector<4x48xf32>
    %cst_45 = arith.constant 1.000000e+00 : f32
    %57 = vector.broadcast %cst_45 : f32 to vector<4x48xf32>
    %58 = arith.addf %57, %56 : vector<4x48xf32>
    %59 = arith.divf %57, %58 : vector<4x48xf32>
    %60 = math.tanh %43 : vector<4x48xf32>
    %61 = arith.mulf %59, %60 : vector<4x48xf32>
    %62 = arith.addf %54, %61 : vector<4x48xf32>
    %63 = arith.negf %48 : vector<4x48xf32>
    %64 = math.exp %63 : vector<4x48xf32>
    %cst_46 = arith.constant 1.000000e+00 : f32
    %65 = vector.broadcast %cst_46 : f32 to vector<4x48xf32>
    %66 = arith.addf %65, %64 : vector<4x48xf32>
    %67 = arith.divf %65, %66 : vector<4x48xf32>
    %68 = math.tanh %62 : vector<4x48xf32>
    %69 = arith.mulf %67, %68 : vector<4x48xf32>
    %70 = vector.extract_strided_slice %0 {offsets = [0, 1, 0], sizes = [4, 1, 48], strides = [1, 1, 1]} : vector<4x8x48xf32> to vector<4x1x48xf32>
    %71 = vector.shape_cast %70 : vector<4x1x48xf32> to vector<4x48xf32>
    %cst_47 = arith.constant dense<0.000000e+00> : vector<4x48xf32>
    %72 = tpu.matmul %71, %2, %cst_47 {dimension_numbers = #tpu.dot_dimension_numbers<[1], [0], [0], [1], [0, 0, 1, 1], [], []>} : vector<4x48xf32>, vector<48x48xf32>, vector<4x48xf32> -> vector<4x48xf32>
    %cst_48 = arith.constant dense<0.000000e+00> : vector<4x48xf32>
    %73 = tpu.matmul %69, %10, %cst_48 {dimension_numbers = #tpu.dot_dimension_numbers<[1], [0], [0], [1], [0, 0, 1, 1], [], []>} : vector<4x48xf32>, vector<48x48xf32>, vector<4x48xf32> -> vector<4x48xf32>
    %74 = arith.addf %72, %73 : vector<4x48xf32>
    %75 = vector.broadcast %18 : vector<1x48xf32> to vector<4x48xf32>
    %76 = arith.addf %74, %75 : vector<4x48xf32>
    %cst_49 = arith.constant dense<0.000000e+00> : vector<4x48xf32>
    %77 = tpu.matmul %71, %4, %cst_49 {dimension_numbers = #tpu.dot_dimension_numbers<[1], [0], [0], [1], [0, 0, 1, 1], [], []>} : vector<4x48xf32>, vector<48x48xf32>, vector<4x48xf32> -> vector<4x48xf32>
    %cst_50 = arith.constant dense<0.000000e+00> : vector<4x48xf32>
    %78 = tpu.matmul %69, %12, %cst_50 {dimension_numbers = #tpu.dot_dimension_numbers<[1], [0], [0], [1], [0, 0, 1, 1], [], []>} : vector<4x48xf32>, vector<48x48xf32>, vector<4x48xf32> -> vector<4x48xf32>
    %79 = arith.addf %77, %78 : vector<4x48xf32>
    %80 = vector.broadcast %20 : vector<1x48xf32> to vector<4x48xf32>
    %81 = arith.addf %79, %80 : vector<4x48xf32>
    %cst_51 = arith.constant dense<0.000000e+00> : vector<4x48xf32>
    %82 = tpu.matmul %71, %6, %cst_51 {dimension_numbers = #tpu.dot_dimension_numbers<[1], [0], [0], [1], [0, 0, 1, 1], [], []>} : vector<4x48xf32>, vector<48x48xf32>, vector<4x48xf32> -> vector<4x48xf32>
    %cst_52 = arith.constant dense<0.000000e+00> : vector<4x48xf32>
    %83 = tpu.matmul %69, %14, %cst_52 {dimension_numbers = #tpu.dot_dimension_numbers<[1], [0], [0], [1], [0, 0, 1, 1], [], []>} : vector<4x48xf32>, vector<48x48xf32>, vector<4x48xf32> -> vector<4x48xf32>
    %84 = arith.addf %82, %83 : vector<4x48xf32>
    %85 = vector.broadcast %22 : vector<1x48xf32> to vector<4x48xf32>
    %86 = arith.addf %84, %85 : vector<4x48xf32>
    %cst_53 = arith.constant dense<0.000000e+00> : vector<4x48xf32>
    %87 = tpu.matmul %71, %8, %cst_53 {dimension_numbers = #tpu.dot_dimension_numbers<[1], [0], [0], [1], [0, 0, 1, 1], [], []>} : vector<4x48xf32>, vector<48x48xf32>, vector<4x48xf32> -> vector<4x48xf32>
    %cst_54 = arith.constant dense<0.000000e+00> : vector<4x48xf32>
    %88 = tpu.matmul %69, %16, %cst_54 {dimension_numbers = #tpu.dot_dimension_numbers<[1], [0], [0], [1], [0, 0, 1, 1], [], []>} : vector<4x48xf32>, vector<48x48xf32>, vector<4x48xf32> -> vector<4x48xf32>
    %89 = arith.addf %87, %88 : vector<4x48xf32>
    %90 = vector.broadcast %24 : vector<1x48xf32> to vector<4x48xf32>
    %91 = arith.addf %89, %90 : vector<4x48xf32>
    %92 = arith.negf %81 : vector<4x48xf32>
    %93 = math.exp %92 : vector<4x48xf32>
    %cst_55 = arith.constant 1.000000e+00 : f32
    %94 = vector.broadcast %cst_55 : f32 to vector<4x48xf32>
    %95 = arith.addf %94, %93 : vector<4x48xf32>
    %96 = arith.divf %94, %95 : vector<4x48xf32>
    %97 = arith.mulf %96, %62 : vector<4x48xf32>
    %98 = arith.negf %76 : vector<4x48xf32>
    %99 = math.exp %98 : vector<4x48xf32>
    %cst_56 = arith.constant 1.000000e+00 : f32
    %100 = vector.broadcast %cst_56 : f32 to vector<4x48xf32>
    %101 = arith.addf %100, %99 : vector<4x48xf32>
    %102 = arith.divf %100, %101 : vector<4x48xf32>
    %103 = math.tanh %86 : vector<4x48xf32>
    %104 = arith.mulf %102, %103 : vector<4x48xf32>
    %105 = arith.addf %97, %104 : vector<4x48xf32>
    %106 = arith.negf %91 : vector<4x48xf32>
    %107 = math.exp %106 : vector<4x48xf32>
    %cst_57 = arith.constant 1.000000e+00 : f32
    %108 = vector.broadcast %cst_57 : f32 to vector<4x48xf32>
    %109 = arith.addf %108, %107 : vector<4x48xf32>
    %110 = arith.divf %108, %109 : vector<4x48xf32>
    %111 = math.tanh %105 : vector<4x48xf32>
    %112 = arith.mulf %110, %111 : vector<4x48xf32>
    %113 = vector.extract_strided_slice %0 {offsets = [0, 2, 0], sizes = [4, 1, 48], strides = [1, 1, 1]} : vector<4x8x48xf32> to vector<4x1x48xf32>
    %114 = vector.shape_cast %113 : vector<4x1x48xf32> to vector<4x48xf32>
    %cst_58 = arith.constant dense<0.000000e+00> : vector<4x48xf32>
    %115 = tpu.matmul %114, %2, %cst_58 {dimension_numbers = #tpu.dot_dimension_numbers<[1], [0], [0], [1], [0, 0, 1, 1], [], []>} : vector<4x48xf32>, vector<48x48xf32>, vector<4x48xf32> -> vector<4x48xf32>
    %cst_59 = arith.constant dense<0.000000e+00> : vector<4x48xf32>
    %116 = tpu.matmul %112, %10, %cst_59 {dimension_numbers = #tpu.dot_dimension_numbers<[1], [0], [0], [1], [0, 0, 1, 1], [], []>} : vector<4x48xf32>, vector<48x48xf32>, vector<4x48xf32> -> vector<4x48xf32>
    %117 = arith.addf %115, %116 : vector<4x48xf32>
    %118 = vector.broadcast %18 : vector<1x48xf32> to vector<4x48xf32>
    %119 = arith.addf %117, %118 : vector<4x48xf32>
    %cst_60 = arith.constant dense<0.000000e+00> : vector<4x48xf32>
    %120 = tpu.matmul %114, %4, %cst_60 {dimension_numbers = #tpu.dot_dimension_numbers<[1], [0], [0], [1], [0, 0, 1, 1], [], []>} : vector<4x48xf32>, vector<48x48xf32>, vector<4x48xf32> -> vector<4x48xf32>
    %cst_61 = arith.constant dense<0.000000e+00> : vector<4x48xf32>
    %121 = tpu.matmul %112, %12, %cst_61 {dimension_numbers = #tpu.dot_dimension_numbers<[1], [0], [0], [1], [0, 0, 1, 1], [], []>} : vector<4x48xf32>, vector<48x48xf32>, vector<4x48xf32> -> vector<4x48xf32>
    %122 = arith.addf %120, %121 : vector<4x48xf32>
    %123 = vector.broadcast %20 : vector<1x48xf32> to vector<4x48xf32>
    %124 = arith.addf %122, %123 : vector<4x48xf32>
    %cst_62 = arith.constant dense<0.000000e+00> : vector<4x48xf32>
    %125 = tpu.matmul %114, %6, %cst_62 {dimension_numbers = #tpu.dot_dimension_numbers<[1], [0], [0], [1], [0, 0, 1, 1], [], []>} : vector<4x48xf32>, vector<48x48xf32>, vector<4x48xf32> -> vector<4x48xf32>
    %cst_63 = arith.constant dense<0.000000e+00> : vector<4x48xf32>
    %126 = tpu.matmul %112, %14, %cst_63 {dimension_numbers = #tpu.dot_dimension_numbers<[1], [0], [0], [1], [0, 0, 1, 1], [], []>} : vector<4x48xf32>, vector<48x48xf32>, vector<4x48xf32> -> vector<4x48xf32>
    %127 = arith.addf %125, %126 : vector<4x48xf32>
    %128 = vector.broadcast %22 : vector<1x48xf32> to vector<4x48xf32>
    %129 = arith.addf %127, %128 : vector<4x48xf32>
    %cst_64 = arith.constant dense<0.000000e+00> : vector<4x48xf32>
    %130 = tpu.matmul %114, %8, %cst_64 {dimension_numbers = #tpu.dot_dimension_numbers<[1], [0], [0], [1], [0, 0, 1, 1], [], []>} : vector<4x48xf32>, vector<48x48xf32>, vector<4x48xf32> -> vector<4x48xf32>
    %cst_65 = arith.constant dense<0.000000e+00> : vector<4x48xf32>
    %131 = tpu.matmul %112, %16, %cst_65 {dimension_numbers = #tpu.dot_dimension_numbers<[1], [0], [0], [1], [0, 0, 1, 1], [], []>} : vector<4x48xf32>, vector<48x48xf32>, vector<4x48xf32> -> vector<4x48xf32>
    %132 = arith.addf %130, %131 : vector<4x48xf32>
    %133 = vector.broadcast %24 : vector<1x48xf32> to vector<4x48xf32>
    %134 = arith.addf %132, %133 : vector<4x48xf32>
    %135 = arith.negf %124 : vector<4x48xf32>
    %136 = math.exp %135 : vector<4x48xf32>
    %cst_66 = arith.constant 1.000000e+00 : f32
    %137 = vector.broadcast %cst_66 : f32 to vector<4x48xf32>
    %138 = arith.addf %137, %136 : vector<4x48xf32>
    %139 = arith.divf %137, %138 : vector<4x48xf32>
    %140 = arith.mulf %139, %105 : vector<4x48xf32>
    %141 = arith.negf %119 : vector<4x48xf32>
    %142 = math.exp %141 : vector<4x48xf32>
    %cst_67 = arith.constant 1.000000e+00 : f32
    %143 = vector.broadcast %cst_67 : f32 to vector<4x48xf32>
    %144 = arith.addf %143, %142 : vector<4x48xf32>
    %145 = arith.divf %143, %144 : vector<4x48xf32>
    %146 = math.tanh %129 : vector<4x48xf32>
    %147 = arith.mulf %145, %146 : vector<4x48xf32>
    %148 = arith.addf %140, %147 : vector<4x48xf32>
    %149 = arith.negf %134 : vector<4x48xf32>
    %150 = math.exp %149 : vector<4x48xf32>
    %cst_68 = arith.constant 1.000000e+00 : f32
    %151 = vector.broadcast %cst_68 : f32 to vector<4x48xf32>
    %152 = arith.addf %151, %150 : vector<4x48xf32>
    %153 = arith.divf %151, %152 : vector<4x48xf32>
    %154 = math.tanh %148 : vector<4x48xf32>
    %155 = arith.mulf %153, %154 : vector<4x48xf32>
    %156 = vector.extract_strided_slice %0 {offsets = [0, 3, 0], sizes = [4, 1, 48], strides = [1, 1, 1]} : vector<4x8x48xf32> to vector<4x1x48xf32>
    %157 = vector.shape_cast %156 : vector<4x1x48xf32> to vector<4x48xf32>
    %cst_69 = arith.constant dense<0.000000e+00> : vector<4x48xf32>
    %158 = tpu.matmul %157, %2, %cst_69 {dimension_numbers = #tpu.dot_dimension_numbers<[1], [0], [0], [1], [0, 0, 1, 1], [], []>} : vector<4x48xf32>, vector<48x48xf32>, vector<4x48xf32> -> vector<4x48xf32>
    %cst_70 = arith.constant dense<0.000000e+00> : vector<4x48xf32>
    %159 = tpu.matmul %155, %10, %cst_70 {dimension_numbers = #tpu.dot_dimension_numbers<[1], [0], [0], [1], [0, 0, 1, 1], [], []>} : vector<4x48xf32>, vector<48x48xf32>, vector<4x48xf32> -> vector<4x48xf32>
    %160 = arith.addf %158, %159 : vector<4x48xf32>
    %161 = vector.broadcast %18 : vector<1x48xf32> to vector<4x48xf32>
    %162 = arith.addf %160, %161 : vector<4x48xf32>
    %cst_71 = arith.constant dense<0.000000e+00> : vector<4x48xf32>
    %163 = tpu.matmul %157, %4, %cst_71 {dimension_numbers = #tpu.dot_dimension_numbers<[1], [0], [0], [1], [0, 0, 1, 1], [], []>} : vector<4x48xf32>, vector<48x48xf32>, vector<4x48xf32> -> vector<4x48xf32>
    %cst_72 = arith.constant dense<0.000000e+00> : vector<4x48xf32>
    %164 = tpu.matmul %155, %12, %cst_72 {dimension_numbers = #tpu.dot_dimension_numbers<[1], [0], [0], [1], [0, 0, 1, 1], [], []>} : vector<4x48xf32>, vector<48x48xf32>, vector<4x48xf32> -> vector<4x48xf32>
    %165 = arith.addf %163, %164 : vector<4x48xf32>
    %166 = vector.broadcast %20 : vector<1x48xf32> to vector<4x48xf32>
    %167 = arith.addf %165, %166 : vector<4x48xf32>
    %cst_73 = arith.constant dense<0.000000e+00> : vector<4x48xf32>
    %168 = tpu.matmul %157, %6, %cst_73 {dimension_numbers = #tpu.dot_dimension_numbers<[1], [0], [0], [1], [0, 0, 1, 1], [], []>} : vector<4x48xf32>, vector<48x48xf32>, vector<4x48xf32> -> vector<4x48xf32>
    %cst_74 = arith.constant dense<0.000000e+00> : vector<4x48xf32>
    %169 = tpu.matmul %155, %14, %cst_74 {dimension_numbers = #tpu.dot_dimension_numbers<[1], [0], [0], [1], [0, 0, 1, 1], [], []>} : vector<4x48xf32>, vector<48x48xf32>, vector<4x48xf32> -> vector<4x48xf32>
    %170 = arith.addf %168, %169 : vector<4x48xf32>
    %171 = vector.broadcast %22 : vector<1x48xf32> to vector<4x48xf32>
    %172 = arith.addf %170, %171 : vector<4x48xf32>
    %cst_75 = arith.constant dense<0.000000e+00> : vector<4x48xf32>
    %173 = tpu.matmul %157, %8, %cst_75 {dimension_numbers = #tpu.dot_dimension_numbers<[1], [0], [0], [1], [0, 0, 1, 1], [], []>} : vector<4x48xf32>, vector<48x48xf32>, vector<4x48xf32> -> vector<4x48xf32>
    %cst_76 = arith.constant dense<0.000000e+00> : vector<4x48xf32>
    %174 = tpu.matmul %155, %16, %cst_76 {dimension_numbers = #tpu.dot_dimension_numbers<[1], [0], [0], [1], [0, 0, 1, 1], [], []>} : vector<4x48xf32>, vector<48x48xf32>, vector<4x48xf32> -> vector<4x48xf32>
    %175 = arith.addf %173, %174 : vector<4x48xf32>
    %176 = vector.broadcast %24 : vector<1x48xf32> to vector<4x48xf32>
    %177 = arith.addf %175, %176 : vector<4x48xf32>
    %178 = arith.negf %167 : vector<4x48xf32>
    %179 = math.exp %178 : vector<4x48xf32>
    %cst_77 = arith.constant 1.000000e+00 : f32
    %180 = vector.broadcast %cst_77 : f32 to vector<4x48xf32>
    %181 = arith.addf %180, %179 : vector<4x48xf32>
    %182 = arith.divf %180, %181 : vector<4x48xf32>
    %183 = arith.mulf %182, %148 : vector<4x48xf32>
    %184 = arith.negf %162 : vector<4x48xf32>
    %185 = math.exp %184 : vector<4x48xf32>
    %cst_78 = arith.constant 1.000000e+00 : f32
    %186 = vector.broadcast %cst_78 : f32 to vector<4x48xf32>
    %187 = arith.addf %186, %185 : vector<4x48xf32>
    %188 = arith.divf %186, %187 : vector<4x48xf32>
    %189 = math.tanh %172 : vector<4x48xf32>
    %190 = arith.mulf %188, %189 : vector<4x48xf32>
    %191 = arith.addf %183, %190 : vector<4x48xf32>
    %192 = arith.negf %177 : vector<4x48xf32>
    %193 = math.exp %192 : vector<4x48xf32>
    %cst_79 = arith.constant 1.000000e+00 : f32
    %194 = vector.broadcast %cst_79 : f32 to vector<4x48xf32>
    %195 = arith.addf %194, %193 : vector<4x48xf32>
    %196 = arith.divf %194, %195 : vector<4x48xf32>
    %197 = math.tanh %191 : vector<4x48xf32>
    %198 = arith.mulf %196, %197 : vector<4x48xf32>
    %199 = vector.extract_strided_slice %0 {offsets = [0, 4, 0], sizes = [4, 1, 48], strides = [1, 1, 1]} : vector<4x8x48xf32> to vector<4x1x48xf32>
    %200 = vector.shape_cast %199 : vector<4x1x48xf32> to vector<4x48xf32>
    %cst_80 = arith.constant dense<0.000000e+00> : vector<4x48xf32>
    %201 = tpu.matmul %200, %2, %cst_80 {dimension_numbers = #tpu.dot_dimension_numbers<[1], [0], [0], [1], [0, 0, 1, 1], [], []>} : vector<4x48xf32>, vector<48x48xf32>, vector<4x48xf32> -> vector<4x48xf32>
    %cst_81 = arith.constant dense<0.000000e+00> : vector<4x48xf32>
    %202 = tpu.matmul %198, %10, %cst_81 {dimension_numbers = #tpu.dot_dimension_numbers<[1], [0], [0], [1], [0, 0, 1, 1], [], []>} : vector<4x48xf32>, vector<48x48xf32>, vector<4x48xf32> -> vector<4x48xf32>
    %203 = arith.addf %201, %202 : vector<4x48xf32>
    %204 = vector.broadcast %18 : vector<1x48xf32> to vector<4x48xf32>
    %205 = arith.addf %203, %204 : vector<4x48xf32>
    %cst_82 = arith.constant dense<0.000000e+00> : vector<4x48xf32>
    %206 = tpu.matmul %200, %4, %cst_82 {dimension_numbers = #tpu.dot_dimension_numbers<[1], [0], [0], [1], [0, 0, 1, 1], [], []>} : vector<4x48xf32>, vector<48x48xf32>, vector<4x48xf32> -> vector<4x48xf32>
    %cst_83 = arith.constant dense<0.000000e+00> : vector<4x48xf32>
    %207 = tpu.matmul %198, %12, %cst_83 {dimension_numbers = #tpu.dot_dimension_numbers<[1], [0], [0], [1], [0, 0, 1, 1], [], []>} : vector<4x48xf32>, vector<48x48xf32>, vector<4x48xf32> -> vector<4x48xf32>
    %208 = arith.addf %206, %207 : vector<4x48xf32>
    %209 = vector.broadcast %20 : vector<1x48xf32> to vector<4x48xf32>
    %210 = arith.addf %208, %209 : vector<4x48xf32>
    %cst_84 = arith.constant dense<0.000000e+00> : vector<4x48xf32>
    %211 = tpu.matmul %200, %6, %cst_84 {dimension_numbers = #tpu.dot_dimension_numbers<[1], [0], [0], [1], [0, 0, 1, 1], [], []>} : vector<4x48xf32>, vector<48x48xf32>, vector<4x48xf32> -> vector<4x48xf32>
    %cst_85 = arith.constant dense<0.000000e+00> : vector<4x48xf32>
    %212 = tpu.matmul %198, %14, %cst_85 {dimension_numbers = #tpu.dot_dimension_numbers<[1], [0], [0], [1], [0, 0, 1, 1], [], []>} : vector<4x48xf32>, vector<48x48xf32>, vector<4x48xf32> -> vector<4x48xf32>
    %213 = arith.addf %211, %212 : vector<4x48xf32>
    %214 = vector.broadcast %22 : vector<1x48xf32> to vector<4x48xf32>
    %215 = arith.addf %213, %214 : vector<4x48xf32>
    %cst_86 = arith.constant dense<0.000000e+00> : vector<4x48xf32>
    %216 = tpu.matmul %200, %8, %cst_86 {dimension_numbers = #tpu.dot_dimension_numbers<[1], [0], [0], [1], [0, 0, 1, 1], [], []>} : vector<4x48xf32>, vector<48x48xf32>, vector<4x48xf32> -> vector<4x48xf32>
    %cst_87 = arith.constant dense<0.000000e+00> : vector<4x48xf32>
    %217 = tpu.matmul %198, %16, %cst_87 {dimension_numbers = #tpu.dot_dimension_numbers<[1], [0], [0], [1], [0, 0, 1, 1], [], []>} : vector<4x48xf32>, vector<48x48xf32>, vector<4x48xf32> -> vector<4x48xf32>
    %218 = arith.addf %216, %217 : vector<4x48xf32>
    %219 = vector.broadcast %24 : vector<1x48xf32> to vector<4x48xf32>
    %220 = arith.addf %218, %219 : vector<4x48xf32>
    %221 = arith.negf %210 : vector<4x48xf32>
    %222 = math.exp %221 : vector<4x48xf32>
    %cst_88 = arith.constant 1.000000e+00 : f32
    %223 = vector.broadcast %cst_88 : f32 to vector<4x48xf32>
    %224 = arith.addf %223, %222 : vector<4x48xf32>
    %225 = arith.divf %223, %224 : vector<4x48xf32>
    %226 = arith.mulf %225, %191 : vector<4x48xf32>
    %227 = arith.negf %205 : vector<4x48xf32>
    %228 = math.exp %227 : vector<4x48xf32>
    %cst_89 = arith.constant 1.000000e+00 : f32
    %229 = vector.broadcast %cst_89 : f32 to vector<4x48xf32>
    %230 = arith.addf %229, %228 : vector<4x48xf32>
    %231 = arith.divf %229, %230 : vector<4x48xf32>
    %232 = math.tanh %215 : vector<4x48xf32>
    %233 = arith.mulf %231, %232 : vector<4x48xf32>
    %234 = arith.addf %226, %233 : vector<4x48xf32>
    %235 = arith.negf %220 : vector<4x48xf32>
    %236 = math.exp %235 : vector<4x48xf32>
    %cst_90 = arith.constant 1.000000e+00 : f32
    %237 = vector.broadcast %cst_90 : f32 to vector<4x48xf32>
    %238 = arith.addf %237, %236 : vector<4x48xf32>
    %239 = arith.divf %237, %238 : vector<4x48xf32>
    %240 = math.tanh %234 : vector<4x48xf32>
    %241 = arith.mulf %239, %240 : vector<4x48xf32>
    %242 = vector.extract_strided_slice %0 {offsets = [0, 5, 0], sizes = [4, 1, 48], strides = [1, 1, 1]} : vector<4x8x48xf32> to vector<4x1x48xf32>
    %243 = vector.shape_cast %242 : vector<4x1x48xf32> to vector<4x48xf32>
    %cst_91 = arith.constant dense<0.000000e+00> : vector<4x48xf32>
    %244 = tpu.matmul %243, %2, %cst_91 {dimension_numbers = #tpu.dot_dimension_numbers<[1], [0], [0], [1], [0, 0, 1, 1], [], []>} : vector<4x48xf32>, vector<48x48xf32>, vector<4x48xf32> -> vector<4x48xf32>
    %cst_92 = arith.constant dense<0.000000e+00> : vector<4x48xf32>
    %245 = tpu.matmul %241, %10, %cst_92 {dimension_numbers = #tpu.dot_dimension_numbers<[1], [0], [0], [1], [0, 0, 1, 1], [], []>} : vector<4x48xf32>, vector<48x48xf32>, vector<4x48xf32> -> vector<4x48xf32>
    %246 = arith.addf %244, %245 : vector<4x48xf32>
    %247 = vector.broadcast %18 : vector<1x48xf32> to vector<4x48xf32>
    %248 = arith.addf %246, %247 : vector<4x48xf32>
    %cst_93 = arith.constant dense<0.000000e+00> : vector<4x48xf32>
    %249 = tpu.matmul %243, %4, %cst_93 {dimension_numbers = #tpu.dot_dimension_numbers<[1], [0], [0], [1], [0, 0, 1, 1], [], []>} : vector<4x48xf32>, vector<48x48xf32>, vector<4x48xf32> -> vector<4x48xf32>
    %cst_94 = arith.constant dense<0.000000e+00> : vector<4x48xf32>
    %250 = tpu.matmul %241, %12, %cst_94 {dimension_numbers = #tpu.dot_dimension_numbers<[1], [0], [0], [1], [0, 0, 1, 1], [], []>} : vector<4x48xf32>, vector<48x48xf32>, vector<4x48xf32> -> vector<4x48xf32>
    %251 = arith.addf %249, %250 : vector<4x48xf32>
    %252 = vector.broadcast %20 : vector<1x48xf32> to vector<4x48xf32>
    %253 = arith.addf %251, %252 : vector<4x48xf32>
    %cst_95 = arith.constant dense<0.000000e+00> : vector<4x48xf32>
    %254 = tpu.matmul %243, %6, %cst_95 {dimension_numbers = #tpu.dot_dimension_numbers<[1], [0], [0], [1], [0, 0, 1, 1], [], []>} : vector<4x48xf32>, vector<48x48xf32>, vector<4x48xf32> -> vector<4x48xf32>
    %cst_96 = arith.constant dense<0.000000e+00> : vector<4x48xf32>
    %255 = tpu.matmul %241, %14, %cst_96 {dimension_numbers = #tpu.dot_dimension_numbers<[1], [0], [0], [1], [0, 0, 1, 1], [], []>} : vector<4x48xf32>, vector<48x48xf32>, vector<4x48xf32> -> vector<4x48xf32>
    %256 = arith.addf %254, %255 : vector<4x48xf32>
    %257 = vector.broadcast %22 : vector<1x48xf32> to vector<4x48xf32>
    %258 = arith.addf %256, %257 : vector<4x48xf32>
    %cst_97 = arith.constant dense<0.000000e+00> : vector<4x48xf32>
    %259 = tpu.matmul %243, %8, %cst_97 {dimension_numbers = #tpu.dot_dimension_numbers<[1], [0], [0], [1], [0, 0, 1, 1], [], []>} : vector<4x48xf32>, vector<48x48xf32>, vector<4x48xf32> -> vector<4x48xf32>
    %cst_98 = arith.constant dense<0.000000e+00> : vector<4x48xf32>
    %260 = tpu.matmul %241, %16, %cst_98 {dimension_numbers = #tpu.dot_dimension_numbers<[1], [0], [0], [1], [0, 0, 1, 1], [], []>} : vector<4x48xf32>, vector<48x48xf32>, vector<4x48xf32> -> vector<4x48xf32>
    %261 = arith.addf %259, %260 : vector<4x48xf32>
    %262 = vector.broadcast %24 : vector<1x48xf32> to vector<4x48xf32>
    %263 = arith.addf %261, %262 : vector<4x48xf32>
    %264 = arith.negf %253 : vector<4x48xf32>
    %265 = math.exp %264 : vector<4x48xf32>
    %cst_99 = arith.constant 1.000000e+00 : f32
    %266 = vector.broadcast %cst_99 : f32 to vector<4x48xf32>
    %267 = arith.addf %266, %265 : vector<4x48xf32>
    %268 = arith.divf %266, %267 : vector<4x48xf32>
    %269 = arith.mulf %268, %234 : vector<4x48xf32>
    %270 = arith.negf %248 : vector<4x48xf32>
    %271 = math.exp %270 : vector<4x48xf32>
    %cst_100 = arith.constant 1.000000e+00 : f32
    %272 = vector.broadcast %cst_100 : f32 to vector<4x48xf32>
    %273 = arith.addf %272, %271 : vector<4x48xf32>
    %274 = arith.divf %272, %273 : vector<4x48xf32>
    %275 = math.tanh %258 : vector<4x48xf32>
    %276 = arith.mulf %274, %275 : vector<4x48xf32>
    %277 = arith.addf %269, %276 : vector<4x48xf32>
    %278 = arith.negf %263 : vector<4x48xf32>
    %279 = math.exp %278 : vector<4x48xf32>
    %cst_101 = arith.constant 1.000000e+00 : f32
    %280 = vector.broadcast %cst_101 : f32 to vector<4x48xf32>
    %281 = arith.addf %280, %279 : vector<4x48xf32>
    %282 = arith.divf %280, %281 : vector<4x48xf32>
    %283 = math.tanh %277 : vector<4x48xf32>
    %284 = arith.mulf %282, %283 : vector<4x48xf32>
    %285 = vector.extract_strided_slice %0 {offsets = [0, 6, 0], sizes = [4, 1, 48], strides = [1, 1, 1]} : vector<4x8x48xf32> to vector<4x1x48xf32>
    %286 = vector.shape_cast %285 : vector<4x1x48xf32> to vector<4x48xf32>
    %cst_102 = arith.constant dense<0.000000e+00> : vector<4x48xf32>
    %287 = tpu.matmul %286, %2, %cst_102 {dimension_numbers = #tpu.dot_dimension_numbers<[1], [0], [0], [1], [0, 0, 1, 1], [], []>} : vector<4x48xf32>, vector<48x48xf32>, vector<4x48xf32> -> vector<4x48xf32>
    %cst_103 = arith.constant dense<0.000000e+00> : vector<4x48xf32>
    %288 = tpu.matmul %284, %10, %cst_103 {dimension_numbers = #tpu.dot_dimension_numbers<[1], [0], [0], [1], [0, 0, 1, 1], [], []>} : vector<4x48xf32>, vector<48x48xf32>, vector<4x48xf32> -> vector<4x48xf32>
    %289 = arith.addf %287, %288 : vector<4x48xf32>
    %290 = vector.broadcast %18 : vector<1x48xf32> to vector<4x48xf32>
    %291 = arith.addf %289, %290 : vector<4x48xf32>
    %cst_104 = arith.constant dense<0.000000e+00> : vector<4x48xf32>
    %292 = tpu.matmul %286, %4, %cst_104 {dimension_numbers = #tpu.dot_dimension_numbers<[1], [0], [0], [1], [0, 0, 1, 1], [], []>} : vector<4x48xf32>, vector<48x48xf32>, vector<4x48xf32> -> vector<4x48xf32>
    %cst_105 = arith.constant dense<0.000000e+00> : vector<4x48xf32>
    %293 = tpu.matmul %284, %12, %cst_105 {dimension_numbers = #tpu.dot_dimension_numbers<[1], [0], [0], [1], [0, 0, 1, 1], [], []>} : vector<4x48xf32>, vector<48x48xf32>, vector<4x48xf32> -> vector<4x48xf32>
    %294 = arith.addf %292, %293 : vector<4x48xf32>
    %295 = vector.broadcast %20 : vector<1x48xf32> to vector<4x48xf32>
    %296 = arith.addf %294, %295 : vector<4x48xf32>
    %cst_106 = arith.constant dense<0.000000e+00> : vector<4x48xf32>
    %297 = tpu.matmul %286, %6, %cst_106 {dimension_numbers = #tpu.dot_dimension_numbers<[1], [0], [0], [1], [0, 0, 1, 1], [], []>} : vector<4x48xf32>, vector<48x48xf32>, vector<4x48xf32> -> vector<4x48xf32>
    %cst_107 = arith.constant dense<0.000000e+00> : vector<4x48xf32>
    %298 = tpu.matmul %284, %14, %cst_107 {dimension_numbers = #tpu.dot_dimension_numbers<[1], [0], [0], [1], [0, 0, 1, 1], [], []>} : vector<4x48xf32>, vector<48x48xf32>, vector<4x48xf32> -> vector<4x48xf32>
    %299 = arith.addf %297, %298 : vector<4x48xf32>
    %300 = vector.broadcast %22 : vector<1x48xf32> to vector<4x48xf32>
    %301 = arith.addf %299, %300 : vector<4x48xf32>
    %cst_108 = arith.constant dense<0.000000e+00> : vector<4x48xf32>
    %302 = tpu.matmul %286, %8, %cst_108 {dimension_numbers = #tpu.dot_dimension_numbers<[1], [0], [0], [1], [0, 0, 1, 1], [], []>} : vector<4x48xf32>, vector<48x48xf32>, vector<4x48xf32> -> vector<4x48xf32>
    %cst_109 = arith.constant dense<0.000000e+00> : vector<4x48xf32>
    %303 = tpu.matmul %284, %16, %cst_109 {dimension_numbers = #tpu.dot_dimension_numbers<[1], [0], [0], [1], [0, 0, 1, 1], [], []>} : vector<4x48xf32>, vector<48x48xf32>, vector<4x48xf32> -> vector<4x48xf32>
    %304 = arith.addf %302, %303 : vector<4x48xf32>
    %305 = vector.broadcast %24 : vector<1x48xf32> to vector<4x48xf32>
    %306 = arith.addf %304, %305 : vector<4x48xf32>
    %307 = arith.negf %296 : vector<4x48xf32>
    %308 = math.exp %307 : vector<4x48xf32>
    %cst_110 = arith.constant 1.000000e+00 : f32
    %309 = vector.broadcast %cst_110 : f32 to vector<4x48xf32>
    %310 = arith.addf %309, %308 : vector<4x48xf32>
    %311 = arith.divf %309, %310 : vector<4x48xf32>
    %312 = arith.mulf %311, %277 : vector<4x48xf32>
    %313 = arith.negf %291 : vector<4x48xf32>
    %314 = math.exp %313 : vector<4x48xf32>
    %cst_111 = arith.constant 1.000000e+00 : f32
    %315 = vector.broadcast %cst_111 : f32 to vector<4x48xf32>
    %316 = arith.addf %315, %314 : vector<4x48xf32>
    %317 = arith.divf %315, %316 : vector<4x48xf32>
    %318 = math.tanh %301 : vector<4x48xf32>
    %319 = arith.mulf %317, %318 : vector<4x48xf32>
    %320 = arith.addf %312, %319 : vector<4x48xf32>
    %321 = arith.negf %306 : vector<4x48xf32>
    %322 = math.exp %321 : vector<4x48xf32>
    %cst_112 = arith.constant 1.000000e+00 : f32
    %323 = vector.broadcast %cst_112 : f32 to vector<4x48xf32>
    %324 = arith.addf %323, %322 : vector<4x48xf32>
    %325 = arith.divf %323, %324 : vector<4x48xf32>
    %326 = math.tanh %320 : vector<4x48xf32>
    %327 = arith.mulf %325, %326 : vector<4x48xf32>
    %328 = vector.extract_strided_slice %0 {offsets = [0, 7, 0], sizes = [4, 1, 48], strides = [1, 1, 1]} : vector<4x8x48xf32> to vector<4x1x48xf32>
    %329 = vector.shape_cast %328 : vector<4x1x48xf32> to vector<4x48xf32>
    %cst_113 = arith.constant dense<0.000000e+00> : vector<4x48xf32>
    %330 = tpu.matmul %329, %2, %cst_113 {dimension_numbers = #tpu.dot_dimension_numbers<[1], [0], [0], [1], [0, 0, 1, 1], [], []>} : vector<4x48xf32>, vector<48x48xf32>, vector<4x48xf32> -> vector<4x48xf32>
    %cst_114 = arith.constant dense<0.000000e+00> : vector<4x48xf32>
    %331 = tpu.matmul %327, %10, %cst_114 {dimension_numbers = #tpu.dot_dimension_numbers<[1], [0], [0], [1], [0, 0, 1, 1], [], []>} : vector<4x48xf32>, vector<48x48xf32>, vector<4x48xf32> -> vector<4x48xf32>
    %332 = arith.addf %330, %331 : vector<4x48xf32>
    %333 = vector.broadcast %18 : vector<1x48xf32> to vector<4x48xf32>
    %334 = arith.addf %332, %333 : vector<4x48xf32>
    %cst_115 = arith.constant dense<0.000000e+00> : vector<4x48xf32>
    %335 = tpu.matmul %329, %4, %cst_115 {dimension_numbers = #tpu.dot_dimension_numbers<[1], [0], [0], [1], [0, 0, 1, 1], [], []>} : vector<4x48xf32>, vector<48x48xf32>, vector<4x48xf32> -> vector<4x48xf32>
    %cst_116 = arith.constant dense<0.000000e+00> : vector<4x48xf32>
    %336 = tpu.matmul %327, %12, %cst_116 {dimension_numbers = #tpu.dot_dimension_numbers<[1], [0], [0], [1], [0, 0, 1, 1], [], []>} : vector<4x48xf32>, vector<48x48xf32>, vector<4x48xf32> -> vector<4x48xf32>
    %337 = arith.addf %335, %336 : vector<4x48xf32>
    %338 = vector.broadcast %20 : vector<1x48xf32> to vector<4x48xf32>
    %339 = arith.addf %337, %338 : vector<4x48xf32>
    %cst_117 = arith.constant dense<0.000000e+00> : vector<4x48xf32>
    %340 = tpu.matmul %329, %6, %cst_117 {dimension_numbers = #tpu.dot_dimension_numbers<[1], [0], [0], [1], [0, 0, 1, 1], [], []>} : vector<4x48xf32>, vector<48x48xf32>, vector<4x48xf32> -> vector<4x48xf32>
    %cst_118 = arith.constant dense<0.000000e+00> : vector<4x48xf32>
    %341 = tpu.matmul %327, %14, %cst_118 {dimension_numbers = #tpu.dot_dimension_numbers<[1], [0], [0], [1], [0, 0, 1, 1], [], []>} : vector<4x48xf32>, vector<48x48xf32>, vector<4x48xf32> -> vector<4x48xf32>
    %342 = arith.addf %340, %341 : vector<4x48xf32>
    %343 = vector.broadcast %22 : vector<1x48xf32> to vector<4x48xf32>
    %344 = arith.addf %342, %343 : vector<4x48xf32>
    %cst_119 = arith.constant dense<0.000000e+00> : vector<4x48xf32>
    %345 = tpu.matmul %329, %8, %cst_119 {dimension_numbers = #tpu.dot_dimension_numbers<[1], [0], [0], [1], [0, 0, 1, 1], [], []>} : vector<4x48xf32>, vector<48x48xf32>, vector<4x48xf32> -> vector<4x48xf32>
    %cst_120 = arith.constant dense<0.000000e+00> : vector<4x48xf32>
    %346 = tpu.matmul %327, %16, %cst_120 {dimension_numbers = #tpu.dot_dimension_numbers<[1], [0], [0], [1], [0, 0, 1, 1], [], []>} : vector<4x48xf32>, vector<48x48xf32>, vector<4x48xf32> -> vector<4x48xf32>
    %347 = arith.addf %345, %346 : vector<4x48xf32>
    %348 = vector.broadcast %24 : vector<1x48xf32> to vector<4x48xf32>
    %349 = arith.addf %347, %348 : vector<4x48xf32>
    %350 = arith.negf %339 : vector<4x48xf32>
    %351 = math.exp %350 : vector<4x48xf32>
    %cst_121 = arith.constant 1.000000e+00 : f32
    %352 = vector.broadcast %cst_121 : f32 to vector<4x48xf32>
    %353 = arith.addf %352, %351 : vector<4x48xf32>
    %354 = arith.divf %352, %353 : vector<4x48xf32>
    %355 = arith.mulf %354, %320 : vector<4x48xf32>
    %356 = arith.negf %334 : vector<4x48xf32>
    %357 = math.exp %356 : vector<4x48xf32>
    %cst_122 = arith.constant 1.000000e+00 : f32
    %358 = vector.broadcast %cst_122 : f32 to vector<4x48xf32>
    %359 = arith.addf %358, %357 : vector<4x48xf32>
    %360 = arith.divf %358, %359 : vector<4x48xf32>
    %361 = math.tanh %344 : vector<4x48xf32>
    %362 = arith.mulf %360, %361 : vector<4x48xf32>
    %363 = arith.addf %355, %362 : vector<4x48xf32>
    %364 = arith.negf %349 : vector<4x48xf32>
    %365 = math.exp %364 : vector<4x48xf32>
    %cst_123 = arith.constant 1.000000e+00 : f32
    %366 = vector.broadcast %cst_123 : f32 to vector<4x48xf32>
    %367 = arith.addf %366, %365 : vector<4x48xf32>
    %368 = arith.divf %366, %367 : vector<4x48xf32>
    %369 = math.tanh %363 : vector<4x48xf32>
    %370 = arith.mulf %368, %369 : vector<4x48xf32>
    %371 = vector.shape_cast %69 : vector<4x48xf32> to vector<4x1x48xf32>
    %372 = vector.shape_cast %112 : vector<4x48xf32> to vector<4x1x48xf32>
    %373 = vector.shape_cast %155 : vector<4x48xf32> to vector<4x1x48xf32>
    %374 = vector.shape_cast %198 : vector<4x48xf32> to vector<4x1x48xf32>
    %375 = vector.shape_cast %241 : vector<4x48xf32> to vector<4x1x48xf32>
    %376 = vector.shape_cast %284 : vector<4x48xf32> to vector<4x1x48xf32>
    %377 = vector.shape_cast %327 : vector<4x48xf32> to vector<4x1x48xf32>
    %378 = vector.shape_cast %370 : vector<4x48xf32> to vector<4x1x48xf32>
    %379 = tpu.concatenate %371, %372, %373, %374, %375, %376, %377, %378 in 1 : vector<4x1x48xf32>, vector<4x1x48xf32>, vector<4x1x48xf32>, vector<4x1x48xf32>, vector<4x1x48xf32>, vector<4x1x48xf32>, vector<4x1x48xf32>, vector<4x1x48xf32> -> vector<4x8x48xf32>
    %c0_124 = arith.constant 0 : index
    %c0_125 = arith.constant 0 : index
    %380 = vector.load %arg0[%c0_124, %c0_125] : memref<4x48xf32, #tpu.memory_space<vmem>>, vector<4x48xf32>
    %c0_126 = arith.constant 0 : index
    %c0_127 = arith.constant 0 : index
    %381 = vector.load %arg3[%c0_126, %c0_127] : memref<4x8xf32, #tpu.memory_space<vmem>>, vector<4x8xf32>
    %382 = vector.shape_cast %379 : vector<4x8x48xf32> to vector<32x48xf32>
    %383 = vector.shape_cast %0 : vector<4x8x48xf32> to vector<32x48xf32>
    %c0_128 = arith.constant 0 : index
    %c0_129 = arith.constant 0 : index
    %384 = vector.load %arg11[%c0_128, %c0_129] : memref<1x48xf32, #tpu.memory_space<vmem>>, vector<1x48xf32>
    %385 = vector.broadcast %384 : vector<1x48xf32> to vector<4x48xf32>
    %386 = arith.addf %385, %380 : vector<4x48xf32>
    %c0_130 = arith.constant 0 : index
    %c0_131 = arith.constant 0 : index
    %c0_132 = arith.constant 0 : index
    %387 = vector.load %arg7[%c0_130, %c0_131, %c0_132] : memref<2x48x24xf32, #tpu.memory_space<vmem>>, vector<1x48x24xf32>
    %388 = vector.shape_cast %387 : vector<1x48x24xf32> to vector<48x24xf32>
    %cst_133 = arith.constant dense<0.000000e+00> : vector<4x24xf32>
    %389 = tpu.matmul %380, %388, %cst_133 {dimension_numbers = #tpu.dot_dimension_numbers<[1], [0], [0], [1], [0, 0, 1, 1], [], []>} : vector<4x48xf32>, vector<48x24xf32>, vector<4x24xf32> -> vector<4x24xf32>
    %c0_134 = arith.constant 0 : index
    %c0_135 = arith.constant 0 : index
    %c0_136 = arith.constant 0 : index
    %390 = vector.load %arg8[%c0_134, %c0_135, %c0_136] : memref<2x48x24xf32, #tpu.memory_space<vmem>>, vector<1x48x24xf32>
    %391 = vector.shape_cast %390 : vector<1x48x24xf32> to vector<48x24xf32>
    %cst_137 = arith.constant dense<0.000000e+00> : vector<32x24xf32>
    %392 = tpu.matmul %382, %391, %cst_137 {dimension_numbers = #tpu.dot_dimension_numbers<[1], [0], [0], [1], [0, 0, 1, 1], [], []>} : vector<32x48xf32>, vector<48x24xf32>, vector<32x24xf32> -> vector<32x24xf32>
    %393 = vector.shape_cast %392 : vector<32x24xf32> to vector<4x8x24xf32>
    %c0_138 = arith.constant 0 : index
    %c0_139 = arith.constant 0 : index
    %c0_140 = arith.constant 0 : index
    %394 = vector.load %arg9[%c0_138, %c0_139, %c0_140] : memref<2x48x24xf32, #tpu.memory_space<vmem>>, vector<1x48x24xf32>
    %395 = vector.shape_cast %394 : vector<1x48x24xf32> to vector<48x24xf32>
    %cst_141 = arith.constant dense<0.000000e+00> : vector<32x24xf32>
    %396 = tpu.matmul %383, %395, %cst_141 {dimension_numbers = #tpu.dot_dimension_numbers<[1], [0], [0], [1], [0, 0, 1, 1], [], []>} : vector<32x48xf32>, vector<48x24xf32>, vector<32x24xf32> -> vector<32x24xf32>
    %397 = vector.shape_cast %396 : vector<32x24xf32> to vector<4x8x24xf32>
    %398 = vector.shape_cast %389 : vector<4x24xf32> to vector<4x1x24xf32>
    %399 = vector.broadcast %398 : vector<4x1x24xf32> to vector<4x8x24xf32>
    %400 = arith.mulf %399, %393 : vector<4x8x24xf32>
    %cst_142 = arith.constant dense<0.000000e+00> : vector<4x8xf32>
    %401 = vector.multi_reduction <add>, %400, %cst_142 [2] : vector<4x8x24xf32> to vector<4x8xf32>
    %cst_143 = arith.constant 0.204124153 : f32
    %402 = vector.broadcast %cst_143 : f32 to vector<4x8xf32>
    %403 = arith.mulf %401, %402 : vector<4x8xf32>
    %cst_144 = arith.constant 5.000000e-01 : f32
    %404 = vector.broadcast %cst_144 : f32 to vector<4x8xf32>
    %405 = arith.cmpf ogt, %381, %404 : vector<4x8xf32>
    %cst_145 = arith.constant -1.000000e+10 : f32
    %406 = vector.broadcast %cst_145 : f32 to vector<4x8xf32>
    %407 = arith.select %405, %406, %403 : vector<4x8xi1>, vector<4x8xf32>
    %cst_146 = arith.constant dense<0xFF800000> : vector<4xf32>
    %408 = vector.multi_reduction <maximumf>, %407, %cst_146 [1] : vector<4x8xf32> to vector<4xf32>
    %409 = vector.shape_cast %408 : vector<4xf32> to vector<4x1xf32>
    %410 = vector.broadcast %409 : vector<4x1xf32> to vector<4x8xf32>
    %411 = arith.subf %407, %410 : vector<4x8xf32>
    %412 = math.exp %411 : vector<4x8xf32>
    %cst_147 = arith.constant dense<0.000000e+00> : vector<4xf32>
    %413 = vector.multi_reduction <add>, %412, %cst_147 [1] : vector<4x8xf32> to vector<4xf32>
    %414 = vector.shape_cast %413 : vector<4xf32> to vector<4x1xf32>
    %415 = vector.broadcast %414 : vector<4x1xf32> to vector<4x8xf32>
    %416 = arith.divf %412, %415 : vector<4x8xf32>
    %c0_148 = arith.constant 0 : index
    %c0_149 = arith.constant 0 : index
    %c0_150 = arith.constant 0 : index
    %417 = vector.load %arg20[%c0_148, %c0_149, %c0_150] : memref<2x4x8xf32, #tpu.memory_space<vmem>>, vector<1x4x8xf32>
    %418 = vector.shape_cast %417 : vector<1x4x8xf32> to vector<4x8xf32>
    %419 = vector.shape_cast %416 : vector<4x8xf32> to vector<1x4x8xf32>
    tpu.vector_store %arg20[%c0_148, %c0_149, %c0_150], %419 {strides = array<i32>} : memref<2x4x8xf32, #tpu.memory_space<vmem>>, vector<1x4x8xf32>,
    %420 = vector.shape_cast %416 : vector<4x8xf32> to vector<4x8x1xf32>
    %421 = vector.broadcast %420 : vector<4x8x1xf32> to vector<4x8x24xf32>
    %422 = arith.mulf %421, %397 : vector<4x8x24xf32>
    %cst_151 = arith.constant dense<0.000000e+00> : vector<4x24xf32>
    %423 = vector.multi_reduction <add>, %422, %cst_151 [1] : vector<4x8x24xf32> to vector<4x24xf32>
    %c0_152 = arith.constant 0 : index
    %c0_153 = arith.constant 0 : index
    %c0_154 = arith.constant 0 : index
    %424 = vector.load %arg10[%c0_152, %c0_153, %c0_154] : memref<2x24x48xf32, #tpu.memory_space<vmem>>, vector<1x24x48xf32>
    %425 = vector.shape_cast %424 : vector<1x24x48xf32> to vector<24x48xf32>
    %cst_155 = arith.constant dense<0.000000e+00> : vector<4x48xf32>
    %426 = tpu.matmul %423, %425, %cst_155 {dimension_numbers = #tpu.dot_dimension_numbers<[1], [0], [0], [1], [0, 0, 1, 1], [], []>} : vector<4x24xf32>, vector<24x48xf32>, vector<4x48xf32> -> vector<4x48xf32>
    %427 = arith.addf %386, %426 : vector<4x48xf32>
    %c1_156 = arith.constant 1 : index
    %c0_157 = arith.constant 0 : index
    %c0_158 = arith.constant 0 : index
    %428 = vector.load %arg7[%c1_156, %c0_157, %c0_158] : memref<2x48x24xf32, #tpu.memory_space<vmem>>, vector<1x48x24xf32>
    %429 = vector.shape_cast %428 : vector<1x48x24xf32> to vector<48x24xf32>
    %cst_159 = arith.constant dense<0.000000e+00> : vector<4x24xf32>
    %430 = tpu.matmul %380, %429, %cst_159 {dimension_numbers = #tpu.dot_dimension_numbers<[1], [0], [0], [1], [0, 0, 1, 1], [], []>} : vector<4x48xf32>, vector<48x24xf32>, vector<4x24xf32> -> vector<4x24xf32>
    %c1_160 = arith.constant 1 : index
    %c0_161 = arith.constant 0 : index
    %c0_162 = arith.constant 0 : index
    %431 = vector.load %arg8[%c1_160, %c0_161, %c0_162] : memref<2x48x24xf32, #tpu.memory_space<vmem>>, vector<1x48x24xf32>
    %432 = vector.shape_cast %431 : vector<1x48x24xf32> to vector<48x24xf32>
    %cst_163 = arith.constant dense<0.000000e+00> : vector<32x24xf32>
    %433 = tpu.matmul %382, %432, %cst_163 {dimension_numbers = #tpu.dot_dimension_numbers<[1], [0], [0], [1], [0, 0, 1, 1], [], []>} : vector<32x48xf32>, vector<48x24xf32>, vector<32x24xf32> -> vector<32x24xf32>
    %434 = vector.shape_cast %433 : vector<32x24xf32> to vector<4x8x24xf32>
    %c1_164 = arith.constant 1 : index
    %c0_165 = arith.constant 0 : index
    %c0_166 = arith.constant 0 : index
    %435 = vector.load %arg9[%c1_164, %c0_165, %c0_166] : memref<2x48x24xf32, #tpu.memory_space<vmem>>, vector<1x48x24xf32>
    %436 = vector.shape_cast %435 : vector<1x48x24xf32> to vector<48x24xf32>
    %cst_167 = arith.constant dense<0.000000e+00> : vector<32x24xf32>
    %437 = tpu.matmul %383, %436, %cst_167 {dimension_numbers = #tpu.dot_dimension_numbers<[1], [0], [0], [1], [0, 0, 1, 1], [], []>} : vector<32x48xf32>, vector<48x24xf32>, vector<32x24xf32> -> vector<32x24xf32>
    %438 = vector.shape_cast %437 : vector<32x24xf32> to vector<4x8x24xf32>
    %439 = vector.shape_cast %430 : vector<4x24xf32> to vector<4x1x24xf32>
    %440 = vector.broadcast %439 : vector<4x1x24xf32> to vector<4x8x24xf32>
    %441 = arith.mulf %440, %434 : vector<4x8x24xf32>
    %cst_168 = arith.constant dense<0.000000e+00> : vector<4x8xf32>
    %442 = vector.multi_reduction <add>, %441, %cst_168 [2] : vector<4x8x24xf32> to vector<4x8xf32>
    %cst_169 = arith.constant 0.204124153 : f32
    %443 = vector.broadcast %cst_169 : f32 to vector<4x8xf32>
    %444 = arith.mulf %442, %443 : vector<4x8xf32>
    %cst_170 = arith.constant 5.000000e-01 : f32
    %445 = vector.broadcast %cst_170 : f32 to vector<4x8xf32>
    %446 = arith.cmpf ogt, %381, %445 : vector<4x8xf32>
    %cst_171 = arith.constant -1.000000e+10 : f32
    %447 = vector.broadcast %cst_171 : f32 to vector<4x8xf32>
    %448 = arith.select %446, %447, %444 : vector<4x8xi1>, vector<4x8xf32>
    %cst_172 = arith.constant dense<0xFF800000> : vector<4xf32>
    %449 = vector.multi_reduction <maximumf>, %448, %cst_172 [1] : vector<4x8xf32> to vector<4xf32>
    %450 = vector.shape_cast %449 : vector<4xf32> to vector<4x1xf32>
    %451 = vector.broadcast %450 : vector<4x1xf32> to vector<4x8xf32>
    %452 = arith.subf %448, %451 : vector<4x8xf32>
    %453 = math.exp %452 : vector<4x8xf32>
    %cst_173 = arith.constant dense<0.000000e+00> : vector<4xf32>
    %454 = vector.multi_reduction <add>, %453, %cst_173 [1] : vector<4x8xf32> to vector<4xf32>
    %455 = vector.shape_cast %454 : vector<4xf32> to vector<4x1xf32>
    %456 = vector.broadcast %455 : vector<4x1xf32> to vector<4x8xf32>
    %457 = arith.divf %453, %456 : vector<4x8xf32>
    %c1_174 = arith.constant 1 : index
    %c0_175 = arith.constant 0 : index
    %c0_176 = arith.constant 0 : index
    %458 = vector.load %arg20[%c1_174, %c0_175, %c0_176] : memref<2x4x8xf32, #tpu.memory_space<vmem>>, vector<1x4x8xf32>
    %459 = vector.shape_cast %458 : vector<1x4x8xf32> to vector<4x8xf32>
    %460 = vector.shape_cast %457 : vector<4x8xf32> to vector<1x4x8xf32>
    tpu.vector_store %arg20[%c1_174, %c0_175, %c0_176], %460 {strides = array<i32>} : memref<2x4x8xf32, #tpu.memory_space<vmem>>, vector<1x4x8xf32>,
    %461 = vector.shape_cast %457 : vector<4x8xf32> to vector<4x8x1xf32>
    %462 = vector.broadcast %461 : vector<4x8x1xf32> to vector<4x8x24xf32>
    %463 = arith.mulf %462, %438 : vector<4x8x24xf32>
    %cst_177 = arith.constant dense<0.000000e+00> : vector<4x24xf32>
    %464 = vector.multi_reduction <add>, %463, %cst_177 [1] : vector<4x8x24xf32> to vector<4x24xf32>
    %c1_178 = arith.constant 1 : index
    %c0_179 = arith.constant 0 : index
    %c0_180 = arith.constant 0 : index
    %465 = vector.load %arg10[%c1_178, %c0_179, %c0_180] : memref<2x24x48xf32, #tpu.memory_space<vmem>>, vector<1x24x48xf32>
    %466 = vector.shape_cast %465 : vector<1x24x48xf32> to vector<24x48xf32>
    %cst_181 = arith.constant dense<0.000000e+00> : vector<4x48xf32>
    %467 = tpu.matmul %464, %466, %cst_181 {dimension_numbers = #tpu.dot_dimension_numbers<[1], [0], [0], [1], [0, 0, 1, 1], [], []>} : vector<4x24xf32>, vector<24x48xf32>, vector<4x48xf32> -> vector<4x48xf32>
    %468 = arith.addf %427, %467 : vector<4x48xf32>
    %cst_182 = arith.constant dense<0.000000e+00> : vector<4xf32>
    %469 = vector.multi_reduction <add>, %468, %cst_182 [1] : vector<4x48xf32> to vector<4xf32>
    %470 = vector.shape_cast %469 : vector<4xf32> to vector<4x1xf32>
    %cst_183 = arith.constant 4.800000e+01 : f32
    %471 = vector.broadcast %cst_183 : f32 to vector<4x1xf32>
    %472 = arith.divf %470, %471 : vector<4x1xf32>
    %473 = vector.broadcast %472 : vector<4x1xf32> to vector<4x48xf32>
    %474 = arith.subf %468, %473 : vector<4x48xf32>
    %475 = vector.broadcast %472 : vector<4x1xf32> to vector<4x48xf32>
    %476 = arith.subf %468, %475 : vector<4x48xf32>
    %477 = arith.mulf %474, %476 : vector<4x48xf32>
    %cst_184 = arith.constant dense<0.000000e+00> : vector<4xf32>
    %478 = vector.multi_reduction <add>, %477, %cst_184 [1] : vector<4x48xf32> to vector<4xf32>
    %479 = vector.shape_cast %478 : vector<4xf32> to vector<4x1xf32>
    %cst_185 = arith.constant 4.800000e+01 : f32
    %480 = vector.broadcast %cst_185 : f32 to vector<4x1xf32>
    %481 = arith.divf %479, %480 : vector<4x1xf32>
    %482 = vector.broadcast %472 : vector<4x1xf32> to vector<4x48xf32>
    %483 = arith.subf %468, %482 : vector<4x48xf32>
    %cst_186 = arith.constant 9.99999974E-6 : f32
    %484 = vector.broadcast %cst_186 : f32 to vector<4x1xf32>
    %485 = arith.addf %481, %484 : vector<4x1xf32>
    %486 = math.rsqrt %485 : vector<4x1xf32>
    %487 = vector.broadcast %486 : vector<4x1xf32> to vector<4x48xf32>
    %488 = arith.mulf %483, %487 : vector<4x48xf32>
    %c0_187 = arith.constant 0 : index
    %c0_188 = arith.constant 0 : index
    %489 = vector.load %arg12[%c0_187, %c0_188] : memref<1x48xf32, #tpu.memory_space<vmem>>, vector<1x48xf32>
    %490 = vector.broadcast %489 : vector<1x48xf32> to vector<4x48xf32>
    %491 = arith.mulf %488, %490 : vector<4x48xf32>
    %c0_189 = arith.constant 0 : index
    %c0_190 = arith.constant 0 : index
    %492 = vector.load %arg13[%c0_189, %c0_190] : memref<1x48xf32, #tpu.memory_space<vmem>>, vector<1x48xf32>
    %493 = vector.broadcast %492 : vector<1x48xf32> to vector<4x48xf32>
    %494 = arith.addf %491, %493 : vector<4x48xf32>
    %c0_191 = arith.constant 0 : index
    %c0_192 = arith.constant 0 : index
    %495 = vector.load %arg1[%c0_191, %c0_192] : memref<4x16xf32, #tpu.memory_space<vmem>>, vector<4x16xf32>
    %c0_193 = arith.constant 0 : index
    %c0_194 = arith.constant 0 : index
    %496 = vector.load %arg14[%c0_193, %c0_194] : memref<48x16xf32, #tpu.memory_space<vmem>>, vector<48x16xf32>
    %cst_195 = arith.constant dense<0.000000e+00> : vector<4x16xf32>
    %497 = tpu.matmul %494, %496, %cst_195 {dimension_numbers = #tpu.dot_dimension_numbers<[1], [0], [0], [1], [0, 0, 1, 1], [], []>} : vector<4x48xf32>, vector<48x16xf32>, vector<4x16xf32> -> vector<4x16xf32>
    %c0_196 = arith.constant 0 : index
    %c0_197 = arith.constant 0 : index
    %498 = vector.load %arg15[%c0_196, %c0_197] : memref<16x16xf32, #tpu.memory_space<vmem>>, vector<16x16xf32>
    %cst_198 = arith.constant dense<0.000000e+00> : vector<4x16xf32>
    %499 = tpu.matmul %495, %498, %cst_198 {dimension_numbers = #tpu.dot_dimension_numbers<[1], [0], [0], [1], [0, 0, 1, 1], [], []>} : vector<4x16xf32>, vector<16x16xf32>, vector<4x16xf32> -> vector<4x16xf32>
    %500 = arith.addf %497, %499 : vector<4x16xf32>
    %c0_199 = arith.constant 0 : index
    %c0_200 = arith.constant 0 : index
    %501 = vector.load %arg16[%c0_199, %c0_200] : memref<1x16xf32, #tpu.memory_space<vmem>>, vector<1x16xf32>
    %502 = vector.broadcast %501 : vector<1x16xf32> to vector<4x16xf32>
    %503 = arith.addf %500, %502 : vector<4x16xf32>
    %cst_201 = arith.constant 0.000000e+00 : f32
    %504 = vector.broadcast %cst_201 : f32 to vector<4x16xf32>
    %505 = arith.maximumf %503, %504 : vector<4x16xf32>
    %c0_202 = arith.constant 0 : index
    %c0_203 = arith.constant 0 : index
    %506 = vector.load %arg17[%c0_202, %c0_203] : memref<16x128xf32, #tpu.memory_space<vmem>>, vector<16x128xf32>
    %cst_204 = arith.constant dense<0.000000e+00> : vector<4x128xf32>
    %507 = tpu.matmul %505, %506, %cst_204 {dimension_numbers = #tpu.dot_dimension_numbers<[1], [0], [0], [1], [0, 0, 1, 1], [], []>} : vector<4x16xf32>, vector<16x128xf32>, vector<4x128xf32> -> vector<4x128xf32>
    %c0_205 = arith.constant 0 : index
    %c0_206 = arith.constant 0 : index
    %508 = vector.load %arg18[%c0_205, %c0_206] : memref<1x128xf32, #tpu.memory_space<vmem>>, vector<1x128xf32>
    %509 = vector.broadcast %508 : vector<1x128xf32> to vector<4x128xf32>
    %510 = arith.addf %507, %509 : vector<4x128xf32>
    %c0_207 = arith.constant 0 : index
    %c0_208 = arith.constant 0 : index
    %511 = vector.load %arg19[%c0_207, %c0_208] : memref<4x128xf32, #tpu.memory_space<vmem>>, vector<4x128xf32>
    tpu.vector_store %arg19[%c0_207, %c0_208], %510 {strides = array<i32>} : memref<4x128xf32, #tpu.memory_space<vmem>>, vector<4x128xf32>,
    return
  }
}

</mosaic_0001>

<llo_original>
// kernel: tpu_custom_call.1
$region0: #{tpu_custom_call.1}
  #allocation0 [shape = 'u32[]', space=smem, size = 0x4, offset = 0x4, fixed_abs, tag = 'smem constant byte address 0x4 - core index']
  #allocation1 [shape = 'u32[144,128]{1,0:T(1,128)}', space=vmem, size = 0x12000, scoped, tag = 'internal scratch']
  %s0 = inlined_call_operand.vmem [shape: f32[4,48], index: 0, kind: input, shape index: {}]
  %s1 = inlined_call_operand.vmem [shape: f32[4,16], index: 1, kind: input, shape index: {}]
  %s2 = inlined_call_operand.hbm [shape: f32[4,8,48], index: 2, kind: input, shape index: {}]
  %s3 = inlined_call_operand.hbm [shape: f32[4,8], index: 3, kind: input, shape index: {}]
  %s4 = inlined_call_operand.vmem [shape: f32[4,48,48], index: 4, kind: input, shape index: {}]
  %s5 = inlined_call_operand.vmem [shape: f32[4,48,48], index: 5, kind: input, shape index: {}]
  %s6 = inlined_call_operand.hbm [shape: f32[4,1,48], index: 6, kind: input, shape index: {}]
  %s7 = inlined_call_operand.vmem [shape: f32[2,48,24], index: 7, kind: input, shape index: {}]
  %s8 = inlined_call_operand.vmem [shape: f32[2,48,24], index: 8, kind: input, shape index: {}]
  %s9 = inlined_call_operand.vmem [shape: f32[2,48,24], index: 9, kind: input, shape index: {}]
  %s10 = inlined_call_operand.hbm [shape: f32[2,24,48], index: 10, kind: input, shape index: {}]
  %s11 = inlined_call_operand.vmem [shape: f32[1,48], index: 11, kind: input, shape index: {}]
  %s12 = inlined_call_operand.hbm [shape: f32[1,48], index: 12, kind: input, shape index: {}]
  %s13 = inlined_call_operand.hbm [shape: f32[1,48], index: 13, kind: input, shape index: {}]
  %s14 = inlined_call_operand.vmem [shape: f32[48,16], index: 14, kind: input, shape index: {}]
  %s15 = inlined_call_operand.vmem [shape: f32[16,16], index: 15, kind: input, shape index: {}]
  %s16 = inlined_call_operand.vmem [shape: f32[1,16], index: 16, kind: input, shape index: {}]
  %s17 = inlined_call_operand.hbm [shape: f32[16,128], index: 17, kind: input, shape index: {}]
  %s18 = inlined_call_operand.vmem [shape: f32[1,128], index: 18, kind: input, shape index: {}]
  %s19 = inlined_call_operand.hbm [shape: f32[4,128], index: 19, kind: output, shape index: {0}]
  %s20 = inlined_call_operand.hbm [shape: f32[2,4,8], index: 20, kind: output, shape index: {1}]
  %21 = xla_tuple %s19, %s20
  %s22 = sld [smem:[#allocation0]]
  $region122: #{tpu_custom_call.1} parent=0
    _
  %s24 = ssub.s32 1, %s22
  %s25 = scalar_select 0, %s24, %s22
  $region1: #{tpu_custom_call.1} parent=0
    #allocation2 [shape = 'u8[16384]{0}', space=vmem, size = 0x4000, scoped, tag = 'input window, operand 2, single buffered']
    #allocation3 [shape = 's32[1]{0}', space=sflag, size = 0x4, scoped, tag = 'scoped memory for tpu_custom_call.1']
    #allocation4 [shape = 's32[1]{0}', space=sflag, size = 0x4, scoped, tag = 'scoped memory for tpu_custom_call.1']
    #allocation5 [shape = 'u8[2048]{0}', space=vmem, size = 0x800, scoped, tag = 'input window, operand 3, single buffered']
    #allocation6 [shape = 's32[1]{0}', space=sflag, size = 0x4, scoped, tag = 'scoped memory for tpu_custom_call.1']
    #allocation7 [shape = 'u8[2048]{0}', space=vmem, size = 0x800, scoped, tag = 'input window, operand 6, single buffered']
    #allocation8 [shape = 'u8[24576]{0}', space=vmem, size = 0x6000, scoped, tag = 'input window, operand 10, single buffered']
    #allocation9 [shape = 's32[1]{0}', space=sflag, size = 0x4, scoped, tag = 'scoped memory for tpu_custom_call.1']
    #allocation10 [shape = 'u8[512]{0}', space=vmem, size = 0x400, scoped, tag = 'input window, operand 12, single buffered']
    #allocation11 [shape = 'u8[512]{0}', space=vmem, size = 0x400, scoped, tag = 'input window, operand 13, single buffered']
    #allocation12 [shape = 's32[1]{0}', space=sflag, size = 0x4, scoped, tag = 'scoped memory for tpu_custom_call.1']
    #allocation13 [shape = 'u8[8192]{0}', space=vmem, size = 0x2000, scoped, tag = 'input window, operand 17, single buffered']
    #allocation14 [shape = 'u8[2048]{0}', space=vmem, size = 0x800, scoped, tag = 'output window, operand 0, single buffered']
    #allocation15 [shape = 'u8[4096]{0}', space=vmem, size = 0x1000, scoped, tag = 'output window, operand 1, single buffered']
    #allocation16 [shape = 's32[1]{0}', space=sflag, size = 0x4, scoped, tag = 'scoped memory for tpu_custom_call.1']
    %26 = vsyncpa [#allocation3], 0
    %27 = vsyncpa [#allocation6], 0
    %28 = vsyncpa [#allocation9], 0
    %29 = vsyncpa [#allocation12], 0
    %30 = vsyncpa [#allocation4], 0
    %31 = vsyncpa [#allocation16], 0
    // Predicated region
    $region2: #{tpu_custom_call.1} parent=1 // pred_check
      _
    $region3: #{tpu_custom_call.1} parent=1 // pred_check_branch
      %33 = sbr.rel (0) target = $region5
    $region4: #{tpu_custom_call.1} parent=1 // pred_region
      _
    $region5: #{tpu_custom_call.1} parent=1 // pred_fallthru
      _
    // Predicated region
    $region6: #{tpu_custom_call.1} parent=1 // pred_check
      _
    $region7: #{tpu_custom_call.1} parent=1 // pred_check_branch
      %35 = sbr.rel (0) target = $region9
    $region8: #{tpu_custom_call.1} parent=1 // pred_region
      _
    $region9: #{tpu_custom_call.1} parent=1 // pred_fallthru
      _
    // Predicated region
    $region10: #{tpu_custom_call.1} parent=1 // pred_check
      _
    $region11: #{tpu_custom_call.1} parent=1 // pred_check_branch
      %37 = sbr.rel (0) target = $region13
    $region12: #{tpu_custom_call.1} parent=1 // pred_region
      %s39 = ssub.s32 512, 512
      %40 = vsyncadd [#allocation3], %s39
      %s41 = sshll.u32 [#allocation2], 4
      %s42 = int_to_ptr.vmem [resolvable:$true] %s41
      %47 = dma.hbm_to_vmem [thread:$0]  %s2, 512, %s42, [#allocation3], 128, 128, 8
    $region13: #{tpu_custom_call.1} parent=1 // pred_fallthru
      _
    // Predicated region
    $region14: #{tpu_custom_call.1} parent=1 // pred_check
      _
    $region15: #{tpu_custom_call.1} parent=1 // pred_check_branch
      %49 = sbr.rel (0) target = $region17
    $region16: #{tpu_custom_call.1} parent=1 // pred_region
      %s51 = ssub.s32 64, 64
      %52 = vsyncadd [#allocation6], %s51
      %s54 = sshll.u32 [#allocation5], 4
      %s55 = int_to_ptr.vmem [resolvable:$true] %s54
      %57 = dma.hbm_to_vmem [thread:$0]  %s3, 64, %s55, [#allocation6]
    $region17: #{tpu_custom_call.1} parent=1 // pred_fallthru
      _
    // Predicated region
    $region18: #{tpu_custom_call.1} parent=1 // pred_check
      _
    $region19: #{tpu_custom_call.1} parent=1 // pred_check_branch
      %59 = sbr.rel (0) target = $region21
    $region20: #{tpu_custom_call.1} parent=1 // pred_region
      _
    $region21: #{tpu_custom_call.1} parent=1 // pred_fallthru
      _
    // Predicated region
    $region22: #{tpu_custom_call.1} parent=1 // pred_check
      _
    $region23: #{tpu_custom_call.1} parent=1 // pred_check_branch
      %61 = sbr.rel (0) target = $region25
    $region24: #{tpu_custom_call.1} parent=1 // pred_region
      _
    $region25: #{tpu_custom_call.1} parent=1 // pred_fallthru
      _
    // Predicated region
    $region26: #{tpu_custom_call.1} parent=1 // pred_check
      _
    $region27: #{tpu_custom_call.1} parent=1 // pred_check_branch
      %63 = sbr.rel (0) target = $region29
    $region28: #{tpu_custom_call.1} parent=1 // pred_region
      %s65 = ssub.s32 64, 64
      %66 = vsyncadd [#allocation6], %s65
      %s67 = sshll.u32 [#allocation7], 4
      %s68 = int_to_ptr.vmem [resolvable:$true] %s67
      %73 = dma.hbm_to_vmem [thread:$0]  %s6, 64, %s68, [#allocation6], 16, 16, 1
    $region29: #{tpu_custom_call.1} parent=1 // pred_fallthru
      _
    // Predicated region
    $region30: #{tpu_custom_call.1} parent=1 // pred_check
      _
    $region31: #{tpu_custom_call.1} parent=1 // pred_check_branch
      %75 = sbr.rel (0) target = $region33
    $region32: #{tpu_custom_call.1} parent=1 // pred_region
      _
    $region33: #{tpu_custom_call.1} parent=1 // pred_fallthru
      _
    // Predicated region
    $region34: #{tpu_custom_call.1} parent=1 // pred_check
      _
    $region35: #{tpu_custom_call.1} parent=1 // pred_check_branch
      %77 = sbr.rel (0) target = $region37
    $region36: #{tpu_custom_call.1} parent=1 // pred_region
      _
    $region37: #{tpu_custom_call.1} parent=1 // pred_fallthru
      _
    // Predicated region
    $region38: #{tpu_custom_call.1} parent=1 // pred_check
      _
    $region39: #{tpu_custom_call.1} parent=1 // pred_check_branch
      %79 = sbr.rel (0) target = $region41
    $region40: #{tpu_custom_call.1} parent=1 // pred_region
      _
    $region41: #{tpu_custom_call.1} parent=1 // pred_fallthru
      _
    // Predicated region
    $region42: #{tpu_custom_call.1} parent=1 // pred_check
      _
    $region43: #{tpu_custom_call.1} parent=1 // pred_check_branch
      %81 = sbr.rel (0) target = $region45
    $region44: #{tpu_custom_call.1} parent=1 // pred_region
      %s83 = ssub.s32 768, 768
      %84 = vsyncadd [#allocation9], %s83
      %s85 = sshll.u32 [#allocation8], 4
      %s86 = int_to_ptr.vmem [resolvable:$true] %s85
      %91 = dma.hbm_to_vmem [thread:$0]  %s10, 768, %s86, [#allocation9], 128, 128, 8
    $region45: #{tpu_custom_call.1} parent=1 // pred_fallthru
      _
    // Predicated region
    $region46: #{tpu_custom_call.1} parent=1 // pred_check
      _
    $region47: #{tpu_custom_call.1} parent=1 // pred_check_branch
      %93 = sbr.rel (0) target = $region49
    $region48: #{tpu_custom_call.1} parent=1 // pred_region
      _
    $region49: #{tpu_custom_call.1} parent=1 // pred_fallthru
      _
    // Predicated region
    $region50: #{tpu_custom_call.1} parent=1 // pred_check
      _
    $region51: #{tpu_custom_call.1} parent=1 // pred_check_branch
      %95 = sbr.rel (0) target = $region53
    $region52: #{tpu_custom_call.1} parent=1 // pred_region
      %s97 = ssub.s32 16, 16
      %98 = vsyncadd [#allocation9], %s97
      %s100 = sshll.u32 [#allocation10], 4
      %s101 = int_to_ptr.vmem [resolvable:$true] %s100
      %103 = dma.hbm_to_vmem [thread:$0]  %s12, 16, %s101, [#allocation9]
    $region53: #{tpu_custom_call.1} parent=1 // pred_fallthru
      _
    // Predicated region
    $region54: #{tpu_custom_call.1} parent=1 // pred_check
      _
    $region55: #{tpu_custom_call.1} parent=1 // pred_check_branch
      %105 = sbr.rel (0) target = $region57
    $region56: #{tpu_custom_call.1} parent=1 // pred_region
      %s107 = ssub.s32 16, 16
      %108 = vsyncadd [#allocation12], %s107
      %s110 = sshll.u32 [#allocation11], 4
      %s111 = int_to_ptr.vmem [resolvable:$true] %s110
      %113 = dma.hbm_to_vmem [thread:$0]  %s13, 16, %s111, [#allocation12]
    $region57: #{tpu_custom_call.1} parent=1 // pred_fallthru
      _
    // Predicated region
    $region58: #{tpu_custom_call.1} parent=1 // pred_check
      _
    $region59: #{tpu_custom_call.1} parent=1 // pred_check_branch
      %115 = sbr.rel (0) target = $region61
    $region60: #{tpu_custom_call.1} parent=1 // pred_region
      _
    $region61: #{tpu_custom_call.1} parent=1 // pred_fallthru
      _
    // Predicated region
    $region62: #{tpu_custom_call.1} parent=1 // pred_check
      _
    $region63: #{tpu_custom_call.1} parent=1 // pred_check_branch
      %117 = sbr.rel (0) target = $region65
    $region64: #{tpu_custom_call.1} parent=1 // pred_region
      _
    $region65: #{tpu_custom_call.1} parent=1 // pred_fallthru
      _
    // Predicated region
    $region66: #{tpu_custom_call.1} parent=1 // pred_check
      _
    $region67: #{tpu_custom_call.1} parent=1 // pred_check_branch
      %119 = sbr.rel (0) target = $region69
    $region68: #{tpu_custom_call.1} parent=1 // pred_region
      _
    $region69: #{tpu_custom_call.1} parent=1 // pred_fallthru
      _
    // Predicated region
    $region70: #{tpu_custom_call.1} parent=1 // pred_check
      _
    $region71: #{tpu_custom_call.1} parent=1 // pred_check_branch
      %121 = sbr.rel (0) target = $region73
    $region72: #{tpu_custom_call.1} parent=1 // pred_region
      %s123 = ssub.s32 256, 256
      %124 = vsyncadd [#allocation12], %s123
      %s125 = sshll.u32 [#allocation13], 4
      %s126 = int_to_ptr.vmem [resolvable:$true] %s125
      %131 = dma.hbm_to_vmem [thread:$0]  %s17, 256, %s126, [#allocation12], 128, 128, 8
    $region73: #{tpu_custom_call.1} parent=1 // pred_fallthru
      _
    // Predicated region
    $region74: #{tpu_custom_call.1} parent=1 // pred_check
      _
    $region75: #{tpu_custom_call.1} parent=1 // pred_check_branch
      %133 = sbr.rel (0) target = $region77
    $region76: #{tpu_custom_call.1} parent=1 // pred_region
      _
    $region77: #{tpu_custom_call.1} parent=1 // pred_fallthru
      _
    // Predicated region
    $region78: #{tpu_custom_call.1} parent=1 // pred_check
      _
    $region79: #{tpu_custom_call.1} parent=1 // pred_check_branch
      %135 = sbr.rel (0) target = $region81
    $region80: #{tpu_custom_call.1} parent=1 // pred_region
      %136 = dma.done [#allocation3], 512
    $region81: #{tpu_custom_call.1} parent=1 // pred_fallthru
      _
    // Predicated region
    $region82: #{tpu_custom_call.1} parent=1 // pred_check
      _
    $region83: #{tpu_custom_call.1} parent=1 // pred_check_branch
      %138 = sbr.rel (0) target = $region85
    $region84: #{tpu_custom_call.1} parent=1 // pred_region
      %139 = dma.done [#allocation6], 64
    $region85: #{tpu_custom_call.1} parent=1 // pred_fallthru
      _
    // Predicated region
    $region86: #{tpu_custom_call.1} parent=1 // pred_check
      _
    $region87: #{tpu_custom_call.1} parent=1 // pred_check_branch
      %141 = sbr.rel (0) target = $region89
    $region88: #{tpu_custom_call.1} parent=1 // pred_region
      %142 = dma.done [#allocation6], 64
    $region89: #{tpu_custom_call.1} parent=1 // pred_fallthru
      _
    // Predicated region
    $region90: #{tpu_custom_call.1} parent=1 // pred_check
      _
    $region91: #{tpu_custom_call.1} parent=1 // pred_check_branch
      %144 = sbr.rel (0) target = $region93
    $region92: #{tpu_custom_call.1} parent=1 // pred_region
      %145 = dma.done [#allocation9], 768
    $region93: #{tpu_custom_call.1} parent=1 // pred_fallthru
      _
    // Predicated region
    $region94: #{tpu_custom_call.1} parent=1 // pred_check
      _
    $region95: #{tpu_custom_call.1} parent=1 // pred_check_branch
      %147 = sbr.rel (0) target = $region97
    $region96: #{tpu_custom_call.1} parent=1 // pred_region
      %148 = dma.done [#allocation9], 16
    $region97: #{tpu_custom_call.1} parent=1 // pred_fallthru
      _
    // Predicated region
    $region98: #{tpu_custom_call.1} parent=1 // pred_check
      _
    $region99: #{tpu_custom_call.1} parent=1 // pred_check_branch
      %150 = sbr.rel (0) target = $region101
    $region100: #{tpu_custom_call.1} parent=1 // pred_region
      %151 = dma.done [#allocation12], 16
    $region101: #{tpu_custom_call.1} parent=1 // pred_fallthru
      _
    // Predicated region
    $region102: #{tpu_custom_call.1} parent=1 // pred_check
      _
    $region103: #{tpu_custom_call.1} parent=1 // pred_check_branch
      %153 = sbr.rel (0) target = $region105
    $region104: #{tpu_custom_call.1} parent=1 // pred_region
      %154 = dma.done [#allocation12], 256
    $region105: #{tpu_custom_call.1} parent=1 // pred_fallthru
      _
    %v155 = vld [vmem:[#allocation2] sm:$0xff]
    %v156 = vld [vmem:[#allocation2 + $0x8] sm:$0xff]
    %v157 = vld [vmem:[#allocation2 + $0x10] sm:$0xff]
    %v158 = vld [vmem:[#allocation2 + $0x18] sm:$0xff]
    %v159 = vld [vmem:[%s4] sm:$0xff]
    %v160 = vld [vmem:[%s4 + $0x8] sm:$0xff]
    %v161 = vld [vmem:[%s4 + $0x10] sm:$0xff]
    %v162 = vld [vmem:[%s4 + $0x18] sm:$0xff]
    %v163 = vld [vmem:[%s4 + $0x20] sm:$0xff]
    %v164 = vld [vmem:[%s4 + $0x28] sm:$0xff]
    %s165 = scalar_lea.vmem %s4, 48
    %v166 = vld [vmem:[%s165] sm:$0xff]
    %v167 = vld [vmem:[%s165 + $0x8] sm:$0xff]
    %v168 = vld [vmem:[%s165 + $0x10] sm:$0xff]
    %v169 = vld [vmem:[%s165 + $0x18] sm:$0xff]
    %v170 = vld [vmem:[%s165 + $0x20] sm:$0xff]
    %v171 = vld [vmem:[%s165 + $0x28] sm:$0xff]
    %s172 = scalar_lea.vmem %s4, 96
    %v173 = vld [vmem:[%s172] sm:$0xff]
    %v174 = vld [vmem:[%s172 + $0x8] sm:$0xff]
    %v175 = vld [vmem:[%s172 + $0x10] sm:$0xff]
    %v176 = vld [vmem:[%s172 + $0x18] sm:$0xff]
    %v177 = vld [vmem:[%s172 + $0x20] sm:$0xff]
    %v178 = vld [vmem:[%s172 + $0x28] sm:$0xff]
    %s179 = scalar_lea.vmem %s4, 144
    %v180 = vld [vmem:[%s179] sm:$0xff]
    %v181 = vld [vmem:[%s179 + $0x8] sm:$0xff]
    %v182 = vld [vmem:[%s179 + $0x10] sm:$0xff]
    %v183 = vld [vmem:[%s179 + $0x18] sm:$0xff]
    %v184 = vld [vmem:[%s179 + $0x20] sm:$0xff]
    %v185 = vld [vmem:[%s179 + $0x28] sm:$0xff]
    %v186 = vld [vmem:[%s5] sm:$0xff]
    %v187 = vld [vmem:[%s5 + $0x8] sm:$0xff]
    %v188 = vld [vmem:[%s5 + $0x10] sm:$0xff]
    %v189 = vld [vmem:[%s5 + $0x18] sm:$0xff]
    %v190 = vld [vmem:[%s5 + $0x20] sm:$0xff]
    %v191 = vld [vmem:[%s5 + $0x28] sm:$0xff]
    %s192 = scalar_lea.vmem %s5, 48
    %v193 = vld [vmem:[%s192] sm:$0xff]
    %v194 = vld [vmem:[%s192 + $0x8] sm:$0xff]
    %v195 = vld [vmem:[%s192 + $0x10] sm:$0xff]
    %v196 = vld [vmem:[%s192 + $0x18] sm:$0xff]
    %v197 = vld [vmem:[%s192 + $0x20] sm:$0xff]
    %v198 = vld [vmem:[%s192 + $0x28] sm:$0xff]
    %s199 = scalar_lea.vmem %s5, 96
    %v200 = vld [vmem:[%s199] sm:$0xff]
    %v201 = vld [vmem:[%s199 + $0x8] sm:$0xff]
    %v202 = vld [vmem:[%s199 + $0x10] sm:$0xff]
    %v203 = vld [vmem:[%s199 + $0x18] sm:$0xff]
    %v204 = vld [vmem:[%s199 + $0x20] sm:$0xff]
    %v205 = vld [vmem:[%s199 + $0x28] sm:$0xff]
    %s206 = scalar_lea.vmem %s5, 144
    %v207 = vld [vmem:[%s206] sm:$0xff]
    %v208 = vld [vmem:[%s206 + $0x8] sm:$0xff]
    %v209 = vld [vmem:[%s206 + $0x10] sm:$0xff]
    %v210 = vld [vmem:[%s206 + $0x18] sm:$0xff]
    %v211 = vld [vmem:[%s206 + $0x20] sm:$0xff]
    %v212 = vld [vmem:[%s206 + $0x28] sm:$0xff]
    %v213 = vld [vmem:[#allocation7] sm:$0x1]
    %s214 = scalar_lea.vmem [#allocation7], 1
    %v215 = vld [vmem:[%s214] sm:$0x1]
    %s216 = scalar_lea.vmem [#allocation7], 2
    %v217 = vld [vmem:[%s216] sm:$0x1]
    %s218 = scalar_lea.vmem [#allocation7], 3
    %v219 = vld [vmem:[%s218] sm:$0x1]
    %vm220 = vcmask 392192
    %v222 = vsel %vm220, 0.0, 0
    %224 = vmatprep.subr.mxu0 0.0
    %225 = vmatpush1.msra.mxu0 0.0
    %226 = vmatprep.subr.mxu0 0.0
    %227 = vmatpush1.msra.mxu0 0.0
    %228 = vmatprep.subr.mxu0 0.0
    %229 = vmatpush1.msra.mxu0 0.0
    %230 = vmatprep.subr.mxu0 0.0
    %231 = vmatpush1.msra.mxu0 0.0
    %232 = vmatprep.subr.mxu0 0.0
    %233 = vmatpush1.msra.mxu0 0.0
    %234 = vmatprep.subr.mxu0 0.0
    %235 = vmatpush1.msra.mxu0 0.0
    %236 = vmatprep.subr.mxu0 0.0
    %237 = vmatpush1.msra.mxu0 0.0
    %238 = vmatprep.subr.mxu0 0.0
    %239 = vmatpush1.msra.mxu0 0.0
    %240 = vmatprep.subr.mxu0 0.0
    %241 = vmatpush1.msra.mxu0 0.0
    %242 = vmatprep.subr.mxu0 0.0
    %243 = vmatpush1.msra.mxu0 0.0
    %244 = vmatprep.subr.mxu0 0.0
    %245 = vmatpush1.msra.mxu0 %v191
    %246 = vmatprep.subr.mxu0 0.0
    %247 = vmatpush1.msra.mxu0 %v190
    %248 = vmatprep.subr.mxu0 0.0
    %249 = vmatpush1.msra.mxu0 %v189
    %250 = vmatprep.subr.mxu0 0.0
    %251 = vmatpush1.msra.mxu0 %v188
    %252 = vmatprep.subr.mxu0 0.0
    %253 = vmatpush1.msra.mxu0 %v187
    %254 = vmatprep.subr.mxu0 0.0
    %255 = vmatpush1.msra.mxu0 %v186
    %256 = vmatprep.subr.mxu0 0.0
    %257 = vmatpush2.msra.mxu0 0.0
    %258 = vmatprep.subr.mxu0 0.0
    %259 = vmatpush2.msra.mxu0 0.0
    %260 = vmatprep.subr.mxu0 0.0
    %261 = vmatpush2.msra.mxu0 0.0
    %262 = vmatprep.subr.mxu0 0.0
    %263 = vmatpush2.msra.mxu0 0.0
    %264 = vmatprep.subr.mxu0 0.0
    %265 = vmatpush2.msra.mxu0 0.0
    %266 = vmatprep.subr.mxu0 0.0
    %267 = vmatpush2.msra.mxu0 0.0
    %268 = vmatprep.subr.mxu0 0.0
    %269 = vmatpush2.msra.mxu0 0.0
    %270 = vmatprep.subr.mxu0 0.0
    %271 = vmatpush2.msra.mxu0 0.0
    %272 = vmatprep.subr.mxu0 0.0
    %273 = vmatpush2.msra.mxu0 0.0
    %274 = vmatprep.subr.mxu0 0.0
    %275 = vmatpush2.msra.mxu0 0.0
    %276 = vmatprep.subr.mxu0 0.0
    %277 = vmatpush2.msra.mxu0 0.0
    %278 = vmatprep.subr.mxu0 0.0
    %279 = vmatpush2.msra.mxu0 0.0
    %280 = vmatprep.subr.mxu0 0.0
    %281 = vmatpush2.msra.mxu0 0.0
    %282 = vmatprep.subr.mxu0 0.0
    %283 = vmatpush2.msra.mxu0 0.0
    %284 = vmatprep.subr.mxu0 0.0
    %285 = vmatpush2.msra.mxu0 0.0
    %286 = vmatprep.subr.mxu0 0.0
    %287 = vmatpush2.msra.mxu0 0.0
    %288 = vmatprep.mubr.f32.mxu0 0.0
    %289 = vmatmul.mubr.f32.gmra.mxu0 %v222
    %v290 = vpop.f32.mrf.mxu0
    %v291 = vadd.f32 0.0, %v290
    %v292 = vpop.f32.mrf.mxu0
    %293 = vdwg.mxu0
    %v298 = vrot.slane %v156, 7
    %vm299 = vcmask 1041409
    %v300 = vsel %vm299, %v298, %v155
    %v301 = vrot.slane %v157, 6
    %vm302 = vcmask 1042434
    %v303 = vsel %vm302, %v301, %v300
    %v304 = vrot.slane %v158, 5
    %vm305 = vcmask 1043459
    %v306 = vsel %vm305, %v304, %v303
    %v307 = vsel %vm220, %v306, 0
    %309 = vmatprep.subr.mxu0 0.0
    %310 = vmatpush1.msra.mxu0 0.0
    %311 = vmatprep.subr.mxu0 0.0
    %312 = vmatpush1.msra.mxu0 0.0
    %313 = vmatprep.subr.mxu0 0.0
    %314 = vmatpush1.msra.mxu0 0.0
    %315 = vmatprep.subr.mxu0 0.0
    %316 = vmatpush1.msra.mxu0 0.0
    %317 = vmatprep.subr.mxu0 0.0
    %318 = vmatpush1.msra.mxu0 0.0
    %319 = vmatprep.subr.mxu0 0.0
    %320 = vmatpush1.msra.mxu0 0.0
    %321 = vmatprep.subr.mxu0 0.0
    %322 = vmatpush1.msra.mxu0 0.0
    %323 = vmatprep.subr.mxu0 0.0
    %324 = vmatpush1.msra.mxu0 0.0
    %325 = vmatprep.subr.mxu0 0.0
    %326 = vmatpush1.msra.mxu0 0.0
    %327 = vmatprep.subr.mxu0 0.0
    %328 = vmatpush1.msra.mxu0 0.0
    %329 = vmatprep.subr.mxu0 0.0
    %330 = vmatpush1.msra.mxu0 %v164
    %331 = vmatprep.subr.mxu0 0.0
    %332 = vmatpush1.msra.mxu0 %v163
    %333 = vmatprep.subr.mxu0 0.0
    %334 = vmatpush1.msra.mxu0 %v162
    %335 = vmatprep.subr.mxu0 0.0
    %336 = vmatpush1.msra.mxu0 %v161
    %337 = vmatprep.subr.mxu0 0.0
    %338 = vmatpush1.msra.mxu0 %v160
    %339 = vmatprep.subr.mxu0 0.0
    %340 = vmatpush1.msra.mxu0 %v159
    %341 = vmatprep.subr.mxu0 0.0
    %342 = vmatpush2.msra.mxu0 0.0
    %343 = vmatprep.subr.mxu0 0.0
    %344 = vmatpush2.msra.mxu0 0.0
    %345 = vmatprep.subr.mxu0 0.0
    %346 = vmatpush2.msra.mxu0 0.0
    %347 = vmatprep.subr.mxu0 0.0
    %348 = vmatpush2.msra.mxu0 0.0
    %349 = vmatprep.subr.mxu0 0.0
    %350 = vmatpush2.msra.mxu0 0.0
    %351 = vmatprep.subr.mxu0 0.0
    %352 = vmatpush2.msra.mxu0 0.0
    %353 = vmatprep.subr.mxu0 0.0
    %354 = vmatpush2.msra.mxu0 0.0
    %355 = vmatprep.subr.mxu0 0.0
    %356 = vmatpush2.msra.mxu0 0.0
    %357 = vmatprep.subr.mxu0 0.0
    %358 = vmatpush2.msra.mxu0 0.0
    %359 = vmatprep.subr.mxu0 0.0
    %360 = vmatpush2.msra.mxu0 0.0
    %361 = vmatprep.subr.mxu0 0.0
    %362 = vmatpush2.msra.mxu0 0.0
    %363 = vmatprep.subr.mxu0 0.0
    %364 = vmatpush2.msra.mxu0 0.0
    %365 = vmatprep.subr.mxu0 0.0
    %366 = vmatpush2.msra.mxu0 0.0
    %367 = vmatprep.subr.mxu0 0.0
    %368 = vmatpush2.msra.mxu0 0.0
    %369 = vmatprep.subr.mxu0 0.0
    %370 = vmatpush2.msra.mxu0 0.0
    %371 = vmatprep.subr.mxu0 0.0
    %372 = vmatpush2.msra.mxu0 0.0
    %373 = vmatprep.mubr.f32.mxu0 0.0
    %374 = vmatmul.mubr.f32.gmra.mxu0 %v307
    %v375 = vpop.f32.mrf.mxu0
    %v376 = vadd.f32 %v291, %v375
    %v377 = vpop.f32.mrf.mxu0
    %378 = vdwg.mxu0
    %v380 = vlaneseq
    %v381 = vshrl.u32 %v380, 7
    %v382 = vsub.s32 0, %v381
    %v383 = vrot.slane %v213, %v382
    %v385 = vadd.f32 %v376, %v383
    %386 = vmatprep.subr.mxu0 0.0
    %387 = vmatpush1.msra.mxu0 0.0
    %388 = vmatprep.subr.mxu0 0.0
    %389 = vmatpush1.msra.mxu0 0.0
    %390 = vmatprep.subr.mxu0 0.0
    %391 = vmatpush1.msra.mxu0 0.0
    %392 = vmatprep.subr.mxu0 0.0
    %393 = vmatpush1.msra.mxu0 0.0
    %394 = vmatprep.subr.mxu0 0.0
    %395 = vmatpush1.msra.mxu0 0.0
    %396 = vmatprep.subr.mxu0 0.0
    %397 = vmatpush1.msra.mxu0 0.0
    %398 = vmatprep.subr.mxu0 0.0
    %399 = vmatpush1.msra.mxu0 0.0
    %400 = vmatprep.subr.mxu0 0.0
    %401 = vmatpush1.msra.mxu0 0.0
    %402 = vmatprep.subr.mxu0 0.0
    %403 = vmatpush1.msra.mxu0 0.0
    %404 = vmatprep.subr.mxu0 0.0
    %405 = vmatpush1.msra.mxu0 0.0
    %406 = vmatprep.subr.mxu0 0.0
    %407 = vmatpush1.msra.mxu0 %v198
    %408 = vmatprep.subr.mxu0 0.0
    %409 = vmatpush1.msra.mxu0 %v197
    %410 = vmatprep.subr.mxu0 0.0
    %411 = vmatpush1.msra.mxu0 %v196
    %412 = vmatprep.subr.mxu0 0.0
    %413 = vmatpush1.msra.mxu0 %v195
    %414 = vmatprep.subr.mxu0 0.0
    %415 = vmatpush1.msra.mxu0 %v194
    %416 = vmatprep.subr.mxu0 0.0
    %417 = vmatpush1.msra.mxu0 %v193
    %418 = vmatprep.subr.mxu0 0.0
    %419 = vmatpush2.msra.mxu0 0.0
    %420 = vmatprep.subr.mxu0 0.0
    %421 = vmatpush2.msra.mxu0 0.0
    %422 = vmatprep.subr.mxu0 0.0
    %423 = vmatpush2.msra.mxu0 0.0
    %424 = vmatprep.subr.mxu0 0.0
    %425 = vmatpush2.msra.mxu0 0.0
    %426 = vmatprep.subr.mxu0 0.0
    %427 = vmatpush2.msra.mxu0 0.0
    %428 = vmatprep.subr.mxu0 0.0
    %429 = vmatpush2.msra.mxu0 0.0
    %430 = vmatprep.subr.mxu0 0.0
    %431 = vmatpush2.msra.mxu0 0.0
    %432 = vmatprep.subr.mxu0 0.0
    %433 = vmatpush2.msra.mxu0 0.0
    %434 = vmatprep.subr.mxu0 0.0
    %435 = vmatpush2.msra.mxu0 0.0
    %436 = vmatprep.subr.mxu0 0.0
    %437 = vmatpush2.msra.mxu0 0.0
    %438 = vmatprep.subr.mxu0 0.0
    %439 = vmatpush2.msra.mxu0 0.0
    %440 = vmatprep.subr.mxu0 0.0
    %441 = vmatpush2.msra.mxu0 0.0
    %442 = vmatprep.subr.mxu0 0.0
    %443 = vmatpush2.msra.mxu0 0.0
    %444 = vmatprep.subr.mxu0 0.0
    %445 = vmatpush2.msra.mxu0 0.0
    %446 = vmatprep.subr.mxu0 0.0
    %447 = vmatpush2.msra.mxu0 0.0
    %448 = vmatprep.subr.mxu0 0.0
    %449 = vmatpush2.msra.mxu0 0.0
    %450 = vmatprep.mubr.f32.mxu0 0.0
    %451 = vmatmul.mubr.f32.gmra.mxu0 %v222
    %v452 = vpop.f32.mrf.mxu0
    %v453 = vadd.f32 0.0, %v452
    %v454 = vpop.f32.mrf.mxu0
    %455 = vdwg.mxu0
    %456 = vmatprep.subr.mxu0 0.0
    %457 = vmatpush1.msra.mxu0 0.0
    %458 = vmatprep.subr.mxu0 0.0
    %459 = vmatpush1.msra.mxu0 0.0
    %460 = vmatprep.subr.mxu0 0.0
    %461 = vmatpush1.msra.mxu0 0.0
    %462 = vmatprep.subr.mxu0 0.0
    %463 = vmatpush1.msra.mxu0 0.0
    %464 = vmatprep.subr.mxu0 0.0
    %465 = vmatpush1.msra.mxu0 0.0
    %466 = vmatprep.subr.mxu0 0.0
    %467 = vmatpush1.msra.mxu0 0.0
    %468 = vmatprep.subr.mxu0 0.0
    %469 = vmatpush1.msra.mxu0 0.0
    %470 = vmatprep.subr.mxu0 0.0
    %471 = vmatpush1.msra.mxu0 0.0
    %472 = vmatprep.subr.mxu0 0.0
    %473 = vmatpush1.msra.mxu0 0.0
    %474 = vmatprep.subr.mxu0 0.0
    %475 = vmatpush1.msra.mxu0 0.0
    %476 = vmatprep.subr.mxu0 0.0
    %477 = vmatpush1.msra.mxu0 %v171
    %478 = vmatprep.subr.mxu0 0.0
    %479 = vmatpush1.msra.mxu0 %v170
    %480 = vmatprep.subr.mxu0 0.0
    %481 = vmatpush1.msra.mxu0 %v169
    %482 = vmatprep.subr.mxu0 0.0
    %483 = vmatpush1.msra.mxu0 %v168
    %484 = vmatprep.subr.mxu0 0.0
    %485 = vmatpush1.msra.mxu0 %v167
    %486 = vmatprep.subr.mxu0 0.0
    %487 = vmatpush1.msra.mxu0 %v166
    %488 = vmatprep.subr.mxu0 0.0
    %489 = vmatpush2.msra.mxu0 0.0
    %490 = vmatprep.subr.mxu0 0.0
    %491 = vmatpush2.msra.mxu0 0.0
    %492 = vmatprep.subr.mxu0 0.0
    %493 = vmatpush2.msra.mxu0 0.0
    %494 = vmatprep.subr.mxu0 0.0
    %495 = vmatpush2.msra.mxu0 0.0
    %496 = vmatprep.subr.mxu0 0.0
    %497 = vmatpush2.msra.mxu0 0.0
    %498 = vmatprep.subr.mxu0 0.0
    %499 = vmatpush2.msra.mxu0 0.0
    %500 = vmatprep.subr.mxu0 0.0
    %501 = vmatpush2.msra.mxu0 0.0
    %502 = vmatprep.subr.mxu0 0.0
    %503 = vmatpush2.msra.mxu0 0.0
    %504 = vmatprep.subr.mxu0 0.0
    %505 = vmatpush2.msra.mxu0 0.0
    %506 = vmatprep.subr.mxu0 0.0
    %507 = vmatpush2.msra.mxu0 0.0
    %508 = vmatprep.subr.mxu0 0.0
    %509 = vmatpush2.msra.mxu0 0.0
    %510 = vmatprep.subr.mxu0 0.0
    %511 = vmatpush2.msra.mxu0 0.0
    %512 = vmatprep.subr.mxu0 0.0
    %513 = vmatpush2.msra.mxu0 0.0
    %514 = vmatprep.subr.mxu0 0.0
    %515 = vmatpush2.msra.mxu0 0.0
    %516 = vmatprep.subr.mxu0 0.0
    %517 = vmatpush2.msra.mxu0 0.0
    %518 = vmatprep.subr.mxu0 0.0
    %519 = vmatpush2.msra.mxu0 0.0
    %520 = vmatprep.mubr.f32.mxu0 0.0
    %521 = vmatmul.mubr.f32.gmra.mxu0 %v307
    %v522 = vpop.f32.mrf.mxu0
    %v523 = vadd.f32 %v453, %v522
    %v524 = vpop.f32.mrf.mxu0
    %525 = vdwg.mxu0
    %v527 = vlaneseq
    %v528 = vshrl.u32 %v527, 7
    %v529 = vsub.s32 0, %v528
    %v530 = vrot.slane %v215, %v529
    %v532 = vadd.f32 %v523, %v530
    %533 = vmatprep.subr.mxu0 0.0
    %534 = vmatpush1.msra.mxu0 0.0
    %535 = vmatprep.subr.mxu0 0.0
    %536 = vmatpush1.msra.mxu0 0.0
    %537 = vmatprep.subr.mxu0 0.0
    %538 = vmatpush1.msra.mxu0 0.0
    %539 = vmatprep.subr.mxu0 0.0
    %540 = vmatpush1.msra.mxu0 0.0
    %541 = vmatprep.subr.mxu0 0.0
    %542 = vmatpush1.msra.mxu0 0.0
    %543 = vmatprep.subr.mxu0 0.0
    %544 = vmatpush1.msra.mxu0 0.0
    %545 = vmatprep.subr.mxu0 0.0
    %546 = vmatpush1.msra.mxu0 0.0
    %547 = vmatprep.subr.mxu0 0.0
    %548 = vmatpush1.msra.mxu0 0.0
    %549 = vmatprep.subr.mxu0 0.0
    %550 = vmatpush1.msra.mxu0 0.0
    %551 = vmatprep.subr.mxu0 0.0
    %552 = vmatpush1.msra.mxu0 0.0
    %553 = vmatprep.subr.mxu0 0.0
    %554 = vmatpush1.msra.mxu0 %v205
    %555 = vmatprep.subr.mxu0 0.0
    %556 = vmatpush1.msra.mxu0 %v204
    %557 = vmatprep.subr.mxu0 0.0
    %558 = vmatpush1.msra.mxu0 %v203
    %559 = vmatprep.subr.mxu0 0.0
    %560 = vmatpush1.msra.mxu0 %v202
    %561 = vmatprep.subr.mxu0 0.0
    %562 = vmatpush1.msra.mxu0 %v201
    %563 = vmatprep.subr.mxu0 0.0
    %564 = vmatpush1.msra.mxu0 %v200
    %565 = vmatprep.subr.mxu0 0.0
    %566 = vmatpush2.msra.mxu0 0.0
    %567 = vmatprep.subr.mxu0 0.0
    %568 = vmatpush2.msra.mxu0 0.0
    %569 = vmatprep.subr.mxu0 0.0
    %570 = vmatpush2.msra.mxu0 0.0
    %571 = vmatprep.subr.mxu0 0.0
    %572 = vmatpush2.msra.mxu0 0.0
    %573 = vmatprep.subr.mxu0 0.0
    %574 = vmatpush2.msra.mxu0 0.0
    %575 = vmatprep.subr.mxu0 0.0
    %576 = vmatpush2.msra.mxu0 0.0
    %577 = vmatprep.subr.mxu0 0.0
    %578 = vmatpush2.msra.mxu0 0.0
    %579 = vmatprep.subr.mxu0 0.0
    %580 = vmatpush2.msra.mxu0 0.0
    %581 = vmatprep.subr.mxu0 0.0
    %582 = vmatpush2.msra.mxu0 0.0
    %583 = vmatprep.subr.mxu0 0.0
    %584 = vmatpush2.msra.mxu0 0.0
    %585 = vmatprep.subr.mxu0 0.0
    %586 = vmatpush2.msra.mxu0 0.0
    %587 = vmatprep.subr.mxu0 0.0
    %588 = vmatpush2.msra.mxu0 0.0
    %589 = vmatprep.subr.mxu0 0.0
    %590 = vmatpush2.msra.mxu0 0.0
    %591 = vmatprep.subr.mxu0 0.0
    %592 = vmatpush2.msra.mxu0 0.0
    %593 = vmatprep.subr.mxu0 0.0
    %594 = vmatpush2.msra.mxu0 0.0
    %595 = vmatprep.subr.mxu0 0.0
    %596 = vmatpush2.msra.mxu0 0.0
    %597 = vmatprep.mubr.f32.mxu0 0.0
    %598 = vmatmul.mubr.f32.gmra.mxu0 %v222
    %v599 = vpop.f32.mrf.mxu0
    %v600 = vadd.f32 0.0, %v599
    %v601 = vpop.f32.mrf.mxu0
    %602 = vdwg.mxu0
    %603 = vmatprep.subr.mxu0 0.0
    %604 = vmatpush1.msra.mxu0 0.0
    %605 = vmatprep.subr.mxu0 0.0
    %606 = vmatpush1.msra.mxu0 0.0
    %607 = vmatprep.subr.mxu0 0.0
    %608 = vmatpush1.msra.mxu0 0.0
    %609 = vmatprep.subr.mxu0 0.0
    %610 = vmatpush1.msra.mxu0 0.0
    %611 = vmatprep.subr.mxu0 0.0
    %612 = vmatpush1.msra.mxu0 0.0
    %613 = vmatprep.subr.mxu0 0.0
    %614 = vmatpush1.msra.mxu0 0.0
    %615 = vmatprep.subr.mxu0 0.0
    %616 = vmatpush1.msra.mxu0 0.0
    %617 = vmatprep.subr.mxu0 0.0
    %618 = vmatpush1.msra.mxu0 0.0
    %619 = vmatprep.subr.mxu0 0.0
    %620 = vmatpush1.msra.mxu0 0.0
    %621 = vmatprep.subr.mxu0 0.0
    %622 = vmatpush1.msra.mxu0 0.0
    %623 = vmatprep.subr.mxu0 0.0
    %624 = vmatpush1.msra.mxu0 %v178
    %625 = vmatprep.subr.mxu0 0.0
    %626 = vmatpush1.msra.mxu0 %v177
    %627 = vmatprep.subr.mxu0 0.0
    %628 = vmatpush1.msra.mxu0 %v176
    %629 = vmatprep.subr.mxu0 0.0
    %630 = vmatpush1.msra.mxu0 %v175
    %631 = vmatprep.subr.mxu0 0.0
    %632 = vmatpush1.msra.mxu0 %v174
    %633 = vmatprep.subr.mxu0 0.0
    %634 = vmatpush1.msra.mxu0 %v173
    %635 = vmatprep.subr.mxu0 0.0
    %636 = vmatpush2.msra.mxu0 0.0
    %637 = vmatprep.subr.mxu0 0.0
    %638 = vmatpush2.msra.mxu0 0.0
    %639 = vmatprep.subr.mxu0 0.0
    %640 = vmatpush2.msra.mxu0 0.0
    %641 = vmatprep.subr.mxu0 0.0
    %642 = vmatpush2.msra.mxu0 0.0
    %643 = vmatprep.subr.mxu0 0.0
    %644 = vmatpush2.msra.mxu0 0.0
    %645 = vmatprep.subr.mxu0 0.0
    %646 = vmatpush2.msra.mxu0 0.0
    %647 = vmatprep.subr.mxu0 0.0
    %648 = vmatpush2.msra.mxu0 0.0
    %649 = vmatprep.subr.mxu0 0.0
    %650 = vmatpush2.msra.mxu0 0.0
    %651 = vmatprep.subr.mxu0 0.0
    %652 = vmatpush2.msra.mxu0 0.0
    %653 = vmatprep.subr.mxu0 0.0
    %654 = vmatpush2.msra.mxu0 0.0
    %655 = vmatprep.subr.mxu0 0.0
    %656 = vmatpush2.msra.mxu0 0.0
    %657 = vmatprep.subr.mxu0 0.0
    %658 = vmatpush2.msra.mxu0 0.0
    %659 = vmatprep.subr.mxu0 0.0
    %660 = vmatpush2.msra.mxu0 0.0
    %661 = vmatprep.subr.mxu0 0.0
    %662 = vmatpush2.msra.mxu0 0.0
    %663 = vmatprep.subr.mxu0 0.0
    %664 = vmatpush2.msra.mxu0 0.0
    %665 = vmatprep.subr.mxu0 0.0
    %666 = vmatpush2.msra.mxu0 0.0
    %667 = vmatprep.mubr.f32.mxu0 0.0
    %668 = vmatmul.mubr.f32.gmra.mxu0 %v307
    %v669 = vpop.f32.mrf.mxu0
    %v670 = vadd.f32 %v600, %v669
    %v671 = vpop.f32.mrf.mxu0
    %672 = vdwg.mxu0
    %v674 = vlaneseq
    %v675 = vshrl.u32 %v674, 7
    %v676 = vsub.s32 0, %v675
    %v677 = vrot.slane %v217, %v676
    %v679 = vadd.f32 %v670, %v677
    %680 = vmatprep.subr.mxu0 0.0
    %681 = vmatpush1.msra.mxu0 0.0
    %682 = vmatprep.subr.mxu0 0.0
    %683 = vmatpush1.msra.mxu0 0.0
    %684 = vmatprep.subr.mxu0 0.0
    %685 = vmatpush1.msra.mxu0 0.0
    %686 = vmatprep.subr.mxu0 0.0
    %687 = vmatpush1.msra.mxu0 0.0
    %688 = vmatprep.subr.mxu0 0.0
    %689 = vmatpush1.msra.mxu0 0.0
    %690 = vmatprep.subr.mxu0 0.0
    %691 = vmatpush1.msra.mxu0 0.0
    %692 = vmatprep.subr.mxu0 0.0
    %693 = vmatpush1.msra.mxu0 0.0
    %694 = vmatprep.subr.mxu0 0.0
    %695 = vmatpush1.msra.mxu0 0.0
    %696 = vmatprep.subr.mxu0 0.0
    %697 = vmatpush1.msra.mxu0 0.0
    %698 = vmatprep.subr.mxu0 0.0
    %699 = vmatpush1.msra.mxu0 0.0
    %700 = vmatprep.subr.mxu0 0.0
    %701 = vmatpush1.msra.mxu0 %v212
    %702 = vmatprep.subr.mxu0 0.0
    %703 = vmatpush1.msra.mxu0 %v211
    %704 = vmatprep.subr.mxu0 0.0
    %705 = vmatpush1.msra.mxu0 %v210
    %706 = vmatprep.subr.mxu0 0.0
    %707 = vmatpush1.msra.mxu0 %v209
    %708 = vmatprep.subr.mxu0 0.0
    %709 = vmatpush1.msra.mxu0 %v208
    %710 = vmatprep.subr.mxu0 0.0
    %711 = vmatpush1.msra.mxu0 %v207
    %712 = vmatprep.subr.mxu0 0.0
    %713 = vmatpush2.msra.mxu0 0.0
    %714 = vmatprep.subr.mxu0 0.0
    %715 = vmatpush2.msra.mxu0 0.0
    %716 = vmatprep.subr.mxu0 0.0
    %717 = vmatpush2.msra.mxu0 0.0
    %718 = vmatprep.subr.mxu0 0.0
    %719 = vmatpush2.msra.mxu0 0.0
    %720 = vmatprep.subr.mxu0 0.0
    %721 = vmatpush2.msra.mxu0 0.0
    %722 = vmatprep.subr.mxu0 0.0
    %723 = vmatpush2.msra.mxu0 0.0
    %724 = vmatprep.subr.mxu0 0.0
    %725 = vmatpush2.msra.mxu0 0.0
    %726 = vmatprep.subr.mxu0 0.0
    %727 = vmatpush2.msra.mxu0 0.0
    %728 = vmatprep.subr.mxu0 0.0
    %729 = vmatpush2.msra.mxu0 0.0
    %730 = vmatprep.subr.mxu0 0.0
    %731 = vmatpush2.msra.mxu0 0.0
    %732 = vmatprep.subr.mxu0 0.0
    %733 = vmatpush2.msra.mxu0 0.0
    %734 = vmatprep.subr.mxu0 0.0
    %735 = vmatpush2.msra.mxu0 0.0
    %736 = vmatprep.subr.mxu0 0.0
    %737 = vmatpush2.msra.mxu0 0.0
    %738 = vmatprep.subr.mxu0 0.0
    %739 = vmatpush2.msra.mxu0 0.0
    %740 = vmatprep.subr.mxu0 0.0
    %741 = vmatpush2.msra.mxu0 0.0
    %742 = vmatprep.subr.mxu0 0.0
    %743 = vmatpush2.msra.mxu0 0.0
    %744 = vmatprep.mubr.f32.mxu0 0.0
    %745 = vmatmul.mubr.f32.gmra.mxu0 %v222
    %v746 = vpop.f32.mrf.mxu0
    %v747 = vadd.f32 0.0, %v746
    %v748 = vpop.f32.mrf.mxu0
    %749 = vdwg.mxu0
    %750 = vmatprep.subr.mxu0 0.0
    %751 = vmatpush1.msra.mxu0 0.0
    %752 = vmatprep.subr.mxu0 0.0
    %753 = vmatpush1.msra.mxu0 0.0
    %754 = vmatprep.subr.mxu0 0.0
    %755 = vmatpush1.msra.mxu0 0.0
    %756 = vmatprep.subr.mxu0 0.0
    %757 = vmatpush1.msra.mxu0 0.0
    %758 = vmatprep.subr.mxu0 0.0
    %759 = vmatpush1.msra.mxu0 0.0
    %760 = vmatprep.subr.mxu0 0.0
    %761 = vmatpush1.msra.mxu0 0.0
    %762 = vmatprep.subr.mxu0 0.0
    %763 = vmatpush1.msra.mxu0 0.0
    %764 = vmatprep.subr.mxu0 0.0
    %765 = vmatpush1.msra.mxu0 0.0
    %766 = vmatprep.subr.mxu0 0.0
    %767 = vmatpush1.msra.mxu0 0.0
    %768 = vmatprep.subr.mxu0 0.0
    %769 = vmatpush1.msra.mxu0 0.0
    %770 = vmatprep.subr.mxu0 0.0
    %771 = vmatpush1.msra.mxu0 %v185
    %772 = vmatprep.subr.mxu0 0.0
    %773 = vmatpush1.msra.mxu0 %v184
    %774 = vmatprep.subr.mxu0 0.0
    %775 = vmatpush1.msra.mxu0 %v183
    %776 = vmatprep.subr.mxu0 0.0
    %777 = vmatpush1.msra.mxu0 %v182
    %778 = vmatprep.subr.mxu0 0.0
    %779 = vmatpush1.msra.mxu0 %v181
    %780 = vmatprep.subr.mxu0 0.0
    %781 = vmatpush1.msra.mxu0 %v180
    %782 = vmatprep.subr.mxu0 0.0
    %783 = vmatpush2.msra.mxu0 0.0
    %784 = vmatprep.subr.mxu0 0.0
    %785 = vmatpush2.msra.mxu0 0.0
    %786 = vmatprep.subr.mxu0 0.0
    %787 = vmatpush2.msra.mxu0 0.0
    %788 = vmatprep.subr.mxu0 0.0
    %789 = vmatpush2.msra.mxu0 0.0
    %790 = vmatprep.subr.mxu0 0.0
    %791 = vmatpush2.msra.mxu0 0.0
    %792 = vmatprep.subr.mxu0 0.0
    %793 = vmatpush2.msra.mxu0 0.0
    %794 = vmatprep.subr.mxu0 0.0
    %795 = vmatpush2.msra.mxu0 0.0
    %796 = vmatprep.subr.mxu0 0.0
    %797 = vmatpush2.msra.mxu0 0.0
    %798 = vmatprep.subr.mxu0 0.0
    %799 = vmatpush2.msra.mxu0 0.0
    %800 = vmatprep.subr.mxu0 0.0
    %801 = vmatpush2.msra.mxu0 0.0
    %802 = vmatprep.subr.mxu0 0.0
    %803 = vmatpush2.msra.mxu0 0.0
    %804 = vmatprep.subr.mxu0 0.0
    %805 = vmatpush2.msra.mxu0 0.0
    %806 = vmatprep.subr.mxu0 0.0
    %807 = vmatpush2.msra.mxu0 0.0
    %808 = vmatprep.subr.mxu0 0.0
    %809 = vmatpush2.msra.mxu0 0.0
    %810 = vmatprep.subr.mxu0 0.0
    %811 = vmatpush2.msra.mxu0 0.0
    %812 = vmatprep.subr.mxu0 0.0
    %813 = vmatpush2.msra.mxu0 0.0
    %814 = vmatprep.mubr.f32.mxu0 0.0
    %815 = vmatmul.mubr.f32.gmra.mxu0 %v307
    %v816 = vpop.f32.mrf.mxu0
    %v817 = vadd.f32 %v747, %v816
    %v818 = vpop.f32.mrf.mxu0
    %819 = vdwg.mxu0
    %v821 = vlaneseq
    %v822 = vshrl.u32 %v821, 7
    %v823 = vsub.s32 0, %v822
    %v824 = vrot.slane %v219, %v823
    %v826 = vadd.f32 %v817, %v824
    %v827 = vxor.u32 %v532, 2147483648
    %v828 = vmul.f32 %v827, 1.442695
    %v829 = vpow.pop %v828
    %v830 = vadd.f32 %v829, 1.0
    %v831 = vrcp.pop %v830
    %v832 = vmul.f32 1.0, %v831
    %v833 = vmul.f32 %v832, 0.0
    %v834 = vxor.u32 %v385, 2147483648
    %v835 = vmul.f32 %v834, 1.442695
    %v836 = vpow.pop %v835
    %v837 = vadd.f32 %v836, 1.0
    %v838 = vrcp.pop %v837
    %v839 = vmul.f32 1.0, %v838
    %v840 = vtanh.pop %v679
    %v841 = vmul.f32 %v839, %v840
    %v842 = vadd.f32 %v833, %v841
    %v843 = vxor.u32 %v826, 2147483648
    %v844 = vmul.f32 %v843, 1.442695
    %v845 = vpow.pop %v844
    %v846 = vadd.f32 %v845, 1.0
    %v847 = vrcp.pop %v846
    %v848 = vmul.f32 1.0, %v847
    %v849 = vtanh.pop %v842
    %v850 = vmul.f32 %v848, %v849
    %v852 = vsel %vm220, %v850, 0
    %854 = vmatprep.subr.mxu0 0.0
    %855 = vmatpush1.msra.mxu0 0.0
    %856 = vmatprep.subr.mxu0 0.0
    %857 = vmatpush1.msra.mxu0 0.0
    %858 = vmatprep.subr.mxu0 0.0
    %859 = vmatpush1.msra.mxu0 0.0
    %860 = vmatprep.subr.mxu0 0.0
    %861 = vmatpush1.msra.mxu0 0.0
    %862 = vmatprep.subr.mxu0 0.0
    %863 = vmatpush1.msra.mxu0 0.0
    %864 = vmatprep.subr.mxu0 0.0
    %865 = vmatpush1.msra.mxu0 0.0
    %866 = vmatprep.subr.mxu0 0.0
    %867 = vmatpush1.msra.mxu0 0.0
    %868 = vmatprep.subr.mxu0 0.0
    %869 = vmatpush1.msra.mxu0 0.0
    %870 = vmatprep.subr.mxu0 0.0
    %871 = vmatpush1.msra.mxu0 0.0
    %872 = vmatprep.subr.mxu0 0.0
    %873 = vmatpush1.msra.mxu0 0.0
    %874 = vmatprep.subr.mxu0 0.0
    %875 = vmatpush1.msra.mxu0 %v191
    %876 = vmatprep.subr.mxu0 0.0
    %877 = vmatpush1.msra.mxu0 %v190
    %878 = vmatprep.subr.mxu0 0.0
    %879 = vmatpush1.msra.mxu0 %v189
    %880 = vmatprep.subr.mxu0 0.0
    %881 = vmatpush1.msra.mxu0 %v188
    %882 = vmatprep.subr.mxu0 0.0
    %883 = vmatpush1.msra.mxu0 %v187
    %884 = vmatprep.subr.mxu0 0.0
    %885 = vmatpush1.msra.mxu0 %v186
    %886 = vmatprep.subr.mxu0 0.0
    %887 = vmatpush2.msra.mxu0 0.0
    %888 = vmatprep.subr.mxu0 0.0
    %889 = vmatpush2.msra.mxu0 0.0
    %890 = vmatprep.subr.mxu0 0.0
    %891 = vmatpush2.msra.mxu0 0.0
    %892 = vmatprep.subr.mxu0 0.0
    %893 = vmatpush2.msra.mxu0 0.0
    %894 = vmatprep.subr.mxu0 0.0
    %895 = vmatpush2.msra.mxu0 0.0
    %896 = vmatprep.subr.mxu0 0.0
    %897 = vmatpush2.msra.mxu0 0.0
    %898 = vmatprep.subr.mxu0 0.0
    %899 = vmatpush2.msra.mxu0 0.0
    %900 = vmatprep.subr.mxu0 0.0
    %901 = vmatpush2.msra.mxu0 0.0
    %902 = vmatprep.subr.mxu0 0.0
    %903 = vmatpush2.msra.mxu0 0.0
    %904 = vmatprep.subr.mxu0 0.0
    %905 = vmatpush2.msra.mxu0 0.0
    %906 = vmatprep.subr.mxu0 0.0
    %907 = vmatpush2.msra.mxu0 0.0
    %908 = vmatprep.subr.mxu0 0.0
    %909 = vmatpush2.msra.mxu0 0.0
    %910 = vmatprep.subr.mxu0 0.0
    %911 = vmatpush2.msra.mxu0 0.0
    %912 = vmatprep.subr.mxu0 0.0
    %913 = vmatpush2.msra.mxu0 0.0
    %914 = vmatprep.subr.mxu0 0.0
    %915 = vmatpush2.msra.mxu0 0.0
    %916 = vmatprep.subr.mxu0 0.0
    %917 = vmatpush2.msra.mxu0 0.0
    %918 = vmatprep.mubr.f32.mxu0 0.0
    %919 = vmatmul.mubr.f32.gmra.mxu0 %v852
    %v920 = vpop.f32.mrf.mxu0
    %v921 = vadd.f32 0.0, %v920
    %v922 = vpop.f32.mrf.mxu0
    %923 = vdwg.mxu0
    %v924 = vrot.slane %v155, 1
    %v925 = vsel %vm299, %v156, %v924
    %v926 = vrot.slane %v157, 7
    %v927 = vsel %vm302, %v926, %v925
    %v928 = vrot.slane %v158, 6
    %v929 = vsel %vm305, %v928, %v927
    %v930 = vsel %vm220, %v929, 0
    %932 = vmatprep.subr.mxu0 0.0
    %933 = vmatpush1.msra.mxu0 0.0
    %934 = vmatprep.subr.mxu0 0.0
    %935 = vmatpush1.msra.mxu0 0.0
    %936 = vmatprep.subr.mxu0 0.0
    %937 = vmatpush1.msra.mxu0 0.0
    %938 = vmatprep.subr.mxu0 0.0
    %939 = vmatpush1.msra.mxu0 0.0
    %940 = vmatprep.subr.mxu0 0.0
    %941 = vmatpush1.msra.mxu0 0.0
    %942 = vmatprep.subr.mxu0 0.0
    %943 = vmatpush1.msra.mxu0 0.0
    %944 = vmatprep.subr.mxu0 0.0
    %945 = vmatpush1.msra.mxu0 0.0
    %946 = vmatprep.subr.mxu0 0.0
    %947 = vmatpush1.msra.mxu0 0.0
    %948 = vmatprep.subr.mxu0 0.0
    %949 = vmatpush1.msra.mxu0 0.0
    %950 = vmatprep.subr.mxu0 0.0
    %951 = vmatpush1.msra.mxu0 0.0
    %952 = vmatprep.subr.mxu0 0.0
    %953 = vmatpush1.msra.mxu0 %v164
    %954 = vmatprep.subr.mxu0 0.0
    %955 = vmatpush1.msra.mxu0 %v163
    %956 = vmatprep.subr.mxu0 0.0
    %957 = vmatpush1.msra.mxu0 %v162
    %958 = vmatprep.subr.mxu0 0.0
    %959 = vmatpush1.msra.mxu0 %v161
    %960 = vmatprep.subr.mxu0 0.0
    %961 = vmatpush1.msra.mxu0 %v160
    %962 = vmatprep.subr.mxu0 0.0
    %963 = vmatpush1.msra.mxu0 %v159
    %964 = vmatprep.subr.mxu0 0.0
    %965 = vmatpush2.msra.mxu0 0.0
    %966 = vmatprep.subr.mxu0 0.0
    %967 = vmatpush2.msra.mxu0 0.0
    %968 = vmatprep.subr.mxu0 0.0
    %969 = vmatpush2.msra.mxu0 0.0
    %970 = vmatprep.subr.mxu0 0.0
    %971 = vmatpush2.msra.mxu0 0.0
    %972 = vmatprep.subr.mxu0 0.0
    %973 = vmatpush2.msra.mxu0 0.0
    %974 = vmatprep.subr.mxu0 0.0
    %975 = vmatpush2.msra.mxu0 0.0
    %976 = vmatprep.subr.mxu0 0.0
    %977 = vmatpush2.msra.mxu0 0.0
    %978 = vmatprep.subr.mxu0 0.0
    %979 = vmatpush2.msra.mxu0 0.0
    %980 = vmatprep.subr.mxu0 0.0
    %981 = vmatpush2.msra.mxu0 0.0
    %982 = vmatprep.subr.mxu0 0.0
    %983 = vmatpush2.msra.mxu0 0.0
    %984 = vmatprep.subr.mxu0 0.0
    %985 = vmatpush2.msra.mxu0 0.0
    %986 = vmatprep.subr.mxu0 0.0
    %987 = vmatpush2.msra.mxu0 0.0
    %988 = vmatprep.subr.mxu0 0.0
    %989 = vmatpush2.msra.mxu0 0.0
    %990 = vmatprep.subr.mxu0 0.0
    %991 = vmatpush2.msra.mxu0 0.0
    %992 = vmatprep.subr.mxu0 0.0
    %993 = vmatpush2.msra.mxu0 0.0
    %994 = vmatprep.subr.mxu0 0.0
    %995 = vmatpush2.msra.mxu0 0.0
    %996 = vmatprep.mubr.f32.mxu0 0.0
    %997 = vmatmul.mubr.f32.gmra.mxu0 %v930
    %v998 = vpop.f32.mrf.mxu0
    %v999 = vadd.f32 %v921, %v998
    %v1000 = vpop.f32.mrf.mxu0
    %1001 = vdwg.mxu0
    %v1002 = vadd.f32 %v999, %v383
    %1003 = vmatprep.subr.mxu0 0.0
    %1004 = vmatpush1.msra.mxu0 0.0
    %1005 = vmatprep.subr.mxu0 0.0
    %1006 = vmatpush1.msra.mxu0 0.0
    %1007 = vmatprep.subr.mxu0 0.0
    %1008 = vmatpush1.msra.mxu0 0.0
    %1009 = vmatprep.subr.mxu0 0.0
    %1010 = vmatpush1.msra.mxu0 0.0
    %1011 = vmatprep.subr.mxu0 0.0
    %1012 = vmatpush1.msra.mxu0 0.0
    %1013 = vmatprep.subr.mxu0 0.0
    %1014 = vmatpush1.msra.mxu0 0.0
    %1015 = vmatprep.subr.mxu0 0.0
    %1016 = vmatpush1.msra.mxu0 0.0
    %1017 = vmatprep.subr.mxu0 0.0
    %1018 = vmatpush1.msra.mxu0 0.0
    %1019 = vmatprep.subr.mxu0 0.0
    %1020 = vmatpush1.msra.mxu0 0.0
    %1021 = vmatprep.subr.mxu0 0.0
    %1022 = vmatpush1.msra.mxu0 0.0
    %1023 = vmatprep.subr.mxu0 0.0
    %1024 = vmatpush1.msra.mxu0 %v198
    %1025 = vmatprep.subr.mxu0 0.0
    %1026 = vmatpush1.msra.mxu0 %v197
    %1027 = vmatprep.subr.mxu0 0.0
    %1028 = vmatpush1.msra.mxu0 %v196
    %1029 = vmatprep.subr.mxu0 0.0
    %1030 = vmatpush1.msra.mxu0 %v195
    %1031 = vmatprep.subr.mxu0 0.0
    %1032 = vmatpush1.msra.mxu0 %v194
    %1033 = vmatprep.subr.mxu0 0.0
    %1034 = vmatpush1.msra.mxu0 %v193
    %1035 = vmatprep.subr.mxu0 0.0
    %1036 = vmatpush2.msra.mxu0 0.0
    %1037 = vmatprep.subr.mxu0 0.0
    %1038 = vmatpush2.msra.mxu0 0.0
    %1039 = vmatprep.subr.mxu0 0.0
    %1040 = vmatpush2.msra.mxu0 0.0
    %1041 = vmatprep.subr.mxu0 0.0
    %1042 = vmatpush2.msra.mxu0 0.0
    %1043 = vmatprep.subr.mxu0 0.0
    %1044 = vmatpush2.msra.mxu0 0.0
    %1045 = vmatprep.subr.mxu0 0.0
    %1046 = vmatpush2.msra.mxu0 0.0
    %1047 = vmatprep.subr.mxu0 0.0
    %1048 = vmatpush2.msra.mxu0 0.0
    %1049 = vmatprep.subr.mxu0 0.0
    %1050 = vmatpush2.msra.mxu0 0.0
    %1051 = vmatprep.subr.mxu0 0.0
    %1052 = vmatpush2.msra.mxu0 0.0
    %1053 = vmatprep.subr.mxu0 0.0
    %1054 = vmatpush2.msra.mxu0 0.0
    %1055 = vmatprep.subr.mxu0 0.0
    %1056 = vmatpush2.msra.mxu0 0.0
    %1057 = vmatprep.subr.mxu0 0.0
    %1058 = vmatpush2.msra.mxu0 0.0
    %1059 = vmatprep.subr.mxu0 0.0
    %1060 = vmatpush2.msra.mxu0 0.0
    %1061 = vmatprep.subr.mxu0 0.0
    %1062 = vmatpush2.msra.mxu0 0.0
    %1063 = vmatprep.subr.mxu0 0.0
    %1064 = vmatpush2.msra.mxu0 0.0
    %1065 = vmatprep.subr.mxu0 0.0
    %1066 = vmatpush2.msra.mxu0 0.0
    %1067 = vmatprep.mubr.f32.mxu0 0.0
    %1068 = vmatmul.mubr.f32.gmra.mxu0 %v852
    %v1069 = vpop.f32.mrf.mxu0
    %v1070 = vadd.f32 0.0, %v1069
    %v1071 = vpop.f32.mrf.mxu0
    %1072 = vdwg.mxu0
    %1073 = vmatprep.subr.mxu0 0.0
    %1074 = vmatpush1.msra.mxu0 0.0
    %1075 = vmatprep.subr.mxu0 0.0
    %1076 = vmatpush1.msra.mxu0 0.0
    %1077 = vmatprep.subr.mxu0 0.0
    %1078 = vmatpush1.msra.mxu0 0.0
    %1079 = vmatprep.subr.mxu0 0.0
    %1080 = vmatpush1.msra.mxu0 0.0
    %1081 = vmatprep.subr.mxu0 0.0
    %1082 = vmatpush1.msra.mxu0 0.0
    %1083 = vmatprep.subr.mxu0 0.0
    %1084 = vmatpush1.msra.mxu0 0.0
    %1085 = vmatprep.subr.mxu0 0.0
    %1086 = vmatpush1.msra.mxu0 0.0
    %1087 = vmatprep.subr.mxu0 0.0
    %1088 = vmatpush1.msra.mxu0 0.0
    %1089 = vmatprep.subr.mxu0 0.0
    %1090 = vmatpush1.msra.mxu0 0.0
    %1091 = vmatprep.subr.mxu0 0.0
    %1092 = vmatpush1.msra.mxu0 0.0
    %1093 = vmatprep.subr.mxu0 0.0
    %1094 = vmatpush1.msra.mxu0 %v171
    %1095 = vmatprep.subr.mxu0 0.0
    %1096 = vmatpush1.msra.mxu0 %v170
    %1097 = vmatprep.subr.mxu0 0.0
    %1098 = vmatpush1.msra.mxu0 %v169
    %1099 = vmatprep.subr.mxu0 0.0
    %1100 = vmatpush1.msra.mxu0 %v168
    %1101 = vmatprep.subr.mxu0 0.0
    %1102 = vmatpush1.msra.mxu0 %v167
    %1103 = vmatprep.subr.mxu0 0.0
    %1104 = vmatpush1.msra.mxu0 %v166
    %1105 = vmatprep.subr.mxu0 0.0
    %1106 = vmatpush2.msra.mxu0 0.0
    %1107 = vmatprep.subr.mxu0 0.0
    %1108 = vmatpush2.msra.mxu0 0.0
    %1109 = vmatprep.subr.mxu0 0.0
    %1110 = vmatpush2.msra.mxu0 0.0
    %1111 = vmatprep.subr.mxu0 0.0
    %1112 = vmatpush2.msra.mxu0 0.0
    %1113 = vmatprep.subr.mxu0 0.0
    %1114 = vmatpush2.msra.mxu0 0.0
    %1115 = vmatprep.subr.mxu0 0.0
    %1116 = vmatpush2.msra.mxu0 0.0
    %1117 = vmatprep.subr.mxu0 0.0
    %1118 = vmatpush2.msra.mxu0 0.0
    %1119 = vmatprep.subr.mxu0 0.0
    %1120 = vmatpush2.msra.mxu0 0.0
    %1121 = vmatprep.subr.mxu0 0.0
    %1122 = vmatpush2.msra.mxu0 0.0
    %1123 = vmatprep.subr.mxu0 0.0
    %1124 = vmatpush2.msra.mxu0 0.0
    %1125 = vmatprep.subr.mxu0 0.0
    %1126 = vmatpush2.msra.mxu0 0.0
    %1127 = vmatprep.subr.mxu0 0.0
    %1128 = vmatpush2.msra.mxu0 0.0
    %1129 = vmatprep.subr.mxu0 0.0
    %1130 = vmatpush2.msra.mxu0 0.0
    %1131 = vmatprep.subr.mxu0 0.0
    %1132 = vmatpush2.msra.mxu0 0.0
    %1133 = vmatprep.subr.mxu0 0.0
    %1134 = vmatpush2.msra.mxu0 0.0
    %1135 = vmatprep.subr.mxu0 0.0
    %1136 = vmatpush2.msra.mxu0 0.0
    %1137 = vmatprep.mubr.f32.mxu0 0.0
    %1138 = vmatmul.mubr.f32.gmra.mxu0 %v930
    %v1139 = vpop.f32.mrf.mxu0
    %v1140 = vadd.f32 %v1070, %v1139
    %v1141 = vpop.f32.mrf.mxu0
    %1142 = vdwg.mxu0
    %v1143 = vadd.f32 %v1140, %v530
    %1144 = vmatprep.subr.mxu0 0.0
    %1145 = vmatpush1.msra.mxu0 0.0
    %1146 = vmatprep.subr.mxu0 0.0
    %1147 = vmatpush1.msra.mxu0 0.0
    %1148 = vmatprep.subr.mxu0 0.0
    %1149 = vmatpush1.msra.mxu0 0.0
    %1150 = vmatprep.subr.mxu0 0.0
    %1151 = vmatpush1.msra.mxu0 0.0
    %1152 = vmatprep.subr.mxu0 0.0
    %1153 = vmatpush1.msra.mxu0 0.0
    %1154 = vmatprep.subr.mxu0 0.0
    %1155 = vmatpush1.msra.mxu0 0.0
    %1156 = vmatprep.subr.mxu0 0.0
    %1157 = vmatpush1.msra.mxu0 0.0
    %1158 = vmatprep.subr.mxu0 0.0
    %1159 = vmatpush1.msra.mxu0 0.0
    %1160 = vmatprep.subr.mxu0 0.0
    %1161 = vmatpush1.msra.mxu0 0.0
    %1162 = vmatprep.subr.mxu0 0.0
    %1163 = vmatpush1.msra.mxu0 0.0
    %1164 = vmatprep.subr.mxu0 0.0
    %1165 = vmatpush1.msra.mxu0 %v205
    %1166 = vmatprep.subr.mxu0 0.0
    %1167 = vmatpush1.msra.mxu0 %v204
    %1168 = vmatprep.subr.mxu0 0.0
    %1169 = vmatpush1.msra.mxu0 %v203
    %1170 = vmatprep.subr.mxu0 0.0
    %1171 = vmatpush1.msra.mxu0 %v202
    %1172 = vmatprep.subr.mxu0 0.0
    %1173 = vmatpush1.msra.mxu0 %v201
    %1174 = vmatprep.subr.mxu0 0.0
    %1175 = vmatpush1.msra.mxu0 %v200
    %1176 = vmatprep.subr.mxu0 0.0
    %1177 = vmatpush2.msra.mxu0 0.0
    %1178 = vmatprep.subr.mxu0 0.0
    %1179 = vmatpush2.msra.mxu0 0.0
    %1180 = vmatprep.subr.mxu0 0.0
    %1181 = vmatpush2.msra.mxu0 0.0
    %1182 = vmatprep.subr.mxu0 0.0
    %1183 = vmatpush2.msra.mxu0 0.0
    %1184 = vmatprep.subr.mxu0 0.0
    %1185 = vmatpush2.msra.mxu0 0.0
    %1186 = vmatprep.subr.mxu0 0.0
    %1187 = vmatpush2.msra.mxu0 0.0
    %1188 = vmatprep.subr.mxu0 0.0
    %1189 = vmatpush2.msra.mxu0 0.0
    %1190 = vmatprep.subr.mxu0 0.0
    %1191 = vmatpush2.msra.mxu0 0.0
    %1192 = vmatprep.subr.mxu0 0.0
    %1193 = vmatpush2.msra.mxu0 0.0
    %1194 = vmatprep.subr.mxu0 0.0
    %1195 = vmatpush2.msra.mxu0 0.0
    %1196 = vmatprep.subr.mxu0 0.0
    %1197 = vmatpush2.msra.mxu0 0.0
    %1198 = vmatprep.subr.mxu0 0.0
    %1199 = vmatpush2.msra.mxu0 0.0
    %1200 = vmatprep.subr.mxu0 0.0
    %1201 = vmatpush2.msra.mxu0 0.0
    %1202 = vmatprep.subr.mxu0 0.0
    %1203 = vmatpush2.msra.mxu0 0.0
    %1204 = vmatprep.subr.mxu0 0.0
    %1205 = vmatpush2.msra.mxu0 0.0
    %1206 = vmatprep.subr.mxu0 0.0
    %1207 = vmatpush2.msra.mxu0 0.0
    %1208 = vmatprep.mubr.f32.mxu0 0.0
    %1209 = vmatmul.mubr.f32.gmra.mxu0 %v852
    %v1210 = vpop.f32.mrf.mxu0
    %v1211 = vadd.f32 0.0, %v1210
    %v1212 = vpop.f32.mrf.mxu0
    %1213 = vdwg.mxu0
    %1214 = vmatprep.subr.mxu0 0.0
    %1215 = vmatpush1.msra.mxu0 0.0
    %1216 = vmatprep.subr.mxu0 0.0
    %1217 = vmatpush1.msra.mxu0 0.0
    %1218 = vmatprep.subr.mxu0 0.0
    %1219 = vmatpush1.msra.mxu0 0.0
    %1220 = vmatprep.subr.mxu0 0.0
    %1221 = vmatpush1.msra.mxu0 0.0
    %1222 = vmatprep.subr.mxu0 0.0
    %1223 = vmatpush1.msra.mxu0 0.0
    %1224 = vmatprep.subr.mxu0 0.0
    %1225 = vmatpush1.msra.mxu0 0.0
    %1226 = vmatprep.subr.mxu0 0.0
    %1227 = vmatpush1.msra.mxu0 0.0
    %1228 = vmatprep.subr.mxu0 0.0
    %1229 = vmatpush1.msra.mxu0 0.0
    %1230 = vmatprep.subr.mxu0 0.0
    %1231 = vmatpush1.msra.mxu0 0.0
    %1232 = vmatprep.subr.mxu0 0.0
    %1233 = vmatpush1.msra.mxu0 0.0
    %1234 = vmatprep.subr.mxu0 0.0
    %1235 = vmatpush1.msra.mxu0 %v178
    %1236 = vmatprep.subr.mxu0 0.0
    %1237 = vmatpush1.msra.mxu0 %v177
    %1238 = vmatprep.subr.mxu0 0.0
    %1239 = vmatpush1.msra.mxu0 %v176
    %1240 = vmatprep.subr.mxu0 0.0
    %1241 = vmatpush1.msra.mxu0 %v175
    %1242 = vmatprep.subr.mxu0 0.0
    %1243 = vmatpush1.msra.mxu0 %v174
    %1244 = vmatprep.subr.mxu0 0.0
    %1245 = vmatpush1.msra.mxu0 %v173
    %1246 = vmatprep.subr.mxu0 0.0
    %1247 = vmatpush2.msra.mxu0 0.0
    %1248 = vmatprep.subr.mxu0 0.0
    %1249 = vmatpush2.msra.mxu0 0.0
    %1250 = vmatprep.subr.mxu0 0.0
    %1251 = vmatpush2.msra.mxu0 0.0
    %1252 = vmatprep.subr.mxu0 0.0
    %1253 = vmatpush2.msra.mxu0 0.0
    %1254 = vmatprep.subr.mxu0 0.0
    %1255 = vmatpush2.msra.mxu0 0.0
    %1256 = vmatprep.subr.mxu0 0.0
    %1257 = vmatpush2.msra.mxu0 0.0
    %1258 = vmatprep.subr.mxu0 0.0
    %1259 = vmatpush2.msra.mxu0 0.0
    %1260 = vmatprep.subr.mxu0 0.0
    %1261 = vmatpush2.msra.mxu0 0.0
    %1262 = vmatprep.subr.mxu0 0.0
    %1263 = vmatpush2.msra.mxu0 0.0
    %1264 = vmatprep.subr.mxu0 0.0
    %1265 = vmatpush2.msra.mxu0 0.0
    %1266 = vmatprep.subr.mxu0 0.0
    %1267 = vmatpush2.msra.mxu0 0.0
    %1268 = vmatprep.subr.mxu0 0.0
    %1269 = vmatpush2.msra.mxu0 0.0
    %1270 = vmatprep.subr.mxu0 0.0
    %1271 = vmatpush2.msra.mxu0 0.0
    %1272 = vmatprep.subr.mxu0 0.0
    %1273 = vmatpush2.msra.mxu0 0.0
    %1274 = vmatprep.subr.mxu0 0.0
    %1275 = vmatpush2.msra.mxu0 0.0
    %1276 = vmatprep.subr.mxu0 0.0
    %1277 = vmatpush2.msra.mxu0 0.0
    %1278 = vmatprep.mubr.f32.mxu0 0.0
    %1279 = vmatmul.mubr.f32.gmra.mxu0 %v930
    %v1280 = vpop.f32.mrf.mxu0
    %v1281 = vadd.f32 %v1211, %v1280
    %v1282 = vpop.f32.mrf.mxu0
    %1283 = vdwg.mxu0
    %v1284 = vadd.f32 %v1281, %v677
    %1285 = vmatprep.subr.mxu0 0.0
    %1286 = vmatpush1.msra.mxu0 0.0
    %1287 = vmatprep.subr.mxu0 0.0
    %1288 = vmatpush1.msra.mxu0 0.0
    %1289 = vmatprep.subr.mxu0 0.0
    %1290 = vmatpush1.msra.mxu0 0.0
    %1291 = vmatprep.subr.mxu0 0.0
    %1292 = vmatpush1.msra.mxu0 0.0
    %1293 = vmatprep.subr.mxu0 0.0
    %1294 = vmatpush1.msra.mxu0 0.0
    %1295 = vmatprep.subr.mxu0 0.0
    %1296 = vmatpush1.msra.mxu0 0.0
    %1297 = vmatprep.subr.mxu0 0.0
    %1298 = vmatpush1.msra.mxu0 0.0
    %1299 = vmatprep.subr.mxu0 0.0
    %1300 = vmatpush1.msra.mxu0 0.0
    %1301 = vmatprep.subr.mxu0 0.0
    %1302 = vmatpush1.msra.mxu0 0.0
    %1303 = vmatprep.subr.mxu0 0.0
    %1304 = vmatpush1.msra.mxu0 0.0
    %1305 = vmatprep.subr.mxu0 0.0
    %1306 = vmatpush1.msra.mxu0 %v212
    %1307 = vmatprep.subr.mxu0 0.0
    %1308 = vmatpush1.msra.mxu0 %v211
    %1309 = vmatprep.subr.mxu0 0.0
    %1310 = vmatpush1.msra.mxu0 %v210
    %1311 = vmatprep.subr.mxu0 0.0
    %1312 = vmatpush1.msra.mxu0 %v209
    %1313 = vmatprep.subr.mxu0 0.0
    %1314 = vmatpush1.msra.mxu0 %v208
    %1315 = vmatprep.subr.mxu0 0.0
    %1316 = vmatpush1.msra.mxu0 %v207
    %1317 = vmatprep.subr.mxu0 0.0
    %1318 = vmatpush2.msra.mxu0 0.0
    %1319 = vmatprep.subr.mxu0 0.0
    %1320 = vmatpush2.msra.mxu0 0.0
    %1321 = vmatprep.subr.mxu0 0.0
    %1322 = vmatpush2.msra.mxu0 0.0
    %1323 = vmatprep.subr.mxu0 0.0
    %1324 = vmatpush2.msra.mxu0 0.0
    %1325 = vmatprep.subr.mxu0 0.0
    %1326 = vmatpush2.msra.mxu0 0.0
    %1327 = vmatprep.subr.mxu0 0.0
    %1328 = vmatpush2.msra.mxu0 0.0
    %1329 = vmatprep.subr.mxu0 0.0
    %1330 = vmatpush2.msra.mxu0 0.0
    %1331 = vmatprep.subr.mxu0 0.0
    %1332 = vmatpush2.msra.mxu0 0.0
    %1333 = vmatprep.subr.mxu0 0.0
    %1334 = vmatpush2.msra.mxu0 0.0
    %1335 = vmatprep.subr.mxu0 0.0
    %1336 = vmatpush2.msra.mxu0 0.0
    %1337 = vmatprep.subr.mxu0 0.0
    %1338 = vmatpush2.msra.mxu0 0.0
    %1339 = vmatprep.subr.mxu0 0.0
    %1340 = vmatpush2.msra.mxu0 0.0
    %1341 = vmatprep.subr.mxu0 0.0
    %1342 = vmatpush2.msra.mxu0 0.0
    %1343 = vmatprep.subr.mxu0 0.0
    %1344 = vmatpush2.msra.mxu0 0.0
    %1345 = vmatprep.subr.mxu0 0.0
    %1346 = vmatpush2.msra.mxu0 0.0
    %1347 = vmatprep.subr.mxu0 0.0
    %1348 = vmatpush2.msra.mxu0 0.0
    %1349 = vmatprep.mubr.f32.mxu0 0.0
    %1350 = vmatmul.mubr.f32.gmra.mxu0 %v852
    %v1351 = vpop.f32.mrf.mxu0
    %v1352 = vadd.f32 0.0, %v1351
    %v1353 = vpop.f32.mrf.mxu0
    %1354 = vdwg.mxu0
    %1355 = vmatprep.subr.mxu0 0.0
    %1356 = vmatpush1.msra.mxu0 0.0
    %1357 = vmatprep.subr.mxu0 0.0
    %1358 = vmatpush1.msra.mxu0 0.0
    %1359 = vmatprep.subr.mxu0 0.0
    %1360 = vmatpush1.msra.mxu0 0.0
    %1361 = vmatprep.subr.mxu0 0.0
    %1362 = vmatpush1.msra.mxu0 0.0
    %1363 = vmatprep.subr.mxu0 0.0
    %1364 = vmatpush1.msra.mxu0 0.0
    %1365 = vmatprep.subr.mxu0 0.0
    %1366 = vmatpush1.msra.mxu0 0.0
    %1367 = vmatprep.subr.mxu0 0.0
    %1368 = vmatpush1.msra.mxu0 0.0
    %1369 = vmatprep.subr.mxu0 0.0
    %1370 = vmatpush1.msra.mxu0 0.0
    %1371 = vmatprep.subr.mxu0 0.0
    %1372 = vmatpush1.msra.mxu0 0.0
    %1373 = vmatprep.subr.mxu0 0.0
    %1374 = vmatpush1.msra.mxu0 0.0
    %1375 = vmatprep.subr.mxu0 0.0
    %1376 = vmatpush1.msra.mxu0 %v185
    %1377 = vmatprep.subr.mxu0 0.0
    %1378 = vmatpush1.msra.mxu0 %v184
    %1379 = vmatprep.subr.mxu0 0.0
    %1380 = vmatpush1.msra.mxu0 %v183
    %1381 = vmatprep.subr.mxu0 0.0
    %1382 = vmatpush1.msra.mxu0 %v182
    %1383 = vmatprep.subr.mxu0 0.0
    %1384 = vmatpush1.msra.mxu0 %v181
    %1385 = vmatprep.subr.mxu0 0.0
    %1386 = vmatpush1.msra.mxu0 %v180
    %1387 = vmatprep.subr.mxu0 0.0
    %1388 = vmatpush2.msra.mxu0 0.0
    %1389 = vmatprep.subr.mxu0 0.0
    %1390 = vmatpush2.msra.mxu0 0.0
    %1391 = vmatprep.subr.mxu0 0.0
    %1392 = vmatpush2.msra.mxu0 0.0
    %1393 = vmatprep.subr.mxu0 0.0
    %1394 = vmatpush2.msra.mxu0 0.0
    %1395 = vmatprep.subr.mxu0 0.0
    %1396 = vmatpush2.msra.mxu0 0.0
    %1397 = vmatprep.subr.mxu0 0.0
    %1398 = vmatpush2.msra.mxu0 0.0
    %1399 = vmatprep.subr.mxu0 0.0
    %1400 = vmatpush2.msra.mxu0 0.0
    %1401 = vmatprep.subr.mxu0 0.0
    %1402 = vmatpush2.msra.mxu0 0.0
    %1403 = vmatprep.subr.mxu0 0.0
    %1404 = vmatpush2.msra.mxu0 0.0
    %1405 = vmatprep.subr.mxu0 0.0
    %1406 = vmatpush2.msra.mxu0 0.0
    %1407 = vmatprep.subr.mxu0 0.0
    %1408 = vmatpush2.msra.mxu0 0.0
    %1409 = vmatprep.subr.mxu0 0.0
    %1410 = vmatpush2.msra.mxu0 0.0
    %1411 = vmatprep.subr.mxu0 0.0
    %1412 = vmatpush2.msra.mxu0 0.0
    %1413 = vmatprep.subr.mxu0 0.0
    %1414 = vmatpush2.msra.mxu0 0.0
    %1415 = vmatprep.subr.mxu0 0.0
    %1416 = vmatpush2.msra.mxu0 0.0
    %1417 = vmatprep.subr.mxu0 0.0
    %1418 = vmatpush2.msra.mxu0 0.0
    %1419 = vmatprep.mubr.f32.mxu0 0.0
    %1420 = vmatmul.mubr.f32.gmra.mxu0 %v930
    %v1421 = vpop.f32.mrf.mxu0
    %v1422 = vadd.f32 %v1352, %v1421
    %v1423 = vpop.f32.mrf.mxu0
    %1424 = vdwg.mxu0
    %v1425 = vadd.f32 %v1422, %v824
    %v1426 = vxor.u32 %v1143, 2147483648
    %v1427 = vmul.f32 %v1426, 1.442695
    %v1428 = vpow.pop %v1427
    %v1429 = vadd.f32 %v1428, 1.0
    %v1430 = vrcp.pop %v1429
    %v1431 = vmul.f32 1.0, %v1430
    %v1432 = vmul.f32 %v1431, %v842
    %v1433 = vxor.u32 %v1002, 2147483648
    %v1434 = vmul.f32 %v1433, 1.442695
    %v1435 = vpow.pop %v1434
    %v1436 = vadd.f32 %v1435, 1.0
    %v1437 = vrcp.pop %v1436
    %v1438 = vmul.f32 1.0, %v1437
    %v1439 = vtanh.pop %v1284
    %v1440 = vmul.f32 %v1438, %v1439
    %v1441 = vadd.f32 %v1432, %v1440
    %v1442 = vxor.u32 %v1425, 2147483648
    %v1443 = vmul.f32 %v1442, 1.442695
    %v1444 = vpow.pop %v1443
    %v1445 = vadd.f32 %v1444, 1.0
    %v1446 = vrcp.pop %v1445
    %v1447 = vmul.f32 1.0, %v1446
    %v1448 = vtanh.pop %v1441
    %v1449 = vmul.f32 %v1447, %v1448
    %v1451 = vsel %vm220, %v1449, 0
    %1453 = vmatprep.subr.mxu0 0.0
    %1454 = vmatpush1.msra.mxu0 0.0
    %1455 = vmatprep.subr.mxu0 0.0
    %1456 = vmatpush1.msra.mxu0 0.0
    %1457 = vmatprep.subr.mxu0 0.0
    %1458 = vmatpush1.msra.mxu0 0.0
    %1459 = vmatprep.subr.mxu0 0.0
    %1460 = vmatpush1.msra.mxu0 0.0
    %1461 = vmatprep.subr.mxu0 0.0
    %1462 = vmatpush1.msra.mxu0 0.0
    %1463 = vmatprep.subr.mxu0 0.0
    %1464 = vmatpush1.msra.mxu0 0.0
    %1465 = vmatprep.subr.mxu0 0.0
    %1466 = vmatpush1.msra.mxu0 0.0
    %1467 = vmatprep.subr.mxu0 0.0
    %1468 = vmatpush1.msra.mxu0 0.0
    %1469 = vmatprep.subr.mxu0 0.0
    %1470 = vmatpush1.msra.mxu0 0.0
    %1471 = vmatprep.subr.mxu0 0.0
    %1472 = vmatpush1.msra.mxu0 0.0
    %1473 = vmatprep.subr.mxu0 0.0
    %1474 = vmatpush1.msra.mxu0 %v191
    %1475 = vmatprep.subr.mxu0 0.0
    %1476 = vmatpush1.msra.mxu0 %v190
    %1477 = vmatprep.subr.mxu0 0.0
    %1478 = vmatpush1.msra.mxu0 %v189
    %1479 = vmatprep.subr.mxu0 0.0
    %1480 = vmatpush1.msra.mxu0 %v188
    %1481 = vmatprep.subr.mxu0 0.0
    %1482 = vmatpush1.msra.mxu0 %v187
    %1483 = vmatprep.subr.mxu0 0.0
    %1484 = vmatpush1.msra.mxu0 %v186
    %1485 = vmatprep.subr.mxu0 0.0
    %1486 = vmatpush2.msra.mxu0 0.0
    %1487 = vmatprep.subr.mxu0 0.0
    %1488 = vmatpush2.msra.mxu0 0.0
    %1489 = vmatprep.subr.mxu0 0.0
    %1490 = vmatpush2.msra.mxu0 0.0
    %1491 = vmatprep.subr.mxu0 0.0
    %1492 = vmatpush2.msra.mxu0 0.0
    %1493 = vmatprep.subr.mxu0 0.0
    %1494 = vmatpush2.msra.mxu0 0.0
    %1495 = vmatprep.subr.mxu0 0.0
    %1496 = vmatpush2.msra.mxu0 0.0
    %1497 = vmatprep.subr.mxu0 0.0
    %1498 = vmatpush2.msra.mxu0 0.0
    %1499 = vmatprep.subr.mxu0 0.0
    %1500 = vmatpush2.msra.mxu0 0.0
    %1501 = vmatprep.subr.mxu0 0.0
    %1502 = vmatpush2.msra.mxu0 0.0
    %1503 = vmatprep.subr.mxu0 0.0
    %1504 = vmatpush2.msra.mxu0 0.0
    %1505 = vmatprep.subr.mxu0 0.0
    %1506 = vmatpush2.msra.mxu0 0.0
    %1507 = vmatprep.subr.mxu0 0.0
    %1508 = vmatpush2.msra.mxu0 0.0
    %1509 = vmatprep.subr.mxu0 0.0
    %1510 = vmatpush2.msra.mxu0 0.0
    %1511 = vmatprep.subr.mxu0 0.0
    %1512 = vmatpush2.msra.mxu0 0.0
    %1513 = vmatprep.subr.mxu0 0.0
    %1514 = vmatpush2.msra.mxu0 0.0
    %1515 = vmatprep.subr.mxu0 0.0
    %1516 = vmatpush2.msra.mxu0 0.0
    %1517 = vmatprep.mubr.f32.mxu0 0.0
    %1518 = vmatmul.mubr.f32.gmra.mxu0 %v1451
    %v1519 = vpop.f32.mrf.mxu0
    %v1520 = vadd.f32 0.0, %v1519
    %v1521 = vpop.f32.mrf.mxu0
    %1522 = vdwg.mxu0
    %v1523 = vrot.slane %v155, 2
    %v1524 = vrot.slane %v156, 1
    %v1525 = vsel %vm299, %v1524, %v1523
    %v1526 = vsel %vm302, %v157, %v1525
    %v1527 = vrot.slane %v158, 7
    %v1528 = vsel %vm305, %v1527, %v1526
    %v1529 = vsel %vm220, %v1528, 0
    %1531 = vmatprep.subr.mxu0 0.0
    %1532 = vmatpush1.msra.mxu0 0.0
    %1533 = vmatprep.subr.mxu0 0.0
    %1534 = vmatpush1.msra.mxu0 0.0
    %1535 = vmatprep.subr.mxu0 0.0
    %1536 = vmatpush1.msra.mxu0 0.0
    %1537 = vmatprep.subr.mxu0 0.0
    %1538 = vmatpush1.msra.mxu0 0.0
    %1539 = vmatprep.subr.mxu0 0.0
    %1540 = vmatpush1.msra.mxu0 0.0
    %1541 = vmatprep.subr.mxu0 0.0
    %1542 = vmatpush1.msra.mxu0 0.0
    %1543 = vmatprep.subr.mxu0 0.0
    %1544 = vmatpush1.msra.mxu0 0.0
    %1545 = vmatprep.subr.mxu0 0.0
    %1546 = vmatpush1.msra.mxu0 0.0
    %1547 = vmatprep.subr.mxu0 0.0
    %1548 = vmatpush1.msra.mxu0 0.0
    %1549 = vmatprep.subr.mxu0 0.0
    %1550 = vmatpush1.msra.mxu0 0.0
    %1551 = vmatprep.subr.mxu0 0.0
    %1552 = vmatpush1.msra.mxu0 %v164
    %1553 = vmatprep.subr.mxu0 0.0
    %1554 = vmatpush1.msra.mxu0 %v163
    %1555 = vmatprep.subr.mxu0 0.0
    %1556 = vmatpush1.msra.mxu0 %v162
    %1557 = vmatprep.subr.mxu0 0.0
    %1558 = vmatpush1.msra.mxu0 %v161
    %1559 = vmatprep.subr.mxu0 0.0
    %1560 = vmatpush1.msra.mxu0 %v160
    %1561 = vmatprep.subr.mxu0 0.0
    %1562 = vmatpush1.msra.mxu0 %v159
    %1563 = vmatprep.subr.mxu0 0.0
    %1564 = vmatpush2.msra.mxu0 0.0
    %1565 = vmatprep.subr.mxu0 0.0
    %1566 = vmatpush2.msra.mxu0 0.0
    %1567 = vmatprep.subr.mxu0 0.0
    %1568 = vmatpush2.msra.mxu0 0.0
    %1569 = vmatprep.subr.mxu0 0.0
    %1570 = vmatpush2.msra.mxu0 0.0
    %1571 = vmatprep.subr.mxu0 0.0
    %1572 = vmatpush2.msra.mxu0 0.0
    %1573 = vmatprep.subr.mxu0 0.0
    %1574 = vmatpush2.msra.mxu0 0.0
    %1575 = vmatprep.subr.mxu0 0.0
    %1576 = vmatpush2.msra.mxu0 0.0
    %1577 = vmatprep.subr.mxu0 0.0
    %1578 = vmatpush2.msra.mxu0 0.0
    %1579 = vmatprep.subr.mxu0 0.0
    %1580 = vmatpush2.msra.mxu0 0.0
    %1581 = vmatprep.subr.mxu0 0.0
    %1582 = vmatpush2.msra.mxu0 0.0
    %1583 = vmatprep.subr.mxu0 0.0
    %1584 = vmatpush2.msra.mxu0 0.0
    %1585 = vmatprep.subr.mxu0 0.0
    %1586 = vmatpush2.msra.mxu0 0.0
    %1587 = vmatprep.subr.mxu0 0.0
    %1588 = vmatpush2.msra.mxu0 0.0
    %1589 = vmatprep.subr.mxu0 0.0
    %1590 = vmatpush2.msra.mxu0 0.0
    %1591 = vmatprep.subr.mxu0 0.0
    %1592 = vmatpush2.msra.mxu0 0.0
    %1593 = vmatprep.subr.mxu0 0.0
    %1594 = vmatpush2.msra.mxu0 0.0
    %1595 = vmatprep.mubr.f32.mxu0 0.0
    %1596 = vmatmul.mubr.f32.gmra.mxu0 %v1529
    %v1597 = vpop.f32.mrf.mxu0
    %v1598 = vadd.f32 %v1520, %v1597
    %v1599 = vpop.f32.mrf.mxu0
    %1600 = vdwg.mxu0
    %v1601 = vadd.f32 %v1598, %v383
    %1602 = vmatprep.subr.mxu0 0.0
    %1603 = vmatpush1.msra.mxu0 0.0
    %1604 = vmatprep.subr.mxu0 0.0
    %1605 = vmatpush1.msra.mxu0 0.0
    %1606 = vmatprep.subr.mxu0 0.0
    %1607 = vmatpush1.msra.mxu0 0.0
    %1608 = vmatprep.subr.mxu0 0.0
    %1609 = vmatpush1.msra.mxu0 0.0
    %1610 = vmatprep.subr.mxu0 0.0
    %1611 = vmatpush1.msra.mxu0 0.0
    %1612 = vmatprep.subr.mxu0 0.0
    %1613 = vmatpush1.msra.mxu0 0.0
    %1614 = vmatprep.subr.mxu0 0.0
    %1615 = vmatpush1.msra.mxu0 0.0
    %1616 = vmatprep.subr.mxu0 0.0
    %1617 = vmatpush1.msra.mxu0 0.0
    %1618 = vmatprep.subr.mxu0 0.0
    %1619 = vmatpush1.msra.mxu0 0.0
    %1620 = vmatprep.subr.mxu0 0.0
    %1621 = vmatpush1.msra.mxu0 0.0
    %1622 = vmatprep.subr.mxu0 0.0
    %1623 = vmatpush1.msra.mxu0 %v198
    %1624 = vmatprep.subr.mxu0 0.0
    %1625 = vmatpush1.msra.mxu0 %v197
    %1626 = vmatprep.subr.mxu0 0.0
    %1627 = vmatpush1.msra.mxu0 %v196
    %1628 = vmatprep.subr.mxu0 0.0
    %1629 = vmatpush1.msra.mxu0 %v195
    %1630 = vmatprep.subr.mxu0 0.0
    %1631 = vmatpush1.msra.mxu0 %v194
    %1632 = vmatprep.subr.mxu0 0.0
    %1633 = vmatpush1.msra.mxu0 %v193
    %1634 = vmatprep.subr.mxu0 0.0
    %1635 = vmatpush2.msra.mxu0 0.0
    %1636 = vmatprep.subr.mxu0 0.0
    %1637 = vmatpush2.msra.mxu0 0.0
    %1638 = vmatprep.subr.mxu0 0.0
    %1639 = vmatpush2.msra.mxu0 0.0
    %1640 = vmatprep.subr.mxu0 0.0
    %1641 = vmatpush2.msra.mxu0 0.0
    %1642 = vmatprep.subr.mxu0 0.0
    %1643 = vmatpush2.msra.mxu0 0.0
    %1644 = vmatprep.subr.mxu0 0.0
    %1645 = vmatpush2.msra.mxu0 0.0
    %1646 = vmatprep.subr.mxu0 0.0
    %1647 = vmatpush2.msra.mxu0 0.0
    %1648 = vmatprep.subr.mxu0 0.0
    %1649 = vmatpush2.msra.mxu0 0.0
    %1650 = vmatprep.subr.mxu0 0.0
    %1651 = vmatpush2.msra.mxu0 0.0
    %1652 = vmatprep.subr.mxu0 0.0
    %1653 = vmatpush2.msra.mxu0 0.0
    %1654 = vmatprep.subr.mxu0 0.0
    %1655 = vmatpush2.msra.mxu0 0.0
    %1656 = vmatprep.subr.mxu0 0.0
    %1657 = vmatpush2.msra.mxu0 0.0
    %1658 = vmatprep.subr.mxu0 0.0
    %1659 = vmatpush2.msra.mxu0 0.0
    %1660 = vmatprep.subr.mxu0 0.0
    %1661 = vmatpush2.msra.mxu0 0.0
    %1662 = vmatprep.subr.mxu0 0.0
    %1663 = vmatpush2.msra.mxu0 0.0
    %1664 = vmatprep.subr.mxu0 0.0
    %1665 = vmatpush2.msra.mxu0 0.0
    %1666 = vmatprep.mubr.f32.mxu0 0.0
    %1667 = vmatmul.mubr.f32.gmra.mxu0 %v1451
    %v1668 = vpop.f32.mrf.mxu0
    %v1669 = vadd.f32 0.0, %v1668
    %v1670 = vpop.f32.mrf.mxu0
    %1671 = vdwg.mxu0
    %1672 = vmatprep.subr.mxu0 0.0
    %1673 = vmatpush1.msra.mxu0 0.0
    %1674 = vmatprep.subr.mxu0 0.0
    %1675 = vmatpush1.msra.mxu0 0.0
    %1676 = vmatprep.subr.mxu0 0.0
    %1677 = vmatpush1.msra.mxu0 0.0
    %1678 = vmatprep.subr.mxu0 0.0
    %1679 = vmatpush1.msra.mxu0 0.0
    %1680 = vmatprep.subr.mxu0 0.0
    %1681 = vmatpush1.msra.mxu0 0.0
    %1682 = vmatprep.subr.mxu0 0.0
    %1683 = vmatpush1.msra.mxu0 0.0
    %1684 = vmatprep.subr.mxu0 0.0
    %1685 = vmatpush1.msra.mxu0 0.0
    %1686 = vmatprep.subr.mxu0 0.0
    %1687 = vmatpush1.msra.mxu0 0.0
    %1688 = vmatprep.subr.mxu0 0.0
    %1689 = vmatpush1.msra.mxu0 0.0
    %1690 = vmatprep.subr.mxu0 0.0
    %1691 = vmatpush1.msra.mxu0 0.0
    %1692 = vmatprep.subr.mxu0 0.0
    %1693 = vmatpush1.msra.mxu0 %v171
    %1694 = vmatprep.subr.mxu0 0.0
    %1695 = vmatpush1.msra.mxu0 %v170
    %1696 = vmatprep.subr.mxu0 0.0
    %1697 = vmatpush1.msra.mxu0 %v169
    %1698 = vmatprep.subr.mxu0 0.0
    %1699 = vmatpush1.msra.mxu0 %v168
    %1700 = vmatprep.subr.mxu0 0.0
    %1701 = vmatpush1.msra.mxu0 %v167
    %1702 = vmatprep.subr.mxu0 0.0
    %1703 = vmatpush1.msra.mxu0 %v166
    %1704 = vmatprep.subr.mxu0 0.0
    %1705 = vmatpush2.msra.mxu0 0.0
    %1706 = vmatprep.subr.mxu0 0.0
    %1707 = vmatpush2.msra.mxu0 0.0
    %1708 = vmatprep.subr.mxu0 0.0
    %1709 = vmatpush2.msra.mxu0 0.0
    %1710 = vmatprep.subr.mxu0 0.0
    %1711 = vmatpush2.msra.mxu0 0.0
    %1712 = vmatprep.subr.mxu0 0.0
    %1713 = vmatpush2.msra.mxu0 0.0
    %1714 = vmatprep.subr.mxu0 0.0
    %1715 = vmatpush2.msra.mxu0 0.0
    %1716 = vmatprep.subr.mxu0 0.0
    %1717 = vmatpush2.msra.mxu0 0.0
    %1718 = vmatprep.subr.mxu0 0.0
    %1719 = vmatpush2.msra.mxu0 0.0
    %1720 = vmatprep.subr.mxu0 0.0
    %1721 = vmatpush2.msra.mxu0 0.0
    %1722 = vmatprep.subr.mxu0 0.0
    %1723 = vmatpush2.msra.mxu0 0.0
    %1724 = vmatprep.subr.mxu0 0.0
    %1725 = vmatpush2.msra.mxu0 0.0
    %1726 = vmatprep.subr.mxu0 0.0
    %1727 = vmatpush2.msra.mxu0 0.0
    %1728 = vmatprep.subr.mxu0 0.0
    %1729 = vmatpush2.msra.mxu0 0.0
    %1730 = vmatprep.subr.mxu0 0.0
    %1731 = vmatpush2.msra.mxu0 0.0
    %1732 = vmatprep.subr.mxu0 0.0
    %1733 = vmatpush2.msra.mxu0 0.0
    %1734 = vmatprep.subr.mxu0 0.0
    %1735 = vmatpush2.msra.mxu0 0.0
    %1736 = vmatprep.mubr.f32.mxu0 0.0
    %1737 = vmatmul.mubr.f32.gmra.mxu0 %v1529
    %v1738 = vpop.f32.mrf.mxu0
    %v1739 = vadd.f32 %v1669, %v1738
    %v1740 = vpop.f32.mrf.mxu0
    %1741 = vdwg.mxu0
    %v1742 = vadd.f32 %v1739, %v530
    %1743 = vmatprep.subr.mxu0 0.0
    %1744 = vmatpush1.msra.mxu0 0.0
    %1745 = vmatprep.subr.mxu0 0.0
    %1746 = vmatpush1.msra.mxu0 0.0
    %1747 = vmatprep.subr.mxu0 0.0
    %1748 = vmatpush1.msra.mxu0 0.0
    %1749 = vmatprep.subr.mxu0 0.0
    %1750 = vmatpush1.msra.mxu0 0.0
    %1751 = vmatprep.subr.mxu0 0.0
    %1752 = vmatpush1.msra.mxu0 0.0
    %1753 = vmatprep.subr.mxu0 0.0
    %1754 = vmatpush1.msra.mxu0 0.0
    %1755 = vmatprep.subr.mxu0 0.0
    %1756 = vmatpush1.msra.mxu0 0.0
    %1757 = vmatprep.subr.mxu0 0.0
    %1758 = vmatpush1.msra.mxu0 0.0
    %1759 = vmatprep.subr.mxu0 0.0
    %1760 = vmatpush1.msra.mxu0 0.0
    %1761 = vmatprep.subr.mxu0 0.0
    %1762 = vmatpush1.msra.mxu0 0.0
    %1763 = vmatprep.subr.mxu0 0.0
    %1764 = vmatpush1.msra.mxu0 %v205
    %1765 = vmatprep.subr.mxu0 0.0
    %1766 = vmatpush1.msra.mxu0 %v204
    %1767 = vmatprep.subr.mxu0 0.0
    %1768 = vmatpush1.msra.mxu0 %v203
    %1769 = vmatprep.subr.mxu0 0.0
    %1770 = vmatpush1.msra.mxu0 %v202
    %1771 = vmatprep.subr.mxu0 0.0
    %1772 = vmatpush1.msra.mxu0 %v201
    %1773 = vmatprep.subr.mxu0 0.0
    %1774 = vmatpush1.msra.mxu0 %v200
    %1775 = vmatprep.subr.mxu0 0.0
    %1776 = vmatpush2.msra.mxu0 0.0
    %1777 = vmatprep.subr.mxu0 0.0
    %1778 = vmatpush2.msra.mxu0 0.0
    %1779 = vmatprep.subr.mxu0 0.0
    %1780 = vmatpush2.msra.mxu0 0.0
    %1781 = vmatprep.subr.mxu0 0.0
    %1782 = vmatpush2.msra.mxu0 0.0
    %1783 = vmatprep.subr.mxu0 0.0
    %1784 = vmatpush2.msra.mxu0 0.0
    %1785 = vmatprep.subr.mxu0 0.0
    %1786 = vmatpush2.msra.mxu0 0.0
    %1787 = vmatprep.subr.mxu0 0.0
    %1788 = vmatpush2.msra.mxu0 0.0
    %1789 = vmatprep.subr.mxu0 0.0
    %1790 = vmatpush2.msra.mxu0 0.0
    %1791 = vmatprep.subr.mxu0 0.0
    %1792 = vmatpush2.msra.mxu0 0.0
    %1793 = vmatprep.subr.mxu0 0.0
    %1794 = vmatpush2.msra.mxu0 0.0
    %1795 = vmatprep.subr.mxu0 0.0
    %1796 = vmatpush2.msra.mxu0 0.0
    %1797 = vmatprep.subr.mxu0 0.0
    %1798 = vmatpush2.msra.mxu0 0.0
    %1799 = vmatprep.subr.mxu0 0.0
    %1800 = vmatpush2.msra.mxu0 0.0
    %1801 = vmatprep.subr.mxu0 0.0
    %1802 = vmatpush2.msra.mxu0 0.0
    %1803 = vmatprep.subr.mxu0 0.0
    %1804 = vmatpush2.msra.mxu0 0.0
    %1805 = vmatprep.subr.mxu0 0.0
    %1806 = vmatpush2.msra.mxu0 0.0
    %1807 = vmatprep.mubr.f32.mxu0 0.0
    %1808 = vmatmul.mubr.f32.gmra.mxu0 %v1451
    %v1809 = vpop.f32.mrf.mxu0
    %v1810 = vadd.f32 0.0, %v1809
    %v1811 = vpop.f32.mrf.mxu0
    %1812 = vdwg.mxu0
    %1813 = vmatprep.subr.mxu0 0.0
    %1814 = vmatpush1.msra.mxu0 0.0
    %1815 = vmatprep.subr.mxu0 0.0
    %1816 = vmatpush1.msra.mxu0 0.0
    %1817 = vmatprep.subr.mxu0 0.0
    %1818 = vmatpush1.msra.mxu0 0.0
    %1819 = vmatprep.subr.mxu0 0.0
    %1820 = vmatpush1.msra.mxu0 0.0
    %1821 = vmatprep.subr.mxu0 0.0
    %1822 = vmatpush1.msra.mxu0 0.0
    %1823 = vmatprep.subr.mxu0 0.0
    %1824 = vmatpush1.msra.mxu0 0.0
    %1825 = vmatprep.subr.mxu0 0.0
    %1826 = vmatpush1.msra.mxu0 0.0
    %1827 = vmatprep.subr.mxu0 0.0
    %1828 = vmatpush1.msra.mxu0 0.0
    %1829 = vmatprep.subr.mxu0 0.0
    %1830 = vmatpush1.msra.mxu0 0.0
    %1831 = vmatprep.subr.mxu0 0.0
    %1832 = vmatpush1.msra.mxu0 0.0
    %1833 = vmatprep.subr.mxu0 0.0
    %1834 = vmatpush1.msra.mxu0 %v178
    %1835 = vmatprep.subr.mxu0 0.0
    %1836 = vmatpush1.msra.mxu0 %v177
    %1837 = vmatprep.subr.mxu0 0.0
    %1838 = vmatpush1.msra.mxu0 %v176
    %1839 = vmatprep.subr.mxu0 0.0
    %1840 = vmatpush1.msra.mxu0 %v175
    %1841 = vmatprep.subr.mxu0 0.0
    %1842 = vmatpush1.msra.mxu0 %v174
    %1843 = vmatprep.subr.mxu0 0.0
    %1844 = vmatpush1.msra.mxu0 %v173
    %1845 = vmatprep.subr.mxu0 0.0
    %1846 = vmatpush2.msra.mxu0 0.0
    %1847 = vmatprep.subr.mxu0 0.0
    %1848 = vmatpush2.msra.mxu0 0.0
    %1849 = vmatprep.subr.mxu0 0.0
    %1850 = vmatpush2.msra.mxu0 0.0
    %1851 = vmatprep.subr.mxu0 0.0
    %1852 = vmatpush2.msra.mxu0 0.0
    %1853 = vmatprep.subr.mxu0 0.0
    %1854 = vmatpush2.msra.mxu0 0.0
    %1855 = vmatprep.subr.mxu0 0.0
    %1856 = vmatpush2.msra.mxu0 0.0
    %1857 = vmatprep.subr.mxu0 0.0
    %1858 = vmatpush2.msra.mxu0 0.0
    %1859 = vmatprep.subr.mxu0 0.0
    %1860 = vmatpush2.msra.mxu0 0.0
    %1861 = vmatprep.subr.mxu0 0.0
    %1862 = vmatpush2.msra.mxu0 0.0
    %1863 = vmatprep.subr.mxu0 0.0
    %1864 = vmatpush2.msra.mxu0 0.0
    %1865 = vmatprep.subr.mxu0 0.0
    %1866 = vmatpush2.msra.mxu0 0.0
    %1867 = vmatprep.subr.mxu0 0.0
    %1868 = vmatpush2.msra.mxu0 0.0
    %1869 = vmatprep.subr.mxu0 0.0
    %1870 = vmatpush2.msra.mxu0 0.0
    %1871 = vmatprep.subr.mxu0 0.0
    %1872 = vmatpush2.msra.mxu0 0.0
    %1873 = vmatprep.subr.mxu0 0.0
    %1874 = vmatpush2.msra.mxu0 0.0
    %1875 = vmatprep.subr.mxu0 0.0
    %1876 = vmatpush2.msra.mxu0 0.0
    %1877 = vmatprep.mubr.f32.mxu0 0.0
    %1878 = vmatmul.mubr.f32.gmra.mxu0 %v1529
    %v1879 = vpop.f32.mrf.mxu0
    %v1880 = vadd.f32 %v1810, %v1879
    %v1881 = vpop.f32.mrf.mxu0
    %1882 = vdwg.mxu0
    %v1883 = vadd.f32 %v1880, %v677
    %1884 = vmatprep.subr.mxu0 0.0
    %1885 = vmatpush1.msra.mxu0 0.0
    %1886 = vmatprep.subr.mxu0 0.0
    %1887 = vmatpush1.msra.mxu0 0.0
    %1888 = vmatprep.subr.mxu0 0.0
    %1889 = vmatpush1.msra.mxu0 0.0
    %1890 = vmatprep.subr.mxu0 0.0
    %1891 = vmatpush1.msra.mxu0 0.0
    %1892 = vmatprep.subr.mxu0 0.0
    %1893 = vmatpush1.msra.mxu0 0.0
    %1894 = vmatprep.subr.mxu0 0.0
    %1895 = vmatpush1.msra.mxu0 0.0
    %1896 = vmatprep.subr.mxu0 0.0
    %1897 = vmatpush1.msra.mxu0 0.0
    %1898 = vmatprep.subr.mxu0 0.0
    %1899 = vmatpush1.msra.mxu0 0.0
    %1900 = vmatprep.subr.mxu0 0.0
    %1901 = vmatpush1.msra.mxu0 0.0
    %1902 = vmatprep.subr.mxu0 0.0
    %1903 = vmatpush1.msra.mxu0 0.0
    %1904 = vmatprep.subr.mxu0 0.0
    %1905 = vmatpush1.msra.mxu0 %v212
    %1906 = vmatprep.subr.mxu0 0.0
    %1907 = vmatpush1.msra.mxu0 %v211
    %1908 = vmatprep.subr.mxu0 0.0
    %1909 = vmatpush1.msra.mxu0 %v210
    %1910 = vmatprep.subr.mxu0 0.0
    %1911 = vmatpush1.msra.mxu0 %v209
    %1912 = vmatprep.subr.mxu0 0.0
    %1913 = vmatpush1.msra.mxu0 %v208
    %1914 = vmatprep.subr.mxu0 0.0
    %1915 = vmatpush1.msra.mxu0 %v207
    %1916 = vmatprep.subr.mxu0 0.0
    %1917 = vmatpush2.msra.mxu0 0.0
    %1918 = vmatprep.subr.mxu0 0.0
    %1919 = vmatpush2.msra.mxu0 0.0
    %1920 = vmatprep.subr.mxu0 0.0
    %1921 = vmatpush2.msra.mxu0 0.0
    %1922 = vmatprep.subr.mxu0 0.0
    %1923 = vmatpush2.msra.mxu0 0.0
    %1924 = vmatprep.subr.mxu0 0.0
    %1925 = vmatpush2.msra.mxu0 0.0
    %1926 = vmatprep.subr.mxu0 0.0
    %1927 = vmatpush2.msra.mxu0 0.0
    %1928 = vmatprep.subr.mxu0 0.0
    %1929 = vmatpush2.msra.mxu0 0.0
    %1930 = vmatprep.subr.mxu0 0.0
    %1931 = vmatpush2.msra.mxu0 0.0
    %1932 = vmatprep.subr.mxu0 0.0
    %1933 = vmatpush2.msra.mxu0 0.0
    %1934 = vmatprep.subr.mxu0 0.0
    %1935 = vmatpush2.msra.mxu0 0.0
    %1936 = vmatprep.subr.mxu0 0.0
    %1937 = vmatpush2.msra.mxu0 0.0
    %1938 = vmatprep.subr.mxu0 0.0
    %1939 = vmatpush2.msra.mxu0 0.0
    %1940 = vmatprep.subr.mxu0 0.0
    %1941 = vmatpush2.msra.mxu0 0.0
    %1942 = vmatprep.subr.mxu0 0.0
    %1943 = vmatpush2.msra.mxu0 0.0
    %1944 = vmatprep.subr.mxu0 0.0
    %1945 = vmatpush2.msra.mxu0 0.0
    %1946 = vmatprep.subr.mxu0 0.0
    %1947 = vmatpush2.msra.mxu0 0.0
    %1948 = vmatprep.mubr.f32.mxu0 0.0
    %1949 = vmatmul.mubr.f32.gmra.mxu0 %v1451
    %v1950 = vpop.f32.mrf.mxu0
    %v1951 = vadd.f32 0.0, %v1950
    %v1952 = vpop.f32.mrf.mxu0
    %1953 = vdwg.mxu0
    %1954 = vmatprep.subr.mxu0 0.0
    %1955 = vmatpush1.msra.mxu0 0.0
    %1956 = vmatprep.subr.mxu0 0.0
    %1957 = vmatpush1.msra.mxu0 0.0
    %1958 = vmatprep.subr.mxu0 0.0
    %1959 = vmatpush1.msra.mxu0 0.0
    %1960 = vmatprep.subr.mxu0 0.0
    %1961 = vmatpush1.msra.mxu0 0.0
    %1962 = vmatprep.subr.mxu0 0.0
    %1963 = vmatpush1.msra.mxu0 0.0
    %1964 = vmatprep.subr.mxu0 0.0
    %1965 = vmatpush1.msra.mxu0 0.0
    %1966 = vmatprep.subr.mxu0 0.0
    %1967 = vmatpush1.msra.mxu0 0.0
    %1968 = vmatprep.subr.mxu0 0.0
    %1969 = vmatpush1.msra.mxu0 0.0
    %1970 = vmatprep.subr.mxu0 0.0
    %1971 = vmatpush1.msra.mxu0 0.0
    %1972 = vmatprep.subr.mxu0 0.0
    %1973 = vmatpush1.msra.mxu0 0.0
    %1974 = vmatprep.subr.mxu0 0.0
    %1975 = vmatpush1.msra.mxu0 %v185
    %1976 = vmatprep.subr.mxu0 0.0
    %1977 = vmatpush1.msra.mxu0 %v184
    %1978 = vmatprep.subr.mxu0 0.0
    %1979 = vmatpush1.msra.mxu0 %v183
    %1980 = vmatprep.subr.mxu0 0.0
    %1981 = vmatpush1.msra.mxu0 %v182
    %1982 = vmatprep.subr.mxu0 0.0
    %1983 = vmatpush1.msra.mxu0 %v181
    %1984 = vmatprep.subr.mxu0 0.0
    %1985 = vmatpush1.msra.mxu0 %v180
    %1986 = vmatprep.subr.mxu0 0.0
    %1987 = vmatpush2.msra.mxu0 0.0
    %1988 = vmatprep.subr.mxu0 0.0
    %1989 = vmatpush2.msra.mxu0 0.0
    %1990 = vmatprep.subr.mxu0 0.0
    %1991 = vmatpush2.msra.mxu0 0.0
    %1992 = vmatprep.subr.mxu0 0.0
    %1993 = vmatpush2.msra.mxu0 0.0
    %1994 = vmatprep.subr.mxu0 0.0
    %1995 = vmatpush2.msra.mxu0 0.0
    %1996 = vmatprep.subr.mxu0 0.0
    %1997 = vmatpush2.msra.mxu0 0.0
    %1998 = vmatprep.subr.mxu0 0.0
    %1999 = vmatpush2.msra.mxu0 0.0
    %2000 = vmatprep.subr.mxu0 0.0
    %2001 = vmatpush2.msra.mxu0 0.0
    %2002 = vmatprep.subr.mxu0 0.0
    %2003 = vmatpush2.msra.mxu0 0.0
    %2004 = vmatprep.subr.mxu0 0.0
    %2005 = vmatpush2.msra.mxu0 0.0
    %2006 = vmatprep.subr.mxu0 0.0
    %2007 = vmatpush2.msra.mxu0 0.0
    %2008 = vmatprep.subr.mxu0 0.0
    %2009 = vmatpush2.msra.mxu0 0.0
    %2010 = vmatprep.subr.mxu0 0.0
    %2011 = vmatpush2.msra.mxu0 0.0
    %2012 = vmatprep.subr.mxu0 0.0
    %2013 = vmatpush2.msra.mxu0 0.0
    %2014 = vmatprep.subr.mxu0 0.0
    %2015 = vmatpush2.msra.mxu0 0.0
    %2016 = vmatprep.subr.mxu0 0.0
    %2017 = vmatpush2.msra.mxu0 0.0
    %2018 = vmatprep.mubr.f32.mxu0 0.0
    %2019 = vmatmul.mubr.f32.gmra.mxu0 %v1529
    %v2020 = vpop.f32.mrf.mxu0
    %v2021 = vadd.f32 %v1951, %v2020
    %v2022 = vpop.f32.mrf.mxu0
    %2023 = vdwg.mxu0
    %v2024 = vadd.f32 %v2021, %v824
    %v2025 = vxor.u32 %v1742, 2147483648
    %v2026 = vmul.f32 %v2025, 1.442695
    %v2027 = vpow.pop %v2026
    %v2028 = vadd.f32 %v2027, 1.0
    %v2029 = vrcp.pop %v2028
    %v2030 = vmul.f32 1.0, %v2029
    %v2031 = vmul.f32 %v2030, %v1441
    %v2032 = vxor.u32 %v1601, 2147483648
    %v2033 = vmul.f32 %v2032, 1.442695
    %v2034 = vpow.pop %v2033
    %v2035 = vadd.f32 %v2034, 1.0
    %v2036 = vrcp.pop %v2035
    %v2037 = vmul.f32 1.0, %v2036
    %v2038 = vtanh.pop %v1883
    %v2039 = vmul.f32 %v2037, %v2038
    %v2040 = vadd.f32 %v2031, %v2039
    %v2041 = vxor.u32 %v2024, 2147483648
    %v2042 = vmul.f32 %v2041, 1.442695
    %v2043 = vpow.pop %v2042
    %v2044 = vadd.f32 %v2043, 1.0
    %v2045 = vrcp.pop %v2044
    %v2046 = vmul.f32 1.0, %v2045
    %v2047 = vtanh.pop %v2040
    %v2048 = vmul.f32 %v2046, %v2047
    %v2050 = vsel %vm220, %v2048, 0
    %2052 = vmatprep.subr.mxu0 0.0
    %2053 = vmatpush1.msra.mxu0 0.0
    %2054 = vmatprep.subr.mxu0 0.0
    %2055 = vmatpush1.msra.mxu0 0.0
    %2056 = vmatprep.subr.mxu0 0.0
    %2057 = vmatpush1.msra.mxu0 0.0
    %2058 = vmatprep.subr.mxu0 0.0
    %2059 = vmatpush1.msra.mxu0 0.0
    %2060 = vmatprep.subr.mxu0 0.0
    %2061 = vmatpush1.msra.mxu0 0.0
    %2062 = vmatprep.subr.mxu0 0.0
    %2063 = vmatpush1.msra.mxu0 0.0
    %2064 = vmatprep.subr.mxu0 0.0
    %2065 = vmatpush1.msra.mxu0 0.0
    %2066 = vmatprep.subr.mxu0 0.0
    %2067 = vmatpush1.msra.mxu0 0.0
    %2068 = vmatprep.subr.mxu0 0.0
    %2069 = vmatpush1.msra.mxu0 0.0
    %2070 = vmatprep.subr.mxu0 0.0
    %2071 = vmatpush1.msra.mxu0 0.0
    %2072 = vmatprep.subr.mxu0 0.0
    %2073 = vmatpush1.msra.mxu0 %v191
    %2074 = vmatprep.subr.mxu0 0.0
    %2075 = vmatpush1.msra.mxu0 %v190
    %2076 = vmatprep.subr.mxu0 0.0
    %2077 = vmatpush1.msra.mxu0 %v189
    %2078 = vmatprep.subr.mxu0 0.0
    %2079 = vmatpush1.msra.mxu0 %v188
    %2080 = vmatprep.subr.mxu0 0.0
    %2081 = vmatpush1.msra.mxu0 %v187
    %2082 = vmatprep.subr.mxu0 0.0
    %2083 = vmatpush1.msra.mxu0 %v186
    %2084 = vmatprep.subr.mxu0 0.0
    %2085 = vmatpush2.msra.mxu0 0.0
    %2086 = vmatprep.subr.mxu0 0.0
    %2087 = vmatpush2.msra.mxu0 0.0
    %2088 = vmatprep.subr.mxu0 0.0
    %2089 = vmatpush2.msra.mxu0 0.0
    %2090 = vmatprep.subr.mxu0 0.0
    %2091 = vmatpush2.msra.mxu0 0.0
    %2092 = vmatprep.subr.mxu0 0.0
    %2093 = vmatpush2.msra.mxu0 0.0
    %2094 = vmatprep.subr.mxu0 0.0
    %2095 = vmatpush2.msra.mxu0 0.0
    %2096 = vmatprep.subr.mxu0 0.0
    %2097 = vmatpush2.msra.mxu0 0.0
    %2098 = vmatprep.subr.mxu0 0.0
    %2099 = vmatpush2.msra.mxu0 0.0
    %2100 = vmatprep.subr.mxu0 0.0
    %2101 = vmatpush2.msra.mxu0 0.0
    %2102 = vmatprep.subr.mxu0 0.0
    %2103 = vmatpush2.msra.mxu0 0.0
    %2104 = vmatprep.subr.mxu0 0.0
    %2105 = vmatpush2.msra.mxu0 0.0
    %2106 = vmatprep.subr.mxu0 0.0
    %2107 = vmatpush2.msra.mxu0 0.0
    %2108 = vmatprep.subr.mxu0 0.0
    %2109 = vmatpush2.msra.mxu0 0.0
    %2110 = vmatprep.subr.mxu0 0.0
    %2111 = vmatpush2.msra.mxu0 0.0
    %2112 = vmatprep.subr.mxu0 0.0
    %2113 = vmatpush2.msra.mxu0 0.0
    %2114 = vmatprep.subr.mxu0 0.0
    %2115 = vmatpush2.msra.mxu0 0.0
    %2116 = vmatprep.mubr.f32.mxu0 0.0
    %2117 = vmatmul.mubr.f32.gmra.mxu0 %v2050
    %v2118 = vpop.f32.mrf.mxu0
    %v2119 = vadd.f32 0.0, %v2118
    %v2120 = vpop.f32.mrf.mxu0
    %2121 = vdwg.mxu0
    %v2122 = vrot.slane %v155, 3
    %v2123 = vrot.slane %v156, 2
    %v2124 = vsel %vm299, %v2123, %v2122
    %v2125 = vrot.slane %v157, 1
    %v2126 = vsel %vm302, %v2125, %v2124
    %v2127 = vsel %vm305, %v158, %v2126
    %v2128 = vsel %vm220, %v2127, 0
    %2130 = vmatprep.subr.mxu0 0.0
    %2131 = vmatpush1.msra.mxu0 0.0
    %2132 = vmatprep.subr.mxu0 0.0
    %2133 = vmatpush1.msra.mxu0 0.0
    %2134 = vmatprep.subr.mxu0 0.0
    %2135 = vmatpush1.msra.mxu0 0.0
    %2136 = vmatprep.subr.mxu0 0.0
    %2137 = vmatpush1.msra.mxu0 0.0
    %2138 = vmatprep.subr.mxu0 0.0
    %2139 = vmatpush1.msra.mxu0 0.0
    %2140 = vmatprep.subr.mxu0 0.0
    %2141 = vmatpush1.msra.mxu0 0.0
    %2142 = vmatprep.subr.mxu0 0.0
    %2143 = vmatpush1.msra.mxu0 0.0
    %2144 = vmatprep.subr.mxu0 0.0
    %2145 = vmatpush1.msra.mxu0 0.0
    %2146 = vmatprep.subr.mxu0 0.0
    %2147 = vmatpush1.msra.mxu0 0.0
    %2148 = vmatprep.subr.mxu0 0.0
    %2149 = vmatpush1.msra.mxu0 0.0
    %2150 = vmatprep.subr.mxu0 0.0
    %2151 = vmatpush1.msra.mxu0 %v164
    %2152 = vmatprep.subr.mxu0 0.0
    %2153 = vmatpush1.msra.mxu0 %v163
    %2154 = vmatprep.subr.mxu0 0.0
    %2155 = vmatpush1.msra.mxu0 %v162
    %2156 = vmatprep.subr.mxu0 0.0
    %2157 = vmatpush1.msra.mxu0 %v161
    %2158 = vmatprep.subr.mxu0 0.0
    %2159 = vmatpush1.msra.mxu0 %v160
    %2160 = vmatprep.subr.mxu0 0.0
    %2161 = vmatpush1.msra.mxu0 %v159
    %2162 = vmatprep.subr.mxu0 0.0
    %2163 = vmatpush2.msra.mxu0 0.0
    %2164 = vmatprep.subr.mxu0 0.0
    %2165 = vmatpush2.msra.mxu0 0.0
    %2166 = vmatprep.subr.mxu0 0.0
    %2167 = vmatpush2.msra.mxu0 0.0
    %2168 = vmatprep.subr.mxu0 0.0
    %2169 = vmatpush2.msra.mxu0 0.0
    %2170 = vmatprep.subr.mxu0 0.0
    %2171 = vmatpush2.msra.mxu0 0.0
    %2172 = vmatprep.subr.mxu0 0.0
    %2173 = vmatpush2.msra.mxu0 0.0
    %2174 = vmatprep.subr.mxu0 0.0
    %2175 = vmatpush2.msra.mxu0 0.0
    %2176 = vmatprep.subr.mxu0 0.0
    %2177 = vmatpush2.msra.mxu0 0.0
    %2178 = vmatprep.subr.mxu0 0.0
    %2179 = vmatpush2.msra.mxu0 0.0
    %2180 = vmatprep.subr.mxu0 0.0
    %2181 = vmatpush2.msra.mxu0 0.0
    %2182 = vmatprep.subr.mxu0 0.0
    %2183 = vmatpush2.msra.mxu0 0.0
    %2184 = vmatprep.subr.mxu0 0.0
    %2185 = vmatpush2.msra.mxu0 0.0
    %2186 = vmatprep.subr.mxu0 0.0
    %2187 = vmatpush2.msra.mxu0 0.0
    %2188 = vmatprep.subr.mxu0 0.0
    %2189 = vmatpush2.msra.mxu0 0.0
    %2190 = vmatprep.subr.mxu0 0.0
    %2191 = vmatpush2.msra.mxu0 0.0
    %2192 = vmatprep.subr.mxu0 0.0
    %2193 = vmatpush2.msra.mxu0 0.0
    %2194 = vmatprep.mubr.f32.mxu0 0.0
    %2195 = vmatmul.mubr.f32.gmra.mxu0 %v2128
    %v2196 = vpop.f32.mrf.mxu0
    %v2197 = vadd.f32 %v2119, %v2196
    %v2198 = vpop.f32.mrf.mxu0
    %2199 = vdwg.mxu0
    %v2200 = vadd.f32 %v2197, %v383
    %2201 = vmatprep.subr.mxu0 0.0
    %2202 = vmatpush1.msra.mxu0 0.0
    %2203 = vmatprep.subr.mxu0 0.0
    %2204 = vmatpush1.msra.mxu0 0.0
    %2205 = vmatprep.subr.mxu0 0.0
    %2206 = vmatpush1.msra.mxu0 0.0
    %2207 = vmatprep.subr.mxu0 0.0
    %2208 = vmatpush1.msra.mxu0 0.0
    %2209 = vmatprep.subr.mxu0 0.0
    %2210 = vmatpush1.msra.mxu0 0.0
    %2211 = vmatprep.subr.mxu0 0.0
    %2212 = vmatpush1.msra.mxu0 0.0
    %2213 = vmatprep.subr.mxu0 0.0
    %2214 = vmatpush1.msra.mxu0 0.0
    %2215 = vmatprep.subr.mxu0 0.0
    %2216 = vmatpush1.msra.mxu0 0.0
    %2217 = vmatprep.subr.mxu0 0.0
    %2218 = vmatpush1.msra.mxu0 0.0
    %2219 = vmatprep.subr.mxu0 0.0
    %2220 = vmatpush1.msra.mxu0 0.0
    %2221 = vmatprep.subr.mxu0 0.0
    %2222 = vmatpush1.msra.mxu0 %v198
    %2223 = vmatprep.subr.mxu0 0.0
    %2224 = vmatpush1.msra.mxu0 %v197
    %2225 = vmatprep.subr.mxu0 0.0
    %2226 = vmatpush1.msra.mxu0 %v196
    %2227 = vmatprep.subr.mxu0 0.0
    %2228 = vmatpush1.msra.mxu0 %v195
    %2229 = vmatprep.subr.mxu0 0.0
    %2230 = vmatpush1.msra.mxu0 %v194
    %2231 = vmatprep.subr.mxu0 0.0
    %2232 = vmatpush1.msra.mxu0 %v193
    %2233 = vmatprep.subr.mxu0 0.0
    %2234 = vmatpush2.msra.mxu0 0.0
    %2235 = vmatprep.subr.mxu0 0.0
    %2236 = vmatpush2.msra.mxu0 0.0
    %2237 = vmatprep.subr.mxu0 0.0
    %2238 = vmatpush2.msra.mxu0 0.0
    %2239 = vmatprep.subr.mxu0 0.0
    %2240 = vmatpush2.msra.mxu0 0.0
    %2241 = vmatprep.subr.mxu0 0.0
    %2242 = vmatpush2.msra.mxu0 0.0
    %2243 = vmatprep.subr.mxu0 0.0
    %2244 = vmatpush2.msra.mxu0 0.0
    %2245 = vmatprep.subr.mxu0 0.0
    %2246 = vmatpush2.msra.mxu0 0.0
    %2247 = vmatprep.subr.mxu0 0.0
    %2248 = vmatpush2.msra.mxu0 0.0
    %2249 = vmatprep.subr.mxu0 0.0
    %2250 = vmatpush2.msra.mxu0 0.0
    %2251 = vmatprep.subr.mxu0 0.0
    %2252 = vmatpush2.msra.mxu0 0.0
    %2253 = vmatprep.subr.mxu0 0.0
    %2254 = vmatpush2.msra.mxu0 0.0
    %2255 = vmatprep.subr.mxu0 0.0
    %2256 = vmatpush2.msra.mxu0 0.0
    %2257 = vmatprep.subr.mxu0 0.0
    %2258 = vmatpush2.msra.mxu0 0.0
    %2259 = vmatprep.subr.mxu0 0.0
    %2260 = vmatpush2.msra.mxu0 0.0
    %2261 = vmatprep.subr.mxu0 0.0
    %2262 = vmatpush2.msra.mxu0 0.0
    %2263 = vmatprep.subr.mxu0 0.0
    %2264 = vmatpush2.msra.mxu0 0.0
    %2265 = vmatprep.mubr.f32.mxu0 0.0
    %2266 = vmatmul.mubr.f32.gmra.mxu0 %v2050
    %v2267 = vpop.f32.mrf.mxu0
    %v2268 = vadd.f32 0.0, %v2267
    %v2269 = vpop.f32.mrf.mxu0
    %2270 = vdwg.mxu0
    %2271 = vmatprep.subr.mxu0 0.0
    %2272 = vmatpush1.msra.mxu0 0.0
    %2273 = vmatprep.subr.mxu0 0.0
    %2274 = vmatpush1.msra.mxu0 0.0
    %2275 = vmatprep.subr.mxu0 0.0
    %2276 = vmatpush1.msra.mxu0 0.0
    %2277 = vmatprep.subr.mxu0 0.0
    %2278 = vmatpush1.msra.mxu0 0.0
    %2279 = vmatprep.subr.mxu0 0.0
    %2280 = vmatpush1.msra.mxu0 0.0
    %2281 = vmatprep.subr.mxu0 0.0
    %2282 = vmatpush1.msra.mxu0 0.0
    %2283 = vmatprep.subr.mxu0 0.0
    %2284 = vmatpush1.msra.mxu0 0.0
    %2285 = vmatprep.subr.mxu0 0.0
    %2286 = vmatpush1.msra.mxu0 0.0
    %2287 = vmatprep.subr.mxu0 0.0
    %2288 = vmatpush1.msra.mxu0 0.0
    %2289 = vmatprep.subr.mxu0 0.0
    %2290 = vmatpush1.msra.mxu0 0.0
    %2291 = vmatprep.subr.mxu0 0.0
    %2292 = vmatpush1.msra.mxu0 %v171
    %2293 = vmatprep.subr.mxu0 0.0
    %2294 = vmatpush1.msra.mxu0 %v170
    %2295 = vmatprep.subr.mxu0 0.0
    %2296 = vmatpush1.msra.mxu0 %v169
    %2297 = vmatprep.subr.mxu0 0.0
    %2298 = vmatpush1.msra.mxu0 %v168
    %2299 = vmatprep.subr.mxu0 0.0
    %2300 = vmatpush1.msra.mxu0 %v167
    %2301 = vmatprep.subr.mxu0 0.0
    %2302 = vmatpush1.msra.mxu0 %v166
    %2303 = vmatprep.subr.mxu0 0.0
    %2304 = vmatpush2.msra.mxu0 0.0
    %2305 = vmatprep.subr.mxu0 0.0
    %2306 = vmatpush2.msra.mxu0 0.0
    %2307 = vmatprep.subr.mxu0 0.0
    %2308 = vmatpush2.msra.mxu0 0.0
    %2309 = vmatprep.subr.mxu0 0.0
    %2310 = vmatpush2.msra.mxu0 0.0
    %2311 = vmatprep.subr.mxu0 0.0
    %2312 = vmatpush2.msra.mxu0 0.0
    %2313 = vmatprep.subr.mxu0 0.0
    %2314 = vmatpush2.msra.mxu0 0.0
    %2315 = vmatprep.subr.mxu0 0.0
    %2316 = vmatpush2.msra.mxu0 0.0
    %2317 = vmatprep.subr.mxu0 0.0
    %2318 = vmatpush2.msra.mxu0 0.0
    %2319 = vmatprep.subr.mxu0 0.0
    %2320 = vmatpush2.msra.mxu0 0.0
    %2321 = vmatprep.subr.mxu0 0.0
    %2322 = vmatpush2.msra.mxu0 0.0
    %2323 = vmatprep.subr.mxu0 0.0
    %2324 = vmatpush2.msra.mxu0 0.0
    %2325 = vmatprep.subr.mxu0 0.0
    %2326 = vmatpush2.msra.mxu0 0.0
    %2327 = vmatprep.subr.mxu0 0.0
    %2328 = vmatpush2.msra.mxu0 0.0
    %2329 = vmatprep.subr.mxu0 0.0
    %2330 = vmatpush2.msra.mxu0 0.0
    %2331 = vmatprep.subr.mxu0 0.0
    %2332 = vmatpush2.msra.mxu0 0.0
    %2333 = vmatprep.subr.mxu0 0.0
    %2334 = vmatpush2.msra.mxu0 0.0
    %2335 = vmatprep.mubr.f32.mxu0 0.0
    %2336 = vmatmul.mubr.f32.gmra.mxu0 %v2128
    %v2337 = vpop.f32.mrf.mxu0
    %v2338 = vadd.f32 %v2268, %v2337
    %v2339 = vpop.f32.mrf.mxu0
    %2340 = vdwg.mxu0
    %v2341 = vadd.f32 %v2338, %v530
    %2342 = vmatprep.subr.mxu0 0.0
    %2343 = vmatpush1.msra.mxu0 0.0
    %2344 = vmatprep.subr.mxu0 0.0
    %2345 = vmatpush1.msra.mxu0 0.0
    %2346 = vmatprep.subr.mxu0 0.0
    %2347 = vmatpush1.msra.mxu0 0.0
    %2348 = vmatprep.subr.mxu0 0.0
    %2349 = vmatpush1.msra.mxu0 0.0
    %2350 = vmatprep.subr.mxu0 0.0
    %2351 = vmatpush1.msra.mxu0 0.0
    %2352 = vmatprep.subr.mxu0 0.0
    %2353 = vmatpush1.msra.mxu0 0.0
    %2354 = vmatprep.subr.mxu0 0.0
    %2355 = vmatpush1.msra.mxu0 0.0
    %2356 = vmatprep.subr.mxu0 0.0
    %2357 = vmatpush1.msra.mxu0 0.0
    %2358 = vmatprep.subr.mxu0 0.0
    %2359 = vmatpush1.msra.mxu0 0.0
    %2360 = vmatprep.subr.mxu0 0.0
    %2361 = vmatpush1.msra.mxu0 0.0
    %2362 = vmatprep.subr.mxu0 0.0
    %2363 = vmatpush1.msra.mxu0 %v205
    %2364 = vmatprep.subr.mxu0 0.0
    %2365 = vmatpush1.msra.mxu0 %v204
    %2366 = vmatprep.subr.mxu0 0.0
    %2367 = vmatpush1.msra.mxu0 %v203
    %2368 = vmatprep.subr.mxu0 0.0
    %2369 = vmatpush1.msra.mxu0 %v202
    %2370 = vmatprep.subr.mxu0 0.0
    %2371 = vmatpush1.msra.mxu0 %v201
    %2372 = vmatprep.subr.mxu0 0.0
    %2373 = vmatpush1.msra.mxu0 %v200
    %2374 = vmatprep.subr.mxu0 0.0
    %2375 = vmatpush2.msra.mxu0 0.0
    %2376 = vmatprep.subr.mxu0 0.0
    %2377 = vmatpush2.msra.mxu0 0.0
    %2378 = vmatprep.subr.mxu0 0.0
    %2379 = vmatpush2.msra.mxu0 0.0
    %2380 = vmatprep.subr.mxu0 0.0
    %2381 = vmatpush2.msra.mxu0 0.0
    %2382 = vmatprep.subr.mxu0 0.0
    %2383 = vmatpush2.msra.mxu0 0.0
    %2384 = vmatprep.subr.mxu0 0.0
    %2385 = vmatpush2.msra.mxu0 0.0
    %2386 = vmatprep.subr.mxu0 0.0
    %2387 = vmatpush2.msra.mxu0 0.0
    %2388 = vmatprep.subr.mxu0 0.0
    %2389 = vmatpush2.msra.mxu0 0.0
    %2390 = vmatprep.subr.mxu0 0.0
    %2391 = vmatpush2.msra.mxu0 0.0
    %2392 = vmatprep.subr.mxu0 0.0
    %2393 = vmatpush2.msra.mxu0 0.0
    %2394 = vmatprep.subr.mxu0 0.0
    %2395 = vmatpush2.msra.mxu0 0.0
    %2396 = vmatprep.subr.mxu0 0.0
    %2397 = vmatpush2.msra.mxu0 0.0
    %2398 = vmatprep.subr.mxu0 0.0
    %2399 = vmatpush2.msra.mxu0 0.0
    %2400 = vmatprep.subr.mxu0 0.0
    %2401 = vmatpush2.msra.mxu0 0.0
    %2402 = vmatprep.subr.mxu0 0.0
    %2403 = vmatpush2.msra.mxu0 0.0
    %2404 = vmatprep.subr.mxu0 0.0
    %2405 = vmatpush2.msra.mxu0 0.0
    %2406 = vmatprep.mubr.f32.mxu0 0.0
    %2407 = vmatmul.mubr.f32.gmra.mxu0 %v2050
    %v2408 = vpop.f32.mrf.mxu0
    %v2409 = vadd.f32 0.0, %v2408
    %v2410 = vpop.f32.mrf.mxu0
    %2411 = vdwg.mxu0
    %2412 = vmatprep.subr.mxu0 0.0
    %2413 = vmatpush1.msra.mxu0 0.0
    %2414 = vmatprep.subr.mxu0 0.0
    %2415 = vmatpush1.msra.mxu0 0.0
    %2416 = vmatprep.subr.mxu0 0.0
    %2417 = vmatpush1.msra.mxu0 0.0
    %2418 = vmatprep.subr.mxu0 0.0
    %2419 = vmatpush1.msra.mxu0 0.0
    %2420 = vmatprep.subr.mxu0 0.0
    %2421 = vmatpush1.msra.mxu0 0.0
    %2422 = vmatprep.subr.mxu0 0.0
    %2423 = vmatpush1.msra.mxu0 0.0
    %2424 = vmatprep.subr.mxu0 0.0
    %2425 = vmatpush1.msra.mxu0 0.0
    %2426 = vmatprep.subr.mxu0 0.0
    %2427 = vmatpush1.msra.mxu0 0.0
    %2428 = vmatprep.subr.mxu0 0.0
    %2429 = vmatpush1.msra.mxu0 0.0
    %2430 = vmatprep.subr.mxu0 0.0
    %2431 = vmatpush1.msra.mxu0 0.0
    %2432 = vmatprep.subr.mxu0 0.0
    %2433 = vmatpush1.msra.mxu0 %v178
    %2434 = vmatprep.subr.mxu0 0.0
    %2435 = vmatpush1.msra.mxu0 %v177
    %2436 = vmatprep.subr.mxu0 0.0
    %2437 = vmatpush1.msra.mxu0 %v176
    %2438 = vmatprep.subr.mxu0 0.0
    %2439 = vmatpush1.msra.mxu0 %v175
    %2440 = vmatprep.subr.mxu0 0.0
    %2441 = vmatpush1.msra.mxu0 %v174
    %2442 = vmatprep.subr.mxu0 0.0
    %2443 = vmatpush1.msra.mxu0 %v173
    %2444 = vmatprep.subr.mxu0 0.0
    %2445 = vmatpush2.msra.mxu0 0.0
    %2446 = vmatprep.subr.mxu0 0.0
    %2447 = vmatpush2.msra.mxu0 0.0
    %2448 = vmatprep.subr.mxu0 0.0
    %2449 = vmatpush2.msra.mxu0 0.0
    %2450 = vmatprep.subr.mxu0 0.0
    %2451 = vmatpush2.msra.mxu0 0.0
    %2452 = vmatprep.subr.mxu0 0.0
    %2453 = vmatpush2.msra.mxu0 0.0
    %2454 = vmatprep.subr.mxu0 0.0
    %2455 = vmatpush2.msra.mxu0 0.0
    %2456 = vmatprep.subr.mxu0 0.0
    %2457 = vmatpush2.msra.mxu0 0.0
    %2458 = vmatprep.subr.mxu0 0.0
    %2459 = vmatpush2.msra.mxu0 0.0
    %2460 = vmatprep.subr.mxu0 0.0
    %2461 = vmatpush2.msra.mxu0 0.0
    %2462 = vmatprep.subr.mxu0 0.0
    %2463 = vmatpush2.msra.mxu0 0.0
    %2464 = vmatprep.subr.mxu0 0.0
    %2465 = vmatpush2.msra.mxu0 0.0
    %2466 = vmatprep.subr.mxu0 0.0
    %2467 = vmatpush2.msra.mxu0 0.0
    %2468 = vmatprep.subr.mxu0 0.0
    %2469 = vmatpush2.msra.mxu0 0.0
    %2470 = vmatprep.subr.mxu0 0.0
    %2471 = vmatpush2.msra.mxu0 0.0
    %2472 = vmatprep.subr.mxu0 0.0
    %2473 = vmatpush2.msra.mxu0 0.0
    %2474 = vmatprep.subr.mxu0 0.0
    %2475 = vmatpush2.msra.mxu0 0.0
    %2476 = vmatprep.mubr.f32.mxu0 0.0
    %2477 = vmatmul.mubr.f32.gmra.mxu0 %v2128
    %v2478 = vpop.f32.mrf.mxu0
    %v2479 = vadd.f32 %v2409, %v2478
    %v2480 = vpop.f32.mrf.mxu0
    %2481 = vdwg.mxu0
    %v2482 = vadd.f32 %v2479, %v677
    %2483 = vmatprep.subr.mxu0 0.0
    %2484 = vmatpush1.msra.mxu0 0.0
    %2485 = vmatprep.subr.mxu0 0.0
    %2486 = vmatpush1.msra.mxu0 0.0
    %2487 = vmatprep.subr.mxu0 0.0
    %2488 = vmatpush1.msra.mxu0 0.0
    %2489 = vmatprep.subr.mxu0 0.0
    %2490 = vmatpush1.msra.mxu0 0.0
    %2491 = vmatprep.subr.mxu0 0.0
    %2492 = vmatpush1.msra.mxu0 0.0
    %2493 = vmatprep.subr.mxu0 0.0
    %2494 = vmatpush1.msra.mxu0 0.0
    %2495 = vmatprep.subr.mxu0 0.0
    %2496 = vmatpush1.msra.mxu0 0.0
    %2497 = vmatprep.subr.mxu0 0.0
    %2498 = vmatpush1.msra.mxu0 0.0
    %2499 = vmatprep.subr.mxu0 0.0
    %2500 = vmatpush1.msra.mxu0 0.0
    %2501 = vmatprep.subr.mxu0 0.0
    %2502 = vmatpush1.msra.mxu0 0.0
    %2503 = vmatprep.subr.mxu0 0.0
    %2504 = vmatpush1.msra.mxu0 %v212
    %2505 = vmatprep.subr.mxu0 0.0
    %2506 = vmatpush1.msra.mxu0 %v211
    %2507 = vmatprep.subr.mxu0 0.0
    %2508 = vmatpush1.msra.mxu0 %v210
    %2509 = vmatprep.subr.mxu0 0.0
    %2510 = vmatpush1.msra.mxu0 %v209
    %2511 = vmatprep.subr.mxu0 0.0
    %2512 = vmatpush1.msra.mxu0 %v208
    %2513 = vmatprep.subr.mxu0 0.0
    %2514 = vmatpush1.msra.mxu0 %v207
    %2515 = vmatprep.subr.mxu0 0.0
    %2516 = vmatpush2.msra.mxu0 0.0
    %2517 = vmatprep.subr.mxu0 0.0
    %2518 = vmatpush2.msra.mxu0 0.0
    %2519 = vmatprep.subr.mxu0 0.0
    %2520 = vmatpush2.msra.mxu0 0.0
    %2521 = vmatprep.subr.mxu0 0.0
    %2522 = vmatpush2.msra.mxu0 0.0
    %2523 = vmatprep.subr.mxu0 0.0
    %2524 = vmatpush2.msra.mxu0 0.0
    %2525 = vmatprep.subr.mxu0 0.0
    %2526 = vmatpush2.msra.mxu0 0.0
    %2527 = vmatprep.subr.mxu0 0.0
    %2528 = vmatpush2.msra.mxu0 0.0
    %2529 = vmatprep.subr.mxu0 0.0
    %2530 = vmatpush2.msra.mxu0 0.0
    %2531 = vmatprep.subr.mxu0 0.0
    %2532 = vmatpush2.msra.mxu0 0.0
    %2533 = vmatprep.subr.mxu0 0.0
    %2534 = vmatpush2.msra.mxu0 0.0
    %2535 = vmatprep.subr.mxu0 0.0
    %2536 = vmatpush2.msra.mxu0 0.0
    %2537 = vmatprep.subr.mxu0 0.0
    %2538 = vmatpush2.msra.mxu0 0.0
    %2539 = vmatprep.subr.mxu0 0.0
    %2540 = vmatpush2.msra.mxu0 0.0
    %2541 = vmatprep.subr.mxu0 0.0
    %2542 = vmatpush2.msra.mxu0 0.0
    %2543 = vmatprep.subr.mxu0 0.0
    %2544 = vmatpush2.msra.mxu0 0.0
    %2545 = vmatprep.subr.mxu0 0.0
    %2546 = vmatpush2.msra.mxu0 0.0
    %2547 = vmatprep.mubr.f32.mxu0 0.0
    %2548 = vmatmul.mubr.f32.gmra.mxu0 %v2050
    %v2549 = vpop.f32.mrf.mxu0
    %v2550 = vadd.f32 0.0, %v2549
    %v2551 = vpop.f32.mrf.mxu0
    %2552 = vdwg.mxu0
    %2553 = vmatprep.subr.mxu0 0.0
    %2554 = vmatpush1.msra.mxu0 0.0
    %2555 = vmatprep.subr.mxu0 0.0
    %2556 = vmatpush1.msra.mxu0 0.0
    %2557 = vmatprep.subr.mxu0 0.0
    %2558 = vmatpush1.msra.mxu0 0.0
    %2559 = vmatprep.subr.mxu0 0.0
    %2560 = vmatpush1.msra.mxu0 0.0
    %2561 = vmatprep.subr.mxu0 0.0
    %2562 = vmatpush1.msra.mxu0 0.0
    %2563 = vmatprep.subr.mxu0 0.0
    %2564 = vmatpush1.msra.mxu0 0.0
    %2565 = vmatprep.subr.mxu0 0.0
    %2566 = vmatpush1.msra.mxu0 0.0
    %2567 = vmatprep.subr.mxu0 0.0
    %2568 = vmatpush1.msra.mxu0 0.0
    %2569 = vmatprep.subr.mxu0 0.0
    %2570 = vmatpush1.msra.mxu0 0.0
    %2571 = vmatprep.subr.mxu0 0.0
    %2572 = vmatpush1.msra.mxu0 0.0
    %2573 = vmatprep.subr.mxu0 0.0
    %2574 = vmatpush1.msra.mxu0 %v185
    %2575 = vmatprep.subr.mxu0 0.0
    %2576 = vmatpush1.msra.mxu0 %v184
    %2577 = vmatprep.subr.mxu0 0.0
    %2578 = vmatpush1.msra.mxu0 %v183
    %2579 = vmatprep.subr.mxu0 0.0
    %2580 = vmatpush1.msra.mxu0 %v182
    %2581 = vmatprep.subr.mxu0 0.0
    %2582 = vmatpush1.msra.mxu0 %v181
    %2583 = vmatprep.subr.mxu0 0.0
    %2584 = vmatpush1.msra.mxu0 %v180
    %2585 = vmatprep.subr.mxu0 0.0
    %2586 = vmatpush2.msra.mxu0 0.0
    %2587 = vmatprep.subr.mxu0 0.0
    %2588 = vmatpush2.msra.mxu0 0.0
    %2589 = vmatprep.subr.mxu0 0.0
    %2590 = vmatpush2.msra.mxu0 0.0
    %2591 = vmatprep.subr.mxu0 0.0
    %2592 = vmatpush2.msra.mxu0 0.0
    %2593 = vmatprep.subr.mxu0 0.0
    %2594 = vmatpush2.msra.mxu0 0.0
    %2595 = vmatprep.subr.mxu0 0.0
    %2596 = vmatpush2.msra.mxu0 0.0
    %2597 = vmatprep.subr.mxu0 0.0
    %2598 = vmatpush2.msra.mxu0 0.0
    %2599 = vmatprep.subr.mxu0 0.0
    %2600 = vmatpush2.msra.mxu0 0.0
    %2601 = vmatprep.subr.mxu0 0.0
    %2602 = vmatpush2.msra.mxu0 0.0
    %2603 = vmatprep.subr.mxu0 0.0
    %2604 = vmatpush2.msra.mxu0 0.0
    %2605 = vmatprep.subr.mxu0 0.0
    %2606 = vmatpush2.msra.mxu0 0.0
    %2607 = vmatprep.subr.mxu0 0.0
    %2608 = vmatpush2.msra.mxu0 0.0
    %2609 = vmatprep.subr.mxu0 0.0
    %2610 = vmatpush2.msra.mxu0 0.0
    %2611 = vmatprep.subr.mxu0 0.0
    %2612 = vmatpush2.msra.mxu0 0.0
    %2613 = vmatprep.subr.mxu0 0.0
    %2614 = vmatpush2.msra.mxu0 0.0
    %2615 = vmatprep.subr.mxu0 0.0
    %2616 = vmatpush2.msra.mxu0 0.0
    %2617 = vmatprep.mubr.f32.mxu0 0.0
    %2618 = vmatmul.mubr.f32.gmra.mxu0 %v2128
    %v2619 = vpop.f32.mrf.mxu0
    %v2620 = vadd.f32 %v2550, %v2619
    %v2621 = vpop.f32.mrf.mxu0
    %2622 = vdwg.mxu0
    %v2623 = vadd.f32 %v2620, %v824
    %v2624 = vxor.u32 %v2341, 2147483648
    %v2625 = vmul.f32 %v2624, 1.442695
    %v2626 = vpow.pop %v2625
    %v2627 = vadd.f32 %v2626, 1.0
    %v2628 = vrcp.pop %v2627
    %v2629 = vmul.f32 1.0, %v2628
    %v2630 = vmul.f32 %v2629, %v2040
    %v2631 = vxor.u32 %v2200, 2147483648
    %v2632 = vmul.f32 %v2631, 1.442695
    %v2633 = vpow.pop %v2632
    %v2634 = vadd.f32 %v2633, 1.0
    %v2635 = vrcp.pop %v2634
    %v2636 = vmul.f32 1.0, %v2635
    %v2637 = vtanh.pop %v2482
    %v2638 = vmul.f32 %v2636, %v2637
    %v2639 = vadd.f32 %v2630, %v2638
    %v2640 = vxor.u32 %v2623, 2147483648
    %v2641 = vmul.f32 %v2640, 1.442695
    %v2642 = vpow.pop %v2641
    %v2643 = vadd.f32 %v2642, 1.0
    %v2644 = vrcp.pop %v2643
    %v2645 = vmul.f32 1.0, %v2644
    %v2646 = vtanh.pop %v2639
    %v2647 = vmul.f32 %v2645, %v2646
    %v2649 = vsel %vm220, %v2647, 0
    %2651 = vmatprep.subr.mxu0 0.0
    %2652 = vmatpush1.msra.mxu0 0.0
    %2653 = vmatprep.subr.mxu0 0.0
    %2654 = vmatpush1.msra.mxu0 0.0
    %2655 = vmatprep.subr.mxu0 0.0
    %2656 = vmatpush1.msra.mxu0 0.0
    %2657 = vmatprep.subr.mxu0 0.0
    %2658 = vmatpush1.msra.mxu0 0.0
    %2659 = vmatprep.subr.mxu0 0.0
    %2660 = vmatpush1.msra.mxu0 0.0
    %2661 = vmatprep.subr.mxu0 0.0
    %2662 = vmatpush1.msra.mxu0 0.0
    %2663 = vmatprep.subr.mxu0 0.0
    %2664 = vmatpush1.msra.mxu0 0.0
    %2665 = vmatprep.subr.mxu0 0.0
    %2666 = vmatpush1.msra.mxu0 0.0
    %2667 = vmatprep.subr.mxu0 0.0
    %2668 = vmatpush1.msra.mxu0 0.0
    %2669 = vmatprep.subr.mxu0 0.0
    %2670 = vmatpush1.msra.mxu0 0.0
    %2671 = vmatprep.subr.mxu0 0.0
    %2672 = vmatpush1.msra.mxu0 %v191
    %2673 = vmatprep.subr.mxu0 0.0
    %2674 = vmatpush1.msra.mxu0 %v190
    %2675 = vmatprep.subr.mxu0 0.0
    %2676 = vmatpush1.msra.mxu0 %v189
    %2677 = vmatprep.subr.mxu0 0.0
    %2678 = vmatpush1.msra.mxu0 %v188
    %2679 = vmatprep.subr.mxu0 0.0
    %2680 = vmatpush1.msra.mxu0 %v187
    %2681 = vmatprep.subr.mxu0 0.0
    %2682 = vmatpush1.msra.mxu0 %v186
    %2683 = vmatprep.subr.mxu0 0.0
    %2684 = vmatpush2.msra.mxu0 0.0
    %2685 = vmatprep.subr.mxu0 0.0
    %2686 = vmatpush2.msra.mxu0 0.0
    %2687 = vmatprep.subr.mxu0 0.0
    %2688 = vmatpush2.msra.mxu0 0.0
    %2689 = vmatprep.subr.mxu0 0.0
    %2690 = vmatpush2.msra.mxu0 0.0
    %2691 = vmatprep.subr.mxu0 0.0
    %2692 = vmatpush2.msra.mxu0 0.0
    %2693 = vmatprep.subr.mxu0 0.0
    %2694 = vmatpush2.msra.mxu0 0.0
    %2695 = vmatprep.subr.mxu0 0.0
    %2696 = vmatpush2.msra.mxu0 0.0
    %2697 = vmatprep.subr.mxu0 0.0
    %2698 = vmatpush2.msra.mxu0 0.0
    %2699 = vmatprep.subr.mxu0 0.0
    %2700 = vmatpush2.msra.mxu0 0.0
    %2701 = vmatprep.subr.mxu0 0.0
    %2702 = vmatpush2.msra.mxu0 0.0
    %2703 = vmatprep.subr.mxu0 0.0
    %2704 = vmatpush2.msra.mxu0 0.0
    %2705 = vmatprep.subr.mxu0 0.0
    %2706 = vmatpush2.msra.mxu0 0.0
    %2707 = vmatprep.subr.mxu0 0.0
    %2708 = vmatpush2.msra.mxu0 0.0
    %2709 = vmatprep.subr.mxu0 0.0
    %2710 = vmatpush2.msra.mxu0 0.0
    %2711 = vmatprep.subr.mxu0 0.0
    %2712 = vmatpush2.msra.mxu0 0.0
    %2713 = vmatprep.subr.mxu0 0.0
    %2714 = vmatpush2.msra.mxu0 0.0
    %2715 = vmatprep.mubr.f32.mxu0 0.0
    %2716 = vmatmul.mubr.f32.gmra.mxu0 %v2649
    %v2717 = vpop.f32.mrf.mxu0
    %v2718 = vadd.f32 0.0, %v2717
    %v2719 = vpop.f32.mrf.mxu0
    %2720 = vdwg.mxu0
    %v2721 = vrot.slane %v155, 4
    %v2722 = vrot.slane %v156, 3
    %v2723 = vsel %vm299, %v2722, %v2721
    %v2724 = vrot.slane %v157, 2
    %v2725 = vsel %vm302, %v2724, %v2723
    %v2726 = vrot.slane %v158, 1
    %v2727 = vsel %vm305, %v2726, %v2725
    %v2728 = vsel %vm220, %v2727, 0
    %2730 = vmatprep.subr.mxu0 0.0
    %2731 = vmatpush1.msra.mxu0 0.0
    %2732 = vmatprep.subr.mxu0 0.0
    %2733 = vmatpush1.msra.mxu0 0.0
    %2734 = vmatprep.subr.mxu0 0.0
    %2735 = vmatpush1.msra.mxu0 0.0
    %2736 = vmatprep.subr.mxu0 0.0
    %2737 = vmatpush1.msra.mxu0 0.0
    %2738 = vmatprep.subr.mxu0 0.0
    %2739 = vmatpush1.msra.mxu0 0.0
    %2740 = vmatprep.subr.mxu0 0.0
    %2741 = vmatpush1.msra.mxu0 0.0
    %2742 = vmatprep.subr.mxu0 0.0
    %2743 = vmatpush1.msra.mxu0 0.0
    %2744 = vmatprep.subr.mxu0 0.0
    %2745 = vmatpush1.msra.mxu0 0.0
    %2746 = vmatprep.subr.mxu0 0.0
    %2747 = vmatpush1.msra.mxu0 0.0
    %2748 = vmatprep.subr.mxu0 0.0
    %2749 = vmatpush1.msra.mxu0 0.0
    %2750 = vmatprep.subr.mxu0 0.0
    %2751 = vmatpush1.msra.mxu0 %v164
    %2752 = vmatprep.subr.mxu0 0.0
    %2753 = vmatpush1.msra.mxu0 %v163
    %2754 = vmatprep.subr.mxu0 0.0
    %2755 = vmatpush1.msra.mxu0 %v162
    %2756 = vmatprep.subr.mxu0 0.0
    %2757 = vmatpush1.msra.mxu0 %v161
    %2758 = vmatprep.subr.mxu0 0.0
    %2759 = vmatpush1.msra.mxu0 %v160
    %2760 = vmatprep.subr.mxu0 0.0
    %2761 = vmatpush1.msra.mxu0 %v159
    %2762 = vmatprep.subr.mxu0 0.0
    %2763 = vmatpush2.msra.mxu0 0.0
    %2764 = vmatprep.subr.mxu0 0.0
    %2765 = vmatpush2.msra.mxu0 0.0
    %2766 = vmatprep.subr.mxu0 0.0
    %2767 = vmatpush2.msra.mxu0 0.0
    %2768 = vmatprep.subr.mxu0 0.0
    %2769 = vmatpush2.msra.mxu0 0.0
    %2770 = vmatprep.subr.mxu0 0.0
    %2771 = vmatpush2.msra.mxu0 0.0
    %2772 = vmatprep.subr.mxu0 0.0
    %2773 = vmatpush2.msra.mxu0 0.0
    %2774 = vmatprep.subr.mxu0 0.0
    %2775 = vmatpush2.msra.mxu0 0.0
    %2776 = vmatprep.subr.mxu0 0.0
    %2777 = vmatpush2.msra.mxu0 0.0
    %2778 = vmatprep.subr.mxu0 0.0
    %2779 = vmatpush2.msra.mxu0 0.0
    %2780 = vmatprep.subr.mxu0 0.0
    %2781 = vmatpush2.msra.mxu0 0.0
    %2782 = vmatprep.subr.mxu0 0.0
    %2783 = vmatpush2.msra.mxu0 0.0
    %2784 = vmatprep.subr.mxu0 0.0
    %2785 = vmatpush2.msra.mxu0 0.0
    %2786 = vmatprep.subr.mxu0 0.0
    %2787 = vmatpush2.msra.mxu0 0.0
    %2788 = vmatprep.subr.mxu0 0.0
    %2789 = vmatpush2.msra.mxu0 0.0
    %2790 = vmatprep.subr.mxu0 0.0
    %2791 = vmatpush2.msra.mxu0 0.0
    %2792 = vmatprep.subr.mxu0 0.0
    %2793 = vmatpush2.msra.mxu0 0.0
    %2794 = vmatprep.mubr.f32.mxu0 0.0
    %2795 = vmatmul.mubr.f32.gmra.mxu0 %v2728
    %v2796 = vpop.f32.mrf.mxu0
    %v2797 = vadd.f32 %v2718, %v2796
    %v2798 = vpop.f32.mrf.mxu0
    %2799 = vdwg.mxu0
    %v2800 = vadd.f32 %v2797, %v383
    %2801 = vmatprep.subr.mxu0 0.0
    %2802 = vmatpush1.msra.mxu0 0.0
    %2803 = vmatprep.subr.mxu0 0.0
    %2804 = vmatpush1.msra.mxu0 0.0
    %2805 = vmatprep.subr.mxu0 0.0
    %2806 = vmatpush1.msra.mxu0 0.0
    %2807 = vmatprep.subr.mxu0 0.0
    %2808 = vmatpush1.msra.mxu0 0.0
    %2809 = vmatprep.subr.mxu0 0.0
    %2810 = vmatpush1.msra.mxu0 0.0
    %2811 = vmatprep.subr.mxu0 0.0
    %2812 = vmatpush1.msra.mxu0 0.0
    %2813 = vmatprep.subr.mxu0 0.0
    %2814 = vmatpush1.msra.mxu0 0.0
    %2815 = vmatprep.subr.mxu0 0.0
    %2816 = vmatpush1.msra.mxu0 0.0
    %2817 = vmatprep.subr.mxu0 0.0
    %2818 = vmatpush1.msra.mxu0 0.0
    %2819 = vmatprep.subr.mxu0 0.0
    %2820 = vmatpush1.msra.mxu0 0.0
    %2821 = vmatprep.subr.mxu0 0.0
    %2822 = vmatpush1.msra.mxu0 %v198
    %2823 = vmatprep.subr.mxu0 0.0
    %2824 = vmatpush1.msra.mxu0 %v197
    %2825 = vmatprep.subr.mxu0 0.0
    %2826 = vmatpush1.msra.mxu0 %v196
    %2827 = vmatprep.subr.mxu0 0.0
    %2828 = vmatpush1.msra.mxu0 %v195
    %2829 = vmatprep.subr.mxu0 0.0
    %2830 = vmatpush1.msra.mxu0 %v194
    %2831 = vmatprep.subr.mxu0 0.0
    %2832 = vmatpush1.msra.mxu0 %v193
    %2833 = vmatprep.subr.mxu0 0.0
    %2834 = vmatpush2.msra.mxu0 0.0
    %2835 = vmatprep.subr.mxu0 0.0
    %2836 = vmatpush2.msra.mxu0 0.0
    %2837 = vmatprep.subr.mxu0 0.0
    %2838 = vmatpush2.msra.mxu0 0.0
    %2839 = vmatprep.subr.mxu0 0.0
    %2840 = vmatpush2.msra.mxu0 0.0
    %2841 = vmatprep.subr.mxu0 0.0
    %2842 = vmatpush2.msra.mxu0 0.0
    %2843 = vmatprep.subr.mxu0 0.0
    %2844 = vmatpush2.msra.mxu0 0.0
    %2845 = vmatprep.subr.mxu0 0.0
    %2846 = vmatpush2.msra.mxu0 0.0
    %2847 = vmatprep.subr.mxu0 0.0
    %2848 = vmatpush2.msra.mxu0 0.0
    %2849 = vmatprep.subr.mxu0 0.0
    %2850 = vmatpush2.msra.mxu0 0.0
    %2851 = vmatprep.subr.mxu0 0.0
    %2852 = vmatpush2.msra.mxu0 0.0
    %2853 = vmatprep.subr.mxu0 0.0
    %2854 = vmatpush2.msra.mxu0 0.0
    %2855 = vmatprep.subr.mxu0 0.0
    %2856 = vmatpush2.msra.mxu0 0.0
    %2857 = vmatprep.subr.mxu0 0.0
    %2858 = vmatpush2.msra.mxu0 0.0
    %2859 = vmatprep.subr.mxu0 0.0
    %2860 = vmatpush2.msra.mxu0 0.0
    %2861 = vmatprep.subr.mxu0 0.0
    %2862 = vmatpush2.msra.mxu0 0.0
    %2863 = vmatprep.subr.mxu0 0.0
    %2864 = vmatpush2.msra.mxu0 0.0
    %2865 = vmatprep.mubr.f32.mxu0 0.0
    %2866 = vmatmul.mubr.f32.gmra.mxu0 %v2649
    %v2867 = vpop.f32.mrf.mxu0
    %v2868 = vadd.f32 0.0, %v2867
    %v2869 = vpop.f32.mrf.mxu0
    %2870 = vdwg.mxu0
    %2871 = vmatprep.subr.mxu0 0.0
    %2872 = vmatpush1.msra.mxu0 0.0
    %2873 = vmatprep.subr.mxu0 0.0
    %2874 = vmatpush1.msra.mxu0 0.0
    %2875 = vmatprep.subr.mxu0 0.0
    %2876 = vmatpush1.msra.mxu0 0.0
    %2877 = vmatprep.subr.mxu0 0.0
    %2878 = vmatpush1.msra.mxu0 0.0
    %2879 = vmatprep.subr.mxu0 0.0
    %2880 = vmatpush1.msra.mxu0 0.0
    %2881 = vmatprep.subr.mxu0 0.0
    %2882 = vmatpush1.msra.mxu0 0.0
    %2883 = vmatprep.subr.mxu0 0.0
    %2884 = vmatpush1.msra.mxu0 0.0
    %2885 = vmatprep.subr.mxu0 0.0
    %2886 = vmatpush1.msra.mxu0 0.0
    %2887 = vmatprep.subr.mxu0 0.0
    %2888 = vmatpush1.msra.mxu0 0.0
    %2889 = vmatprep.subr.mxu0 0.0
    %2890 = vmatpush1.msra.mxu0 0.0
    %2891 = vmatprep.subr.mxu0 0.0
    %2892 = vmatpush1.msra.mxu0 %v171
    %2893 = vmatprep.subr.mxu0 0.0
    %2894 = vmatpush1.msra.mxu0 %v170
    %2895 = vmatprep.subr.mxu0 0.0
    %2896 = vmatpush1.msra.mxu0 %v169
    %2897 = vmatprep.subr.mxu0 0.0
    %2898 = vmatpush1.msra.mxu0 %v168
    %2899 = vmatprep.subr.mxu0 0.0
    %2900 = vmatpush1.msra.mxu0 %v167
    %2901 = vmatprep.subr.mxu0 0.0
    %2902 = vmatpush1.msra.mxu0 %v166
    %2903 = vmatprep.subr.mxu0 0.0
    %2904 = vmatpush2.msra.mxu0 0.0
    %2905 = vmatprep.subr.mxu0 0.0
    %2906 = vmatpush2.msra.mxu0 0.0
    %2907 = vmatprep.subr.mxu0 0.0
    %2908 = vmatpush2.msra.mxu0 0.0
    %2909 = vmatprep.subr.mxu0 0.0
    %2910 = vmatpush2.msra.mxu0 0.0
    %2911 = vmatprep.subr.mxu0 0.0
    %2912 = vmatpush2.msra.mxu0 0.0
    %2913 = vmatprep.subr.mxu0 0.0
    %2914 = vmatpush2.msra.mxu0 0.0
    %2915 = vmatprep.subr.mxu0 0.0
    %2916 = vmatpush2.msra.mxu0 0.0
    %2917 = vmatprep.subr.mxu0 0.0
    %2918 = vmatpush2.msra.mxu0 0.0
    %2919 = vmatprep.subr.mxu0 0.0
    %2920 = vmatpush2.msra.mxu0 0.0
    %2921 = vmatprep.subr.mxu0 0.0
    %2922 = vmatpush2.msra.mxu0 0.0
    %2923 = vmatprep.subr.mxu0 0.0
    %2924 = vmatpush2.msra.mxu0 0.0
    %2925 = vmatprep.subr.mxu0 0.0
    %2926 = vmatpush2.msra.mxu0 0.0
    %2927 = vmatprep.subr.mxu0 0.0
    %2928 = vmatpush2.msra.mxu0 0.0
    %2929 = vmatprep.subr.mxu0 0.0
    %2930 = vmatpush2.msra.mxu0 0.0
    %2931 = vmatprep.subr.mxu0 0.0
    %2932 = vmatpush2.msra.mxu0 0.0
    %2933 = vmatprep.subr.mxu0 0.0
    %2934 = vmatpush2.msra.mxu0 0.0
    %2935 = vmatprep.mubr.f32.mxu0 0.0
    %2936 = vmatmul.mubr.f32.gmra.mxu0 %v2728
    %v2937 = vpop.f32.mrf.mxu0
    %v2938 = vadd.f32 %v2868, %v2937
    %v2939 = vpop.f32.mrf.mxu0
    %2940 = vdwg.mxu0
    %v2941 = vadd.f32 %v2938, %v530
    %2942 = vmatprep.subr.mxu0 0.0
    %2943 = vmatpush1.msra.mxu0 0.0
    %2944 = vmatprep.subr.mxu0 0.0
    %2945 = vmatpush1.msra.mxu0 0.0
    %2946 = vmatprep.subr.mxu0 0.0
    %2947 = vmatpush1.msra.mxu0 0.0
    %2948 = vmatprep.subr.mxu0 0.0
    %2949 = vmatpush1.msra.mxu0 0.0
    %2950 = vmatprep.subr.mxu0 0.0
    %2951 = vmatpush1.msra.mxu0 0.0
    %2952 = vmatprep.subr.mxu0 0.0
    %2953 = vmatpush1.msra.mxu0 0.0
    %2954 = vmatprep.subr.mxu0 0.0
    %2955 = vmatpush1.msra.mxu0 0.0
    %2956 = vmatprep.subr.mxu0 0.0
    %2957 = vmatpush1.msra.mxu0 0.0
    %2958 = vmatprep.subr.mxu0 0.0
    %2959 = vmatpush1.msra.mxu0 0.0
    %2960 = vmatprep.subr.mxu0 0.0
    %2961 = vmatpush1.msra.mxu0 0.0
    %2962 = vmatprep.subr.mxu0 0.0
    %2963 = vmatpush1.msra.mxu0 %v205
    %2964 = vmatprep.subr.mxu0 0.0
    %2965 = vmatpush1.msra.mxu0 %v204
    %2966 = vmatprep.subr.mxu0 0.0
    %2967 = vmatpush1.msra.mxu0 %v203
    %2968 = vmatprep.subr.mxu0 0.0
    %2969 = vmatpush1.msra.mxu0 %v202
    %2970 = vmatprep.subr.mxu0 0.0
    %2971 = vmatpush1.msra.mxu0 %v201
    %2972 = vmatprep.subr.mxu0 0.0
    %2973 = vmatpush1.msra.mxu0 %v200
    %2974 = vmatprep.subr.mxu0 0.0
    %2975 = vmatpush2.msra.mxu0 0.0
    %2976 = vmatprep.subr.mxu0 0.0
    %2977 = vmatpush2.msra.mxu0 0.0
    %2978 = vmatprep.subr.mxu0 0.0
    %2979 = vmatpush2.msra.mxu0 0.0
    %2980 = vmatprep.subr.mxu0 0.0
    %2981 = vmatpush2.msra.mxu0 0.0
    %2982 = vmatprep.subr.mxu0 0.0
    %2983 = vmatpush2.msra.mxu0 0.0
    %2984 = vmatprep.subr.mxu0 0.0
    %2985 = vmatpush2.msra.mxu0 0.0
    %2986 = vmatprep.subr.mxu0 0.0
    %2987 = vmatpush2.msra.mxu0 0.0
    %2988 = vmatprep.subr.mxu0 0.0
    %2989 = vmatpush2.msra.mxu0 0.0
    %2990 = vmatprep.subr.mxu0 0.0
    %2991 = vmatpush2.msra.mxu0 0.0
    %2992 = vmatprep.subr.mxu0 0.0
    %2993 = vmatpush2.msra.mxu0 0.0
    %2994 = vmatprep.subr.mxu0 0.0
    %2995 = vmatpush2.msra.mxu0 0.0
    %2996 = vmatprep.subr.mxu0 0.0
    %2997 = vmatpush2.msra.mxu0 0.0
    %2998 = vmatprep.subr.mxu0 0.0
    %2999 = vmatpush2.msra.mxu0 0.0
    %3000 = vmatprep.subr.mxu0 0.0
    %3001 = vmatpush2.msra.mxu0 0.0
    %3002 = vmatprep.subr.mxu0 0.0
    %3003 = vmatpush2.msra.mxu0 0.0
    %3004 = vmatprep.subr.mxu0 0.0
    %3005 = vmatpush2.msra.mxu0 0.0
    %3006 = vmatprep.mubr.f32.mxu0 0.0
    %3007 = vmatmul.mubr.f32.gmra.mxu0 %v2649
    %v3008 = vpop.f32.mrf.mxu0
    %v3009 = vadd.f32 0.0, %v3008
    %v3010 = vpop.f32.mrf.mxu0
    %3011 = vdwg.mxu0
    %3012 = vmatprep.subr.mxu0 0.0
    %3013 = vmatpush1.msra.mxu0 0.0
    %3014 = vmatprep.subr.mxu0 0.0
    %3015 = vmatpush1.msra.mxu0 0.0
    %3016 = vmatprep.subr.mxu0 0.0
    %3017 = vmatpush1.msra.mxu0 0.0
    %3018 = vmatprep.subr.mxu0 0.0
    %3019 = vmatpush1.msra.mxu0 0.0
    %3020 = vmatprep.subr.mxu0 0.0
    %3021 = vmatpush1.msra.mxu0 0.0
    %3022 = vmatprep.subr.mxu0 0.0
    %3023 = vmatpush1.msra.mxu0 0.0
    %3024 = vmatprep.subr.mxu0 0.0
    %3025 = vmatpush1.msra.mxu0 0.0
    %3026 = vmatprep.subr.mxu0 0.0
    %3027 = vmatpush1.msra.mxu0 0.0
    %3028 = vmatprep.subr.mxu0 0.0
    %3029 = vmatpush1.msra.mxu0 0.0
    %3030 = vmatprep.subr.mxu0 0.0
    %3031 = vmatpush1.msra.mxu0 0.0
    %3032 = vmatprep.subr.mxu0 0.0
    %3033 = vmatpush1.msra.mxu0 %v178
    %3034 = vmatprep.subr.mxu0 0.0
    %3035 = vmatpush1.msra.mxu0 %v177
    %3036 = vmatprep.subr.mxu0 0.0
    %3037 = vmatpush1.msra.mxu0 %v176
    %3038 = vmatprep.subr.mxu0 0.0
    %3039 = vmatpush1.msra.mxu0 %v175
    %3040 = vmatprep.subr.mxu0 0.0
    %3041 = vmatpush1.msra.mxu0 %v174
    %3042 = vmatprep.subr.mxu0 0.0
    %3043 = vmatpush1.msra.mxu0 %v173
    %3044 = vmatprep.subr.mxu0 0.0
    %3045 = vmatpush2.msra.mxu0 0.0
    %3046 = vmatprep.subr.mxu0 0.0
    %3047 = vmatpush2.msra.mxu0 0.0
    %3048 = vmatprep.subr.mxu0 0.0
    %3049 = vmatpush2.msra.mxu0 0.0
    %3050 = vmatprep.subr.mxu0 0.0
    %3051 = vmatpush2.msra.mxu0 0.0
    %3052 = vmatprep.subr.mxu0 0.0
    %3053 = vmatpush2.msra.mxu0 0.0
    %3054 = vmatprep.subr.mxu0 0.0
    %3055 = vmatpush2.msra.mxu0 0.0
    %3056 = vmatprep.subr.mxu0 0.0
    %3057 = vmatpush2.msra.mxu0 0.0
    %3058 = vmatprep.subr.mxu0 0.0
    %3059 = vmatpush2.msra.mxu0 0.0
    %3060 = vmatprep.subr.mxu0 0.0
    %3061 = vmatpush2.msra.mxu0 0.0
    %3062 = vmatprep.subr.mxu0 0.0
    %3063 = vmatpush2.msra.mxu0 0.0
    %3064 = vmatprep.subr.mxu0 0.0
    %3065 = vmatpush2.msra.mxu0 0.0
    %3066 = vmatprep.subr.mxu0 0.0
    %3067 = vmatpush2.msra.mxu0 0.0
    %3068 = vmatprep.subr.mxu0 0.0
    %3069 = vmatpush2.msra.mxu0 0.0
    %3070 = vmatprep.subr.mxu0 0.0
    %3071 = vmatpush2.msra.mxu0 0.0
    %3072 = vmatprep.subr.mxu0 0.0
    %3073 = vmatpush2.msra.mxu0 0.0
    %3074 = vmatprep.subr.mxu0 0.0
    %3075 = vmatpush2.msra.mxu0 0.0
    %3076 = vmatprep.mubr.f32.mxu0 0.0
    %3077 = vmatmul.mubr.f32.gmra.mxu0 %v2728
    %v3078 = vpop.f32.mrf.mxu0
    %v3079 = vadd.f32 %v3009, %v3078
    %v3080 = vpop.f32.mrf.mxu0
    %3081 = vdwg.mxu0
    %v3082 = vadd.f32 %v3079, %v677
    %3083 = vmatprep.subr.mxu0 0.0
    %3084 = vmatpush1.msra.mxu0 0.0
    %3085 = vmatprep.subr.mxu0 0.0
    %3086 = vmatpush1.msra.mxu0 0.0
    %3087 = vmatprep.subr.mxu0 0.0
    %3088 = vmatpush1.msra.mxu0 0.0
    %3089 = vmatprep.subr.mxu0 0.0
    %3090 = vmatpush1.msra.mxu0 0.0
    %3091 = vmatprep.subr.mxu0 0.0
    %3092 = vmatpush1.msra.mxu0 0.0
    %3093 = vmatprep.subr.mxu0 0.0
    %3094 = vmatpush1.msra.mxu0 0.0
    %3095 = vmatprep.subr.mxu0 0.0
    %3096 = vmatpush1.msra.mxu0 0.0
    %3097 = vmatprep.subr.mxu0 0.0
    %3098 = vmatpush1.msra.mxu0 0.0
    %3099 = vmatprep.subr.mxu0 0.0
    %3100 = vmatpush1.msra.mxu0 0.0
    %3101 = vmatprep.subr.mxu0 0.0
    %3102 = vmatpush1.msra.mxu0 0.0
    %3103 = vmatprep.subr.mxu0 0.0
    %3104 = vmatpush1.msra.mxu0 %v212
    %3105 = vmatprep.subr.mxu0 0.0
    %3106 = vmatpush1.msra.mxu0 %v211
    %3107 = vmatprep.subr.mxu0 0.0
    %3108 = vmatpush1.msra.mxu0 %v210
    %3109 = vmatprep.subr.mxu0 0.0
    %3110 = vmatpush1.msra.mxu0 %v209
    %3111 = vmatprep.subr.mxu0 0.0
    %3112 = vmatpush1.msra.mxu0 %v208
    %3113 = vmatprep.subr.mxu0 0.0
    %3114 = vmatpush1.msra.mxu0 %v207
    %3115 = vmatprep.subr.mxu0 0.0
    %3116 = vmatpush2.msra.mxu0 0.0
    %3117 = vmatprep.subr.mxu0 0.0
    %3118 = vmatpush2.msra.mxu0 0.0
    %3119 = vmatprep.subr.mxu0 0.0
    %3120 = vmatpush2.msra.mxu0 0.0
    %3121 = vmatprep.subr.mxu0 0.0
    %3122 = vmatpush2.msra.mxu0 0.0
    %3123 = vmatprep.subr.mxu0 0.0
    %3124 = vmatpush2.msra.mxu0 0.0
    %3125 = vmatprep.subr.mxu0 0.0
    %3126 = vmatpush2.msra.mxu0 0.0
    %3127 = vmatprep.subr.mxu0 0.0
    %3128 = vmatpush2.msra.mxu0 0.0
    %3129 = vmatprep.subr.mxu0 0.0
    %3130 = vmatpush2.msra.mxu0 0.0
    %3131 = vmatprep.subr.mxu0 0.0
    %3132 = vmatpush2.msra.mxu0 0.0
    %3133 = vmatprep.subr.mxu0 0.0
    %3134 = vmatpush2.msra.mxu0 0.0
    %3135 = vmatprep.subr.mxu0 0.0
    %3136 = vmatpush2.msra.mxu0 0.0
    %3137 = vmatprep.subr.mxu0 0.0
    %3138 = vmatpush2.msra.mxu0 0.0
    %3139 = vmatprep.subr.mxu0 0.0
    %3140 = vmatpush2.msra.mxu0 0.0
    %3141 = vmatprep.subr.mxu0 0.0
    %3142 = vmatpush2.msra.mxu0 0.0
    %3143 = vmatprep.subr.mxu0 0.0
    %3144 = vmatpush2.msra.mxu0 0.0
    %3145 = vmatprep.subr.mxu0 0.0
    %3146 = vmatpush2.msra.mxu0 0.0
    %3147 = vmatprep.mubr.f32.mxu0 0.0
    %3148 = vmatmul.mubr.f32.gmra.mxu0 %v2649
    %v3149 = vpop.f32.mrf.mxu0
    %v3150 = vadd.f32 0.0, %v3149
    %v3151 = vpop.f32.mrf.mxu0
    %3152 = vdwg.mxu0
    %3153 = vmatprep.subr.mxu0 0.0
    %3154 = vmatpush1.msra.mxu0 0.0
    %3155 = vmatprep.subr.mxu0 0.0
    %3156 = vmatpush1.msra.mxu0 0.0
    %3157 = vmatprep.subr.mxu0 0.0
    %3158 = vmatpush1.msra.mxu0 0.0
    %3159 = vmatprep.subr.mxu0 0.0
    %3160 = vmatpush1.msra.mxu0 0.0
    %3161 = vmatprep.subr.mxu0 0.0
    %3162 = vmatpush1.msra.mxu0 0.0
    %3163 = vmatprep.subr.mxu0 0.0
    %3164 = vmatpush1.msra.mxu0 0.0
    %3165 = vmatprep.subr.mxu0 0.0
    %3166 = vmatpush1.msra.mxu0 0.0
    %3167 = vmatprep.subr.mxu0 0.0
    %3168 = vmatpush1.msra.mxu0 0.0
    %3169 = vmatprep.subr.mxu0 0.0
    %3170 = vmatpush1.msra.mxu0 0.0
    %3171 = vmatprep.subr.mxu0 0.0
    %3172 = vmatpush1.msra.mxu0 0.0
    %3173 = vmatprep.subr.mxu0 0.0
    %3174 = vmatpush1.msra.mxu0 %v185
    %3175 = vmatprep.subr.mxu0 0.0
    %3176 = vmatpush1.msra.mxu0 %v184
    %3177 = vmatprep.subr.mxu0 0.0
    %3178 = vmatpush1.msra.mxu0 %v183
    %3179 = vmatprep.subr.mxu0 0.0
    %3180 = vmatpush1.msra.mxu0 %v182
    %3181 = vmatprep.subr.mxu0 0.0
    %3182 = vmatpush1.msra.mxu0 %v181
    %3183 = vmatprep.subr.mxu0 0.0
    %3184 = vmatpush1.msra.mxu0 %v180
    %3185 = vmatprep.subr.mxu0 0.0
    %3186 = vmatpush2.msra.mxu0 0.0
    %3187 = vmatprep.subr.mxu0 0.0
    %3188 = vmatpush2.msra.mxu0 0.0
    %3189 = vmatprep.subr.mxu0 0.0
    %3190 = vmatpush2.msra.mxu0 0.0
    %3191 = vmatprep.subr.mxu0 0.0
    %3192 = vmatpush2.msra.mxu0 0.0
    %3193 = vmatprep.subr.mxu0 0.0
    %3194 = vmatpush2.msra.mxu0 0.0
    %3195 = vmatprep.subr.mxu0 0.0
    %3196 = vmatpush2.msra.mxu0 0.0
    %3197 = vmatprep.subr.mxu0 0.0
    %3198 = vmatpush2.msra.mxu0 0.0
    %3199 = vmatprep.subr.mxu0 0.0
    %3200 = vmatpush2.msra.mxu0 0.0
    %3201 = vmatprep.subr.mxu0 0.0
    %3202 = vmatpush2.msra.mxu0 0.0
    %3203 = vmatprep.subr.mxu0 0.0
    %3204 = vmatpush2.msra.mxu0 0.0
    %3205 = vmatprep.subr.mxu0 0.0
    %3206 = vmatpush2.msra.mxu0 0.0
    %3207 = vmatprep.subr.mxu0 0.0
    %3208 = vmatpush2.msra.mxu0 0.0
    %3209 = vmatprep.subr.mxu0 0.0
    %3210 = vmatpush2.msra.mxu0 0.0
    %3211 = vmatprep.subr.mxu0 0.0
    %3212 = vmatpush2.msra.mxu0 0.0
    %3213 = vmatprep.subr.mxu0 0.0
    %3214 = vmatpush2.msra.mxu0 0.0
    %3215 = vmatprep.subr.mxu0 0.0
    %3216 = vmatpush2.msra.mxu0 0.0
    %3217 = vmatprep.mubr.f32.mxu0 0.0
    %3218 = vmatmul.mubr.f32.gmra.mxu0 %v2728
    %v3219 = vpop.f32.mrf.mxu0
    %v3220 = vadd.f32 %v3150, %v3219
    %v3221 = vpop.f32.mrf.mxu0
    %3222 = vdwg.mxu0
    %v3223 = vadd.f32 %v3220, %v824
    %v3224 = vxor.u32 %v2941, 2147483648
    %v3225 = vmul.f32 %v3224, 1.442695
    %v3226 = vpow.pop %v3225
    %v3227 = vadd.f32 %v3226, 1.0
    %v3228 = vrcp.pop %v3227
    %v3229 = vmul.f32 1.0, %v3228
    %v3230 = vmul.f32 %v3229, %v2639
    %v3231 = vxor.u32 %v2800, 2147483648
    %v3232 = vmul.f32 %v3231, 1.442695
    %v3233 = vpow.pop %v3232
    %v3234 = vadd.f32 %v3233, 1.0
    %v3235 = vrcp.pop %v3234
    %v3236 = vmul.f32 1.0, %v3235
    %v3237 = vtanh.pop %v3082
    %v3238 = vmul.f32 %v3236, %v3237
    %v3239 = vadd.f32 %v3230, %v3238
    %v3240 = vxor.u32 %v3223, 2147483648
    %v3241 = vmul.f32 %v3240, 1.442695
    %v3242 = vpow.pop %v3241
    %v3243 = vadd.f32 %v3242, 1.0
    %v3244 = vrcp.pop %v3243
    %v3245 = vmul.f32 1.0, %v3244
    %v3246 = vtanh.pop %v3239
    %v3247 = vmul.f32 %v3245, %v3246
    %v3249 = vsel %vm220, %v3247, 0
    %3251 = vmatprep.subr.mxu0 0.0
    %3252 = vmatpush1.msra.mxu0 0.0
    %3253 = vmatprep.subr.mxu0 0.0
    %3254 = vmatpush1.msra.mxu0 0.0
    %3255 = vmatprep.subr.mxu0 0.0
    %3256 = vmatpush1.msra.mxu0 0.0
    %3257 = vmatprep.subr.mxu0 0.0
    %3258 = vmatpush1.msra.mxu0 0.0
    %3259 = vmatprep.subr.mxu0 0.0
    %3260 = vmatpush1.msra.mxu0 0.0
    %3261 = vmatprep.subr.mxu0 0.0
    %3262 = vmatpush1.msra.mxu0 0.0
    %3263 = vmatprep.subr.mxu0 0.0
    %3264 = vmatpush1.msra.mxu0 0.0
    %3265 = vmatprep.subr.mxu0 0.0
    %3266 = vmatpush1.msra.mxu0 0.0
    %3267 = vmatprep.subr.mxu0 0.0
    %3268 = vmatpush1.msra.mxu0 0.0
    %3269 = vmatprep.subr.mxu0 0.0
    %3270 = vmatpush1.msra.mxu0 0.0
    %3271 = vmatprep.subr.mxu0 0.0
    %3272 = vmatpush1.msra.mxu0 %v191
    %3273 = vmatprep.subr.mxu0 0.0
    %3274 = vmatpush1.msra.mxu0 %v190
    %3275 = vmatprep.subr.mxu0 0.0
    %3276 = vmatpush1.msra.mxu0 %v189
    %3277 = vmatprep.subr.mxu0 0.0
    %3278 = vmatpush1.msra.mxu0 %v188
    %3279 = vmatprep.subr.mxu0 0.0
    %3280 = vmatpush1.msra.mxu0 %v187
    %3281 = vmatprep.subr.mxu0 0.0
    %3282 = vmatpush1.msra.mxu0 %v186
    %3283 = vmatprep.subr.mxu0 0.0
    %3284 = vmatpush2.msra.mxu0 0.0
    %3285 = vmatprep.subr.mxu0 0.0
    %3286 = vmatpush2.msra.mxu0 0.0
    %3287 = vmatprep.subr.mxu0 0.0
    %3288 = vmatpush2.msra.mxu0 0.0
    %3289 = vmatprep.subr.mxu0 0.0
    %3290 = vmatpush2.msra.mxu0 0.0
    %3291 = vmatprep.subr.mxu0 0.0
    %3292 = vmatpush2.msra.mxu0 0.0
    %3293 = vmatprep.subr.mxu0 0.0
    %3294 = vmatpush2.msra.mxu0 0.0
    %3295 = vmatprep.subr.mxu0 0.0
    %3296 = vmatpush2.msra.mxu0 0.0
    %3297 = vmatprep.subr.mxu0 0.0
    %3298 = vmatpush2.msra.mxu0 0.0
    %3299 = vmatprep.subr.mxu0 0.0
    %3300 = vmatpush2.msra.mxu0 0.0
    %3301 = vmatprep.subr.mxu0 0.0
    %3302 = vmatpush2.msra.mxu0 0.0
    %3303 = vmatprep.subr.mxu0 0.0
    %3304 = vmatpush2.msra.mxu0 0.0
    %3305 = vmatprep.subr.mxu0 0.0
    %3306 = vmatpush2.msra.mxu0 0.0
    %3307 = vmatprep.subr.mxu0 0.0
    %3308 = vmatpush2.msra.mxu0 0.0
    %3309 = vmatprep.subr.mxu0 0.0
    %3310 = vmatpush2.msra.mxu0 0.0
    %3311 = vmatprep.subr.mxu0 0.0
    %3312 = vmatpush2.msra.mxu0 0.0
    %3313 = vmatprep.subr.mxu0 0.0
    %3314 = vmatpush2.msra.mxu0 0.0
    %3315 = vmatprep.mubr.f32.mxu0 0.0
    %3316 = vmatmul.mubr.f32.gmra.mxu0 %v3249
    %v3317 = vpop.f32.mrf.mxu0
    %v3318 = vadd.f32 0.0, %v3317
    %v3319 = vpop.f32.mrf.mxu0
    %3320 = vdwg.mxu0
    %v3321 = vrot.slane %v155, 5
    %v3322 = vrot.slane %v156, 4
    %v3323 = vsel %vm299, %v3322, %v3321
    %v3324 = vrot.slane %v157, 3
    %v3325 = vsel %vm302, %v3324, %v3323
    %v3326 = vrot.slane %v158, 2
    %v3327 = vsel %vm305, %v3326, %v3325
    %v3328 = vsel %vm220, %v3327, 0
    %3330 = vmatprep.subr.mxu0 0.0
    %3331 = vmatpush1.msra.mxu0 0.0
    %3332 = vmatprep.subr.mxu0 0.0
    %3333 = vmatpush1.msra.mxu0 0.0
    %3334 = vmatprep.subr.mxu0 0.0
    %3335 = vmatpush1.msra.mxu0 0.0
    %3336 = vmatprep.subr.mxu0 0.0
    %3337 = vmatpush1.msra.mxu0 0.0
    %3338 = vmatprep.subr.mxu0 0.0
    %3339 = vmatpush1.msra.mxu0 0.0
    %3340 = vmatprep.subr.mxu0 0.0
    %3341 = vmatpush1.msra.mxu0 0.0
    %3342 = vmatprep.subr.mxu0 0.0
    %3343 = vmatpush1.msra.mxu0 0.0
    %3344 = vmatprep.subr.mxu0 0.0
    %3345 = vmatpush1.msra.mxu0 0.0
    %3346 = vmatprep.subr.mxu0 0.0
    %3347 = vmatpush1.msra.mxu0 0.0
    %3348 = vmatprep.subr.mxu0 0.0
    %3349 = vmatpush1.msra.mxu0 0.0
    %3350 = vmatprep.subr.mxu0 0.0
    %3351 = vmatpush1.msra.mxu0 %v164
    %3352 = vmatprep.subr.mxu0 0.0
    %3353 = vmatpush1.msra.mxu0 %v163
    %3354 = vmatprep.subr.mxu0 0.0
    %3355 = vmatpush1.msra.mxu0 %v162
    %3356 = vmatprep.subr.mxu0 0.0
    %3357 = vmatpush1.msra.mxu0 %v161
    %3358 = vmatprep.subr.mxu0 0.0
    %3359 = vmatpush1.msra.mxu0 %v160
    %3360 = vmatprep.subr.mxu0 0.0
    %3361 = vmatpush1.msra.mxu0 %v159
    %3362 = vmatprep.subr.mxu0 0.0
    %3363 = vmatpush2.msra.mxu0 0.0
    %3364 = vmatprep.subr.mxu0 0.0
    %3365 = vmatpush2.msra.mxu0 0.0
    %3366 = vmatprep.subr.mxu0 0.0
    %3367 = vmatpush2.msra.mxu0 0.0
    %3368 = vmatprep.subr.mxu0 0.0
    %3369 = vmatpush2.msra.mxu0 0.0
    %3370 = vmatprep.subr.mxu0 0.0
    %3371 = vmatpush2.msra.mxu0 0.0
    %3372 = vmatprep.subr.mxu0 0.0
    %3373 = vmatpush2.msra.mxu0 0.0
    %3374 = vmatprep.subr.mxu0 0.0
    %3375 = vmatpush2.msra.mxu0 0.0
    %3376 = vmatprep.subr.mxu0 0.0
    %3377 = vmatpush2.msra.mxu0 0.0
    %3378 = vmatprep.subr.mxu0 0.0
    %3379 = vmatpush2.msra.mxu0 0.0
    %3380 = vmatprep.subr.mxu0 0.0
    %3381 = vmatpush2.msra.mxu0 0.0
    %3382 = vmatprep.subr.mxu0 0.0
    %3383 = vmatpush2.msra.mxu0 0.0
    %3384 = vmatprep.subr.mxu0 0.0
    %3385 = vmatpush2.msra.mxu0 0.0
    %3386 = vmatprep.subr.mxu0 0.0
    %3387 = vmatpush2.msra.mxu0 0.0
    %3388 = vmatprep.subr.mxu0 0.0
    %3389 = vmatpush2.msra.mxu0 0.0
    %3390 = vmatprep.subr.mxu0 0.0
    %3391 = vmatpush2.msra.mxu0 0.0
    %3392 = vmatprep.subr.mxu0 0.0
    %3393 = vmatpush2.msra.mxu0 0.0
    %3394 = vmatprep.mubr.f32.mxu0 0.0
    %3395 = vmatmul.mubr.f32.gmra.mxu0 %v3328
    %v3396 = vpop.f32.mrf.mxu0
    %v3397 = vadd.f32 %v3318, %v3396
    %v3398 = vpop.f32.mrf.mxu0
    %3399 = vdwg.mxu0
    %v3400 = vadd.f32 %v3397, %v383
    %3401 = vmatprep.subr.mxu0 0.0
    %3402 = vmatpush1.msra.mxu0 0.0
    %3403 = vmatprep.subr.mxu0 0.0
    %3404 = vmatpush1.msra.mxu0 0.0
    %3405 = vmatprep.subr.mxu0 0.0
    %3406 = vmatpush1.msra.mxu0 0.0
    %3407 = vmatprep.subr.mxu0 0.0
    %3408 = vmatpush1.msra.mxu0 0.0
    %3409 = vmatprep.subr.mxu0 0.0
    %3410 = vmatpush1.msra.mxu0 0.0
    %3411 = vmatprep.subr.mxu0 0.0
    %3412 = vmatpush1.msra.mxu0 0.0
    %3413 = vmatprep.subr.mxu0 0.0
    %3414 = vmatpush1.msra.mxu0 0.0
    %3415 = vmatprep.subr.mxu0 0.0
    %3416 = vmatpush1.msra.mxu0 0.0
    %3417 = vmatprep.subr.mxu0 0.0
    %3418 = vmatpush1.msra.mxu0 0.0
    %3419 = vmatprep.subr.mxu0 0.0
    %3420 = vmatpush1.msra.mxu0 0.0
    %3421 = vmatprep.subr.mxu0 0.0
    %3422 = vmatpush1.msra.mxu0 %v198
    %3423 = vmatprep.subr.mxu0 0.0
    %3424 = vmatpush1.msra.mxu0 %v197
    %3425 = vmatprep.subr.mxu0 0.0
    %3426 = vmatpush1.msra.mxu0 %v196
    %3427 = vmatprep.subr.mxu0 0.0
    %3428 = vmatpush1.msra.mxu0 %v195
    %3429 = vmatprep.subr.mxu0 0.0
    %3430 = vmatpush1.msra.mxu0 %v194
    %3431 = vmatprep.subr.mxu0 0.0
    %3432 = vmatpush1.msra.mxu0 %v193
    %3433 = vmatprep.subr.mxu0 0.0
    %3434 = vmatpush2.msra.mxu0 0.0
    %3435 = vmatprep.subr.mxu0 0.0
    %3436 = vmatpush2.msra.mxu0 0.0
    %3437 = vmatprep.subr.mxu0 0.0
    %3438 = vmatpush2.msra.mxu0 0.0
    %3439 = vmatprep.subr.mxu0 0.0
    %3440 = vmatpush2.msra.mxu0 0.0
    %3441 = vmatprep.subr.mxu0 0.0
    %3442 = vmatpush2.msra.mxu0 0.0
    %3443 = vmatprep.subr.mxu0 0.0
    %3444 = vmatpush2.msra.mxu0 0.0
    %3445 = vmatprep.subr.mxu0 0.0
    %3446 = vmatpush2.msra.mxu0 0.0
    %3447 = vmatprep.subr.mxu0 0.0
    %3448 = vmatpush2.msra.mxu0 0.0
    %3449 = vmatprep.subr.mxu0 0.0
    %3450 = vmatpush2.msra.mxu0 0.0
    %3451 = vmatprep.subr.mxu0 0.0
    %3452 = vmatpush2.msra.mxu0 0.0
    %3453 = vmatprep.subr.mxu0 0.0
    %3454 = vmatpush2.msra.mxu0 0.0
    %3455 = vmatprep.subr.mxu0 0.0
    %3456 = vmatpush2.msra.mxu0 0.0
    %3457 = vmatprep.subr.mxu0 0.0
    %3458 = vmatpush2.msra.mxu0 0.0
    %3459 = vmatprep.subr.mxu0 0.0
    %3460 = vmatpush2.msra.mxu0 0.0
    %3461 = vmatprep.subr.mxu0 0.0
    %3462 = vmatpush2.msra.mxu0 0.0
    %3463 = vmatprep.subr.mxu0 0.0
    %3464 = vmatpush2.msra.mxu0 0.0
    %3465 = vmatprep.mubr.f32.mxu0 0.0
    %3466 = vmatmul.mubr.f32.gmra.mxu0 %v3249
    %v3467 = vpop.f32.mrf.mxu0
    %v3468 = vadd.f32 0.0, %v3467
    %v3469 = vpop.f32.mrf.mxu0
    %3470 = vdwg.mxu0
    %3471 = vmatprep.subr.mxu0 0.0
    %3472 = vmatpush1.msra.mxu0 0.0
    %3473 = vmatprep.subr.mxu0 0.0
    %3474 = vmatpush1.msra.mxu0 0.0
    %3475 = vmatprep.subr.mxu0 0.0
    %3476 = vmatpush1.msra.mxu0 0.0
    %3477 = vmatprep.subr.mxu0 0.0
    %3478 = vmatpush1.msra.mxu0 0.0
    %3479 = vmatprep.subr.mxu0 0.0
    %3480 = vmatpush1.msra.mxu0 0.0
    %3481 = vmatprep.subr.mxu0 0.0
    %3482 = vmatpush1.msra.mxu0 0.0
    %3483 = vmatprep.subr.mxu0 0.0
    %3484 = vmatpush1.msra.mxu0 0.0
    %3485 = vmatprep.subr.mxu0 0.0
    %3486 = vmatpush1.msra.mxu0 0.0
    %3487 = vmatprep.subr.mxu0 0.0
    %3488 = vmatpush1.msra.mxu0 0.0
    %3489 = vmatprep.subr.mxu0 0.0
    %3490 = vmatpush1.msra.mxu0 0.0
    %3491 = vmatprep.subr.mxu0 0.0
    %3492 = vmatpush1.msra.mxu0 %v171
    %3493 = vmatprep.subr.mxu0 0.0
    %3494 = vmatpush1.msra.mxu0 %v170
    %3495 = vmatprep.subr.mxu0 0.0
    %3496 = vmatpush1.msra.mxu0 %v169
    %3497 = vmatprep.subr.mxu0 0.0
    %3498 = vmatpush1.msra.mxu0 %v168
    %3499 = vmatprep.subr.mxu0 0.0
    %3500 = vmatpush1.msra.mxu0 %v167
    %3501 = vmatprep.subr.mxu0 0.0
    %3502 = vmatpush1.msra.mxu0 %v166
    %3503 = vmatprep.subr.mxu0 0.0
    %3504 = vmatpush2.msra.mxu0 0.0
    %3505 = vmatprep.subr.mxu0 0.0
    %3506 = vmatpush2.msra.mxu0 0.0
    %3507 = vmatprep.subr.mxu0 0.0
    %3508 = vmatpush2.msra.mxu0 0.0
    %3509 = vmatprep.subr.mxu0 0.0
    %3510 = vmatpush2.msra.mxu0 0.0
    %3511 = vmatprep.subr.mxu0 0.0
    %3512 = vmatpush2.msra.mxu0 0.0
    %3513 = vmatprep.subr.mxu0 0.0
    %3514 = vmatpush2.msra.mxu0 0.0
    %3515 = vmatprep.subr.mxu0 0.0
    %3516 = vmatpush2.msra.mxu0 0.0
    %3517 = vmatprep.subr.mxu0 0.0
    %3518 = vmatpush2.msra.mxu0 0.0
    %3519 = vmatprep.subr.mxu0 0.0
    %3520 = vmatpush2.msra.mxu0 0.0
    %3521 = vmatprep.subr.mxu0 0.0
    %3522 = vmatpush2.msra.mxu0 0.0
    %3523 = vmatprep.subr.mxu0 0.0
    %3524 = vmatpush2.msra.mxu0 0.0
    %3525 = vmatprep.subr.mxu0 0.0
    %3526 = vmatpush2.msra.mxu0 0.0
    %3527 = vmatprep.subr.mxu0 0.0
    %3528 = vmatpush2.msra.mxu0 0.0
    %3529 = vmatprep.subr.mxu0 0.0
    %3530 = vmatpush2.msra.mxu0 0.0
    %3531 = vmatprep.subr.mxu0 0.0
    %3532 = vmatpush2.msra.mxu0 0.0
    %3533 = vmatprep.subr.mxu0 0.0
    %3534 = vmatpush2.msra.mxu0 0.0
    %3535 = vmatprep.mubr.f32.mxu0 0.0
    %3536 = vmatmul.mubr.f32.gmra.mxu0 %v3328
    %v3537 = vpop.f32.mrf.mxu0
    %v3538 = vadd.f32 %v3468, %v3537
    %v3539 = vpop.f32.mrf.mxu0
    %3540 = vdwg.mxu0
    %v3541 = vadd.f32 %v3538, %v530
    %3542 = vmatprep.subr.mxu0 0.0
    %3543 = vmatpush1.msra.mxu0 0.0
    %3544 = vmatprep.subr.mxu0 0.0
    %3545 = vmatpush1.msra.mxu0 0.0
    %3546 = vmatprep.subr.mxu0 0.0
    %3547 = vmatpush1.msra.mxu0 0.0
    %3548 = vmatprep.subr.mxu0 0.0
    %3549 = vmatpush1.msra.mxu0 0.0
    %3550 = vmatprep.subr.mxu0 0.0
    %3551 = vmatpush1.msra.mxu0 0.0
    %3552 = vmatprep.subr.mxu0 0.0
    %3553 = vmatpush1.msra.mxu0 0.0
    %3554 = vmatprep.subr.mxu0 0.0
    %3555 = vmatpush1.msra.mxu0 0.0
    %3556 = vmatprep.subr.mxu0 0.0
    %3557 = vmatpush1.msra.mxu0 0.0
    %3558 = vmatprep.subr.mxu0 0.0
    %3559 = vmatpush1.msra.mxu0 0.0
    %3560 = vmatprep.subr.mxu0 0.0
    %3561 = vmatpush1.msra.mxu0 0.0
    %3562 = vmatprep.subr.mxu0 0.0
    %3563 = vmatpush1.msra.mxu0 %v205
    %3564 = vmatprep.subr.mxu0 0.0
    %3565 = vmatpush1.msra.mxu0 %v204
    %3566 = vmatprep.subr.mxu0 0.0
    %3567 = vmatpush1.msra.mxu0 %v203
    %3568 = vmatprep.subr.mxu0 0.0
    %3569 = vmatpush1.msra.mxu0 %v202
    %3570 = vmatprep.subr.mxu0 0.0
    %3571 = vmatpush1.msra.mxu0 %v201
    %3572 = vmatprep.subr.mxu0 0.0
    %3573 = vmatpush1.msra.mxu0 %v200
    %3574 = vmatprep.subr.mxu0 0.0
    %3575 = vmatpush2.msra.mxu0 0.0
    %3576 = vmatprep.subr.mxu0 0.0
    %3577 = vmatpush2.msra.mxu0 0.0
    %3578 = vmatprep.subr.mxu0 0.0
    %3579 = vmatpush2.msra.mxu0 0.0
    %3580 = vmatprep.subr.mxu0 0.0
    %3581 = vmatpush2.msra.mxu0 0.0
    %3582 = vmatprep.subr.mxu0 0.0
    %3583 = vmatpush2.msra.mxu0 0.0
    %3584 = vmatprep.subr.mxu0 0.0
    %3585 = vmatpush2.msra.mxu0 0.0
    %3586 = vmatprep.subr.mxu0 0.0
    %3587 = vmatpush2.msra.mxu0 0.0
    %3588 = vmatprep.subr.mxu0 0.0
    %3589 = vmatpush2.msra.mxu0 0.0
    %3590 = vmatprep.subr.mxu0 0.0
    %3591 = vmatpush2.msra.mxu0 0.0
    %3592 = vmatprep.subr.mxu0 0.0
    %3593 = vmatpush2.msra.mxu0 0.0
    %3594 = vmatprep.subr.mxu0 0.0
    %3595 = vmatpush2.msra.mxu0 0.0
    %3596 = vmatprep.subr.mxu0 0.0
    %3597 = vmatpush2.msra.mxu0 0.0
    %3598 = vmatprep.subr.mxu0 0.0
    %3599 = vmatpush2.msra.mxu0 0.0
    %3600 = vmatprep.subr.mxu0 0.0
    %3601 = vmatpush2.msra.mxu0 0.0
    %3602 = vmatprep.subr.mxu0 0.0
    %3603 = vmatpush2.msra.mxu0 0.0
    %3604 = vmatprep.subr.mxu0 0.0
    %3605 = vmatpush2.msra.mxu0 0.0
    %3606 = vmatprep.mubr.f32.mxu0 0.0
    %3607 = vmatmul.mubr.f32.gmra.mxu0 %v3249
    %v3608 = vpop.f32.mrf.mxu0
    %v3609 = vadd.f32 0.0, %v3608
    %v3610 = vpop.f32.mrf.mxu0
    %3611 = vdwg.mxu0
    %3612 = vmatprep.subr.mxu0 0.0
    %3613 = vmatpush1.msra.mxu0 0.0
    %3614 = vmatprep.subr.mxu0 0.0
    %3615 = vmatpush1.msra.mxu0 0.0
    %3616 = vmatprep.subr.mxu0 0.0
    %3617 = vmatpush1.msra.mxu0 0.0
    %3618 = vmatprep.subr.mxu0 0.0
    %3619 = vmatpush1.msra.mxu0 0.0
    %3620 = vmatprep.subr.mxu0 0.0
    %3621 = vmatpush1.msra.mxu0 0.0
    %3622 = vmatprep.subr.mxu0 0.0
    %3623 = vmatpush1.msra.mxu0 0.0
    %3624 = vmatprep.subr.mxu0 0.0
    %3625 = vmatpush1.msra.mxu0 0.0
    %3626 = vmatprep.subr.mxu0 0.0
    %3627 = vmatpush1.msra.mxu0 0.0
    %3628 = vmatprep.subr.mxu0 0.0
    %3629 = vmatpush1.msra.mxu0 0.0
    %3630 = vmatprep.subr.mxu0 0.0
    %3631 = vmatpush1.msra.mxu0 0.0
    %3632 = vmatprep.subr.mxu0 0.0
    %3633 = vmatpush1.msra.mxu0 %v178
    %3634 = vmatprep.subr.mxu0 0.0
    %3635 = vmatpush1.msra.mxu0 %v177
    %3636 = vmatprep.subr.mxu0 0.0
    %3637 = vmatpush1.msra.mxu0 %v176
    %3638 = vmatprep.subr.mxu0 0.0
    %3639 = vmatpush1.msra.mxu0 %v175
    %3640 = vmatprep.subr.mxu0 0.0
    %3641 = vmatpush1.msra.mxu0 %v174
    %3642 = vmatprep.subr.mxu0 0.0
    %3643 = vmatpush1.msra.mxu0 %v173
    %3644 = vmatprep.subr.mxu0 0.0
    %3645 = vmatpush2.msra.mxu0 0.0
    %3646 = vmatprep.subr.mxu0 0.0
    %3647 = vmatpush2.msra.mxu0 0.0
    %3648 = vmatprep.subr.mxu0 0.0
    %3649 = vmatpush2.msra.mxu0 0.0
    %3650 = vmatprep.subr.mxu0 0.0
    %3651 = vmatpush2.msra.mxu0 0.0
    %3652 = vmatprep.subr.mxu0 0.0
    %3653 = vmatpush2.msra.mxu0 0.0
    %3654 = vmatprep.subr.mxu0 0.0
    %3655 = vmatpush2.msra.mxu0 0.0
    %3656 = vmatprep.subr.mxu0 0.0
    %3657 = vmatpush2.msra.mxu0 0.0
    %3658 = vmatprep.subr.mxu0 0.0
    %3659 = vmatpush2.msra.mxu0 0.0
    %3660 = vmatprep.subr.mxu0 0.0
    %3661 = vmatpush2.msra.mxu0 0.0
    %3662 = vmatprep.subr.mxu0 0.0
    %3663 = vmatpush2.msra.mxu0 0.0
    %3664 = vmatprep.subr.mxu0 0.0
    %3665 = vmatpush2.msra.mxu0 0.0
    %3666 = vmatprep.subr.mxu0 0.0
    %3667 = vmatpush2.msra.mxu0 0.0
    %3668 = vmatprep.subr.mxu0 0.0
    %3669 = vmatpush2.msra.mxu0 0.0
    %3670 = vmatprep.subr.mxu0 0.0
    %3671 = vmatpush2.msra.mxu0 0.0
    %3672 = vmatprep.subr.mxu0 0.0
    %3673 = vmatpush2.msra.mxu0 0.0
    %3674 = vmatprep.subr.mxu0 0.0
    %3675 = vmatpush2.msra.mxu0 0.0
    %3676 = vmatprep.mubr.f32.mxu0 0.0
    %3677 = vmatmul.mubr.f32.gmra.mxu0 %v3328
    %v3678 = vpop.f32.mrf.mxu0
    %v3679 = vadd.f32 %v3609, %v3678
    %v3680 = vpop.f32.mrf.mxu0
    %3681 = vdwg.mxu0
    %v3682 = vadd.f32 %v3679, %v677
    %3683 = vmatprep.subr.mxu0 0.0
    %3684 = vmatpush1.msra.mxu0 0.0
    %3685 = vmatprep.subr.mxu0 0.0
    %3686 = vmatpush1.msra.mxu0 0.0
    %3687 = vmatprep.subr.mxu0 0.0
    %3688 = vmatpush1.msra.mxu0 0.0
    %3689 = vmatprep.subr.mxu0 0.0
    %3690 = vmatpush1.msra.mxu0 0.0
    %3691 = vmatprep.subr.mxu0 0.0
    %3692 = vmatpush1.msra.mxu0 0.0
    %3693 = vmatprep.subr.mxu0 0.0
    %3694 = vmatpush1.msra.mxu0 0.0
    %3695 = vmatprep.subr.mxu0 0.0
    %3696 = vmatpush1.msra.mxu0 0.0
    %3697 = vmatprep.subr.mxu0 0.0
    %3698 = vmatpush1.msra.mxu0 0.0
    %3699 = vmatprep.subr.mxu0 0.0
    %3700 = vmatpush1.msra.mxu0 0.0
    %3701 = vmatprep.subr.mxu0 0.0
    %3702 = vmatpush1.msra.mxu0 0.0
    %3703 = vmatprep.subr.mxu0 0.0
    %3704 = vmatpush1.msra.mxu0 %v212
    %3705 = vmatprep.subr.mxu0 0.0
    %3706 = vmatpush1.msra.mxu0 %v211
    %3707 = vmatprep.subr.mxu0 0.0
    %3708 = vmatpush1.msra.mxu0 %v210
    %3709 = vmatprep.subr.mxu0 0.0
    %3710 = vmatpush1.msra.mxu0 %v209
    %3711 = vmatprep.subr.mxu0 0.0
    %3712 = vmatpush1.msra.mxu0 %v208
    %3713 = vmatprep.subr.mxu0 0.0
    %3714 = vmatpush1.msra.mxu0 %v207
    %3715 = vmatprep.subr.mxu0 0.0
    %3716 = vmatpush2.msra.mxu0 0.0
    %3717 = vmatprep.subr.mxu0 0.0
    %3718 = vmatpush2.msra.mxu0 0.0
    %3719 = vmatprep.subr.mxu0 0.0
    %3720 = vmatpush2.msra.mxu0 0.0
    %3721 = vmatprep.subr.mxu0 0.0
    %3722 = vmatpush2.msra.mxu0 0.0
    %3723 = vmatprep.subr.mxu0 0.0
    %3724 = vmatpush2.msra.mxu0 0.0
    %3725 = vmatprep.subr.mxu0 0.0
    %3726 = vmatpush2.msra.mxu0 0.0
    %3727 = vmatprep.subr.mxu0 0.0
    %3728 = vmatpush2.msra.mxu0 0.0
    %3729 = vmatprep.subr.mxu0 0.0
    %3730 = vmatpush2.msra.mxu0 0.0
    %3731 = vmatprep.subr.mxu0 0.0
    %3732 = vmatpush2.msra.mxu0 0.0
    %3733 = vmatprep.subr.mxu0 0.0
    %3734 = vmatpush2.msra.mxu0 0.0
    %3735 = vmatprep.subr.mxu0 0.0
    %3736 = vmatpush2.msra.mxu0 0.0
    %3737 = vmatprep.subr.mxu0 0.0
    %3738 = vmatpush2.msra.mxu0 0.0
    %3739 = vmatprep.subr.mxu0 0.0
    %3740 = vmatpush2.msra.mxu0 0.0
    %3741 = vmatprep.subr.mxu0 0.0
    %3742 = vmatpush2.msra.mxu0 0.0
    %3743 = vmatprep.subr.mxu0 0.0
    %3744 = vmatpush2.msra.mxu0 0.0
    %3745 = vmatprep.subr.mxu0 0.0
    %3746 = vmatpush2.msra.mxu0 0.0
    %3747 = vmatprep.mubr.f32.mxu0 0.0
    %3748 = vmatmul.mubr.f32.gmra.mxu0 %v3249
    %v3749 = vpop.f32.mrf.mxu0
    %v3750 = vadd.f32 0.0, %v3749
    %v3751 = vpop.f32.mrf.mxu0
    %3752 = vdwg.mxu0
    %3753 = vmatprep.subr.mxu0 0.0
    %3754 = vmatpush1.msra.mxu0 0.0
    %3755 = vmatprep.subr.mxu0 0.0
    %3756 = vmatpush1.msra.mxu0 0.0
    %3757 = vmatprep.subr.mxu0 0.0
    %3758 = vmatpush1.msra.mxu0 0.0
    %3759 = vmatprep.subr.mxu0 0.0
    %3760 = vmatpush1.msra.mxu0 0.0
    %3761 = vmatprep.subr.mxu0 0.0
    %3762 = vmatpush1.msra.mxu0 0.0
    %3763 = vmatprep.subr.mxu0 0.0
    %3764 = vmatpush1.msra.mxu0 0.0
    %3765 = vmatprep.subr.mxu0 0.0
    %3766 = vmatpush1.msra.mxu0 0.0
    %3767 = vmatprep.subr.mxu0 0.0
    %3768 = vmatpush1.msra.mxu0 0.0
    %3769 = vmatprep.subr.mxu0 0.0
    %3770 = vmatpush1.msra.mxu0 0.0
    %3771 = vmatprep.subr.mxu0 0.0
    %3772 = vmatpush1.msra.mxu0 0.0
    %3773 = vmatprep.subr.mxu0 0.0
    %3774 = vmatpush1.msra.mxu0 %v185
    %3775 = vmatprep.subr.mxu0 0.0
    %3776 = vmatpush1.msra.mxu0 %v184
    %3777 = vmatprep.subr.mxu0 0.0
    %3778 = vmatpush1.msra.mxu0 %v183
    %3779 = vmatprep.subr.mxu0 0.0
    %3780 = vmatpush1.msra.mxu0 %v182
    %3781 = vmatprep.subr.mxu0 0.0
    %3782 = vmatpush1.msra.mxu0 %v181
    %3783 = vmatprep.subr.mxu0 0.0
    %3784 = vmatpush1.msra.mxu0 %v180
    %3785 = vmatprep.subr.mxu0 0.0
    %3786 = vmatpush2.msra.mxu0 0.0
    %3787 = vmatprep.subr.mxu0 0.0
    %3788 = vmatpush2.msra.mxu0 0.0
    %3789 = vmatprep.subr.mxu0 0.0
    %3790 = vmatpush2.msra.mxu0 0.0
    %3791 = vmatprep.subr.mxu0 0.0
    %3792 = vmatpush2.msra.mxu0 0.0
    %3793 = vmatprep.subr.mxu0 0.0
    %3794 = vmatpush2.msra.mxu0 0.0
    %3795 = vmatprep.subr.mxu0 0.0
    %3796 = vmatpush2.msra.mxu0 0.0
    %3797 = vmatprep.subr.mxu0 0.0
    %3798 = vmatpush2.msra.mxu0 0.0
    %3799 = vmatprep.subr.mxu0 0.0
    %3800 = vmatpush2.msra.mxu0 0.0
    %3801 = vmatprep.subr.mxu0 0.0
    %3802 = vmatpush2.msra.mxu0 0.0
    %3803 = vmatprep.subr.mxu0 0.0
    %3804 = vmatpush2.msra.mxu0 0.0
    %3805 = vmatprep.subr.mxu0 0.0
    %3806 = vmatpush2.msra.mxu0 0.0
    %3807 = vmatprep.subr.mxu0 0.0
    %3808 = vmatpush2.msra.mxu0 0.0
    %3809 = vmatprep.subr.mxu0 0.0
    %3810 = vmatpush2.msra.mxu0 0.0
    %3811 = vmatprep.subr.mxu0 0.0
    %3812 = vmatpush2.msra.mxu0 0.0
    %3813 = vmatprep.subr.mxu0 0.0
    %3814 = vmatpush2.msra.mxu0 0.0
    %3815 = vmatprep.subr.mxu0 0.0
    %3816 = vmatpush2.msra.mxu0 0.0
    %3817 = vmatprep.mubr.f32.mxu0 0.0
    %3818 = vmatmul.mubr.f32.gmra.mxu0 %v3328
    %v3819 = vpop.f32.mrf.mxu0
    %v3820 = vadd.f32 %v3750, %v3819
    %v3821 = vpop.f32.mrf.mxu0
    %3822 = vdwg.mxu0
    %v3823 = vadd.f32 %v3820, %v824
    %v3824 = vxor.u32 %v3541, 2147483648
    %v3825 = vmul.f32 %v3824, 1.442695
    %v3826 = vpow.pop %v3825
    %v3827 = vadd.f32 %v3826, 1.0
    %v3828 = vrcp.pop %v3827
    %v3829 = vmul.f32 1.0, %v3828
    %v3830 = vmul.f32 %v3829, %v3239
    %v3831 = vxor.u32 %v3400, 2147483648
    %v3832 = vmul.f32 %v3831, 1.442695
    %v3833 = vpow.pop %v3832
    %v3834 = vadd.f32 %v3833, 1.0
    %v3835 = vrcp.pop %v3834
    %v3836 = vmul.f32 1.0, %v3835
    %v3837 = vtanh.pop %v3682
    %v3838 = vmul.f32 %v3836, %v3837
    %v3839 = vadd.f32 %v3830, %v3838
    %v3840 = vxor.u32 %v3823, 2147483648
    %v3841 = vmul.f32 %v3840, 1.442695
    %v3842 = vpow.pop %v3841
    %v3843 = vadd.f32 %v3842, 1.0
    %v3844 = vrcp.pop %v3843
    %v3845 = vmul.f32 1.0, %v3844
    %v3846 = vtanh.pop %v3839
    %v3847 = vmul.f32 %v3845, %v3846
    %v3849 = vsel %vm220, %v3847, 0
    %3851 = vmatprep.subr.mxu0 0.0
    %3852 = vmatpush1.msra.mxu0 0.0
    %3853 = vmatprep.subr.mxu0 0.0
    %3854 = vmatpush1.msra.mxu0 0.0
    %3855 = vmatprep.subr.mxu0 0.0
    %3856 = vmatpush1.msra.mxu0 0.0
    %3857 = vmatprep.subr.mxu0 0.0
    %3858 = vmatpush1.msra.mxu0 0.0
    %3859 = vmatprep.subr.mxu0 0.0
    %3860 = vmatpush1.msra.mxu0 0.0
    %3861 = vmatprep.subr.mxu0 0.0
    %3862 = vmatpush1.msra.mxu0 0.0
    %3863 = vmatprep.subr.mxu0 0.0
    %3864 = vmatpush1.msra.mxu0 0.0
    %3865 = vmatprep.subr.mxu0 0.0
    %3866 = vmatpush1.msra.mxu0 0.0
    %3867 = vmatprep.subr.mxu0 0.0
    %3868 = vmatpush1.msra.mxu0 0.0
    %3869 = vmatprep.subr.mxu0 0.0
    %3870 = vmatpush1.msra.mxu0 0.0
    %3871 = vmatprep.subr.mxu0 0.0
    %3872 = vmatpush1.msra.mxu0 %v191
    %3873 = vmatprep.subr.mxu0 0.0
    %3874 = vmatpush1.msra.mxu0 %v190
    %3875 = vmatprep.subr.mxu0 0.0
    %3876 = vmatpush1.msra.mxu0 %v189
    %3877 = vmatprep.subr.mxu0 0.0
    %3878 = vmatpush1.msra.mxu0 %v188
    %3879 = vmatprep.subr.mxu0 0.0
    %3880 = vmatpush1.msra.mxu0 %v187
    %3881 = vmatprep.subr.mxu0 0.0
    %3882 = vmatpush1.msra.mxu0 %v186
    %3883 = vmatprep.subr.mxu0 0.0
    %3884 = vmatpush2.msra.mxu0 0.0
    %3885 = vmatprep.subr.mxu0 0.0
    %3886 = vmatpush2.msra.mxu0 0.0
    %3887 = vmatprep.subr.mxu0 0.0
    %3888 = vmatpush2.msra.mxu0 0.0
    %3889 = vmatprep.subr.mxu0 0.0
    %3890 = vmatpush2.msra.mxu0 0.0
    %3891 = vmatprep.subr.mxu0 0.0
    %3892 = vmatpush2.msra.mxu0 0.0
    %3893 = vmatprep.subr.mxu0 0.0
    %3894 = vmatpush2.msra.mxu0 0.0
    %3895 = vmatprep.subr.mxu0 0.0
    %3896 = vmatpush2.msra.mxu0 0.0
    %3897 = vmatprep.subr.mxu0 0.0
    %3898 = vmatpush2.msra.mxu0 0.0
    %3899 = vmatprep.subr.mxu0 0.0
    %3900 = vmatpush2.msra.mxu0 0.0
    %3901 = vmatprep.subr.mxu0 0.0
    %3902 = vmatpush2.msra.mxu0 0.0
    %3903 = vmatprep.subr.mxu0 0.0
    %3904 = vmatpush2.msra.mxu0 0.0
    %3905 = vmatprep.subr.mxu0 0.0
    %3906 = vmatpush2.msra.mxu0 0.0
    %3907 = vmatprep.subr.mxu0 0.0
    %3908 = vmatpush2.msra.mxu0 0.0
    %3909 = vmatprep.subr.mxu0 0.0
    %3910 = vmatpush2.msra.mxu0 0.0
    %3911 = vmatprep.subr.mxu0 0.0
    %3912 = vmatpush2.msra.mxu0 0.0
    %3913 = vmatprep.subr.mxu0 0.0
    %3914 = vmatpush2.msra.mxu0 0.0
    %3915 = vmatprep.mubr.f32.mxu0 0.0
    %3916 = vmatmul.mubr.f32.gmra.mxu0 %v3849
    %v3917 = vpop.f32.mrf.mxu0
    %v3918 = vadd.f32 0.0, %v3917
    %v3919 = vpop.f32.mrf.mxu0
    %3920 = vdwg.mxu0
    %v3921 = vrot.slane %v155, 6
    %v3922 = vrot.slane %v156, 5
    %v3923 = vsel %vm299, %v3922, %v3921
    %v3924 = vrot.slane %v157, 4
    %v3925 = vsel %vm302, %v3924, %v3923
    %v3926 = vrot.slane %v158, 3
    %v3927 = vsel %vm305, %v3926, %v3925
    %v3928 = vsel %vm220, %v3927, 0
    %3930 = vmatprep.subr.mxu0 0.0
    %3931 = vmatpush1.msra.mxu0 0.0
    %3932 = vmatprep.subr.mxu0 0.0
    %3933 = vmatpush1.msra.mxu0 0.0
    %3934 = vmatprep.subr.mxu0 0.0
    %3935 = vmatpush1.msra.mxu0 0.0
    %3936 = vmatprep.subr.mxu0 0.0
    %3937 = vmatpush1.msra.mxu0 0.0
    %3938 = vmatprep.subr.mxu0 0.0
    %3939 = vmatpush1.msra.mxu0 0.0
    %3940 = vmatprep.subr.mxu0 0.0
    %3941 = vmatpush1.msra.mxu0 0.0
    %3942 = vmatprep.subr.mxu0 0.0
    %3943 = vmatpush1.msra.mxu0 0.0
    %3944 = vmatprep.subr.mxu0 0.0
    %3945 = vmatpush1.msra.mxu0 0.0
    %3946 = vmatprep.subr.mxu0 0.0
    %3947 = vmatpush1.msra.mxu0 0.0
    %3948 = vmatprep.subr.mxu0 0.0
    %3949 = vmatpush1.msra.mxu0 0.0
    %3950 = vmatprep.subr.mxu0 0.0
    %3951 = vmatpush1.msra.mxu0 %v164
    %3952 = vmatprep.subr.mxu0 0.0
    %3953 = vmatpush1.msra.mxu0 %v163
    %3954 = vmatprep.subr.mxu0 0.0
    %3955 = vmatpush1.msra.mxu0 %v162
    %3956 = vmatprep.subr.mxu0 0.0
    %3957 = vmatpush1.msra.mxu0 %v161
    %3958 = vmatprep.subr.mxu0 0.0
    %3959 = vmatpush1.msra.mxu0 %v160
    %3960 = vmatprep.subr.mxu0 0.0
    %3961 = vmatpush1.msra.mxu0 %v159
    %3962 = vmatprep.subr.mxu0 0.0
    %3963 = vmatpush2.msra.mxu0 0.0
    %3964 = vmatprep.subr.mxu0 0.0
    %3965 = vmatpush2.msra.mxu0 0.0
    %3966 = vmatprep.subr.mxu0 0.0
    %3967 = vmatpush2.msra.mxu0 0.0
    %3968 = vmatprep.subr.mxu0 0.0
    %3969 = vmatpush2.msra.mxu0 0.0
    %3970 = vmatprep.subr.mxu0 0.0
    %3971 = vmatpush2.msra.mxu0 0.0
    %3972 = vmatprep.subr.mxu0 0.0
    %3973 = vmatpush2.msra.mxu0 0.0
    %3974 = vmatprep.subr.mxu0 0.0
    %3975 = vmatpush2.msra.mxu0 0.0
    %3976 = vmatprep.subr.mxu0 0.0
    %3977 = vmatpush2.msra.mxu0 0.0
    %3978 = vmatprep.subr.mxu0 0.0
    %3979 = vmatpush2.msra.mxu0 0.0
    %3980 = vmatprep.subr.mxu0 0.0
    %3981 = vmatpush2.msra.mxu0 0.0
    %3982 = vmatprep.subr.mxu0 0.0
    %3983 = vmatpush2.msra.mxu0 0.0
    %3984 = vmatprep.subr.mxu0 0.0
    %3985 = vmatpush2.msra.mxu0 0.0
    %3986 = vmatprep.subr.mxu0 0.0
    %3987 = vmatpush2.msra.mxu0 0.0
    %3988 = vmatprep.subr.mxu0 0.0
    %3989 = vmatpush2.msra.mxu0 0.0
    %3990 = vmatprep.subr.mxu0 0.0
    %3991 = vmatpush2.msra.mxu0 0.0
    %3992 = vmatprep.subr.mxu0 0.0
    %3993 = vmatpush2.msra.mxu0 0.0
    %3994 = vmatprep.mubr.f32.mxu0 0.0
    %3995 = vmatmul.mubr.f32.gmra.mxu0 %v3928
    %v3996 = vpop.f32.mrf.mxu0
    %v3997 = vadd.f32 %v3918, %v3996
    %v3998 = vpop.f32.mrf.mxu0
    %3999 = vdwg.mxu0
    %v4000 = vadd.f32 %v3997, %v383
    %4001 = vmatprep.subr.mxu0 0.0
    %4002 = vmatpush1.msra.mxu0 0.0
    %4003 = vmatprep.subr.mxu0 0.0
    %4004 = vmatpush1.msra.mxu0 0.0
    %4005 = vmatprep.subr.mxu0 0.0
    %4006 = vmatpush1.msra.mxu0 0.0
    %4007 = vmatprep.subr.mxu0 0.0
    %4008 = vmatpush1.msra.mxu0 0.0
    %4009 = vmatprep.subr.mxu0 0.0
    %4010 = vmatpush1.msra.mxu0 0.0
    %4011 = vmatprep.subr.mxu0 0.0
    %4012 = vmatpush1.msra.mxu0 0.0
    %4013 = vmatprep.subr.mxu0 0.0
    %4014 = vmatpush1.msra.mxu0 0.0
    %4015 = vmatprep.subr.mxu0 0.0
    %4016 = vmatpush1.msra.mxu0 0.0
    %4017 = vmatprep.subr.mxu0 0.0
    %4018 = vmatpush1.msra.mxu0 0.0
    %4019 = vmatprep.subr.mxu0 0.0
    %4020 = vmatpush1.msra.mxu0 0.0
    %4021 = vmatprep.subr.mxu0 0.0
    %4022 = vmatpush1.msra.mxu0 %v198
    %4023 = vmatprep.subr.mxu0 0.0
    %4024 = vmatpush1.msra.mxu0 %v197
    %4025 = vmatprep.subr.mxu0 0.0
    %4026 = vmatpush1.msra.mxu0 %v196
    %4027 = vmatprep.subr.mxu0 0.0
    %4028 = vmatpush1.msra.mxu0 %v195
    %4029 = vmatprep.subr.mxu0 0.0
    %4030 = vmatpush1.msra.mxu0 %v194
    %4031 = vmatprep.subr.mxu0 0.0
    %4032 = vmatpush1.msra.mxu0 %v193
    %4033 = vmatprep.subr.mxu0 0.0
    %4034 = vmatpush2.msra.mxu0 0.0
    %4035 = vmatprep.subr.mxu0 0.0
    %4036 = vmatpush2.msra.mxu0 0.0
    %4037 = vmatprep.subr.mxu0 0.0
    %4038 = vmatpush2.msra.mxu0 0.0
    %4039 = vmatprep.subr.mxu0 0.0
    %4040 = vmatpush2.msra.mxu0 0.0
    %4041 = vmatprep.subr.mxu0 0.0
    %4042 = vmatpush2.msra.mxu0 0.0
    %4043 = vmatprep.subr.mxu0 0.0
    %4044 = vmatpush2.msra.mxu0 0.0
    %4045 = vmatprep.subr.mxu0 0.0
    %4046 = vmatpush2.msra.mxu0 0.0
    %4047 = vmatprep.subr.mxu0 0.0
    %4048 = vmatpush2.msra.mxu0 0.0
    %4049 = vmatprep.subr.mxu0 0.0
    %4050 = vmatpush2.msra.mxu0 0.0
    %4051 = vmatprep.subr.mxu0 0.0
    %4052 = vmatpush2.msra.mxu0 0.0
    %4053 = vmatprep.subr.mxu0 0.0
    %4054 = vmatpush2.msra.mxu0 0.0
    %4055 = vmatprep.subr.mxu0 0.0
    %4056 = vmatpush2.msra.mxu0 0.0
    %4057 = vmatprep.subr.mxu0 0.0
    %4058 = vmatpush2.msra.mxu0 0.0
    %4059 = vmatprep.subr.mxu0 0.0
    %4060 = vmatpush2.msra.mxu0 0.0
    %4061 = vmatprep.subr.mxu0 0.0
    %4062 = vmatpush2.msra.mxu0 0.0
    %4063 = vmatprep.subr.mxu0 0.0
    %4064 = vmatpush2.msra.mxu0 0.0
    %4065 = vmatprep.mubr.f32.mxu0 0.0
    %4066 = vmatmul.mubr.f32.gmra.mxu0 %v3849
    %v4067 = vpop.f32.mrf.mxu0
    %v4068 = vadd.f32 0.0, %v4067
    %v4069 = vpop.f32.mrf.mxu0
    %4070 = vdwg.mxu0
    %4071 = vmatprep.subr.mxu0 0.0
    %4072 = vmatpush1.msra.mxu0 0.0
    %4073 = vmatprep.subr.mxu0 0.0
    %4074 = vmatpush1.msra.mxu0 0.0
    %4075 = vmatprep.subr.mxu0 0.0
    %4076 = vmatpush1.msra.mxu0 0.0
    %4077 = vmatprep.subr.mxu0 0.0
    %4078 = vmatpush1.msra.mxu0 0.0
    %4079 = vmatprep.subr.mxu0 0.0
    %4080 = vmatpush1.msra.mxu0 0.0
    %4081 = vmatprep.subr.mxu0 0.0
    %4082 = vmatpush1.msra.mxu0 0.0
    %4083 = vmatprep.subr.mxu0 0.0
    %4084 = vmatpush1.msra.mxu0 0.0
    %4085 = vmatprep.subr.mxu0 0.0
    %4086 = vmatpush1.msra.mxu0 0.0
    %4087 = vmatprep.subr.mxu0 0.0
    %4088 = vmatpush1.msra.mxu0 0.0
    %4089 = vmatprep.subr.mxu0 0.0
    %4090 = vmatpush1.msra.mxu0 0.0
    %4091 = vmatprep.subr.mxu0 0.0
    %4092 = vmatpush1.msra.mxu0 %v171
    %4093 = vmatprep.subr.mxu0 0.0
    %4094 = vmatpush1.msra.mxu0 %v170
    %4095 = vmatprep.subr.mxu0 0.0
    %4096 = vmatpush1.msra.mxu0 %v169
    %4097 = vmatprep.subr.mxu0 0.0
    %4098 = vmatpush1.msra.mxu0 %v168
    %4099 = vmatprep.subr.mxu0 0.0
    %4100 = vmatpush1.msra.mxu0 %v167
    %4101 = vmatprep.subr.mxu0 0.0
    %4102 = vmatpush1.msra.mxu0 %v166
    %4103 = vmatprep.subr.mxu0 0.0
    %4104 = vmatpush2.msra.mxu0 0.0
    %4105 = vmatprep.subr.mxu0 0.0
    %4106 = vmatpush2.msra.mxu0 0.0
    %4107 = vmatprep.subr.mxu0 0.0
    %4108 = vmatpush2.msra.mxu0 0.0
    %4109 = vmatprep.subr.mxu0 0.0
    %4110 = vmatpush2.msra.mxu0 0.0
    %4111 = vmatprep.subr.mxu0 0.0
    %4112 = vmatpush2.msra.mxu0 0.0
    %4113 = vmatprep.subr.mxu0 0.0
    %4114 = vmatpush2.msra.mxu0 0.0
    %4115 = vmatprep.subr.mxu0 0.0
    %4116 = vmatpush2.msra.mxu0 0.0
    %4117 = vmatprep.subr.mxu0 0.0
    %4118 = vmatpush2.msra.mxu0 0.0
    %4119 = vmatprep.subr.mxu0 0.0
    %4120 = vmatpush2.msra.mxu0 0.0
    %4121 = vmatprep.subr.mxu0 0.0
    %4122 = vmatpush2.msra.mxu0 0.0
    %4123 = vmatprep.subr.mxu0 0.0
    %4124 = vmatpush2.msra.mxu0 0.0
    %4125 = vmatprep.subr.mxu0 0.0
    %4126 = vmatpush2.msra.mxu0 0.0
    %4127 = vmatprep.subr.mxu0 0.0
    %4128 = vmatpush2.msra.mxu0 0.0
    %4129 = vmatprep.subr.mxu0 0.0
    %4130 = vmatpush2.msra.mxu0 0.0
    %4131 = vmatprep.subr.mxu0 0.0
    %4132 = vmatpush2.msra.mxu0 0.0
    %4133 = vmatprep.subr.mxu0 0.0
    %4134 = vmatpush2.msra.mxu0 0.0
    %4135 = vmatprep.mubr.f32.mxu0 0.0
    %4136 = vmatmul.mubr.f32.gmra.mxu0 %v3928
    %v4137 = vpop.f32.mrf.mxu0
    %v4138 = vadd.f32 %v4068, %v4137
    %v4139 = vpop.f32.mrf.mxu0
    %4140 = vdwg.mxu0
    %v4141 = vadd.f32 %v4138, %v530
    %4142 = vmatprep.subr.mxu0 0.0
    %4143 = vmatpush1.msra.mxu0 0.0
    %4144 = vmatprep.subr.mxu0 0.0
    %4145 = vmatpush1.msra.mxu0 0.0
    %4146 = vmatprep.subr.mxu0 0.0
    %4147 = vmatpush1.msra.mxu0 0.0
    %4148 = vmatprep.subr.mxu0 0.0
    %4149 = vmatpush1.msra.mxu0 0.0
    %4150 = vmatprep.subr.mxu0 0.0
    %4151 = vmatpush1.msra.mxu0 0.0
    %4152 = vmatprep.subr.mxu0 0.0
    %4153 = vmatpush1.msra.mxu0 0.0
    %4154 = vmatprep.subr.mxu0 0.0
    %4155 = vmatpush1.msra.mxu0 0.0
    %4156 = vmatprep.subr.mxu0 0.0
    %4157 = vmatpush1.msra.mxu0 0.0
    %4158 = vmatprep.subr.mxu0 0.0
    %4159 = vmatpush1.msra.mxu0 0.0
    %4160 = vmatprep.subr.mxu0 0.0
    %4161 = vmatpush1.msra.mxu0 0.0
    %4162 = vmatprep.subr.mxu0 0.0
    %4163 = vmatpush1.msra.mxu0 %v205
    %4164 = vmatprep.subr.mxu0 0.0
    %4165 = vmatpush1.msra.mxu0 %v204
    %4166 = vmatprep.subr.mxu0 0.0
    %4167 = vmatpush1.msra.mxu0 %v203
    %4168 = vmatprep.subr.mxu0 0.0
    %4169 = vmatpush1.msra.mxu0 %v202
    %4170 = vmatprep.subr.mxu0 0.0
    %4171 = vmatpush1.msra.mxu0 %v201
    %4172 = vmatprep.subr.mxu0 0.0
    %4173 = vmatpush1.msra.mxu0 %v200
    %4174 = vmatprep.subr.mxu0 0.0
    %4175 = vmatpush2.msra.mxu0 0.0
    %4176 = vmatprep.subr.mxu0 0.0
    %4177 = vmatpush2.msra.mxu0 0.0
    %4178 = vmatprep.subr.mxu0 0.0
    %4179 = vmatpush2.msra.mxu0 0.0
    %4180 = vmatprep.subr.mxu0 0.0
    %4181 = vmatpush2.msra.mxu0 0.0
    %4182 = vmatprep.subr.mxu0 0.0
    %4183 = vmatpush2.msra.mxu0 0.0
    %4184 = vmatprep.subr.mxu0 0.0
    %4185 = vmatpush2.msra.mxu0 0.0
    %4186 = vmatprep.subr.mxu0 0.0
    %4187 = vmatpush2.msra.mxu0 0.0
    %4188 = vmatprep.subr.mxu0 0.0
    %4189 = vmatpush2.msra.mxu0 0.0
    %4190 = vmatprep.subr.mxu0 0.0
    %4191 = vmatpush2.msra.mxu0 0.0
    %4192 = vmatprep.subr.mxu0 0.0
    %4193 = vmatpush2.msra.mxu0 0.0
    %4194 = vmatprep.subr.mxu0 0.0
    %4195 = vmatpush2.msra.mxu0 0.0
    %4196 = vmatprep.subr.mxu0 0.0
    %4197 = vmatpush2.msra.mxu0 0.0
    %4198 = vmatprep.subr.mxu0 0.0
    %4199 = vmatpush2.msra.mxu0 0.0
    %4200 = vmatprep.subr.mxu0 0.0
    %4201 = vmatpush2.msra.mxu0 0.0
    %4202 = vmatprep.subr.mxu0 0.0
    %4203 = vmatpush2.msra.mxu0 0.0
    %4204 = vmatprep.subr.mxu0 0.0
    %4205 = vmatpush2.msra.mxu0 0.0
    %4206 = vmatprep.mubr.f32.mxu0 0.0
    %4207 = vmatmul.mubr.f32.gmra.mxu0 %v3849
    %v4208 = vpop.f32.mrf.mxu0
    %v4209 = vadd.f32 0.0, %v4208
    %v4210 = vpop.f32.mrf.mxu0
    %4211 = vdwg.mxu0
    %4212 = vmatprep.subr.mxu0 0.0
    %4213 = vmatpush1.msra.mxu0 0.0
    %4214 = vmatprep.subr.mxu0 0.0
    %4215 = vmatpush1.msra.mxu0 0.0
    %4216 = vmatprep.subr.mxu0 0.0
    %4217 = vmatpush1.msra.mxu0 0.0
    %4218 = vmatprep.subr.mxu0 0.0
    %4219 = vmatpush1.msra.mxu0 0.0
    %4220 = vmatprep.subr.mxu0 0.0
    %4221 = vmatpush1.msra.mxu0 0.0
    %4222 = vmatprep.subr.mxu0 0.0
    %4223 = vmatpush1.msra.mxu0 0.0
    %4224 = vmatprep.subr.mxu0 0.0
    %4225 = vmatpush1.msra.mxu0 0.0
    %4226 = vmatprep.subr.mxu0 0.0
    %4227 = vmatpush1.msra.mxu0 0.0
    %4228 = vmatprep.subr.mxu0 0.0
    %4229 = vmatpush1.msra.mxu0 0.0
    %4230 = vmatprep.subr.mxu0 0.0
    %4231 = vmatpush1.msra.mxu0 0.0
    %4232 = vmatprep.subr.mxu0 0.0
    %4233 = vmatpush1.msra.mxu0 %v178
    %4234 = vmatprep.subr.mxu0 0.0
    %4235 = vmatpush1.msra.mxu0 %v177
    %4236 = vmatprep.subr.mxu0 0.0
    %4237 = vmatpush1.msra.mxu0 %v176
    %4238 = vmatprep.subr.mxu0 0.0
    %4239 = vmatpush1.msra.mxu0 %v175
    %4240 = vmatprep.subr.mxu0 0.0
    %4241 = vmatpush1.msra.mxu0 %v174
    %4242 = vmatprep.subr.mxu0 0.0
    %4243 = vmatpush1.msra.mxu0 %v173
    %4244 = vmatprep.subr.mxu0 0.0
    %4245 = vmatpush2.msra.mxu0 0.0
    %4246 = vmatprep.subr.mxu0 0.0
    %4247 = vmatpush2.msra.mxu0 0.0
    %4248 = vmatprep.subr.mxu0 0.0
    %4249 = vmatpush2.msra.mxu0 0.0
    %4250 = vmatprep.subr.mxu0 0.0
    %4251 = vmatpush2.msra.mxu0 0.0
    %4252 = vmatprep.subr.mxu0 0.0
    %4253 = vmatpush2.msra.mxu0 0.0
    %4254 = vmatprep.subr.mxu0 0.0
    %4255 = vmatpush2.msra.mxu0 0.0
    %4256 = vmatprep.subr.mxu0 0.0
    %4257 = vmatpush2.msra.mxu0 0.0
    %4258 = vmatprep.subr.mxu0 0.0
    %4259 = vmatpush2.msra.mxu0 0.0
    %4260 = vmatprep.subr.mxu0 0.0
    %4261 = vmatpush2.msra.mxu0 0.0
    %4262 = vmatprep.subr.mxu0 0.0
    %4263 = vmatpush2.msra.mxu0 0.0
    %4264 = vmatprep.subr.mxu0 0.0
    %4265 = vmatpush2.msra.mxu0 0.0
    %4266 = vmatprep.subr.mxu0 0.0
    %4267 = vmatpush2.msra.mxu0 0.0
    %4268 = vmatprep.subr.mxu0 0.0
    %4269 = vmatpush2.msra.mxu0 0.0
    %4270 = vmatprep.subr.mxu0 0.0
    %4271 = vmatpush2.msra.mxu0 0.0
    %4272 = vmatprep.subr.mxu0 0.0
    %4273 = vmatpush2.msra.mxu0 0.0
    %4274 = vmatprep.subr.mxu0 0.0
    %4275 = vmatpush2.msra.mxu0 0.0
    %4276 = vmatprep.mubr.f32.mxu0 0.0
    %4277 = vmatmul.mubr.f32.gmra.mxu0 %v3928
    %v4278 = vpop.f32.mrf.mxu0
    %v4279 = vadd.f32 %v4209, %v4278
    %v4280 = vpop.f32.mrf.mxu0
    %4281 = vdwg.mxu0
    %v4282 = vadd.f32 %v4279, %v677
    %4283 = vmatprep.subr.mxu0 0.0
    %4284 = vmatpush1.msra.mxu0 0.0
    %4285 = vmatprep.subr.mxu0 0.0
    %4286 = vmatpush1.msra.mxu0 0.0
    %4287 = vmatprep.subr.mxu0 0.0
    %4288 = vmatpush1.msra.mxu0 0.0
    %4289 = vmatprep.subr.mxu0 0.0
    %4290 = vmatpush1.msra.mxu0 0.0
    %4291 = vmatprep.subr.mxu0 0.0
    %4292 = vmatpush1.msra.mxu0 0.0
    %4293 = vmatprep.subr.mxu0 0.0
    %4294 = vmatpush1.msra.mxu0 0.0
    %4295 = vmatprep.subr.mxu0 0.0
    %4296 = vmatpush1.msra.mxu0 0.0
    %4297 = vmatprep.subr.mxu0 0.0
    %4298 = vmatpush1.msra.mxu0 0.0
    %4299 = vmatprep.subr.mxu0 0.0
    %4300 = vmatpush1.msra.mxu0 0.0
    %4301 = vmatprep.subr.mxu0 0.0
    %4302 = vmatpush1.msra.mxu0 0.0
    %4303 = vmatprep.subr.mxu0 0.0
    %4304 = vmatpush1.msra.mxu0 %v212
    %4305 = vmatprep.subr.mxu0 0.0
    %4306 = vmatpush1.msra.mxu0 %v211
    %4307 = vmatprep.subr.mxu0 0.0
    %4308 = vmatpush1.msra.mxu0 %v210
    %4309 = vmatprep.subr.mxu0 0.0
    %4310 = vmatpush1.msra.mxu0 %v209
    %4311 = vmatprep.subr.mxu0 0.0
    %4312 = vmatpush1.msra.mxu0 %v208
    %4313 = vmatprep.subr.mxu0 0.0
    %4314 = vmatpush1.msra.mxu0 %v207
    %4315 = vmatprep.subr.mxu0 0.0
    %4316 = vmatpush2.msra.mxu0 0.0
    %4317 = vmatprep.subr.mxu0 0.0
    %4318 = vmatpush2.msra.mxu0 0.0
    %4319 = vmatprep.subr.mxu0 0.0
    %4320 = vmatpush2.msra.mxu0 0.0
    %4321 = vmatprep.subr.mxu0 0.0
    %4322 = vmatpush2.msra.mxu0 0.0
    %4323 = vmatprep.subr.mxu0 0.0
    %4324 = vmatpush2.msra.mxu0 0.0
    %4325 = vmatprep.subr.mxu0 0.0
    %4326 = vmatpush2.msra.mxu0 0.0
    %4327 = vmatprep.subr.mxu0 0.0
    %4328 = vmatpush2.msra.mxu0 0.0
    %4329 = vmatprep.subr.mxu0 0.0
    %4330 = vmatpush2.msra.mxu0 0.0
    %4331 = vmatprep.subr.mxu0 0.0
    %4332 = vmatpush2.msra.mxu0 0.0
    %4333 = vmatprep.subr.mxu0 0.0
    %4334 = vmatpush2.msra.mxu0 0.0
    %4335 = vmatprep.subr.mxu0 0.0
    %4336 = vmatpush2.msra.mxu0 0.0
    %4337 = vmatprep.subr.mxu0 0.0
    %4338 = vmatpush2.msra.mxu0 0.0
    %4339 = vmatprep.subr.mxu0 0.0
    %4340 = vmatpush2.msra.mxu0 0.0
    %4341 = vmatprep.subr.mxu0 0.0
    %4342 = vmatpush2.msra.mxu0 0.0
    %4343 = vmatprep.subr.mxu0 0.0
    %4344 = vmatpush2.msra.mxu0 0.0
    %4345 = vmatprep.subr.mxu0 0.0
    %4346 = vmatpush2.msra.mxu0 0.0
    %4347 = vmatprep.mubr.f32.mxu0 0.0
    %4348 = vmatmul.mubr.f32.gmra.mxu0 %v3849
    %v4349 = vpop.f32.mrf.mxu0
    %v4350 = vadd.f32 0.0, %v4349
    %v4351 = vpop.f32.mrf.mxu0
    %4352 = vdwg.mxu0
    %4353 = vmatprep.subr.mxu0 0.0
    %4354 = vmatpush1.msra.mxu0 0.0
    %4355 = vmatprep.subr.mxu0 0.0
    %4356 = vmatpush1.msra.mxu0 0.0
    %4357 = vmatprep.subr.mxu0 0.0
    %4358 = vmatpush1.msra.mxu0 0.0
    %4359 = vmatprep.subr.mxu0 0.0
    %4360 = vmatpush1.msra.mxu0 0.0
    %4361 = vmatprep.subr.mxu0 0.0
    %4362 = vmatpush1.msra.mxu0 0.0
    %4363 = vmatprep.subr.mxu0 0.0
    %4364 = vmatpush1.msra.mxu0 0.0
    %4365 = vmatprep.subr.mxu0 0.0
    %4366 = vmatpush1.msra.mxu0 0.0
    %4367 = vmatprep.subr.mxu0 0.0
    %4368 = vmatpush1.msra.mxu0 0.0
    %4369 = vmatprep.subr.mxu0 0.0
    %4370 = vmatpush1.msra.mxu0 0.0
    %4371 = vmatprep.subr.mxu0 0.0
    %4372 = vmatpush1.msra.mxu0 0.0
    %4373 = vmatprep.subr.mxu0 0.0
    %4374 = vmatpush1.msra.mxu0 %v185
    %4375 = vmatprep.subr.mxu0 0.0
    %4376 = vmatpush1.msra.mxu0 %v184
    %4377 = vmatprep.subr.mxu0 0.0
    %4378 = vmatpush1.msra.mxu0 %v183
    %4379 = vmatprep.subr.mxu0 0.0
    %4380 = vmatpush1.msra.mxu0 %v182
    %4381 = vmatprep.subr.mxu0 0.0
    %4382 = vmatpush1.msra.mxu0 %v181
    %4383 = vmatprep.subr.mxu0 0.0
    %4384 = vmatpush1.msra.mxu0 %v180
    %4385 = vmatprep.subr.mxu0 0.0
    %4386 = vmatpush2.msra.mxu0 0.0
    %4387 = vmatprep.subr.mxu0 0.0
    %4388 = vmatpush2.msra.mxu0 0.0
    %4389 = vmatprep.subr.mxu0 0.0
    %4390 = vmatpush2.msra.mxu0 0.0
    %4391 = vmatprep.subr.mxu0 0.0
    %4392 = vmatpush2.msra.mxu0 0.0
    %4393 = vmatprep.subr.mxu0 0.0
    %4394 = vmatpush2.msra.mxu0 0.0
    %4395 = vmatprep.subr.mxu0 0.0
    %4396 = vmatpush2.msra.mxu0 0.0
    %4397 = vmatprep.subr.mxu0 0.0
    %4398 = vmatpush2.msra.mxu0 0.0
    %4399 = vmatprep.subr.mxu0 0.0
    %4400 = vmatpush2.msra.mxu0 0.0
    %4401 = vmatprep.subr.mxu0 0.0
    %4402 = vmatpush2.msra.mxu0 0.0
    %4403 = vmatprep.subr.mxu0 0.0
    %4404 = vmatpush2.msra.mxu0 0.0
    %4405 = vmatprep.subr.mxu0 0.0
    %4406 = vmatpush2.msra.mxu0 0.0
    %4407 = vmatprep.subr.mxu0 0.0
    %4408 = vmatpush2.msra.mxu0 0.0
    %4409 = vmatprep.subr.mxu0 0.0
    %4410 = vmatpush2.msra.mxu0 0.0
    %4411 = vmatprep.subr.mxu0 0.0
    %4412 = vmatpush2.msra.mxu0 0.0
    %4413 = vmatprep.subr.mxu0 0.0
    %4414 = vmatpush2.msra.mxu0 0.0
    %4415 = vmatprep.subr.mxu0 0.0
    %4416 = vmatpush2.msra.mxu0 0.0
    %4417 = vmatprep.mubr.f32.mxu0 0.0
    %4418 = vmatmul.mubr.f32.gmra.mxu0 %v3928
    %v4419 = vpop.f32.mrf.mxu0
    %v4420 = vadd.f32 %v4350, %v4419
    %v4421 = vpop.f32.mrf.mxu0
    %4422 = vdwg.mxu0
    %v4423 = vadd.f32 %v4420, %v824
    %v4424 = vxor.u32 %v4141, 2147483648
    %v4425 = vmul.f32 %v4424, 1.442695
    %v4426 = vpow.pop %v4425
    %v4427 = vadd.f32 %v4426, 1.0
    %v4428 = vrcp.pop %v4427
    %v4429 = vmul.f32 1.0, %v4428
    %v4430 = vmul.f32 %v4429, %v3839
    %v4431 = vxor.u32 %v4000, 2147483648
    %v4432 = vmul.f32 %v4431, 1.442695
    %v4433 = vpow.pop %v4432
    %v4434 = vadd.f32 %v4433, 1.0
    %v4435 = vrcp.pop %v4434
    %v4436 = vmul.f32 1.0, %v4435
    %v4437 = vtanh.pop %v4282
    %v4438 = vmul.f32 %v4436, %v4437
    %v4439 = vadd.f32 %v4430, %v4438
    %v4440 = vxor.u32 %v4423, 2147483648
    %v4441 = vmul.f32 %v4440, 1.442695
    %v4442 = vpow.pop %v4441
    %v4443 = vadd.f32 %v4442, 1.0
    %v4444 = vrcp.pop %v4443
    %v4445 = vmul.f32 1.0, %v4444
    %v4446 = vtanh.pop %v4439
    %v4447 = vmul.f32 %v4445, %v4446
    %v4449 = vsel %vm220, %v4447, 0
    %4451 = vmatprep.subr.mxu0 0.0
    %4452 = vmatpush1.msra.mxu0 0.0
    %4453 = vmatprep.subr.mxu0 0.0
    %4454 = vmatpush1.msra.mxu0 0.0
    %4455 = vmatprep.subr.mxu0 0.0
    %4456 = vmatpush1.msra.mxu0 0.0
    %4457 = vmatprep.subr.mxu0 0.0
    %4458 = vmatpush1.msra.mxu0 0.0
    %4459 = vmatprep.subr.mxu0 0.0
    %4460 = vmatpush1.msra.mxu0 0.0
    %4461 = vmatprep.subr.mxu0 0.0
    %4462 = vmatpush1.msra.mxu0 0.0
    %4463 = vmatprep.subr.mxu0 0.0
    %4464 = vmatpush1.msra.mxu0 0.0
    %4465 = vmatprep.subr.mxu0 0.0
    %4466 = vmatpush1.msra.mxu0 0.0
    %4467 = vmatprep.subr.mxu0 0.0
    %4468 = vmatpush1.msra.mxu0 0.0
    %4469 = vmatprep.subr.mxu0 0.0
    %4470 = vmatpush1.msra.mxu0 0.0
    %4471 = vmatprep.subr.mxu0 0.0
    %4472 = vmatpush1.msra.mxu0 %v191
    %4473 = vmatprep.subr.mxu0 0.0
    %4474 = vmatpush1.msra.mxu0 %v190
    %4475 = vmatprep.subr.mxu0 0.0
    %4476 = vmatpush1.msra.mxu0 %v189
    %4477 = vmatprep.subr.mxu0 0.0
    %4478 = vmatpush1.msra.mxu0 %v188
    %4479 = vmatprep.subr.mxu0 0.0
    %4480 = vmatpush1.msra.mxu0 %v187
    %4481 = vmatprep.subr.mxu0 0.0
    %4482 = vmatpush1.msra.mxu0 %v186
    %4483 = vmatprep.subr.mxu0 0.0
    %4484 = vmatpush2.msra.mxu0 0.0
    %4485 = vmatprep.subr.mxu0 0.0
    %4486 = vmatpush2.msra.mxu0 0.0
    %4487 = vmatprep.subr.mxu0 0.0
    %4488 = vmatpush2.msra.mxu0 0.0
    %4489 = vmatprep.subr.mxu0 0.0
    %4490 = vmatpush2.msra.mxu0 0.0
    %4491 = vmatprep.subr.mxu0 0.0
    %4492 = vmatpush2.msra.mxu0 0.0
    %4493 = vmatprep.subr.mxu0 0.0
    %4494 = vmatpush2.msra.mxu0 0.0
    %4495 = vmatprep.subr.mxu0 0.0
    %4496 = vmatpush2.msra.mxu0 0.0
    %4497 = vmatprep.subr.mxu0 0.0
    %4498 = vmatpush2.msra.mxu0 0.0
    %4499 = vmatprep.subr.mxu0 0.0
    %4500 = vmatpush2.msra.mxu0 0.0
    %4501 = vmatprep.subr.mxu0 0.0
    %4502 = vmatpush2.msra.mxu0 0.0
    %4503 = vmatprep.subr.mxu0 0.0
    %4504 = vmatpush2.msra.mxu0 0.0
    %4505 = vmatprep.subr.mxu0 0.0
    %4506 = vmatpush2.msra.mxu0 0.0
    %4507 = vmatprep.subr.mxu0 0.0
    %4508 = vmatpush2.msra.mxu0 0.0
    %4509 = vmatprep.subr.mxu0 0.0
    %4510 = vmatpush2.msra.mxu0 0.0
    %4511 = vmatprep.subr.mxu0 0.0
    %4512 = vmatpush2.msra.mxu0 0.0
    %4513 = vmatprep.subr.mxu0 0.0
    %4514 = vmatpush2.msra.mxu0 0.0
    %4515 = vmatprep.mubr.f32.mxu0 0.0
    %4516 = vmatmul.mubr.f32.gmra.mxu0 %v4449
    %v4517 = vpop.f32.mrf.mxu0
    %v4518 = vadd.f32 0.0, %v4517
    %v4519 = vpop.f32.mrf.mxu0
    %4520 = vdwg.mxu0
    %v4521 = vrot.slane %v155, 7
    %v4522 = vrot.slane %v156, 6
    %v4523 = vsel %vm299, %v4522, %v4521
    %v4524 = vrot.slane %v157, 5
    %v4525 = vsel %vm302, %v4524, %v4523
    %v4526 = vrot.slane %v158, 4
    %v4527 = vsel %vm305, %v4526, %v4525
    %v4528 = vsel %vm220, %v4527, 0
    %4530 = vmatprep.subr.mxu0 0.0
    %4531 = vmatpush1.msra.mxu0 0.0
    %4532 = vmatprep.subr.mxu0 0.0
    %4533 = vmatpush1.msra.mxu0 0.0
    %4534 = vmatprep.subr.mxu0 0.0
    %4535 = vmatpush1.msra.mxu0 0.0
    %4536 = vmatprep.subr.mxu0 0.0
    %4537 = vmatpush1.msra.mxu0 0.0
    %4538 = vmatprep.subr.mxu0 0.0
    %4539 = vmatpush1.msra.mxu0 0.0
    %4540 = vmatprep.subr.mxu0 0.0
    %4541 = vmatpush1.msra.mxu0 0.0
    %4542 = vmatprep.subr.mxu0 0.0
    %4543 = vmatpush1.msra.mxu0 0.0
    %4544 = vmatprep.subr.mxu0 0.0
    %4545 = vmatpush1.msra.mxu0 0.0
    %4546 = vmatprep.subr.mxu0 0.0
    %4547 = vmatpush1.msra.mxu0 0.0
    %4548 = vmatprep.subr.mxu0 0.0
    %4549 = vmatpush1.msra.mxu0 0.0
    %4550 = vmatprep.subr.mxu0 0.0
    %4551 = vmatpush1.msra.mxu0 %v164
    %4552 = vmatprep.subr.mxu0 0.0
    %4553 = vmatpush1.msra.mxu0 %v163
    %4554 = vmatprep.subr.mxu0 0.0
    %4555 = vmatpush1.msra.mxu0 %v162
    %4556 = vmatprep.subr.mxu0 0.0
    %4557 = vmatpush1.msra.mxu0 %v161
    %4558 = vmatprep.subr.mxu0 0.0
    %4559 = vmatpush1.msra.mxu0 %v160
    %4560 = vmatprep.subr.mxu0 0.0
    %4561 = vmatpush1.msra.mxu0 %v159
    %4562 = vmatprep.subr.mxu0 0.0
    %4563 = vmatpush2.msra.mxu0 0.0
    %4564 = vmatprep.subr.mxu0 0.0
    %4565 = vmatpush2.msra.mxu0 0.0
    %4566 = vmatprep.subr.mxu0 0.0
    %4567 = vmatpush2.msra.mxu0 0.0
    %4568 = vmatprep.subr.mxu0 0.0
    %4569 = vmatpush2.msra.mxu0 0.0
    %4570 = vmatprep.subr.mxu0 0.0
    %4571 = vmatpush2.msra.mxu0 0.0
    %4572 = vmatprep.subr.mxu0 0.0
    %4573 = vmatpush2.msra.mxu0 0.0
    %4574 = vmatprep.subr.mxu0 0.0
    %4575 = vmatpush2.msra.mxu0 0.0
    %4576 = vmatprep.subr.mxu0 0.0
    %4577 = vmatpush2.msra.mxu0 0.0
    %4578 = vmatprep.subr.mxu0 0.0
    %4579 = vmatpush2.msra.mxu0 0.0
    %4580 = vmatprep.subr.mxu0 0.0
    %4581 = vmatpush2.msra.mxu0 0.0
    %4582 = vmatprep.subr.mxu0 0.0
    %4583 = vmatpush2.msra.mxu0 0.0
    %4584 = vmatprep.subr.mxu0 0.0
    %4585 = vmatpush2.msra.mxu0 0.0
    %4586 = vmatprep.subr.mxu0 0.0
    %4587 = vmatpush2.msra.mxu0 0.0
    %4588 = vmatprep.subr.mxu0 0.0
    %4589 = vmatpush2.msra.mxu0 0.0
    %4590 = vmatprep.subr.mxu0 0.0
    %4591 = vmatpush2.msra.mxu0 0.0
    %4592 = vmatprep.subr.mxu0 0.0
    %4593 = vmatpush2.msra.mxu0 0.0
    %4594 = vmatprep.mubr.f32.mxu0 0.0
    %4595 = vmatmul.mubr.f32.gmra.mxu0 %v4528
    %v4596 = vpop.f32.mrf.mxu0
    %v4597 = vadd.f32 %v4518, %v4596
    %v4598 = vpop.f32.mrf.mxu0
    %4599 = vdwg.mxu0
    %v4600 = vadd.f32 %v4597, %v383
    %4601 = vmatprep.subr.mxu0 0.0
    %4602 = vmatpush1.msra.mxu0 0.0
    %4603 = vmatprep.subr.mxu0 0.0
    %4604 = vmatpush1.msra.mxu0 0.0
    %4605 = vmatprep.subr.mxu0 0.0
    %4606 = vmatpush1.msra.mxu0 0.0
    %4607 = vmatprep.subr.mxu0 0.0
    %4608 = vmatpush1.msra.mxu0 0.0
    %4609 = vmatprep.subr.mxu0 0.0
    %4610 = vmatpush1.msra.mxu0 0.0
    %4611 = vmatprep.subr.mxu0 0.0
    %4612 = vmatpush1.msra.mxu0 0.0
    %4613 = vmatprep.subr.mxu0 0.0
    %4614 = vmatpush1.msra.mxu0 0.0
    %4615 = vmatprep.subr.mxu0 0.0
    %4616 = vmatpush1.msra.mxu0 0.0
    %4617 = vmatprep.subr.mxu0 0.0
    %4618 = vmatpush1.msra.mxu0 0.0
    %4619 = vmatprep.subr.mxu0 0.0
    %4620 = vmatpush1.msra.mxu0 0.0
    %4621 = vmatprep.subr.mxu0 0.0
    %4622 = vmatpush1.msra.mxu0 %v198
    %4623 = vmatprep.subr.mxu0 0.0
    %4624 = vmatpush1.msra.mxu0 %v197
    %4625 = vmatprep.subr.mxu0 0.0
    %4626 = vmatpush1.msra.mxu0 %v196
    %4627 = vmatprep.subr.mxu0 0.0
    %4628 = vmatpush1.msra.mxu0 %v195
    %4629 = vmatprep.subr.mxu0 0.0
    %4630 = vmatpush1.msra.mxu0 %v194
    %4631 = vmatprep.subr.mxu0 0.0
    %4632 = vmatpush1.msra.mxu0 %v193
    %4633 = vmatprep.subr.mxu0 0.0
    %4634 = vmatpush2.msra.mxu0 0.0
    %4635 = vmatprep.subr.mxu0 0.0
    %4636 = vmatpush2.msra.mxu0 0.0
    %4637 = vmatprep.subr.mxu0 0.0
    %4638 = vmatpush2.msra.mxu0 0.0
    %4639 = vmatprep.subr.mxu0 0.0
    %4640 = vmatpush2.msra.mxu0 0.0
    %4641 = vmatprep.subr.mxu0 0.0
    %4642 = vmatpush2.msra.mxu0 0.0
    %4643 = vmatprep.subr.mxu0 0.0
    %4644 = vmatpush2.msra.mxu0 0.0
    %4645 = vmatprep.subr.mxu0 0.0
    %4646 = vmatpush2.msra.mxu0 0.0
    %4647 = vmatprep.subr.mxu0 0.0
    %4648 = vmatpush2.msra.mxu0 0.0
    %4649 = vmatprep.subr.mxu0 0.0
    %4650 = vmatpush2.msra.mxu0 0.0
    %4651 = vmatprep.subr.mxu0 0.0
    %4652 = vmatpush2.msra.mxu0 0.0
    %4653 = vmatprep.subr.mxu0 0.0
    %4654 = vmatpush2.msra.mxu0 0.0
    %4655 = vmatprep.subr.mxu0 0.0
    %4656 = vmatpush2.msra.mxu0 0.0
    %4657 = vmatprep.subr.mxu0 0.0
    %4658 = vmatpush2.msra.mxu0 0.0
    %4659 = vmatprep.subr.mxu0 0.0
    %4660 = vmatpush2.msra.mxu0 0.0
    %4661 = vmatprep.subr.mxu0 0.0
    %4662 = vmatpush2.msra.mxu0 0.0
    %4663 = vmatprep.subr.mxu0 0.0
    %4664 = vmatpush2.msra.mxu0 0.0
    %4665 = vmatprep.mubr.f32.mxu0 0.0
    %4666 = vmatmul.mubr.f32.gmra.mxu0 %v4449
    %v4667 = vpop.f32.mrf.mxu0
    %v4668 = vadd.f32 0.0, %v4667
    %v4669 = vpop.f32.mrf.mxu0
    %4670 = vdwg.mxu0
    %4671 = vmatprep.subr.mxu0 0.0
    %4672 = vmatpush1.msra.mxu0 0.0
    %4673 = vmatprep.subr.mxu0 0.0
    %4674 = vmatpush1.msra.mxu0 0.0
    %4675 = vmatprep.subr.mxu0 0.0
    %4676 = vmatpush1.msra.mxu0 0.0
    %4677 = vmatprep.subr.mxu0 0.0
    %4678 = vmatpush1.msra.mxu0 0.0
    %4679 = vmatprep.subr.mxu0 0.0
    %4680 = vmatpush1.msra.mxu0 0.0
    %4681 = vmatprep.subr.mxu0 0.0
    %4682 = vmatpush1.msra.mxu0 0.0
    %4683 = vmatprep.subr.mxu0 0.0
    %4684 = vmatpush1.msra.mxu0 0.0
    %4685 = vmatprep.subr.mxu0 0.0
    %4686 = vmatpush1.msra.mxu0 0.0
    %4687 = vmatprep.subr.mxu0 0.0
    %4688 = vmatpush1.msra.mxu0 0.0
    %4689 = vmatprep.subr.mxu0 0.0
    %4690 = vmatpush1.msra.mxu0 0.0
    %4691 = vmatprep.subr.mxu0 0.0
    %4692 = vmatpush1.msra.mxu0 %v171
    %4693 = vmatprep.subr.mxu0 0.0
    %4694 = vmatpush1.msra.mxu0 %v170
    %4695 = vmatprep.subr.mxu0 0.0
    %4696 = vmatpush1.msra.mxu0 %v169
    %4697 = vmatprep.subr.mxu0 0.0
    %4698 = vmatpush1.msra.mxu0 %v168
    %4699 = vmatprep.subr.mxu0 0.0
    %4700 = vmatpush1.msra.mxu0 %v167
    %4701 = vmatprep.subr.mxu0 0.0
    %4702 = vmatpush1.msra.mxu0 %v166
    %4703 = vmatprep.subr.mxu0 0.0
    %4704 = vmatpush2.msra.mxu0 0.0
    %4705 = vmatprep.subr.mxu0 0.0
    %4706 = vmatpush2.msra.mxu0 0.0
    %4707 = vmatprep.subr.mxu0 0.0
    %4708 = vmatpush2.msra.mxu0 0.0
    %4709 = vmatprep.subr.mxu0 0.0
    %4710 = vmatpush2.msra.mxu0 0.0
    %4711 = vmatprep.subr.mxu0 0.0
    %4712 = vmatpush2.msra.mxu0 0.0
    %4713 = vmatprep.subr.mxu0 0.0
    %4714 = vmatpush2.msra.mxu0 0.0
    %4715 = vmatprep.subr.mxu0 0.0
    %4716 = vmatpush2.msra.mxu0 0.0
    %4717 = vmatprep.subr.mxu0 0.0
    %4718 = vmatpush2.msra.mxu0 0.0
    %4719 = vmatprep.subr.mxu0 0.0
    %4720 = vmatpush2.msra.mxu0 0.0
    %4721 = vmatprep.subr.mxu0 0.0
    %4722 = vmatpush2.msra.mxu0 0.0
    %4723 = vmatprep.subr.mxu0 0.0
    %4724 = vmatpush2.msra.mxu0 0.0
    %4725 = vmatprep.subr.mxu0 0.0
    %4726 = vmatpush2.msra.mxu0 0.0
    %4727 = vmatprep.subr.mxu0 0.0
    %4728 = vmatpush2.msra.mxu0 0.0
    %4729 = vmatprep.subr.mxu0 0.0
    %4730 = vmatpush2.msra.mxu0 0.0
    %4731 = vmatprep.subr.mxu0 0.0
    %4732 = vmatpush2.msra.mxu0 0.0
    %4733 = vmatprep.subr.mxu0 0.0
    %4734 = vmatpush2.msra.mxu0 0.0
    %4735 = vmatprep.mubr.f32.mxu0 0.0
    %4736 = vmatmul.mubr.f32.gmra.mxu0 %v4528
    %v4737 = vpop.f32.mrf.mxu0
    %v4738 = vadd.f32 %v4668, %v4737
    %v4739 = vpop.f32.mrf.mxu0
    %4740 = vdwg.mxu0
    %v4741 = vadd.f32 %v4738, %v530
    %4742 = vmatprep.subr.mxu0 0.0
    %4743 = vmatpush1.msra.mxu0 0.0
    %4744 = vmatprep.subr.mxu0 0.0
    %4745 = vmatpush1.msra.mxu0 0.0
    %4746 = vmatprep.subr.mxu0 0.0
    %4747 = vmatpush1.msra.mxu0 0.0
    %4748 = vmatprep.subr.mxu0 0.0
    %4749 = vmatpush1.msra.mxu0 0.0
    %4750 = vmatprep.subr.mxu0 0.0
    %4751 = vmatpush1.msra.mxu0 0.0
    %4752 = vmatprep.subr.mxu0 0.0
    %4753 = vmatpush1.msra.mxu0 0.0
    %4754 = vmatprep.subr.mxu0 0.0
    %4755 = vmatpush1.msra.mxu0 0.0
    %4756 = vmatprep.subr.mxu0 0.0
    %4757 = vmatpush1.msra.mxu0 0.0
    %4758 = vmatprep.subr.mxu0 0.0
    %4759 = vmatpush1.msra.mxu0 0.0
    %4760 = vmatprep.subr.mxu0 0.0
    %4761 = vmatpush1.msra.mxu0 0.0
    %4762 = vmatprep.subr.mxu0 0.0
    %4763 = vmatpush1.msra.mxu0 %v205
    %4764 = vmatprep.subr.mxu0 0.0
    %4765 = vmatpush1.msra.mxu0 %v204
    %4766 = vmatprep.subr.mxu0 0.0
    %4767 = vmatpush1.msra.mxu0 %v203
    %4768 = vmatprep.subr.mxu0 0.0
    %4769 = vmatpush1.msra.mxu0 %v202
    %4770 = vmatprep.subr.mxu0 0.0
    %4771 = vmatpush1.msra.mxu0 %v201
    %4772 = vmatprep.subr.mxu0 0.0
    %4773 = vmatpush1.msra.mxu0 %v200
    %4774 = vmatprep.subr.mxu0 0.0
    %4775 = vmatpush2.msra.mxu0 0.0
    %4776 = vmatprep.subr.mxu0 0.0
    %4777 = vmatpush2.msra.mxu0 0.0
    %4778 = vmatprep.subr.mxu0 0.0
    %4779 = vmatpush2.msra.mxu0 0.0
    %4780 = vmatprep.subr.mxu0 0.0
    %4781 = vmatpush2.msra.mxu0 0.0
    %4782 = vmatprep.subr.mxu0 0.0
    %4783 = vmatpush2.msra.mxu0 0.0
    %4784 = vmatprep.subr.mxu0 0.0
    %4785 = vmatpush2.msra.mxu0 0.0
    %4786 = vmatprep.subr.mxu0 0.0
    %4787 = vmatpush2.msra.mxu0 0.0
    %4788 = vmatprep.subr.mxu0 0.0
    %4789 = vmatpush2.msra.mxu0 0.0
    %4790 = vmatprep.subr.mxu0 0.0
    %4791 = vmatpush2.msra.mxu0 0.0
    %4792 = vmatprep.subr.mxu0 0.0
    %4793 = vmatpush2.msra.mxu0 0.0
    %4794 = vmatprep.subr.mxu0 0.0
    %4795 = vmatpush2.msra.mxu0 0.0
    %4796 = vmatprep.subr.mxu0 0.0
    %4797 = vmatpush2.msra.mxu0 0.0
    %4798 = vmatprep.subr.mxu0 0.0
    %4799 = vmatpush2.msra.mxu0 0.0
    %4800 = vmatprep.subr.mxu0 0.0
    %4801 = vmatpush2.msra.mxu0 0.0
    %4802 = vmatprep.subr.mxu0 0.0
    %4803 = vmatpush2.msra.mxu0 0.0
    %4804 = vmatprep.subr.mxu0 0.0
    %4805 = vmatpush2.msra.mxu0 0.0
    %4806 = vmatprep.mubr.f32.mxu0 0.0
    %4807 = vmatmul.mubr.f32.gmra.mxu0 %v4449
    %v4808 = vpop.f32.mrf.mxu0
    %v4809 = vadd.f32 0.0, %v4808
    %v4810 = vpop.f32.mrf.mxu0
    %4811 = vdwg.mxu0
    %4812 = vmatprep.subr.mxu0 0.0
    %4813 = vmatpush1.msra.mxu0 0.0
    %4814 = vmatprep.subr.mxu0 0.0
    %4815 = vmatpush1.msra.mxu0 0.0
    %4816 = vmatprep.subr.mxu0 0.0
    %4817 = vmatpush1.msra.mxu0 0.0
    %4818 = vmatprep.subr.mxu0 0.0
    %4819 = vmatpush1.msra.mxu0 0.0
    %4820 = vmatprep.subr.mxu0 0.0
    %4821 = vmatpush1.msra.mxu0 0.0
    %4822 = vmatprep.subr.mxu0 0.0
    %4823 = vmatpush1.msra.mxu0 0.0
    %4824 = vmatprep.subr.mxu0 0.0
    %4825 = vmatpush1.msra.mxu0 0.0
    %4826 = vmatprep.subr.mxu0 0.0
    %4827 = vmatpush1.msra.mxu0 0.0
    %4828 = vmatprep.subr.mxu0 0.0
    %4829 = vmatpush1.msra.mxu0 0.0
    %4830 = vmatprep.subr.mxu0 0.0
    %4831 = vmatpush1.msra.mxu0 0.0
    %4832 = vmatprep.subr.mxu0 0.0
    %4833 = vmatpush1.msra.mxu0 %v178
    %4834 = vmatprep.subr.mxu0 0.0
    %4835 = vmatpush1.msra.mxu0 %v177
    %4836 = vmatprep.subr.mxu0 0.0
    %4837 = vmatpush1.msra.mxu0 %v176
    %4838 = vmatprep.subr.mxu0 0.0
    %4839 = vmatpush1.msra.mxu0 %v175
    %4840 = vmatprep.subr.mxu0 0.0
    %4841 = vmatpush1.msra.mxu0 %v174
    %4842 = vmatprep.subr.mxu0 0.0
    %4843 = vmatpush1.msra.mxu0 %v173
    %4844 = vmatprep.subr.mxu0 0.0
    %4845 = vmatpush2.msra.mxu0 0.0
    %4846 = vmatprep.subr.mxu0 0.0
    %4847 = vmatpush2.msra.mxu0 0.0
    %4848 = vmatprep.subr.mxu0 0.0
    %4849 = vmatpush2.msra.mxu0 0.0
    %4850 = vmatprep.subr.mxu0 0.0
    %4851 = vmatpush2.msra.mxu0 0.0
    %4852 = vmatprep.subr.mxu0 0.0
    %4853 = vmatpush2.msra.mxu0 0.0
    %4854 = vmatprep.subr.mxu0 0.0
    %4855 = vmatpush2.msra.mxu0 0.0
    %4856 = vmatprep.subr.mxu0 0.0
    %4857 = vmatpush2.msra.mxu0 0.0
    %4858 = vmatprep.subr.mxu0 0.0
    %4859 = vmatpush2.msra.mxu0 0.0
    %4860 = vmatprep.subr.mxu0 0.0
    %4861 = vmatpush2.msra.mxu0 0.0
    %4862 = vmatprep.subr.mxu0 0.0
    %4863 = vmatpush2.msra.mxu0 0.0
    %4864 = vmatprep.subr.mxu0 0.0
    %4865 = vmatpush2.msra.mxu0 0.0
    %4866 = vmatprep.subr.mxu0 0.0
    %4867 = vmatpush2.msra.mxu0 0.0
    %4868 = vmatprep.subr.mxu0 0.0
    %4869 = vmatpush2.msra.mxu0 0.0
    %4870 = vmatprep.subr.mxu0 0.0
    %4871 = vmatpush2.msra.mxu0 0.0
    %4872 = vmatprep.subr.mxu0 0.0
    %4873 = vmatpush2.msra.mxu0 0.0
    %4874 = vmatprep.subr.mxu0 0.0
    %4875 = vmatpush2.msra.mxu0 0.0
    %4876 = vmatprep.mubr.f32.mxu0 0.0
    %4877 = vmatmul.mubr.f32.gmra.mxu0 %v4528
    %v4878 = vpop.f32.mrf.mxu0
    %v4879 = vadd.f32 %v4809, %v4878
    %v4880 = vpop.f32.mrf.mxu0
    %4881 = vdwg.mxu0
    %v4882 = vadd.f32 %v4879, %v677
    %4883 = vmatprep.subr.mxu0 0.0
    %4884 = vmatpush1.msra.mxu0 0.0
    %4885 = vmatprep.subr.mxu0 0.0
    %4886 = vmatpush1.msra.mxu0 0.0
    %4887 = vmatprep.subr.mxu0 0.0
    %4888 = vmatpush1.msra.mxu0 0.0
    %4889 = vmatprep.subr.mxu0 0.0
    %4890 = vmatpush1.msra.mxu0 0.0
    %4891 = vmatprep.subr.mxu0 0.0
    %4892 = vmatpush1.msra.mxu0 0.0
    %4893 = vmatprep.subr.mxu0 0.0
    %4894 = vmatpush1.msra.mxu0 0.0
    %4895 = vmatprep.subr.mxu0 0.0
    %4896 = vmatpush1.msra.mxu0 0.0
    %4897 = vmatprep.subr.mxu0 0.0
    %4898 = vmatpush1.msra.mxu0 0.0
    %4899 = vmatprep.subr.mxu0 0.0
    %4900 = vmatpush1.msra.mxu0 0.0
    %4901 = vmatprep.subr.mxu0 0.0
    %4902 = vmatpush1.msra.mxu0 0.0
    %4903 = vmatprep.subr.mxu0 0.0
    %4904 = vmatpush1.msra.mxu0 %v212
    %4905 = vmatprep.subr.mxu0 0.0
    %4906 = vmatpush1.msra.mxu0 %v211
    %4907 = vmatprep.subr.mxu0 0.0
    %4908 = vmatpush1.msra.mxu0 %v210
    %4909 = vmatprep.subr.mxu0 0.0
    %4910 = vmatpush1.msra.mxu0 %v209
    %4911 = vmatprep.subr.mxu0 0.0
    %4912 = vmatpush1.msra.mxu0 %v208
    %4913 = vmatprep.subr.mxu0 0.0
    %4914 = vmatpush1.msra.mxu0 %v207
    %4915 = vmatprep.subr.mxu0 0.0
    %4916 = vmatpush2.msra.mxu0 0.0
    %4917 = vmatprep.subr.mxu0 0.0
    %4918 = vmatpush2.msra.mxu0 0.0
    %4919 = vmatprep.subr.mxu0 0.0
    %4920 = vmatpush2.msra.mxu0 0.0
    %4921 = vmatprep.subr.mxu0 0.0
    %4922 = vmatpush2.msra.mxu0 0.0
    %4923 = vmatprep.subr.mxu0 0.0
    %4924 = vmatpush2.msra.mxu0 0.0
    %4925 = vmatprep.subr.mxu0 0.0
    %4926 = vmatpush2.msra.mxu0 0.0
    %4927 = vmatprep.subr.mxu0 0.0
    %4928 = vmatpush2.msra.mxu0 0.0
    %4929 = vmatprep.subr.mxu0 0.0
    %4930 = vmatpush2.msra.mxu0 0.0
    %4931 = vmatprep.subr.mxu0 0.0
    %4932 = vmatpush2.msra.mxu0 0.0
    %4933 = vmatprep.subr.mxu0 0.0
    %4934 = vmatpush2.msra.mxu0 0.0
    %4935 = vmatprep.subr.mxu0 0.0
    %4936 = vmatpush2.msra.mxu0 0.0
    %4937 = vmatprep.subr.mxu0 0.0
    %4938 = vmatpush2.msra.mxu0 0.0
    %4939 = vmatprep.subr.mxu0 0.0
    %4940 = vmatpush2.msra.mxu0 0.0
    %4941 = vmatprep.subr.mxu0 0.0
    %4942 = vmatpush2.msra.mxu0 0.0
    %4943 = vmatprep.subr.mxu0 0.0
    %4944 = vmatpush2.msra.mxu0 0.0
    %4945 = vmatprep.subr.mxu0 0.0
    %4946 = vmatpush2.msra.mxu0 0.0
    %4947 = vmatprep.mubr.f32.mxu0 0.0
    %4948 = vmatmul.mubr.f32.gmra.mxu0 %v4449
    %v4949 = vpop.f32.mrf.mxu0
    %v4950 = vadd.f32 0.0, %v4949
    %v4951 = vpop.f32.mrf.mxu0
    %4952 = vdwg.mxu0
    %4953 = vmatprep.subr.mxu0 0.0
    %4954 = vmatpush1.msra.mxu0 0.0
    %4955 = vmatprep.subr.mxu0 0.0
    %4956 = vmatpush1.msra.mxu0 0.0
    %4957 = vmatprep.subr.mxu0 0.0
    %4958 = vmatpush1.msra.mxu0 0.0
    %4959 = vmatprep.subr.mxu0 0.0
    %4960 = vmatpush1.msra.mxu0 0.0
    %4961 = vmatprep.subr.mxu0 0.0
    %4962 = vmatpush1.msra.mxu0 0.0
    %4963 = vmatprep.subr.mxu0 0.0
    %4964 = vmatpush1.msra.mxu0 0.0
    %4965 = vmatprep.subr.mxu0 0.0
    %4966 = vmatpush1.msra.mxu0 0.0
    %4967 = vmatprep.subr.mxu0 0.0
    %4968 = vmatpush1.msra.mxu0 0.0
    %4969 = vmatprep.subr.mxu0 0.0
    %4970 = vmatpush1.msra.mxu0 0.0
    %4971 = vmatprep.subr.mxu0 0.0
    %4972 = vmatpush1.msra.mxu0 0.0
    %4973 = vmatprep.subr.mxu0 0.0
    %4974 = vmatpush1.msra.mxu0 %v185
    %4975 = vmatprep.subr.mxu0 0.0
    %4976 = vmatpush1.msra.mxu0 %v184
    %4977 = vmatprep.subr.mxu0 0.0
    %4978 = vmatpush1.msra.mxu0 %v183
    %4979 = vmatprep.subr.mxu0 0.0
    %4980 = vmatpush1.msra.mxu0 %v182
    %4981 = vmatprep.subr.mxu0 0.0
    %4982 = vmatpush1.msra.mxu0 %v181
    %4983 = vmatprep.subr.mxu0 0.0
    %4984 = vmatpush1.msra.mxu0 %v180
    %4985 = vmatprep.subr.mxu0 0.0
    %4986 = vmatpush2.msra.mxu0 0.0
    %4987 = vmatprep.subr.mxu0 0.0
    %4988 = vmatpush2.msra.mxu0 0.0
    %4989 = vmatprep.subr.mxu0 0.0
    %4990 = vmatpush2.msra.mxu0 0.0
    %4991 = vmatprep.subr.mxu0 0.0
    %4992 = vmatpush2.msra.mxu0 0.0
    %4993 = vmatprep.subr.mxu0 0.0
    %4994 = vmatpush2.msra.mxu0 0.0
    %4995 = vmatprep.subr.mxu0 0.0
    %4996 = vmatpush2.msra.mxu0 0.0
    %4997 = vmatprep.subr.mxu0 0.0
    %4998 = vmatpush2.msra.mxu0 0.0
    %4999 = vmatprep.subr.mxu0 0.0
    %5000 = vmatpush2.msra.mxu0 0.0
    %5001 = vmatprep.subr.mxu0 0.0
    %5002 = vmatpush2.msra.mxu0 0.0
    %5003 = vmatprep.subr.mxu0 0.0
    %5004 = vmatpush2.msra.mxu0 0.0
    %5005 = vmatprep.subr.mxu0 0.0
    %5006 = vmatpush2.msra.mxu0 0.0
    %5007 = vmatprep.subr.mxu0 0.0
    %5008 = vmatpush2.msra.mxu0 0.0
    %5009 = vmatprep.subr.mxu0 0.0
    %5010 = vmatpush2.msra.mxu0 0.0
    %5011 = vmatprep.subr.mxu0 0.0
    %5012 = vmatpush2.msra.mxu0 0.0
    %5013 = vmatprep.subr.mxu0 0.0
    %5014 = vmatpush2.msra.mxu0 0.0
    %5015 = vmatprep.subr.mxu0 0.0
    %5016 = vmatpush2.msra.mxu0 0.0
    %5017 = vmatprep.mubr.f32.mxu0 0.0
    %5018 = vmatmul.mubr.f32.gmra.mxu0 %v4528
    %v5019 = vpop.f32.mrf.mxu0
    %v5020 = vadd.f32 %v4950, %v5019
    %v5021 = vpop.f32.mrf.mxu0
    %5022 = vdwg.mxu0
    %v5023 = vadd.f32 %v5020, %v824
    %v5024 = vxor.u32 %v4741, 2147483648
    %v5025 = vmul.f32 %v5024, 1.442695
    %v5026 = vpow.pop %v5025
    %v5027 = vadd.f32 %v5026, 1.0
    %v5028 = vrcp.pop %v5027
    %v5029 = vmul.f32 1.0, %v5028
    %v5030 = vmul.f32 %v5029, %v4439
    %v5031 = vxor.u32 %v4600, 2147483648
    %v5032 = vmul.f32 %v5031, 1.442695
    %v5033 = vpow.pop %v5032
    %v5034 = vadd.f32 %v5033, 1.0
    %v5035 = vrcp.pop %v5034
    %v5036 = vmul.f32 1.0, %v5035
    %v5037 = vtanh.pop %v4882
    %v5038 = vmul.f32 %v5036, %v5037
    %v5039 = vadd.f32 %v5030, %v5038
    %v5040 = vxor.u32 %v5023, 2147483648
    %v5041 = vmul.f32 %v5040, 1.442695
    %v5042 = vpow.pop %v5041
    %v5043 = vadd.f32 %v5042, 1.0
    %v5044 = vrcp.pop %v5043
    %v5045 = vmul.f32 1.0, %v5044
    %v5046 = vtanh.pop %v5039
    %v5047 = vmul.f32 %v5045, %v5046
    %v5049 = vunpack.c.l.s4 1966171168
    %v5050 = vunpack.c.0.s8 %v5049
    %v5051 = vlaneseq
    %v5052 = vshrl.u32 %v5051, 7
    %v5053 = vsub.s32 %v5050, %v5052
    %v5054 = vrot.slane %v850, %v5053
    %v5055 = vcombine.high %v5054, %v5054
    %v5057 = vunpack.c.l.s4 1966171168
    %v5058 = vunpack.c.0.s8 %v5057
    %v5059 = vlaneseq
    %v5060 = vshrl.u32 %v5059, 7
    %v5061 = vsub.s32 %v5058, %v5060
    %v5062 = vrot.slane %v5054, %v5061
    %v5064 = vunpack.c.l.s4 1966171168
    %v5065 = vunpack.c.0.s8 %v5064
    %v5066 = vlaneseq
    %v5067 = vshrl.u32 %v5066, 7
    %v5068 = vsub.s32 %v5065, %v5067
    %v5069 = vrot.slane %v5055, %v5068
    %v5070 = vcombine.high %v5062, %v5062
    %v5071 = vcombine.high %v5069, %v5069
    %v5077 = vunpack.c.l.s4 1966171168
    %v5078 = vunpack.c.0.s8 %v5077
    %v5079 = vlaneseq
    %v5080 = vshrl.u32 %v5079, 7
    %v5081 = vsub.s32 %v5078, %v5080
    %v5082 = vrot.slane %v1449, %v5081
    %v5083 = vcombine.high %v5082, %v5082
    %v5085 = vunpack.c.l.s4 1966171168
    %v5086 = vunpack.c.0.s8 %v5085
    %v5087 = vlaneseq
    %v5088 = vshrl.u32 %v5087, 7
    %v5089 = vsub.s32 %v5086, %v5088
    %v5090 = vrot.slane %v5082, %v5089
    %v5092 = vunpack.c.l.s4 1966171168
    %v5093 = vunpack.c.0.s8 %v5092
    %v5094 = vlaneseq
    %v5095 = vshrl.u32 %v5094, 7
    %v5096 = vsub.s32 %v5093, %v5095
    %v5097 = vrot.slane %v5083, %v5096
    %v5098 = vcombine.high %v5090, %v5090
    %v5099 = vcombine.high %v5097, %v5097
    %v5101 = vunpack.c.l.s4 1966171168
    %v5102 = vunpack.c.0.s8 %v5101
    %v5103 = vlaneseq
    %v5104 = vshrl.u32 %v5103, 7
    %v5105 = vsub.s32 %v5102, %v5104
    %v5106 = vrot.slane %v2048, %v5105
    %v5107 = vcombine.high %v5106, %v5106
    %v5109 = vunpack.c.l.s4 1966171168
    %v5110 = vunpack.c.0.s8 %v5109
    %v5111 = vlaneseq
    %v5112 = vshrl.u32 %v5111, 7
    %v5113 = vsub.s32 %v5110, %v5112
    %v5114 = vrot.slane %v5106, %v5113
    %v5116 = vunpack.c.l.s4 1966171168
    %v5117 = vunpack.c.0.s8 %v5116
    %v5118 = vlaneseq
    %v5119 = vshrl.u32 %v5118, 7
    %v5120 = vsub.s32 %v5117, %v5119
    %v5121 = vrot.slane %v5107, %v5120
    %v5122 = vcombine.high %v5114, %v5114
    %v5123 = vcombine.high %v5121, %v5121
    %v5125 = vunpack.c.l.s4 1966171168
    %v5126 = vunpack.c.0.s8 %v5125
    %v5127 = vlaneseq
    %v5128 = vshrl.u32 %v5127, 7
    %v5129 = vsub.s32 %v5126, %v5128
    %v5130 = vrot.slane %v2647, %v5129
    %v5131 = vcombine.high %v5130, %v5130
    %v5133 = vunpack.c.l.s4 1966171168
    %v5134 = vunpack.c.0.s8 %v5133
    %v5135 = vlaneseq
    %v5136 = vshrl.u32 %v5135, 7
    %v5137 = vsub.s32 %v5134, %v5136
    %v5138 = vrot.slane %v5130, %v5137
    %v5140 = vunpack.c.l.s4 1966171168
    %v5141 = vunpack.c.0.s8 %v5140
    %v5142 = vlaneseq
    %v5143 = vshrl.u32 %v5142, 7
    %v5144 = vsub.s32 %v5141, %v5143
    %v5145 = vrot.slane %v5131, %v5144
    %v5146 = vcombine.high %v5138, %v5138
    %v5147 = vcombine.high %v5145, %v5145
    %v5149 = vunpack.c.l.s4 1966171168
    %v5150 = vunpack.c.0.s8 %v5149
    %v5151 = vlaneseq
    %v5152 = vshrl.u32 %v5151, 7
    %v5153 = vsub.s32 %v5150, %v5152
    %v5154 = vrot.slane %v3247, %v5153
    %v5155 = vcombine.high %v5154, %v5154
    %v5157 = vunpack.c.l.s4 1966171168
    %v5158 = vunpack.c.0.s8 %v5157
    %v5159 = vlaneseq
    %v5160 = vshrl.u32 %v5159, 7
    %v5161 = vsub.s32 %v5158, %v5160
    %v5162 = vrot.slane %v5154, %v5161
    %v5164 = vunpack.c.l.s4 1966171168
    %v5165 = vunpack.c.0.s8 %v5164
    %v5166 = vlaneseq
    %v5167 = vshrl.u32 %v5166, 7
    %v5168 = vsub.s32 %v5165, %v5167
    %v5169 = vrot.slane %v5155, %v5168
    %v5170 = vcombine.high %v5162, %v5162
    %v5171 = vcombine.high %v5169, %v5169
    %v5173 = vunpack.c.l.s4 1966171168
    %v5174 = vunpack.c.0.s8 %v5173
    %v5175 = vlaneseq
    %v5176 = vshrl.u32 %v5175, 7
    %v5177 = vsub.s32 %v5174, %v5176
    %v5178 = vrot.slane %v3847, %v5177
    %v5179 = vcombine.high %v5178, %v5178
    %v5181 = vunpack.c.l.s4 1966171168
    %v5182 = vunpack.c.0.s8 %v5181
    %v5183 = vlaneseq
    %v5184 = vshrl.u32 %v5183, 7
    %v5185 = vsub.s32 %v5182, %v5184
    %v5186 = vrot.slane %v5178, %v5185
    %v5188 = vunpack.c.l.s4 1966171168
    %v5189 = vunpack.c.0.s8 %v5188
    %v5190 = vlaneseq
    %v5191 = vshrl.u32 %v5190, 7
    %v5192 = vsub.s32 %v5189, %v5191
    %v5193 = vrot.slane %v5179, %v5192
    %v5194 = vcombine.high %v5186, %v5186
    %v5195 = vcombine.high %v5193, %v5193
    %v5197 = vunpack.c.l.s4 1966171168
    %v5198 = vunpack.c.0.s8 %v5197
    %v5199 = vlaneseq
    %v5200 = vshrl.u32 %v5199, 7
    %v5201 = vsub.s32 %v5198, %v5200
    %v5202 = vrot.slane %v4447, %v5201
    %v5203 = vcombine.high %v5202, %v5202
    %v5205 = vunpack.c.l.s4 1966171168
    %v5206 = vunpack.c.0.s8 %v5205
    %v5207 = vlaneseq
    %v5208 = vshrl.u32 %v5207, 7
    %v5209 = vsub.s32 %v5206, %v5208
    %v5210 = vrot.slane %v5202, %v5209
    %v5212 = vunpack.c.l.s4 1966171168
    %v5213 = vunpack.c.0.s8 %v5212
    %v5214 = vlaneseq
    %v5215 = vshrl.u32 %v5214, 7
    %v5216 = vsub.s32 %v5213, %v5215
    %v5217 = vrot.slane %v5203, %v5216
    %v5218 = vcombine.high %v5210, %v5210
    %v5219 = vcombine.high %v5217, %v5217
    %v5222 = vunpack.c.l.s4 1966171168
    %v5223 = vunpack.c.0.s8 %v5222
    %v5224 = vlaneseq
    %v5225 = vshrl.u32 %v5224, 7
    %v5226 = vsub.s32 %v5223, %v5225
    %v5227 = vrot.slane %v5047, %v5226
    %v5228 = vcombine.high %v5227, %v5227
    %v5230 = vunpack.c.l.s4 1966171168
    %v5231 = vunpack.c.0.s8 %v5230
    %v5232 = vlaneseq
    %v5233 = vshrl.u32 %v5232, 7
    %v5234 = vsub.s32 %v5231, %v5233
    %v5235 = vrot.slane %v5227, %v5234
    %v5237 = vunpack.c.l.s4 1966171168
    %v5238 = vunpack.c.0.s8 %v5237
    %v5239 = vlaneseq
    %v5240 = vshrl.u32 %v5239, 7
    %v5241 = vsub.s32 %v5238, %v5240
    %v5242 = vrot.slane %v5228, %v5241
    %v5243 = vcombine.high %v5235, %v5235
    %v5244 = vcombine.high %v5242, %v5242
    %v5245 = vlaneseq
    %v5246 = vshrl.u32 %v5245, 7
    %v5247 = vsub.s32 0, %v5246
    %v5248 = vrot.slane %v5090, %v5247
    %v5249 = vlaneseq
    %v5250 = vshrl.u32 %v5249, 7
    %v5251 = vsub.s32 0, %v5250
    %v5252 = vrot.slane %v5097, %v5251
    %v5253 = vlaneseq
    %v5254 = vshrl.u32 %v5253, 7
    %v5255 = vsub.s32 0, %v5254
    %v5256 = vrot.slane %v5098, %v5255
    %v5257 = vlaneseq
    %v5258 = vshrl.u32 %v5257, 7
    %v5259 = vsub.s32 0, %v5258
    %v5260 = vrot.slane %v5099, %v5259
    %v5265 = vlaneseq
    %v5266 = vshrl.u32 %v5265, 7
    %v5267 = vsub.s32 0, %v5266
    %v5268 = vrot.slane %v5114, %v5267
    %v5269 = vlaneseq
    %v5270 = vshrl.u32 %v5269, 7
    %v5271 = vsub.s32 0, %v5270
    %v5272 = vrot.slane %v5121, %v5271
    %v5273 = vlaneseq
    %v5274 = vshrl.u32 %v5273, 7
    %v5275 = vsub.s32 0, %v5274
    %v5276 = vrot.slane %v5122, %v5275
    %v5277 = vlaneseq
    %v5278 = vshrl.u32 %v5277, 7
    %v5279 = vsub.s32 0, %v5278
    %v5280 = vrot.slane %v5123, %v5279
    %v5285 = vlaneseq
    %v5286 = vshrl.u32 %v5285, 7
    %v5287 = vsub.s32 0, %v5286
    %v5288 = vrot.slane %v5138, %v5287
    %v5289 = vlaneseq
    %v5290 = vshrl.u32 %v5289, 7
    %v5291 = vsub.s32 0, %v5290
    %v5292 = vrot.slane %v5145, %v5291
    %v5293 = vlaneseq
    %v5294 = vshrl.u32 %v5293, 7
    %v5295 = vsub.s32 0, %v5294
    %v5296 = vrot.slane %v5146, %v5295
    %v5297 = vlaneseq
    %v5298 = vshrl.u32 %v5297, 7
    %v5299 = vsub.s32 0, %v5298
    %v5300 = vrot.slane %v5147, %v5299
    %v5305 = vlaneseq
    %v5306 = vshrl.u32 %v5305, 7
    %v5307 = vsub.s32 0, %v5306
    %v5308 = vrot.slane %v5162, %v5307
    %v5309 = vlaneseq
    %v5310 = vshrl.u32 %v5309, 7
    %v5311 = vsub.s32 0, %v5310
    %v5312 = vrot.slane %v5169, %v5311
    %v5313 = vlaneseq
    %v5314 = vshrl.u32 %v5313, 7
    %v5315 = vsub.s32 0, %v5314
    %v5316 = vrot.slane %v5170, %v5315
    %v5317 = vlaneseq
    %v5318 = vshrl.u32 %v5317, 7
    %v5319 = vsub.s32 0, %v5318
    %v5320 = vrot.slane %v5171, %v5319
    %v5325 = vlaneseq
    %v5326 = vshrl.u32 %v5325, 7
    %v5327 = vsub.s32 0, %v5326
    %v5328 = vrot.slane %v5186, %v5327
    %v5329 = vlaneseq
    %v5330 = vshrl.u32 %v5329, 7
    %v5331 = vsub.s32 0, %v5330
    %v5332 = vrot.slane %v5193, %v5331
    %v5333 = vlaneseq
    %v5334 = vshrl.u32 %v5333, 7
    %v5335 = vsub.s32 0, %v5334
    %v5336 = vrot.slane %v5194, %v5335
    %v5337 = vlaneseq
    %v5338 = vshrl.u32 %v5337, 7
    %v5339 = vsub.s32 0, %v5338
    %v5340 = vrot.slane %v5195, %v5339
    %v5345 = vlaneseq
    %v5346 = vshrl.u32 %v5345, 7
    %v5347 = vsub.s32 0, %v5346
    %v5348 = vrot.slane %v5210, %v5347
    %v5349 = vlaneseq
    %v5350 = vshrl.u32 %v5349, 7
    %v5351 = vsub.s32 0, %v5350
    %v5352 = vrot.slane %v5217, %v5351
    %v5353 = vlaneseq
    %v5354 = vshrl.u32 %v5353, 7
    %v5355 = vsub.s32 0, %v5354
    %v5356 = vrot.slane %v5218, %v5355
    %v5357 = vlaneseq
    %v5358 = vshrl.u32 %v5357, 7
    %v5359 = vsub.s32 0, %v5358
    %v5360 = vrot.slane %v5219, %v5359
    %v5365 = vlaneseq
    %v5366 = vshrl.u32 %v5365, 7
    %v5367 = vsub.s32 0, %v5366
    %v5368 = vrot.slane %v5235, %v5367
    %v5369 = vlaneseq
    %v5370 = vshrl.u32 %v5369, 7
    %v5371 = vsub.s32 0, %v5370
    %v5372 = vrot.slane %v5242, %v5371
    %v5373 = vlaneseq
    %v5374 = vshrl.u32 %v5373, 7
    %v5375 = vsub.s32 0, %v5374
    %v5376 = vrot.slane %v5243, %v5375
    %v5377 = vlaneseq
    %v5378 = vshrl.u32 %v5377, 7
    %v5379 = vsub.s32 0, %v5378
    %v5380 = vrot.slane %v5244, %v5379
    %vm5385 = vcmask 1040384
    %v5386 = vsel %vm5385, %v5062, %v5248
    %v5387 = vsel %vm5385, %v5069, %v5252
    %v5388 = vsel %vm5385, %v5070, %v5256
    %v5389 = vsel %vm5385, %v5071, %v5260
    %vm5390 = vcmask 1041408
    %v5391 = vsel %vm5390, %v5386, %v5268
    %v5392 = vsel %vm5390, %v5387, %v5272
    %v5393 = vsel %vm5390, %v5388, %v5276
    %v5394 = vsel %vm5390, %v5389, %v5280
    %vm5395 = vcmask 1042432
    %v5396 = vsel %vm5395, %v5391, %v5288
    %v5397 = vsel %vm5395, %v5392, %v5292
    %v5398 = vsel %vm5395, %v5393, %v5296
    %v5399 = vsel %vm5395, %v5394, %v5300
    %vm5400 = vcmask 1043456
    %v5401 = vsel %vm5400, %v5396, %v5308
    %v5402 = vsel %vm5400, %v5397, %v5312
    %v5403 = vsel %vm5400, %v5398, %v5316
    %v5404 = vsel %vm5400, %v5399, %v5320
    %vm5405 = vcmask 1044480
    %v5406 = vsel %vm5405, %v5401, %v5328
    %v5407 = vsel %vm5405, %v5402, %v5332
    %v5408 = vsel %vm5405, %v5403, %v5336
    %v5409 = vsel %vm5405, %v5404, %v5340
    %vm5410 = vcmask 1045504
    %v5411 = vsel %vm5410, %v5406, %v5348
    %v5412 = vsel %vm5410, %v5407, %v5352
    %v5413 = vsel %vm5410, %v5408, %v5356
    %v5414 = vsel %vm5410, %v5409, %v5360
    %vm5415 = vcmask 1046528
    %v5416 = vsel %vm5415, %v5411, %v5368
    %v5417 = vsel %vm5415, %v5412, %v5372
    %v5418 = vsel %vm5415, %v5413, %v5376
    %v5419 = vsel %vm5415, %v5414, %v5380
    %v5420 = vld [vmem:[%s0] sm:$0xf]
    %v5421 = vld [vmem:[#allocation5] sm:$0xf]
    %v5422 = vld [vmem:[%s11] sm:$0x1]
    %v5424 = vlaneseq
    %v5425 = vshrl.u32 %v5424, 7
    %v5426 = vsub.s32 0, %v5425
    %v5427 = vrot.slane %v5422, %v5426
    %v5429 = vadd.f32 %v5427, %v5420
    %v5430 = vld [vmem:[%s7] sm:$0xff]
    %v5431 = vld [vmem:[%s7 + $0x8] sm:$0xff]
    %v5432 = vld [vmem:[%s7 + $0x10] sm:$0xff]
    %v5433 = vld [vmem:[%s7 + $0x18] sm:$0xff]
    %v5434 = vld [vmem:[%s7 + $0x20] sm:$0xff]
    %v5435 = vld [vmem:[%s7 + $0x28] sm:$0xff]
    %v5437 = vsel %vm220, %v5420, 0
    %5439 = vmatprep.subr.mxu0 0.0
    %5440 = vmatpush1.msra.mxu0 0.0
    %5441 = vmatprep.subr.mxu0 0.0
    %5442 = vmatpush1.msra.mxu0 0.0
    %5443 = vmatprep.subr.mxu0 0.0
    %5444 = vmatpush1.msra.mxu0 0.0
    %5445 = vmatprep.subr.mxu0 0.0
    %5446 = vmatpush1.msra.mxu0 0.0
    %5447 = vmatprep.subr.mxu0 0.0
    %5448 = vmatpush1.msra.mxu0 0.0
    %5449 = vmatprep.subr.mxu0 0.0
    %5450 = vmatpush1.msra.mxu0 0.0
    %5451 = vmatprep.subr.mxu0 0.0
    %5452 = vmatpush1.msra.mxu0 0.0
    %5453 = vmatprep.subr.mxu0 0.0
    %5454 = vmatpush1.msra.mxu0 0.0
    %5455 = vmatprep.subr.mxu0 0.0
    %5456 = vmatpush1.msra.mxu0 0.0
    %5457 = vmatprep.subr.mxu0 0.0
    %5458 = vmatpush1.msra.mxu0 0.0
    %5459 = vmatprep.subr.mxu0 0.0
    %5460 = vmatpush1.msra.mxu0 %v5435
    %5461 = vmatprep.subr.mxu0 0.0
    %5462 = vmatpush1.msra.mxu0 %v5434
    %5463 = vmatprep.subr.mxu0 0.0
    %5464 = vmatpush1.msra.mxu0 %v5433
    %5465 = vmatprep.subr.mxu0 0.0
    %5466 = vmatpush1.msra.mxu0 %v5432
    %5467 = vmatprep.subr.mxu0 0.0
    %5468 = vmatpush1.msra.mxu0 %v5431
    %5469 = vmatprep.subr.mxu0 0.0
    %5470 = vmatpush1.msra.mxu0 %v5430
    %5471 = vmatprep.subr.mxu0 0.0
    %5472 = vmatpush2.msra.mxu0 0.0
    %5473 = vmatprep.subr.mxu0 0.0
    %5474 = vmatpush2.msra.mxu0 0.0
    %5475 = vmatprep.subr.mxu0 0.0
    %5476 = vmatpush2.msra.mxu0 0.0
    %5477 = vmatprep.subr.mxu0 0.0
    %5478 = vmatpush2.msra.mxu0 0.0
    %5479 = vmatprep.subr.mxu0 0.0
    %5480 = vmatpush2.msra.mxu0 0.0
    %5481 = vmatprep.subr.mxu0 0.0
    %5482 = vmatpush2.msra.mxu0 0.0
    %5483 = vmatprep.subr.mxu0 0.0
    %5484 = vmatpush2.msra.mxu0 0.0
    %5485 = vmatprep.subr.mxu0 0.0
    %5486 = vmatpush2.msra.mxu0 0.0
    %5487 = vmatprep.subr.mxu0 0.0
    %5488 = vmatpush2.msra.mxu0 0.0
    %5489 = vmatprep.subr.mxu0 0.0
    %5490 = vmatpush2.msra.mxu0 0.0
    %5491 = vmatprep.subr.mxu0 0.0
    %5492 = vmatpush2.msra.mxu0 0.0
    %5493 = vmatprep.subr.mxu0 0.0
    %5494 = vmatpush2.msra.mxu0 0.0
    %5495 = vmatprep.subr.mxu0 0.0
    %5496 = vmatpush2.msra.mxu0 0.0
    %5497 = vmatprep.subr.mxu0 0.0
    %5498 = vmatpush2.msra.mxu0 0.0
    %5499 = vmatprep.subr.mxu0 0.0
    %5500 = vmatpush2.msra.mxu0 0.0
    %5501 = vmatprep.subr.mxu0 0.0
    %5502 = vmatpush2.msra.mxu0 0.0
    %5503 = vmatprep.mubr.f32.mxu0 0.0
    %5504 = vmatmul.mubr.f32.gmra.mxu0 %v5437
    %v5505 = vpop.f32.mrf.mxu0
    %v5506 = vadd.f32 0.0, %v5505
    %v5507 = vpop.f32.mrf.mxu0
    %5508 = vdwg.mxu0
    %v5509 = vld [vmem:[%s8] sm:$0xff]
    %v5510 = vld [vmem:[%s8 + $0x8] sm:$0xff]
    %v5511 = vld [vmem:[%s8 + $0x10] sm:$0xff]
    %v5512 = vld [vmem:[%s8 + $0x18] sm:$0xff]
    %v5513 = vld [vmem:[%s8 + $0x20] sm:$0xff]
    %v5514 = vld [vmem:[%s8 + $0x28] sm:$0xff]
    %v5516 = vsel %vm220, %v5416, 0
    %v5519 = vsel %vm220, %v5417, 0
    %v5522 = vsel %vm220, %v5418, 0
    %v5525 = vsel %vm220, %v5419, 0
    %5527 = vmatprep.subr.mxu0 0.0
    %5528 = vmatpush1.msra.mxu0 0.0
    %5529 = vmatprep.subr.mxu0 0.0
    %5530 = vmatpush1.msra.mxu0 0.0
    %5531 = vmatprep.subr.mxu0 0.0
    %5532 = vmatpush1.msra.mxu0 0.0
    %5533 = vmatprep.subr.mxu0 0.0
    %5534 = vmatpush1.msra.mxu0 0.0
    %5535 = vmatprep.subr.mxu0 0.0
    %5536 = vmatpush1.msra.mxu0 0.0
    %5537 = vmatprep.subr.mxu0 0.0
    %5538 = vmatpush1.msra.mxu0 0.0
    %5539 = vmatprep.subr.mxu0 0.0
    %5540 = vmatpush1.msra.mxu0 0.0
    %5541 = vmatprep.subr.mxu0 0.0
    %5542 = vmatpush1.msra.mxu0 0.0
    %5543 = vmatprep.subr.mxu0 0.0
    %5544 = vmatpush1.msra.mxu0 0.0
    %5545 = vmatprep.subr.mxu0 0.0
    %5546 = vmatpush1.msra.mxu0 0.0
    %5547 = vmatprep.subr.mxu0 0.0
    %5548 = vmatpush1.msra.mxu0 %v5514
    %5549 = vmatprep.subr.mxu0 0.0
    %5550 = vmatpush1.msra.mxu0 %v5513
    %5551 = vmatprep.subr.mxu0 0.0
    %5552 = vmatpush1.msra.mxu0 %v5512
    %5553 = vmatprep.subr.mxu0 0.0
    %5554 = vmatpush1.msra.mxu0 %v5511
    %5555 = vmatprep.subr.mxu0 0.0
    %5556 = vmatpush1.msra.mxu0 %v5510
    %5557 = vmatprep.subr.mxu0 0.0
    %5558 = vmatpush1.msra.mxu0 %v5509
    %5559 = vmatprep.subr.mxu0 0.0
    %5560 = vmatpush2.msra.mxu0 0.0
    %5561 = vmatprep.subr.mxu0 0.0
    %5562 = vmatpush2.msra.mxu0 0.0
    %5563 = vmatprep.subr.mxu0 0.0
    %5564 = vmatpush2.msra.mxu0 0.0
    %5565 = vmatprep.subr.mxu0 0.0
    %5566 = vmatpush2.msra.mxu0 0.0
    %5567 = vmatprep.subr.mxu0 0.0
    %5568 = vmatpush2.msra.mxu0 0.0
    %5569 = vmatprep.subr.mxu0 0.0
    %5570 = vmatpush2.msra.mxu0 0.0
    %5571 = vmatprep.subr.mxu0 0.0
    %5572 = vmatpush2.msra.mxu0 0.0
    %5573 = vmatprep.subr.mxu0 0.0
    %5574 = vmatpush2.msra.mxu0 0.0
    %5575 = vmatprep.subr.mxu0 0.0
    %5576 = vmatpush2.msra.mxu0 0.0
    %5577 = vmatprep.subr.mxu0 0.0
    %5578 = vmatpush2.msra.mxu0 0.0
    %5579 = vmatprep.subr.mxu0 0.0
    %5580 = vmatpush2.msra.mxu0 0.0
    %5581 = vmatprep.subr.mxu0 0.0
    %5582 = vmatpush2.msra.mxu0 0.0
    %5583 = vmatprep.subr.mxu0 0.0
    %5584 = vmatpush2.msra.mxu0 0.0
    %5585 = vmatprep.subr.mxu0 0.0
    %5586 = vmatpush2.msra.mxu0 0.0
    %5587 = vmatprep.subr.mxu0 0.0
    %5588 = vmatpush2.msra.mxu0 0.0
    %5589 = vmatprep.subr.mxu0 0.0
    %5590 = vmatpush2.msra.mxu0 0.0
    %5591 = vmatprep.mubr.f32.mxu0 0.0
    %5592 = vmatmul.mubr.f32.gmra.mxu0 %v5516
    %v5593 = vpop.f32.mrf.mxu0
    %v5594 = vadd.f32 0.0, %v5593
    %v5595 = vpop.f32.mrf.mxu0
    %5596 = vmatprep.mubr.f32.mxu0 0.0
    %5597 = vmatmul.mubr.f32.gmra.mxu0 %v5519
    %v5598 = vpop.f32.mrf.mxu0
    %v5599 = vadd.f32 0.0, %v5598
    %v5600 = vpop.f32.mrf.mxu0
    %5601 = vmatprep.mubr.f32.mxu0 0.0
    %5602 = vmatmul.mubr.f32.gmra.mxu0 %v5522
    %v5603 = vpop.f32.mrf.mxu0
    %v5604 = vadd.f32 0.0, %v5603
    %v5605 = vpop.f32.mrf.mxu0
    %5606 = vmatprep.mubr.f32.mxu0 0.0
    %5607 = vmatmul.mubr.f32.gmra.mxu0 %v5525
    %v5608 = vpop.f32.mrf.mxu0
    %v5609 = vadd.f32 0.0, %v5608
    %v5610 = vpop.f32.mrf.mxu0
    %5611 = vdwg.mxu0
    %v5612 = vld [vmem:[%s9] sm:$0xff]
    %v5613 = vld [vmem:[%s9 + $0x8] sm:$0xff]
    %v5614 = vld [vmem:[%s9 + $0x10] sm:$0xff]
    %v5615 = vld [vmem:[%s9 + $0x18] sm:$0xff]
    %v5616 = vld [vmem:[%s9 + $0x20] sm:$0xff]
    %v5617 = vld [vmem:[%s9 + $0x28] sm:$0xff]
    %v5618 = vsel %vm220, %v155, 0
    %v5620 = vsel %vm220, %v156, 0
    %v5622 = vsel %vm220, %v157, 0
    %v5624 = vsel %vm220, %v158, 0
    %5626 = vmatprep.subr.mxu0 0.0
    %5627 = vmatpush1.msra.mxu0 0.0
    %5628 = vmatprep.subr.mxu0 0.0
    %5629 = vmatpush1.msra.mxu0 0.0
    %5630 = vmatprep.subr.mxu0 0.0
    %5631 = vmatpush1.msra.mxu0 0.0
    %5632 = vmatprep.subr.mxu0 0.0
    %5633 = vmatpush1.msra.mxu0 0.0
    %5634 = vmatprep.subr.mxu0 0.0
    %5635 = vmatpush1.msra.mxu0 0.0
    %5636 = vmatprep.subr.mxu0 0.0
    %5637 = vmatpush1.msra.mxu0 0.0
    %5638 = vmatprep.subr.mxu0 0.0
    %5639 = vmatpush1.msra.mxu0 0.0
    %5640 = vmatprep.subr.mxu0 0.0
    %5641 = vmatpush1.msra.mxu0 0.0
    %5642 = vmatprep.subr.mxu0 0.0
    %5643 = vmatpush1.msra.mxu0 0.0
    %5644 = vmatprep.subr.mxu0 0.0
    %5645 = vmatpush1.msra.mxu0 0.0
    %5646 = vmatprep.subr.mxu0 0.0
    %5647 = vmatpush1.msra.mxu0 %v5617
    %5648 = vmatprep.subr.mxu0 0.0
    %5649 = vmatpush1.msra.mxu0 %v5616
    %5650 = vmatprep.subr.mxu0 0.0
    %5651 = vmatpush1.msra.mxu0 %v5615
    %5652 = vmatprep.subr.mxu0 0.0
    %5653 = vmatpush1.msra.mxu0 %v5614
    %5654 = vmatprep.subr.mxu0 0.0
    %5655 = vmatpush1.msra.mxu0 %v5613
    %5656 = vmatprep.subr.mxu0 0.0
    %5657 = vmatpush1.msra.mxu0 %v5612
    %5658 = vmatprep.subr.mxu0 0.0
    %5659 = vmatpush2.msra.mxu0 0.0
    %5660 = vmatprep.subr.mxu0 0.0
    %5661 = vmatpush2.msra.mxu0 0.0
    %5662 = vmatprep.subr.mxu0 0.0
    %5663 = vmatpush2.msra.mxu0 0.0
    %5664 = vmatprep.subr.mxu0 0.0
    %5665 = vmatpush2.msra.mxu0 0.0
    %5666 = vmatprep.subr.mxu0 0.0
    %5667 = vmatpush2.msra.mxu0 0.0
    %5668 = vmatprep.subr.mxu0 0.0
    %5669 = vmatpush2.msra.mxu0 0.0
    %5670 = vmatprep.subr.mxu0 0.0
    %5671 = vmatpush2.msra.mxu0 0.0
    %5672 = vmatprep.subr.mxu0 0.0
    %5673 = vmatpush2.msra.mxu0 0.0
    %5674 = vmatprep.subr.mxu0 0.0
    %5675 = vmatpush2.msra.mxu0 0.0
    %5676 = vmatprep.subr.mxu0 0.0
    %5677 = vmatpush2.msra.mxu0 0.0
    %5678 = vmatprep.subr.mxu0 0.0
    %5679 = vmatpush2.msra.mxu0 0.0
    %5680 = vmatprep.subr.mxu0 0.0
    %5681 = vmatpush2.msra.mxu0 0.0
    %5682 = vmatprep.subr.mxu0 0.0
    %5683 = vmatpush2.msra.mxu0 0.0
    %5684 = vmatprep.subr.mxu0 0.0
    %5685 = vmatpush2.msra.mxu0 0.0
    %5686 = vmatprep.subr.mxu0 0.0
    %5687 = vmatpush2.msra.mxu0 0.0
    %5688 = vmatprep.subr.mxu0 0.0
    %5689 = vmatpush2.msra.mxu0 0.0
    %5690 = vmatprep.mubr.f32.mxu0 0.0
    %5691 = vmatmul.mubr.f32.gmra.mxu0 %v5618
    %v5692 = vpop.f32.mrf.mxu0
    %v5693 = vadd.f32 0.0, %v5692
    %v5694 = vpop.f32.mrf.mxu0
    %5695 = vmatprep.mubr.f32.mxu0 0.0
    %5696 = vmatmul.mubr.f32.gmra.mxu0 %v5620
    %v5697 = vpop.f32.mrf.mxu0
    %v5698 = vadd.f32 0.0, %v5697
    %v5699 = vpop.f32.mrf.mxu0
    %5700 = vmatprep.mubr.f32.mxu0 0.0
    %5701 = vmatmul.mubr.f32.gmra.mxu0 %v5622
    %v5702 = vpop.f32.mrf.mxu0
    %v5703 = vadd.f32 0.0, %v5702
    %v5704 = vpop.f32.mrf.mxu0
    %5705 = vmatprep.mubr.f32.mxu0 0.0
    %5706 = vmatmul.mubr.f32.gmra.mxu0 %v5624
    %v5707 = vpop.f32.mrf.mxu0
    %v5708 = vadd.f32 0.0, %v5707
    %v5709 = vpop.f32.mrf.mxu0
    %5710 = vdwg.mxu0
    %v5713 = vunpack.c.l.s4 1966171168
    %v5714 = vunpack.c.0.s8 %v5713
    %v5715 = vlaneseq
    %v5716 = vshrl.u32 %v5715, 7
    %v5717 = vsub.s32 %v5714, %v5716
    %v5718 = vrot.slane %v5506, %v5717
    %v5719 = vcombine.high %v5718, %v5718
    %v5721 = vunpack.c.l.s4 1966171168
    %v5722 = vunpack.c.0.s8 %v5721
    %v5723 = vlaneseq
    %v5724 = vshrl.u32 %v5723, 7
    %v5725 = vsub.s32 %v5722, %v5724
    %v5726 = vrot.slane %v5718, %v5725
    %v5728 = vunpack.c.l.s4 1966171168
    %v5729 = vunpack.c.0.s8 %v5728
    %v5730 = vlaneseq
    %v5731 = vshrl.u32 %v5730, 7
    %v5732 = vsub.s32 %v5729, %v5731
    %v5733 = vrot.slane %v5719, %v5732
    %v5734 = vcombine.high %v5726, %v5726
    %v5735 = vcombine.high %v5733, %v5733
    %v5736 = vlaneseq
    %v5737 = vshrl.u32 %v5736, 7
    %v5738 = vsub.s32 0, %v5737
    %v5739 = vrot.slane %v5726, %v5738
    %v5740 = vlaneseq
    %v5741 = vshrl.u32 %v5740, 7
    %v5742 = vsub.s32 0, %v5741
    %v5743 = vrot.slane %v5733, %v5742
    %v5744 = vlaneseq
    %v5745 = vshrl.u32 %v5744, 7
    %v5746 = vsub.s32 0, %v5745
    %v5747 = vrot.slane %v5734, %v5746
    %v5748 = vlaneseq
    %v5749 = vshrl.u32 %v5748, 7
    %v5750 = vsub.s32 0, %v5749
    %v5751 = vrot.slane %v5735, %v5750
    %v5756 = vmul.f32 %v5739, %v5594
    %v5757 = vmul.f32 %v5743, %v5599
    %v5758 = vmul.f32 %v5747, %v5604
    %v5759 = vmul.f32 %v5751, %v5609
    %vm5760 = vcmask 195584
    %v5761 = vsel %vm5760, %v5756, 0.0
    %5762 = vadd.xlane.f32.xlu0 %v5761
    %v5763 = vpop.xlane.xlu0 %5762
    %v5764 = vsel %vm5760, %v5757, 0.0
    %5765 = vadd.xlane.f32.xlu0 %v5764
    %v5766 = vpop.xlane.xlu0 %5765
    %v5767 = vsel %vm5760, %v5758, 0.0
    %5768 = vadd.xlane.f32.xlu0 %v5767
    %v5769 = vpop.xlane.xlu0 %5768
    %v5770 = vsel %vm5760, %v5759, 0.0
    %5771 = vadd.xlane.f32.xlu0 %v5770
    %v5772 = vpop.xlane.xlu0 %5771
    %v5773 = vmul.f32 %v5763, 0.20412415
    %v5774 = vmul.f32 %v5766, 0.20412415
    %v5775 = vmul.f32 %v5769, 0.20412415
    %v5776 = vmul.f32 %v5772, 0.20412415
    %vm5777 = vcmp.gt.f32.partialorder %v5421, 0.5
    %v5782 = vlaneseq
    %v5783 = vand.u32 %v5782, 127
    %v5784 = vlaneseq
    %v5785 = vshrl.u32 %v5784, 7
    %v5786 = vsub.s32 %v5783, %v5785
    %v5787 = vrot.slane %v5773, %v5786
    %v5788 = vlaneseq
    %v5789 = vshrl.u32 %v5788, 7
    %v5790 = vsub.s32 %v5783, %v5789
    %v5791 = vrot.slane %v5774, %v5790
    %v5792 = vlaneseq
    %v5793 = vshrl.u32 %v5792, 7
    %v5794 = vsub.s32 %v5783, %v5793
    %v5795 = vrot.slane %v5775, %v5794
    %v5796 = vlaneseq
    %v5797 = vshrl.u32 %v5796, 7
    %v5798 = vsub.s32 %v5783, %v5797
    %v5799 = vrot.slane %v5776, %v5798
    %v5800 = vsel %vm299, %v5791, %v5787
    %v5801 = vsel %vm302, %v5795, %v5800
    %v5802 = vsel %vm305, %v5799, %v5801
    %v5804 = vsel %vm5777, -1e+10, %v5802
    %vm5805 = vcmask 60416
    %v5806 = vsel %vm5805, %v5804, -inf
    %5807 = vmax.xlane.f32.xlu0 %v5806
    %v5808 = vpop.xlane.xlu0 %5807
    %v5809 = vsub.f32 %v5804, %v5808
    %v5810 = vmul.f32 %v5809, 1.442695
    %v5811 = vpow.pop %v5810
    %v5812 = vsel %vm5805, %v5811, 0.0
    %5813 = vadd.xlane.f32.xlu0 %v5812
    %v5814 = vpop.xlane.xlu0 %5813
    %v5815 = vrcp.pop %v5814
    %v5816 = vmul.f32 %v5811, %v5815
    %5817 = vst.msk [vmem:[#allocation15] sm:$0xf] %vm5805, %v5816
    %v5818 = vlaneseq
    %v5819 = vshrl.u32 %v5818, 7
    %v5820 = vsub.s32 0, %v5819
    %v5821 = vrot.slane %v5816, %v5820
    %5823 = vbcast.lane.b32.xlu0 %v5821, 256
    %v5824 = vpop.permute.xlu0 %5823
    %v5825 = vlaneseq
    %v5826 = vshrl.u32 %v5825, 7
    %v5827 = vsub.s32 1, %v5826
    %v5828 = vrot.slane %v5816, %v5827
    %5830 = vbcast.lane.b32.xlu0 %v5828, 256
    %v5831 = vpop.permute.xlu0 %5830
    %v5832 = vlaneseq
    %v5833 = vshrl.u32 %v5832, 7
    %v5834 = vsub.s32 2, %v5833
    %v5835 = vrot.slane %v5816, %v5834
    %5837 = vbcast.lane.b32.xlu0 %v5835, 256
    %v5838 = vpop.permute.xlu0 %5837
    %v5839 = vlaneseq
    %v5840 = vshrl.u32 %v5839, 7
    %v5841 = vsub.s32 3, %v5840
    %v5842 = vrot.slane %v5816, %v5841
    %5844 = vbcast.lane.b32.xlu0 %v5842, 256
    %v5845 = vpop.permute.xlu0 %5844
    %v5846 = vmul.f32 %v5824, %v5693
    %v5847 = vmul.f32 %v5831, %v5698
    %v5848 = vmul.f32 %v5838, %v5703
    %v5849 = vmul.f32 %v5845, %v5708
    %v5850 = vsel %vm5760, %v5846, 0.0
    %v5851 = vrot.slane %v5850, 4
    %v5852 = vadd.f32 %v5850, %v5851
    %v5853 = vrot.slane %v5852, 2
    %v5854 = vadd.f32 %v5852, %v5853
    %v5855 = vrot.slane %v5854, 1
    %v5856 = vadd.f32 %v5854, %v5855
    %v5857 = vsel %vm5760, %v5847, 0.0
    %v5858 = vrot.slane %v5857, 4
    %v5859 = vadd.f32 %v5857, %v5858
    %v5860 = vrot.slane %v5859, 2
    %v5861 = vadd.f32 %v5859, %v5860
    %v5862 = vrot.slane %v5861, 1
    %v5863 = vadd.f32 %v5861, %v5862
    %v5864 = vsel %vm5760, %v5848, 0.0
    %v5865 = vrot.slane %v5864, 4
    %v5866 = vadd.f32 %v5864, %v5865
    %v5867 = vrot.slane %v5866, 2
    %v5868 = vadd.f32 %v5866, %v5867
    %v5869 = vrot.slane %v5868, 1
    %v5870 = vadd.f32 %v5868, %v5869
    %v5871 = vsel %vm5760, %v5849, 0.0
    %v5872 = vrot.slane %v5871, 4
    %v5873 = vadd.f32 %v5871, %v5872
    %v5874 = vrot.slane %v5873, 2
    %v5875 = vadd.f32 %v5873, %v5874
    %v5876 = vrot.slane %v5875, 1
    %v5877 = vadd.f32 %v5875, %v5876
    %v5878 = vld [vmem:[#allocation8] sm:$0xff]
    %v5879 = vld [vmem:[#allocation8 + $0x8] sm:$0xff]
    %v5880 = vld [vmem:[#allocation8 + $0x10] sm:$0xff]
    %v5885 = vsel %vm299, %v5863, %v5856
    %v5886 = vsel %vm302, %v5870, %v5885
    %v5887 = vsel %vm305, %v5877, %v5886
    %v5888 = vsel %vm5760, %v5887, 0
    %5890 = vmatprep.subr.mxu0 0.0
    %5891 = vmatpush1.msra.mxu0 0.0
    %5892 = vmatprep.subr.mxu0 0.0
    %5893 = vmatpush1.msra.mxu0 0.0
    %5894 = vmatprep.subr.mxu0 0.0
    %5895 = vmatpush1.msra.mxu0 0.0
    %5896 = vmatprep.subr.mxu0 0.0
    %5897 = vmatpush1.msra.mxu0 0.0
    %5898 = vmatprep.subr.mxu0 0.0
    %5899 = vmatpush1.msra.mxu0 0.0
    %5900 = vmatprep.subr.mxu0 0.0
    %5901 = vmatpush1.msra.mxu0 0.0
    %5902 = vmatprep.subr.mxu0 0.0
    %5903 = vmatpush1.msra.mxu0 0.0
    %5904 = vmatprep.subr.mxu0 0.0
    %5905 = vmatpush1.msra.mxu0 0.0
    %5906 = vmatprep.subr.mxu0 0.0
    %5907 = vmatpush1.msra.mxu0 0.0
    %5908 = vmatprep.subr.mxu0 0.0
    %5909 = vmatpush1.msra.mxu0 0.0
    %5910 = vmatprep.subr.mxu0 0.0
    %5911 = vmatpush1.msra.mxu0 0.0
    %5912 = vmatprep.subr.mxu0 0.0
    %5913 = vmatpush1.msra.mxu0 0.0
    %5914 = vmatprep.subr.mxu0 0.0
    %5915 = vmatpush1.msra.mxu0 0.0
    %5916 = vmatprep.subr.mxu0 0.0
    %5917 = vmatpush1.msra.mxu0 %v5880
    %5918 = vmatprep.subr.mxu0 0.0
    %5919 = vmatpush1.msra.mxu0 %v5879
    %5920 = vmatprep.subr.mxu0 0.0
    %5921 = vmatpush1.msra.mxu0 %v5878
    %5922 = vmatprep.subr.mxu0 0.0
    %5923 = vmatpush2.msra.mxu0 0.0
    %5924 = vmatprep.subr.mxu0 0.0
    %5925 = vmatpush2.msra.mxu0 0.0
    %5926 = vmatprep.subr.mxu0 0.0
    %5927 = vmatpush2.msra.mxu0 0.0
    %5928 = vmatprep.subr.mxu0 0.0
    %5929 = vmatpush2.msra.mxu0 0.0
    %5930 = vmatprep.subr.mxu0 0.0
    %5931 = vmatpush2.msra.mxu0 0.0
    %5932 = vmatprep.subr.mxu0 0.0
    %5933 = vmatpush2.msra.mxu0 0.0
    %5934 = vmatprep.subr.mxu0 0.0
    %5935 = vmatpush2.msra.mxu0 0.0
    %5936 = vmatprep.subr.mxu0 0.0
    %5937 = vmatpush2.msra.mxu0 0.0
    %5938 = vmatprep.subr.mxu0 0.0
    %5939 = vmatpush2.msra.mxu0 0.0
    %5940 = vmatprep.subr.mxu0 0.0
    %5941 = vmatpush2.msra.mxu0 0.0
    %5942 = vmatprep.subr.mxu0 0.0
    %5943 = vmatpush2.msra.mxu0 0.0
    %5944 = vmatprep.subr.mxu0 0.0
    %5945 = vmatpush2.msra.mxu0 0.0
    %5946 = vmatprep.subr.mxu0 0.0
    %5947 = vmatpush2.msra.mxu0 0.0
    %5948 = vmatprep.subr.mxu0 0.0
    %5949 = vmatpush2.msra.mxu0 0.0
    %5950 = vmatprep.subr.mxu0 0.0
    %5951 = vmatpush2.msra.mxu0 0.0
    %5952 = vmatprep.subr.mxu0 0.0
    %5953 = vmatpush2.msra.mxu0 0.0
    %5954 = vmatprep.mubr.f32.mxu0 0.0
    %5955 = vmatmul.mubr.f32.gmra.mxu0 %v5888
    %v5956 = vpop.f32.mrf.mxu0
    %v5957 = vadd.f32 0.0, %v5956
    %v5958 = vpop.f32.mrf.mxu0
    %5959 = vdwg.mxu0
    %v5960 = vadd.f32 %v5429, %v5957
    %s5961 = scalar_lea.vmem %s7, 48
    %v5962 = vld [vmem:[%s5961] sm:$0xff]
    %v5963 = vld [vmem:[%s5961 + $0x8] sm:$0xff]
    %v5964 = vld [vmem:[%s5961 + $0x10] sm:$0xff]
    %v5965 = vld [vmem:[%s5961 + $0x18] sm:$0xff]
    %v5966 = vld [vmem:[%s5961 + $0x20] sm:$0xff]
    %v5967 = vld [vmem:[%s5961 + $0x28] sm:$0xff]
    %5968 = vmatprep.subr.mxu0 0.0
    %5969 = vmatpush1.msra.mxu0 0.0
    %5970 = vmatprep.subr.mxu0 0.0
    %5971 = vmatpush1.msra.mxu0 0.0
    %5972 = vmatprep.subr.mxu0 0.0
    %5973 = vmatpush1.msra.mxu0 0.0
    %5974 = vmatprep.subr.mxu0 0.0
    %5975 = vmatpush1.msra.mxu0 0.0
    %5976 = vmatprep.subr.mxu0 0.0
    %5977 = vmatpush1.msra.mxu0 0.0
    %5978 = vmatprep.subr.mxu0 0.0
    %5979 = vmatpush1.msra.mxu0 0.0
    %5980 = vmatprep.subr.mxu0 0.0
    %5981 = vmatpush1.msra.mxu0 0.0
    %5982 = vmatprep.subr.mxu0 0.0
    %5983 = vmatpush1.msra.mxu0 0.0
    %5984 = vmatprep.subr.mxu0 0.0
    %5985 = vmatpush1.msra.mxu0 0.0
    %5986 = vmatprep.subr.mxu0 0.0
    %5987 = vmatpush1.msra.mxu0 0.0
    %5988 = vmatprep.subr.mxu0 0.0
    %5989 = vmatpush1.msra.mxu0 %v5967
    %5990 = vmatprep.subr.mxu0 0.0
    %5991 = vmatpush1.msra.mxu0 %v5966
    %5992 = vmatprep.subr.mxu0 0.0
    %5993 = vmatpush1.msra.mxu0 %v5965
    %5994 = vmatprep.subr.mxu0 0.0
    %5995 = vmatpush1.msra.mxu0 %v5964
    %5996 = vmatprep.subr.mxu0 0.0
    %5997 = vmatpush1.msra.mxu0 %v5963
    %5998 = vmatprep.subr.mxu0 0.0
    %5999 = vmatpush1.msra.mxu0 %v5962
    %6000 = vmatprep.subr.mxu0 0.0
    %6001 = vmatpush2.msra.mxu0 0.0
    %6002 = vmatprep.subr.mxu0 0.0
    %6003 = vmatpush2.msra.mxu0 0.0
    %6004 = vmatprep.subr.mxu0 0.0
    %6005 = vmatpush2.msra.mxu0 0.0
    %6006 = vmatprep.subr.mxu0 0.0
    %6007 = vmatpush2.msra.mxu0 0.0
    %6008 = vmatprep.subr.mxu0 0.0
    %6009 = vmatpush2.msra.mxu0 0.0
    %6010 = vmatprep.subr.mxu0 0.0
    %6011 = vmatpush2.msra.mxu0 0.0
    %6012 = vmatprep.subr.mxu0 0.0
    %6013 = vmatpush2.msra.mxu0 0.0
    %6014 = vmatprep.subr.mxu0 0.0
    %6015 = vmatpush2.msra.mxu0 0.0
    %6016 = vmatprep.subr.mxu0 0.0
    %6017 = vmatpush2.msra.mxu0 0.0
    %6018 = vmatprep.subr.mxu0 0.0
    %6019 = vmatpush2.msra.mxu0 0.0
    %6020 = vmatprep.subr.mxu0 0.0
    %6021 = vmatpush2.msra.mxu0 0.0
    %6022 = vmatprep.subr.mxu0 0.0
    %6023 = vmatpush2.msra.mxu0 0.0
    %6024 = vmatprep.subr.mxu0 0.0
    %6025 = vmatpush2.msra.mxu0 0.0
    %6026 = vmatprep.subr.mxu0 0.0
    %6027 = vmatpush2.msra.mxu0 0.0
    %6028 = vmatprep.subr.mxu0 0.0
    %6029 = vmatpush2.msra.mxu0 0.0
    %6030 = vmatprep.subr.mxu0 0.0
    %6031 = vmatpush2.msra.mxu0 0.0
    %6032 = vmatprep.mubr.f32.mxu0 0.0
    %6033 = vmatmul.mubr.f32.gmra.mxu0 %v5437
    %v6034 = vpop.f32.mrf.mxu0
    %v6035 = vadd.f32 0.0, %v6034
    %v6036 = vpop.f32.mrf.mxu0
    %6037 = vdwg.mxu0
    %s6038 = scalar_lea.vmem %s8, 48
    %v6039 = vld [vmem:[%s6038] sm:$0xff]
    %v6040 = vld [vmem:[%s6038 + $0x8] sm:$0xff]
    %v6041 = vld [vmem:[%s6038 + $0x10] sm:$0xff]
    %v6042 = vld [vmem:[%s6038 + $0x18] sm:$0xff]
    %v6043 = vld [vmem:[%s6038 + $0x20] sm:$0xff]
    %v6044 = vld [vmem:[%s6038 + $0x28] sm:$0xff]
    %6045 = vmatprep.subr.mxu0 0.0
    %6046 = vmatpush1.msra.mxu0 0.0
    %6047 = vmatprep.subr.mxu0 0.0
    %6048 = vmatpush1.msra.mxu0 0.0
    %6049 = vmatprep.subr.mxu0 0.0
    %6050 = vmatpush1.msra.mxu0 0.0
    %6051 = vmatprep.subr.mxu0 0.0
    %6052 = vmatpush1.msra.mxu0 0.0
    %6053 = vmatprep.subr.mxu0 0.0
    %6054 = vmatpush1.msra.mxu0 0.0
    %6055 = vmatprep.subr.mxu0 0.0
    %6056 = vmatpush1.msra.mxu0 0.0
    %6057 = vmatprep.subr.mxu0 0.0
    %6058 = vmatpush1.msra.mxu0 0.0
    %6059 = vmatprep.subr.mxu0 0.0
    %6060 = vmatpush1.msra.mxu0 0.0
    %6061 = vmatprep.subr.mxu0 0.0
    %6062 = vmatpush1.msra.mxu0 0.0
    %6063 = vmatprep.subr.mxu0 0.0
    %6064 = vmatpush1.msra.mxu0 0.0
    %6065 = vmatprep.subr.mxu0 0.0
    %6066 = vmatpush1.msra.mxu0 %v6044
    %6067 = vmatprep.subr.mxu0 0.0
    %6068 = vmatpush1.msra.mxu0 %v6043
    %6069 = vmatprep.subr.mxu0 0.0
    %6070 = vmatpush1.msra.mxu0 %v6042
    %6071 = vmatprep.subr.mxu0 0.0
    %6072 = vmatpush1.msra.mxu0 %v6041
    %6073 = vmatprep.subr.mxu0 0.0
    %6074 = vmatpush1.msra.mxu0 %v6040
    %6075 = vmatprep.subr.mxu0 0.0
    %6076 = vmatpush1.msra.mxu0 %v6039
    %6077 = vmatprep.subr.mxu0 0.0
    %6078 = vmatpush2.msra.mxu0 0.0
    %6079 = vmatprep.subr.mxu0 0.0
    %6080 = vmatpush2.msra.mxu0 0.0
    %6081 = vmatprep.subr.mxu0 0.0
    %6082 = vmatpush2.msra.mxu0 0.0
    %6083 = vmatprep.subr.mxu0 0.0
    %6084 = vmatpush2.msra.mxu0 0.0
    %6085 = vmatprep.subr.mxu0 0.0
    %6086 = vmatpush2.msra.mxu0 0.0
    %6087 = vmatprep.subr.mxu0 0.0
    %6088 = vmatpush2.msra.mxu0 0.0
    %6089 = vmatprep.subr.mxu0 0.0
    %6090 = vmatpush2.msra.mxu0 0.0
    %6091 = vmatprep.subr.mxu0 0.0
    %6092 = vmatpush2.msra.mxu0 0.0
    %6093 = vmatprep.subr.mxu0 0.0
    %6094 = vmatpush2.msra.mxu0 0.0
    %6095 = vmatprep.subr.mxu0 0.0
    %6096 = vmatpush2.msra.mxu0 0.0
    %6097 = vmatprep.subr.mxu0 0.0
    %6098 = vmatpush2.msra.mxu0 0.0
    %6099 = vmatprep.subr.mxu0 0.0
    %6100 = vmatpush2.msra.mxu0 0.0
    %6101 = vmatprep.subr.mxu0 0.0
    %6102 = vmatpush2.msra.mxu0 0.0
    %6103 = vmatprep.subr.mxu0 0.0
    %6104 = vmatpush2.msra.mxu0 0.0
    %6105 = vmatprep.subr.mxu0 0.0
    %6106 = vmatpush2.msra.mxu0 0.0
    %6107 = vmatprep.subr.mxu0 0.0
    %6108 = vmatpush2.msra.mxu0 0.0
    %6109 = vmatprep.mubr.f32.mxu0 0.0
    %6110 = vmatmul.mubr.f32.gmra.mxu0 %v5516
    %v6111 = vpop.f32.mrf.mxu0
    %v6112 = vadd.f32 0.0, %v6111
    %v6113 = vpop.f32.mrf.mxu0
    %6114 = vmatprep.mubr.f32.mxu0 0.0
    %6115 = vmatmul.mubr.f32.gmra.mxu0 %v5519
    %v6116 = vpop.f32.mrf.mxu0
    %v6117 = vadd.f32 0.0, %v6116
    %v6118 = vpop.f32.mrf.mxu0
    %6119 = vmatprep.mubr.f32.mxu0 0.0
    %6120 = vmatmul.mubr.f32.gmra.mxu0 %v5522
    %v6121 = vpop.f32.mrf.mxu0
    %v6122 = vadd.f32 0.0, %v6121
    %v6123 = vpop.f32.mrf.mxu0
    %6124 = vmatprep.mubr.f32.mxu0 0.0
    %6125 = vmatmul.mubr.f32.gmra.mxu0 %v5525
    %v6126 = vpop.f32.mrf.mxu0
    %v6127 = vadd.f32 0.0, %v6126
    %v6128 = vpop.f32.mrf.mxu0
    %6129 = vdwg.mxu0
    %s6130 = scalar_lea.vmem %s9, 48
    %v6131 = vld [vmem:[%s6130] sm:$0xff]
    %v6132 = vld [vmem:[%s6130 + $0x8] sm:$0xff]
    %v6133 = vld [vmem:[%s6130 + $0x10] sm:$0xff]
    %v6134 = vld [vmem:[%s6130 + $0x18] sm:$0xff]
    %v6135 = vld [vmem:[%s6130 + $0x20] sm:$0xff]
    %v6136 = vld [vmem:[%s6130 + $0x28] sm:$0xff]
    %6137 = vmatprep.subr.mxu0 0.0
    %6138 = vmatpush1.msra.mxu0 0.0
    %6139 = vmatprep.subr.mxu0 0.0
    %6140 = vmatpush1.msra.mxu0 0.0
    %6141 = vmatprep.subr.mxu0 0.0
    %6142 = vmatpush1.msra.mxu0 0.0
    %6143 = vmatprep.subr.mxu0 0.0
    %6144 = vmatpush1.msra.mxu0 0.0
    %6145 = vmatprep.subr.mxu0 0.0
    %6146 = vmatpush1.msra.mxu0 0.0
    %6147 = vmatprep.subr.mxu0 0.0
    %6148 = vmatpush1.msra.mxu0 0.0
    %6149 = vmatprep.subr.mxu0 0.0
    %6150 = vmatpush1.msra.mxu0 0.0
    %6151 = vmatprep.subr.mxu0 0.0
    %6152 = vmatpush1.msra.mxu0 0.0
    %6153 = vmatprep.subr.mxu0 0.0
    %6154 = vmatpush1.msra.mxu0 0.0
    %6155 = vmatprep.subr.mxu0 0.0
    %6156 = vmatpush1.msra.mxu0 0.0
    %6157 = vmatprep.subr.mxu0 0.0
    %6158 = vmatpush1.msra.mxu0 %v6136
    %6159 = vmatprep.subr.mxu0 0.0
    %6160 = vmatpush1.msra.mxu0 %v6135
    %6161 = vmatprep.subr.mxu0 0.0
    %6162 = vmatpush1.msra.mxu0 %v6134
    %6163 = vmatprep.subr.mxu0 0.0
    %6164 = vmatpush1.msra.mxu0 %v6133
    %6165 = vmatprep.subr.mxu0 0.0
    %6166 = vmatpush1.msra.mxu0 %v6132
    %6167 = vmatprep.subr.mxu0 0.0
    %6168 = vmatpush1.msra.mxu0 %v6131
    %6169 = vmatprep.subr.mxu0 0.0
    %6170 = vmatpush2.msra.mxu0 0.0
    %6171 = vmatprep.subr.mxu0 0.0
    %6172 = vmatpush2.msra.mxu0 0.0
    %6173 = vmatprep.subr.mxu0 0.0
    %6174 = vmatpush2.msra.mxu0 0.0
    %6175 = vmatprep.subr.mxu0 0.0
    %6176 = vmatpush2.msra.mxu0 0.0
    %6177 = vmatprep.subr.mxu0 0.0
    %6178 = vmatpush2.msra.mxu0 0.0
    %6179 = vmatprep.subr.mxu0 0.0
    %6180 = vmatpush2.msra.mxu0 0.0
    %6181 = vmatprep.subr.mxu0 0.0
    %6182 = vmatpush2.msra.mxu0 0.0
    %6183 = vmatprep.subr.mxu0 0.0
    %6184 = vmatpush2.msra.mxu0 0.0
    %6185 = vmatprep.subr.mxu0 0.0
    %6186 = vmatpush2.msra.mxu0 0.0
    %6187 = vmatprep.subr.mxu0 0.0
    %6188 = vmatpush2.msra.mxu0 0.0
    %6189 = vmatprep.subr.mxu0 0.0
    %6190 = vmatpush2.msra.mxu0 0.0
    %6191 = vmatprep.subr.mxu0 0.0
    %6192 = vmatpush2.msra.mxu0 0.0
    %6193 = vmatprep.subr.mxu0 0.0
    %6194 = vmatpush2.msra.mxu0 0.0
    %6195 = vmatprep.subr.mxu0 0.0
    %6196 = vmatpush2.msra.mxu0 0.0
    %6197 = vmatprep.subr.mxu0 0.0
    %6198 = vmatpush2.msra.mxu0 0.0
    %6199 = vmatprep.subr.mxu0 0.0
    %6200 = vmatpush2.msra.mxu0 0.0
    %6201 = vmatprep.mubr.f32.mxu0 0.0
    %6202 = vmatmul.mubr.f32.gmra.mxu0 %v5618
    %v6203 = vpop.f32.mrf.mxu0
    %v6204 = vadd.f32 0.0, %v6203
    %v6205 = vpop.f32.mrf.mxu0
    %6206 = vmatprep.mubr.f32.mxu0 0.0
    %6207 = vmatmul.mubr.f32.gmra.mxu0 %v5620
    %v6208 = vpop.f32.mrf.mxu0
    %v6209 = vadd.f32 0.0, %v6208
    %v6210 = vpop.f32.mrf.mxu0
    %6211 = vmatprep.mubr.f32.mxu0 0.0
    %6212 = vmatmul.mubr.f32.gmra.mxu0 %v5622
    %v6213 = vpop.f32.mrf.mxu0
    %v6214 = vadd.f32 0.0, %v6213
    %v6215 = vpop.f32.mrf.mxu0
    %6216 = vmatprep.mubr.f32.mxu0 0.0
    %6217 = vmatmul.mubr.f32.gmra.mxu0 %v5624
    %v6218 = vpop.f32.mrf.mxu0
    %v6219 = vadd.f32 0.0, %v6218
    %v6220 = vpop.f32.mrf.mxu0
    %6221 = vdwg.mxu0
    %v6224 = vunpack.c.l.s4 1966171168
    %v6225 = vunpack.c.0.s8 %v6224
    %v6226 = vlaneseq
    %v6227 = vshrl.u32 %v6226, 7
    %v6228 = vsub.s32 %v6225, %v6227
    %v6229 = vrot.slane %v6035, %v6228
    %v6230 = vcombine.high %v6229, %v6229
    %v6232 = vunpack.c.l.s4 1966171168
    %v6233 = vunpack.c.0.s8 %v6232
    %v6234 = vlaneseq
    %v6235 = vshrl.u32 %v6234, 7
    %v6236 = vsub.s32 %v6233, %v6235
    %v6237 = vrot.slane %v6229, %v6236
    %v6239 = vunpack.c.l.s4 1966171168
    %v6240 = vunpack.c.0.s8 %v6239
    %v6241 = vlaneseq
    %v6242 = vshrl.u32 %v6241, 7
    %v6243 = vsub.s32 %v6240, %v6242
    %v6244 = vrot.slane %v6230, %v6243
    %v6245 = vcombine.high %v6237, %v6237
    %v6246 = vcombine.high %v6244, %v6244
    %v6247 = vlaneseq
    %v6248 = vshrl.u32 %v6247, 7
    %v6249 = vsub.s32 0, %v6248
    %v6250 = vrot.slane %v6237, %v6249
    %v6251 = vlaneseq
    %v6252 = vshrl.u32 %v6251, 7
    %v6253 = vsub.s32 0, %v6252
    %v6254 = vrot.slane %v6244, %v6253
    %v6255 = vlaneseq
    %v6256 = vshrl.u32 %v6255, 7
    %v6257 = vsub.s32 0, %v6256
    %v6258 = vrot.slane %v6245, %v6257
    %v6259 = vlaneseq
    %v6260 = vshrl.u32 %v6259, 7
    %v6261 = vsub.s32 0, %v6260
    %v6262 = vrot.slane %v6246, %v6261
    %v6267 = vmul.f32 %v6250, %v6112
    %v6268 = vmul.f32 %v6254, %v6117
    %v6269 = vmul.f32 %v6258, %v6122
    %v6270 = vmul.f32 %v6262, %v6127
    %v6271 = vsel %vm5760, %v6267, 0.0
    %6272 = vadd.xlane.f32.xlu0 %v6271
    %v6273 = vpop.xlane.xlu0 %6272
    %v6274 = vsel %vm5760, %v6268, 0.0
    %6275 = vadd.xlane.f32.xlu0 %v6274
    %v6276 = vpop.xlane.xlu0 %6275
    %v6277 = vsel %vm5760, %v6269, 0.0
    %6278 = vadd.xlane.f32.xlu0 %v6277
    %v6279 = vpop.xlane.xlu0 %6278
    %v6280 = vsel %vm5760, %v6270, 0.0
    %6281 = vadd.xlane.f32.xlu0 %v6280
    %v6282 = vpop.xlane.xlu0 %6281
    %v6283 = vmul.f32 %v6273, 0.20412415
    %v6284 = vmul.f32 %v6276, 0.20412415
    %v6285 = vmul.f32 %v6279, 0.20412415
    %v6286 = vmul.f32 %v6282, 0.20412415
    %v6291 = vlaneseq
    %v6292 = vshrl.u32 %v6291, 7
    %v6293 = vsub.s32 %v5783, %v6292
    %v6294 = vrot.slane %v6283, %v6293
    %v6295 = vlaneseq
    %v6296 = vshrl.u32 %v6295, 7
    %v6297 = vsub.s32 %v5783, %v6296
    %v6298 = vrot.slane %v6284, %v6297
    %v6299 = vlaneseq
    %v6300 = vshrl.u32 %v6299, 7
    %v6301 = vsub.s32 %v5783, %v6300
    %v6302 = vrot.slane %v6285, %v6301
    %v6303 = vlaneseq
    %v6304 = vshrl.u32 %v6303, 7
    %v6305 = vsub.s32 %v5783, %v6304
    %v6306 = vrot.slane %v6286, %v6305
    %v6307 = vsel %vm299, %v6298, %v6294
    %v6308 = vsel %vm302, %v6302, %v6307
    %v6309 = vsel %vm305, %v6306, %v6308
    %v6311 = vsel %vm5777, -1e+10, %v6309
    %v6312 = vsel %vm5805, %v6311, -inf
    %6313 = vmax.xlane.f32.xlu0 %v6312
    %v6314 = vpop.xlane.xlu0 %6313
    %v6315 = vsub.f32 %v6311, %v6314
    %v6316 = vmul.f32 %v6315, 1.442695
    %v6317 = vpow.pop %v6316
    %v6318 = vsel %vm5805, %v6317, 0.0
    %6319 = vadd.xlane.f32.xlu0 %v6318
    %v6320 = vpop.xlane.xlu0 %6319
    %v6321 = vrcp.pop %v6320
    %v6322 = vmul.f32 %v6317, %v6321
    %s6323 = scalar_lea.vmem [#allocation15], 4
    %6324 = vst.msk [vmem:[%s6323] sm:$0xf] %vm5805, %v6322
    %v6325 = vlaneseq
    %v6326 = vshrl.u32 %v6325, 7
    %v6327 = vsub.s32 0, %v6326
    %v6328 = vrot.slane %v6322, %v6327
    %6330 = vbcast.lane.b32.xlu0 %v6328, 256
    %v6331 = vpop.permute.xlu0 %6330
    %v6332 = vlaneseq
    %v6333 = vshrl.u32 %v6332, 7
    %v6334 = vsub.s32 1, %v6333
    %v6335 = vrot.slane %v6322, %v6334
    %6337 = vbcast.lane.b32.xlu0 %v6335, 256
    %v6338 = vpop.permute.xlu0 %6337
    %v6339 = vlaneseq
    %v6340 = vshrl.u32 %v6339, 7
    %v6341 = vsub.s32 2, %v6340
    %v6342 = vrot.slane %v6322, %v6341
    %6344 = vbcast.lane.b32.xlu0 %v6342, 256
    %v6345 = vpop.permute.xlu0 %6344
    %v6346 = vlaneseq
    %v6347 = vshrl.u32 %v6346, 7
    %v6348 = vsub.s32 3, %v6347
    %v6349 = vrot.slane %v6322, %v6348
    %6351 = vbcast.lane.b32.xlu0 %v6349, 256
    %v6352 = vpop.permute.xlu0 %6351
    %v6353 = vmul.f32 %v6331, %v6204
    %v6354 = vmul.f32 %v6338, %v6209
    %v6355 = vmul.f32 %v6345, %v6214
    %v6356 = vmul.f32 %v6352, %v6219
    %v6357 = vsel %vm5760, %v6353, 0.0
    %v6358 = vrot.slane %v6357, 4
    %v6359 = vadd.f32 %v6357, %v6358
    %v6360 = vrot.slane %v6359, 2
    %v6361 = vadd.f32 %v6359, %v6360
    %v6362 = vrot.slane %v6361, 1
    %v6363 = vadd.f32 %v6361, %v6362
    %v6364 = vsel %vm5760, %v6354, 0.0
    %v6365 = vrot.slane %v6364, 4
    %v6366 = vadd.f32 %v6364, %v6365
    %v6367 = vrot.slane %v6366, 2
    %v6368 = vadd.f32 %v6366, %v6367
    %v6369 = vrot.slane %v6368, 1
    %v6370 = vadd.f32 %v6368, %v6369
    %v6371 = vsel %vm5760, %v6355, 0.0
    %v6372 = vrot.slane %v6371, 4
    %v6373 = vadd.f32 %v6371, %v6372
    %v6374 = vrot.slane %v6373, 2
    %v6375 = vadd.f32 %v6373, %v6374
    %v6376 = vrot.slane %v6375, 1
    %v6377 = vadd.f32 %v6375, %v6376
    %v6378 = vsel %vm5760, %v6356, 0.0
    %v6379 = vrot.slane %v6378, 4
    %v6380 = vadd.f32 %v6378, %v6379
    %v6381 = vrot.slane %v6380, 2
    %v6382 = vadd.f32 %v6380, %v6381
    %v6383 = vrot.slane %v6382, 1
    %v6384 = vadd.f32 %v6382, %v6383
    %s6385 = scalar_lea.vmem [#allocation8], 24
    %v6386 = vld [vmem:[%s6385] sm:$0xff]
    %v6387 = vld [vmem:[%s6385 + $0x8] sm:$0xff]
    %v6388 = vld [vmem:[%s6385 + $0x10] sm:$0xff]
    %v6393 = vsel %vm299, %v6370, %v6363
    %v6394 = vsel %vm302, %v6377, %v6393
    %v6395 = vsel %vm305, %v6384, %v6394
    %v6396 = vsel %vm5760, %v6395, 0
    %6398 = vmatprep.subr.mxu0 0.0
    %6399 = vmatpush1.msra.mxu0 0.0
    %6400 = vmatprep.subr.mxu0 0.0
    %6401 = vmatpush1.msra.mxu0 0.0
    %6402 = vmatprep.subr.mxu0 0.0
    %6403 = vmatpush1.msra.mxu0 0.0
    %6404 = vmatprep.subr.mxu0 0.0
    %6405 = vmatpush1.msra.mxu0 0.0
    %6406 = vmatprep.subr.mxu0 0.0
    %6407 = vmatpush1.msra.mxu0 0.0
    %6408 = vmatprep.subr.mxu0 0.0
    %6409 = vmatpush1.msra.mxu0 0.0
    %6410 = vmatprep.subr.mxu0 0.0
    %6411 = vmatpush1.msra.mxu0 0.0
    %6412 = vmatprep.subr.mxu0 0.0
    %6413 = vmatpush1.msra.mxu0 0.0
    %6414 = vmatprep.subr.mxu0 0.0
    %6415 = vmatpush1.msra.mxu0 0.0
    %6416 = vmatprep.subr.mxu0 0.0
    %6417 = vmatpush1.msra.mxu0 0.0
    %6418 = vmatprep.subr.mxu0 0.0
    %6419 = vmatpush1.msra.mxu0 0.0
    %6420 = vmatprep.subr.mxu0 0.0
    %6421 = vmatpush1.msra.mxu0 0.0
    %6422 = vmatprep.subr.mxu0 0.0
    %6423 = vmatpush1.msra.mxu0 0.0
    %6424 = vmatprep.subr.mxu0 0.0
    %6425 = vmatpush1.msra.mxu0 %v6388
    %6426 = vmatprep.subr.mxu0 0.0
    %6427 = vmatpush1.msra.mxu0 %v6387
    %6428 = vmatprep.subr.mxu0 0.0
    %6429 = vmatpush1.msra.mxu0 %v6386
    %6430 = vmatprep.subr.mxu0 0.0
    %6431 = vmatpush2.msra.mxu0 0.0
    %6432 = vmatprep.subr.mxu0 0.0
    %6433 = vmatpush2.msra.mxu0 0.0
    %6434 = vmatprep.subr.mxu0 0.0
    %6435 = vmatpush2.msra.mxu0 0.0
    %6436 = vmatprep.subr.mxu0 0.0
    %6437 = vmatpush2.msra.mxu0 0.0
    %6438 = vmatprep.subr.mxu0 0.0
    %6439 = vmatpush2.msra.mxu0 0.0
    %6440 = vmatprep.subr.mxu0 0.0
    %6441 = vmatpush2.msra.mxu0 0.0
    %6442 = vmatprep.subr.mxu0 0.0
    %6443 = vmatpush2.msra.mxu0 0.0
    %6444 = vmatprep.subr.mxu0 0.0
    %6445 = vmatpush2.msra.mxu0 0.0
    %6446 = vmatprep.subr.mxu0 0.0
    %6447 = vmatpush2.msra.mxu0 0.0
    %6448 = vmatprep.subr.mxu0 0.0
    %6449 = vmatpush2.msra.mxu0 0.0
    %6450 = vmatprep.subr.mxu0 0.0
    %6451 = vmatpush2.msra.mxu0 0.0
    %6452 = vmatprep.subr.mxu0 0.0
    %6453 = vmatpush2.msra.mxu0 0.0
    %6454 = vmatprep.subr.mxu0 0.0
    %6455 = vmatpush2.msra.mxu0 0.0
    %6456 = vmatprep.subr.mxu0 0.0
    %6457 = vmatpush2.msra.mxu0 0.0
    %6458 = vmatprep.subr.mxu0 0.0
    %6459 = vmatpush2.msra.mxu0 0.0
    %6460 = vmatprep.subr.mxu0 0.0
    %6461 = vmatpush2.msra.mxu0 0.0
    %6462 = vmatprep.mubr.f32.mxu0 0.0
    %6463 = vmatmul.mubr.f32.gmra.mxu0 %v6396
    %v6464 = vpop.f32.mrf.mxu0
    %v6465 = vadd.f32 0.0, %v6464
    %v6466 = vpop.f32.mrf.mxu0
    %6467 = vdwg.mxu0
    %v6468 = vadd.f32 %v5960, %v6465
    %vm6469 = vcmask 388096
    %v6470 = vsel %vm6469, %v6468, 0.0
    %6471 = vadd.xlane.f32.xlu0 %v6470
    %v6472 = vpop.xlane.xlu0 %6471
    %v6473 = vrcp.pop 48.0
    %v6474 = vmul.f32 %v6472, %v6473
    %v6475 = vsub.f32 %v6468, %v6474
    %v6476 = vmul.f32 %v6475, %v6475
    %v6477 = vsel %vm6469, %v6476, 0.0
    %6478 = vadd.xlane.f32.xlu0 %v6477
    %v6479 = vpop.xlane.xlu0 %6478
    %v6480 = vmul.f32 %v6479, %v6473
    %v6481 = vadd.f32 %v6480, 1e-05
    %v6482 = vrsqrt.pop %v6481
    %v6483 = vmul.f32 %v6475, %v6482
    %v6484 = vld [vmem:[#allocation10] sm:$0x1]
    %v6486 = vlaneseq
    %v6487 = vshrl.u32 %v6486, 7
    %v6488 = vsub.s32 0, %v6487
    %v6489 = vrot.slane %v6484, %v6488
    %v6491 = vmul.f32 %v6483, %v6489
    %v6492 = vld [vmem:[#allocation11] sm:$0x1]
    %v6494 = vlaneseq
    %v6495 = vshrl.u32 %v6494, 7
    %v6496 = vsub.s32 0, %v6495
    %v6497 = vrot.slane %v6492, %v6496
    %v6499 = vadd.f32 %v6491, %v6497
    %v6500 = vld [vmem:[%s1] sm:$0xf]
    %v6501 = vld [vmem:[%s14] sm:$0xff]
    %v6502 = vld [vmem:[%s14 + $0x8] sm:$0xff]
    %v6503 = vld [vmem:[%s14 + $0x10] sm:$0xff]
    %v6504 = vld [vmem:[%s14 + $0x18] sm:$0xff]
    %v6505 = vld [vmem:[%s14 + $0x20] sm:$0xff]
    %v6506 = vld [vmem:[%s14 + $0x28] sm:$0xff]
    %v6507 = vld [vmem:[%s15] sm:$0xff]
    %v6508 = vld [vmem:[%s15 + $0x8] sm:$0xff]
    %vm6509 = vcmask 130048
    %v6511 = vsel %vm6509, %v6500, 0
    %6513 = vmatprep.subr.mxu0 0.0
    %6514 = vmatpush1.msra.mxu0 0.0
    %6515 = vmatprep.subr.mxu0 0.0
    %6516 = vmatpush1.msra.mxu0 0.0
    %6517 = vmatprep.subr.mxu0 0.0
    %6518 = vmatpush1.msra.mxu0 0.0
    %6519 = vmatprep.subr.mxu0 0.0
    %6520 = vmatpush1.msra.mxu0 0.0
    %6521 = vmatprep.subr.mxu0 0.0
    %6522 = vmatpush1.msra.mxu0 0.0
    %6523 = vmatprep.subr.mxu0 0.0
    %6524 = vmatpush1.msra.mxu0 0.0
    %6525 = vmatprep.subr.mxu0 0.0
    %6526 = vmatpush1.msra.mxu0 0.0
    %6527 = vmatprep.subr.mxu0 0.0
    %6528 = vmatpush1.msra.mxu0 0.0
    %6529 = vmatprep.subr.mxu0 0.0
    %6530 = vmatpush1.msra.mxu0 0.0
    %6531 = vmatprep.subr.mxu0 0.0
    %6532 = vmatpush1.msra.mxu0 0.0
    %6533 = vmatprep.subr.mxu0 0.0
    %6534 = vmatpush1.msra.mxu0 0.0
    %6535 = vmatprep.subr.mxu0 0.0
    %6536 = vmatpush1.msra.mxu0 0.0
    %6537 = vmatprep.subr.mxu0 0.0
    %6538 = vmatpush1.msra.mxu0 0.0
    %6539 = vmatprep.subr.mxu0 0.0
    %6540 = vmatpush1.msra.mxu0 0.0
    %6541 = vmatprep.subr.mxu0 0.0
    %6542 = vmatpush1.msra.mxu0 %v6508
    %6543 = vmatprep.subr.mxu0 0.0
    %6544 = vmatpush1.msra.mxu0 %v6507
    %6545 = vmatprep.subr.mxu0 0.0
    %6546 = vmatpush2.msra.mxu0 0.0
    %6547 = vmatprep.subr.mxu0 0.0
    %6548 = vmatpush2.msra.mxu0 0.0
    %6549 = vmatprep.subr.mxu0 0.0
    %6550 = vmatpush2.msra.mxu0 0.0
    %6551 = vmatprep.subr.mxu0 0.0
    %6552 = vmatpush2.msra.mxu0 0.0
    %6553 = vmatprep.subr.mxu0 0.0
    %6554 = vmatpush2.msra.mxu0 0.0
    %6555 = vmatprep.subr.mxu0 0.0
    %6556 = vmatpush2.msra.mxu0 0.0
    %6557 = vmatprep.subr.mxu0 0.0
    %6558 = vmatpush2.msra.mxu0 0.0
    %6559 = vmatprep.subr.mxu0 0.0
    %6560 = vmatpush2.msra.mxu0 0.0
    %6561 = vmatprep.subr.mxu0 0.0
    %6562 = vmatpush2.msra.mxu0 0.0
    %6563 = vmatprep.subr.mxu0 0.0
    %6564 = vmatpush2.msra.mxu0 0.0
    %6565 = vmatprep.subr.mxu0 0.0
    %6566 = vmatpush2.msra.mxu0 0.0
    %6567 = vmatprep.subr.mxu0 0.0
    %6568 = vmatpush2.msra.mxu0 0.0
    %6569 = vmatprep.subr.mxu0 0.0
    %6570 = vmatpush2.msra.mxu0 0.0
    %6571 = vmatprep.subr.mxu0 0.0
    %6572 = vmatpush2.msra.mxu0 0.0
    %6573 = vmatprep.subr.mxu0 0.0
    %6574 = vmatpush2.msra.mxu0 0.0
    %6575 = vmatprep.subr.mxu0 0.0
    %6576 = vmatpush2.msra.mxu0 0.0
    %6577 = vmatprep.mubr.f32.mxu0 0.0
    %6578 = vmatmul.mubr.f32.gmra.mxu0 %v6511
    %v6579 = vpop.f32.mrf.mxu0
    %v6580 = vadd.f32 0.0, %v6579
    %v6581 = vpop.f32.mrf.mxu0
    %6582 = vdwg.mxu0
    %v6584 = vsel %vm220, %v6499, 0
    %6586 = vmatprep.subr.mxu0 0.0
    %6587 = vmatpush1.msra.mxu0 0.0
    %6588 = vmatprep.subr.mxu0 0.0
    %6589 = vmatpush1.msra.mxu0 0.0
    %6590 = vmatprep.subr.mxu0 0.0
    %6591 = vmatpush1.msra.mxu0 0.0
    %6592 = vmatprep.subr.mxu0 0.0
    %6593 = vmatpush1.msra.mxu0 0.0
    %6594 = vmatprep.subr.mxu0 0.0
    %6595 = vmatpush1.msra.mxu0 0.0
    %6596 = vmatprep.subr.mxu0 0.0
    %6597 = vmatpush1.msra.mxu0 0.0
    %6598 = vmatprep.subr.mxu0 0.0
    %6599 = vmatpush1.msra.mxu0 0.0
    %6600 = vmatprep.subr.mxu0 0.0
    %6601 = vmatpush1.msra.mxu0 0.0
    %6602 = vmatprep.subr.mxu0 0.0
    %6603 = vmatpush1.msra.mxu0 0.0
    %6604 = vmatprep.subr.mxu0 0.0
    %6605 = vmatpush1.msra.mxu0 0.0
    %6606 = vmatprep.subr.mxu0 0.0
    %6607 = vmatpush1.msra.mxu0 %v6506
    %6608 = vmatprep.subr.mxu0 0.0
    %6609 = vmatpush1.msra.mxu0 %v6505
    %6610 = vmatprep.subr.mxu0 0.0
    %6611 = vmatpush1.msra.mxu0 %v6504
    %6612 = vmatprep.subr.mxu0 0.0
    %6613 = vmatpush1.msra.mxu0 %v6503
    %6614 = vmatprep.subr.mxu0 0.0
    %6615 = vmatpush1.msra.mxu0 %v6502
    %6616 = vmatprep.subr.mxu0 0.0
    %6617 = vmatpush1.msra.mxu0 %v6501
    %6618 = vmatprep.subr.mxu0 0.0
    %6619 = vmatpush2.msra.mxu0 0.0
    %6620 = vmatprep.subr.mxu0 0.0
    %6621 = vmatpush2.msra.mxu0 0.0
    %6622 = vmatprep.subr.mxu0 0.0
    %6623 = vmatpush2.msra.mxu0 0.0
    %6624 = vmatprep.subr.mxu0 0.0
    %6625 = vmatpush2.msra.mxu0 0.0
    %6626 = vmatprep.subr.mxu0 0.0
    %6627 = vmatpush2.msra.mxu0 0.0
    %6628 = vmatprep.subr.mxu0 0.0
    %6629 = vmatpush2.msra.mxu0 0.0
    %6630 = vmatprep.subr.mxu0 0.0
    %6631 = vmatpush2.msra.mxu0 0.0
    %6632 = vmatprep.subr.mxu0 0.0
    %6633 = vmatpush2.msra.mxu0 0.0
    %6634 = vmatprep.subr.mxu0 0.0
    %6635 = vmatpush2.msra.mxu0 0.0
    %6636 = vmatprep.subr.mxu0 0.0
    %6637 = vmatpush2.msra.mxu0 0.0
    %6638 = vmatprep.subr.mxu0 0.0
    %6639 = vmatpush2.msra.mxu0 0.0
    %6640 = vmatprep.subr.mxu0 0.0
    %6641 = vmatpush2.msra.mxu0 0.0
    %6642 = vmatprep.subr.mxu0 0.0
    %6643 = vmatpush2.msra.mxu0 0.0
    %6644 = vmatprep.subr.mxu0 0.0
    %6645 = vmatpush2.msra.mxu0 0.0
    %6646 = vmatprep.subr.mxu0 0.0
    %6647 = vmatpush2.msra.mxu0 0.0
    %6648 = vmatprep.subr.mxu0 0.0
    %6649 = vmatpush2.msra.mxu0 0.0
    %6650 = vmatprep.mubr.f32.mxu0 0.0
    %6651 = vmatmul.mubr.f32.gmra.mxu0 %v6584
    %v6652 = vpop.f32.mrf.mxu0
    %v6653 = vadd.f32 %v6580, %v6652
    %v6654 = vpop.f32.mrf.mxu0
    %6655 = vdwg.mxu0
    %v6656 = vld [vmem:[%s16] sm:$0x1]
    %v6658 = vlaneseq
    %v6659 = vshrl.u32 %v6658, 7
    %v6660 = vsub.s32 0, %v6659
    %v6661 = vrot.slane %v6656, %v6660
    %v6663 = vadd.f32 %v6653, %v6661
    %v6664 = vmax.f32 %v6663, 0.0
    %v6665 = vld [vmem:[#allocation13] sm:$0xff]
    %v6666 = vld [vmem:[#allocation13 + $0x8] sm:$0xff]
    %v6667 = vld [vmem:[%s18] sm:$0x1]
    %v6669 = vlaneseq
    %v6670 = vshrl.u32 %v6669, 7
    %v6671 = vsub.s32 0, %v6670
    %v6672 = vrot.slane %v6667, %v6671
    %v6675 = vsel %vm6509, %v6664, 0
    %6677 = vmatprep.subr.mxu0 0.0
    %6678 = vmatpush1.msra.mxu0 0.0
    %6679 = vmatprep.subr.mxu0 0.0
    %6680 = vmatpush1.msra.mxu0 0.0
    %6681 = vmatprep.subr.mxu0 0.0
    %6682 = vmatpush1.msra.mxu0 0.0
    %6683 = vmatprep.subr.mxu0 0.0
    %6684 = vmatpush1.msra.mxu0 0.0
    %6685 = vmatprep.subr.mxu0 0.0
    %6686 = vmatpush1.msra.mxu0 0.0
    %6687 = vmatprep.subr.mxu0 0.0
    %6688 = vmatpush1.msra.mxu0 0.0
    %6689 = vmatprep.subr.mxu0 0.0
    %6690 = vmatpush1.msra.mxu0 0.0
    %6691 = vmatprep.subr.mxu0 0.0
    %6692 = vmatpush1.msra.mxu0 0.0
    %6693 = vmatprep.subr.mxu0 0.0
    %6694 = vmatpush1.msra.mxu0 0.0
    %6695 = vmatprep.subr.mxu0 0.0
    %6696 = vmatpush1.msra.mxu0 0.0
    %6697 = vmatprep.subr.mxu0 0.0
    %6698 = vmatpush1.msra.mxu0 0.0
    %6699 = vmatprep.subr.mxu0 0.0
    %6700 = vmatpush1.msra.mxu0 0.0
    %6701 = vmatprep.subr.mxu0 0.0
    %6702 = vmatpush1.msra.mxu0 0.0
    %6703 = vmatprep.subr.mxu0 0.0
    %6704 = vmatpush1.msra.mxu0 0.0
    %6705 = vmatprep.subr.mxu0 0.0
    %6706 = vmatpush1.msra.mxu0 %v6666
    %6707 = vmatprep.subr.mxu0 0.0
    %6708 = vmatpush1.msra.mxu0 %v6665
    %6709 = vmatprep.subr.mxu0 0.0
    %6710 = vmatpush2.msra.mxu0 0.0
    %6711 = vmatprep.subr.mxu0 0.0
    %6712 = vmatpush2.msra.mxu0 0.0
    %6713 = vmatprep.subr.mxu0 0.0
    %6714 = vmatpush2.msra.mxu0 0.0
    %6715 = vmatprep.subr.mxu0 0.0
    %6716 = vmatpush2.msra.mxu0 0.0
    %6717 = vmatprep.subr.mxu0 0.0
    %6718 = vmatpush2.msra.mxu0 0.0
    %6719 = vmatprep.subr.mxu0 0.0
    %6720 = vmatpush2.msra.mxu0 0.0
    %6721 = vmatprep.subr.mxu0 0.0
    %6722 = vmatpush2.msra.mxu0 0.0
    %6723 = vmatprep.subr.mxu0 0.0
    %6724 = vmatpush2.msra.mxu0 0.0
    %6725 = vmatprep.subr.mxu0 0.0
    %6726 = vmatpush2.msra.mxu0 0.0
    %6727 = vmatprep.subr.mxu0 0.0
    %6728 = vmatpush2.msra.mxu0 0.0
    %6729 = vmatprep.subr.mxu0 0.0
    %6730 = vmatpush2.msra.mxu0 0.0
    %6731 = vmatprep.subr.mxu0 0.0
    %6732 = vmatpush2.msra.mxu0 0.0
    %6733 = vmatprep.subr.mxu0 0.0
    %6734 = vmatpush2.msra.mxu0 0.0
    %6735 = vmatprep.subr.mxu0 0.0
    %6736 = vmatpush2.msra.mxu0 0.0
    %6737 = vmatprep.subr.mxu0 0.0
    %6738 = vmatpush2.msra.mxu0 0.0
    %6739 = vmatprep.subr.mxu0 0.0
    %6740 = vmatpush2.msra.mxu0 0.0
    %6741 = vmatprep.mubr.f32.mxu0 0.0
    %6742 = vmatmul.mubr.f32.gmra.mxu0 %v6675
    %v6743 = vpop.f32.mrf.mxu0
    %v6744 = vadd.f32 %v6672, %v6743
    %v6745 = vpop.f32.mrf.mxu0
    %6746 = vdwg.mxu0
    %6747 = vst [vmem:[#allocation14] sm:$0xf] %v6744
    // Predicated region
    $region106: #{tpu_custom_call.1} parent=1 // pred_check
      _
    $region107: #{tpu_custom_call.1} parent=1 // pred_check_branch
      %6749 = sbr.rel (0) target = $region109
    $region108: #{tpu_custom_call.1} parent=1 // pred_region
      %s6751 = ssub.s32 64, 64
      %6752 = vsyncadd [#allocation4], %s6751
      %s6754 = sshll.u32 [#allocation14], 4
      %s6755 = int_to_ptr.vmem [resolvable:$true] %s6754
      %6757 = dma.vmem_to_hbm [thread:$0]  %s6755, 64, %s19, [#allocation4]
    $region109: #{tpu_custom_call.1} parent=1 // pred_fallthru
      _
    // Predicated region
    $region110: #{tpu_custom_call.1} parent=1 // pred_check
      _
    $region111: #{tpu_custom_call.1} parent=1 // pred_check_branch
      %6759 = sbr.rel (0) target = $region113
    $region112: #{tpu_custom_call.1} parent=1 // pred_region
      %s6761 = ssub.s32 128, 128
      %6762 = vsyncadd [#allocation16], %s6761
      %s6763 = sshll.u32 [#allocation15], 4
      %s6764 = int_to_ptr.vmem [resolvable:$true] %s6763
      %6769 = dma.vmem_to_hbm [thread:$0]  %s6764, 128, %s20, [#allocation16], 64, 64, 4
    $region113: #{tpu_custom_call.1} parent=1 // pred_fallthru
      _
    // Predicated region
    $region114: #{tpu_custom_call.1} parent=1 // pred_check
      _
    $region115: #{tpu_custom_call.1} parent=1 // pred_check_branch
      %6771 = sbr.rel (0) target = $region117
    $region116: #{tpu_custom_call.1} parent=1 // pred_region
      %6772 = dma.done [#allocation4], 64
    $region117: #{tpu_custom_call.1} parent=1 // pred_fallthru
      _
    // Predicated region
    $region118: #{tpu_custom_call.1} parent=1 // pred_check
      _
    $region119: #{tpu_custom_call.1} parent=1 // pred_check_branch
      %6774 = sbr.rel (0) target = $region121
    $region120: #{tpu_custom_call.1} parent=1 // pred_region
      %6775 = dma.done [#allocation16], 128
    $region121: #{tpu_custom_call.1} parent=1 // pred_fallthru
      _
    %6776 = vsyncpa [#allocation3], 1
    %6777 = vsyncpa [#allocation6], 1
    %6778 = vsyncpa [#allocation9], 1
    %6779 = vsyncpa [#allocation12], 1
    %6780 = vsyncpa [#allocation4], 1
    %6781 = vsyncpa [#allocation16], 1

</llo_original>
